<compile_context>
chip_gen: v7x
topology: tpu7x:2x2x1
jax: 0.10.0
libtpu: 0.0.40
codegen_flags: <defaults>
</compile_context>

<pallas_src>
import functools

import numpy as np
import jax
import jax.numpy as jnp
from jax.experimental import pallas as pl
from jax.experimental.pallas import tpu as pltpu


# ----------------------------------------------------------------------------------
# Pallas kernel: both branches handled by the branch grid axis (weights indexed by b)
# ----------------------------------------------------------------------------------
def _fused_kernel(dens_ref, k0_ref, vemb_ref,
                  w1k_ref, w1v_ref, b1_ref, w2_ref, b2_ref, w3_ref, b3_ref,
                  rgb_ref, alpha_ref, weights_ref, ainv_ref, acc_ref,
                  *, act_shift, interval):
    S, TN = dens_ref.shape                     # steps, rays-per-tile (rays on lanes)
    K0 = k0_ref.shape[-1]
    W = w2_ref.shape[-1]
    M = S * TN                                 # batched point count for the MLP

    # --- Raw2Alpha: alpha = 1 - (1 + exp(d + shift))^(-interval)
    #              = 1 - exp(-softplus(d + shift) * interval)        (f32, EUP path)
    dens = dens_ref[...]                                             # [S, TN]
    alpha = 1.0 - jnp.exp(-jax.nn.softplus(dens + act_shift) * interval)
    alpha_ref[...] = alpha                                           # lane-dense store

    # --- Alphas2Weights: exclusive cumprod of (1 - alpha) over the step axis.
    #     S is small & static -> unrolled whole-row vector ops (no masked 1-lane
    #     stores, no serial per-sample chain on sliced lanes).
    om = 1.0 - alpha                                                 # [S, TN]
    t = jnp.ones((1, TN), jnp.float32)                               # running T
    w_rows = []
    for s in range(S):
        w_rows.append(alpha[s:s + 1, :] * t)                         # weight row s
        t = t * om[s:s + 1, :]
    weights = jnp.concatenate(w_rows, axis=0)                        # [S, TN]
    weights_ref[...] = weights                                       # lane-dense store
    ainv_ref[...] = t                                                # alphainv_last [1, TN]

    # --- rgbnet MLP, batched over all S*TN points of the tile (bf16 MXU, f32 accum).
    #     First layer is split (k0 rows + viewdir rows) so we never need
    #     torch.cat([k0, viewdirs_emb[ray_id]], -1); the per-ray viewdir part is
    #     computed ONCE per tile ([TN, W]) and broadcast over steps.  b1 is folded in.
    hv = jnp.dot(vemb_ref[...], w1v_ref[...],
                 preferred_element_type=jnp.float32) + b1_ref[...]   # [TN, W] f32
    k0f = k0_ref[...].reshape(M, K0)                                 # bf16, free reshape
    h = jnp.dot(k0f, w1k_ref[...], preferred_element_type=jnp.float32)   # [M, W]
    h = h.reshape(S, TN, W) + hv[None, :, :]
    h = jnp.maximum(h, 0.0).astype(jnp.bfloat16).reshape(M, W)
    h = jnp.dot(h, w2_ref[...], preferred_element_type=jnp.float32) + b2_ref[...]
    h = jnp.maximum(h, 0.0).astype(jnp.bfloat16)
    logit = jnp.dot(h, w3_ref[...], preferred_element_type=jnp.float32) + b3_ref[...]
    rgb = jax.nn.sigmoid(logit)                                      # [M, 3] f32
    rgb3 = rgb.reshape(S, TN, 3)
    rgb_ref[...] = rgb3

    # --- segment_coo(weights * rgb, ray_id, reduce='sum'):
    #     acc[n, c] = sum_s weights[s, n] * rgb[s, n, c]
    #     One small [S, TN] -> [TN, S] transpose, then S fused mul-adds.
    wT = weights.T                                                   # [TN, S]
    acc = jnp.zeros((TN, 3), jnp.float32)
    for s in range(S):
        acc = acc + wT[:, s:s + 1] * rgb3[s]
    acc_ref[...] = acc                                               # [TN, 3]


def make_fused_call(N, TN, S, K0, DEMB, W, act_shift, interval):
    assert N % TN == 0, "N must be a multiple of TN"
    assert TN % 128 == 0, "TN must be a multiple of 128 (rays are the lane axis)"
    kernel = functools.partial(_fused_kernel,
                               act_shift=float(act_shift),
                               interval=float(interval))
    grid = (2, N // TN)                         # (branch, ray tile)

    in_specs = [
        pl.BlockSpec((None, S, TN), lambda b, i: (b, 0, i)),          # density (f32)
        pl.BlockSpec((None, S, TN, K0), lambda b, i: (b, 0, i, 0)),   # k0 features (bf16)
        pl.BlockSpec((TN, DEMB), lambda b, i: (i, 0)),                # viewdir emb (bf16)
        pl.BlockSpec((None, K0, W), lambda b, i: (b, 0, 0)),          # W1 (k0 rows)
        pl.BlockSpec((None, DEMB, W), lambda b, i: (b, 0, 0)),        # W1 (viewdir rows)
        pl.BlockSpec((None, 1, W), lambda b, i: (b, 0, 0)),           # b1
        pl.BlockSpec((None, W, W), lambda b, i: (b, 0, 0)),           # W2
        pl.BlockSpec((None, 1, W), lambda b, i: (b, 0, 0)),           # b2
        pl.BlockSpec((None, W, 3), lambda b, i: (b, 0, 0)),           # W3
        pl.BlockSpec((None, 1, 3), lambda b, i: (b, 0, 0)),           # b3
    ]
    out_specs = [
        pl.BlockSpec((None, S, TN, 3), lambda b, i: (b, 0, i, 0)),    # raw rgb
        pl.BlockSpec((None, S, TN), lambda b, i: (b, 0, i)),          # raw alpha
        pl.BlockSpec((None, S, TN), lambda b, i: (b, 0, i)),          # weights
        pl.BlockSpec((None, 1, TN), lambda b, i: (b, 0, i)),          # alphainv_last
        pl.BlockSpec((None, TN, 3), lambda b, i: (b, i, 0)),          # sum_s w*rgb per ray
    ]
    out_shape = (
        jax.ShapeDtypeStruct((2, S, N, 3), jnp.float32),
        jax.ShapeDtypeStruct((2, S, N), jnp.float32),
        jax.ShapeDtypeStruct((2, S, N), jnp.float32),
        jax.ShapeDtypeStruct((2, 1, N), jnp.float32),
        jax.ShapeDtypeStruct((2, N, 3), jnp.float32),
    )

    # advisory cost estimate for the XLA scheduler
    flops = 2 * 2 * N * (S * (K0 * W + W * W + W * 3) + DEMB * W)
    transcendentals = 2 * N * S * 6
    bytes_in = (2 * S * N * 4 + 2 * S * N * K0 * 2 + N * DEMB * 2
                + 2 * ((K0 + DEMB + W) * W * 2 + W * 3 * 2 + (2 * W + 3) * 4))
    bytes_out = 2 * S * N * 3 * 4 + 2 * 2 * S * N * 4 + 2 * N * 4 + 2 * N * 3 * 4
    cost = pl.CostEstimate(flops=int(flops),
                           transcendentals=int(transcendentals),
                           bytes_accessed=int(bytes_in + bytes_out))

    return pl.pallas_call(
        kernel,
        out_shape=out_shape,
        grid_spec=pltpu.PrefetchScalarGridSpec(
            num_scalar_prefetch=0,
            grid=grid,
            in_specs=in_specs,
            out_specs=out_specs),
        compiler_params=pltpu.CompilerParams(
            dimension_semantics=("parallel", "parallel")),
        cost_estimate=cost,
    )


# ----------------------------------------------------------------------------------
# Plain-JAX glue: trilinear voxel sampling (== F.grid_sample align_corners=True)
# ----------------------------------------------------------------------------------
def trilinear_sample(grid, pts):
    """grid: [C, Rx, Ry, Rz]; pts: [..., 3] in [-1, 1] (x indexes the first spatial
    dim, matching DVGO's DenseGrid which .flip()s coords before grid_sample)."""
    g = jnp.moveaxis(grid, 0, -1)                         # [Rx, Ry, Rz, C]
    res = jnp.array(grid.shape[1:], jnp.float32)
    u = (pts + 1.0) * 0.5 * (res - 1.0)                   # align_corners=True mapping
    u = jnp.clip(u, 0.0, res - 1.0)
    i0 = jnp.clip(jnp.floor(u), 0.0, res - 2.0).astype(jnp.int32)
    f = u - i0.astype(jnp.float32)
    i1 = i0 + 1
    ix0, iy0, iz0 = i0[..., 0], i0[..., 1], i0[..., 2]
    ix1, iy1, iz1 = i1[..., 0], i1[..., 1], i1[..., 2]
    fx, fy, fz = f[..., 0:1], f[..., 1:2], f[..., 2:3]
    c000 = g[ix0, iy0, iz0]; c001 = g[ix0, iy0, iz1]
    c010 = g[ix0, iy1, iz0]; c011 = g[ix0, iy1, iz1]
    c100 = g[ix1, iy0, iz0]; c101 = g[ix1, iy0, iz1]
    c110 = g[ix1, iy1, iz0]; c111 = g[ix1, iy1, iz1]
    c00 = c000 * (1 - fz) + c001 * fz
    c01 = c010 * (1 - fz) + c011 * fz
    c10 = c100 * (1 - fz) + c101 * fz
    c11 = c110 * (1 - fz) + c111 * fz
    c0 = c00 * (1 - fy) + c01 * fy
    c1 = c10 * (1 - fy) + c11 * fy
    return c0 * (1 - fx) + c1 * fx                        # [..., C]


def viewdir_embedding(viewdirs, viewfreq):
    e = (viewdirs[..., None] * viewfreq).reshape(viewdirs.shape[0], -1)
    return jnp.concatenate([viewdirs, jnp.sin(e), jnp.cos(e)], axis=-1)


# ----------------------------------------------------------------------------------
# Full forward (fg + bg fused into one pallas_call) -- mirrors DirectBiVoxGO.forward
# ----------------------------------------------------------------------------------
def direct_bivoxgo_forward(params, rays_o, rays_d, viewdirs, *,
                           stepsize, bg, cfg):
    N = rays_o.shape[0]
    S, K0, DEMB, W, TN = cfg["S"], cfg["K0"], cfg["DEMB"], cfg["W"], cfg["TN"]

    # sample_ray ------------------------------------------------------------------
    # TODO(synk): CUDA render_utils_cuda.sample_pts_on_rays / sample_bg_pts_on_rays
    # (ray-AABB intersection, ragged compaction, inverse-sphere bg parameterization)
    # replaced by fixed dense uniform stepping clamped to the [-1,1]^3 bbox.
    rays_o_n = (rays_o - cfg["scene_center"]) / cfg["scene_radius"]
    rays_d_n = rays_d / jnp.linalg.norm(rays_d, axis=-1, keepdims=True)
    stepdist = stepsize * cfg["voxel_size"]
    t_fg = stepdist * jnp.arange(S, dtype=jnp.float32)
    pts_fg = jnp.clip(rays_o_n[:, None, :] + t_fg[None, :, None] * rays_d_n[:, None, :],
                      -1.0, 1.0)                                       # [N, S, 3]
    t_bg = 1.0 + stepdist * (jnp.arange(S, dtype=jnp.float32) + 1.0)
    pts_bg = jnp.clip(rays_o_n[:, None, :] + t_bg[None, :, None] * rays_d_n[:, None, :],
                      -1.0, 1.0)                                       # [N, S, 3]

    interval = stepsize * cfg["voxel_size_ratio"]
    vemb = viewdir_embedding(viewdirs, cfg["viewfreq"]).astype(jnp.bfloat16)  # [N, 27]

    # TODO(synk): the trilinear grid_sample gather stays in XLA; the 16^3 grids fit in
    # VMEM and could be fused into the kernel (8-corner lerp in-kernel) later.
    def sample(branch, pts):
        p = params[branch]
        dens = trilinear_sample(p["density"], pts)[..., 0]             # [N, S]
        k0 = trilinear_sample(p["k0"], pts)                            # [N, S, K0]
        return dens, k0

    dens_fg, k0_fg = sample("fg", pts_fg)
    dens_bg, k0_bg = sample("bg", pts_bg)

    # branch-stacked, step-major layouts (rays become the lane axis inside the kernel)
    dens_all = jnp.stack([dens_fg, dens_bg]).transpose(0, 2, 1)        # [2, S, N] f32
    k0_all = jnp.stack([k0_fg, k0_bg]).transpose(0, 2, 1, 3).astype(jnp.bfloat16)

    def stackw(name, dtype):
        return jnp.stack([params["fg"][name], params["bg"][name]]).astype(dtype)

    call = make_fused_call(N, TN, S, K0, DEMB, W, cfg["act_shift"], interval)
    rgb, alpha, weights, ainv, acc = call(
        dens_all, k0_all, vemb,
        stackw("w1k", jnp.bfloat16), stackw("w1v", jnp.bfloat16), stackw("b1", jnp.float32),
        stackw("w2", jnp.bfloat16), stackw("b2", jnp.float32),
        stackw("w3", jnp.bfloat16), stackw("b3", jnp.float32))

    ainv_fg = ainv[0, 0]                                               # [N]
    ainv_bg = ainv[1, 0]
    # fast_color_thres == 0 -> the prev_alphainv_last / alpha / weights masking
    # branches in _forward are all no-ops, so bg stays dense too.
    rgb_marched = (acc[0]
                   + ainv_fg[:, None] * acc[1]
                   + (ainv_fg * ainv_bg)[:, None] * bg)                # [N, 3]

    # back to the module's ray-major point ordering for the raw outputs
    def ray_major(x):                        # [S, N, ...] -> [N*S, ...]
        return jnp.moveaxis(x, 0, 1).reshape((x.shape[1] * x.shape[0],) + x.shape[2:])

    ray_id = jnp.repeat(jnp.arange(N, dtype=jnp.int32), S)
    return {
        "rgb_marched": rgb_marched,
        "alphainv_last": jnp.concatenate([ainv_fg, ainv_bg]),
        "weights": jnp.concatenate([ray_major(weights[0]), ray_major(weights[1])]),
        "raw_alpha": jnp.concatenate([ray_major(alpha[0]), ray_major(alpha[1])]),
        "raw_rgb": jnp.concatenate([ray_major(rgb[0]), ray_major(rgb[1])], axis=0),
        "ray_id": jnp.concatenate([ray_id, ray_id]),
    }


# ----------------------------------------------------------------------------------
# Deterministic synthetic parameter init (shapes follow DirectBiVoxGO.__init__)
# ----------------------------------------------------------------------------------
def init_branch_params(key, R, K0, DEMB, W):
    ks = jax.random.split(key, 8)

    def lin_w(k, fi, fo):
        bound = 1.0 / np.sqrt(fi)
        return jax.random.uniform(k, (fi, fo), jnp.float32, -bound, bound)

    def lin_b(k, fi, fo):
        bound = 1.0 / np.sqrt(fi)
        return jax.random.uniform(k, (1, fo), jnp.float32, -bound, bound)

    dim0 = K0 + DEMB
    return {
        "density": 0.3 * jax.random.normal(ks[0], (1, R, R, R), jnp.float32),
        "k0": 0.3 * jax.random.normal(ks[1], (K0, R, R, R), jnp.float32),
        "w1k": lin_w(ks[2], dim0, W)[:K0],        # first-layer rows for k0 features
        "w1v": lin_w(ks[3], dim0, W)[:DEMB],      # first-layer rows for viewdir emb
        "b1": lin_b(ks[4], dim0, W),
        "w2": lin_w(ks[5], W, W),
        "b2": lin_b(ks[6], W, W),
        "w3": lin_w(ks[7], W, 3),
        "b3": jnp.zeros((1, 3), jnp.float32),     # nn.init.constant_(bias, 0)
    }


if __name__ == "__main__":
    # small, TPU-friendly shapes (TN is the rays-per-tile; use 512-2048 for real loads)
    N = 256          # rays
    TN = 128         # rays per grid step (lane axis -> keep a multiple of 128)
    S = 8            # samples per ray (fg and bg use the same step count here)
    K0 = 12          # rgbnet_dim
    PE = 4           # viewbase_pe
    DEMB = 3 + 3 * PE * 2   # 27
    W = 128          # rgbnet_width
    R = 16           # world_size per axis

    alpha_init = 1e-2
    num_voxels = R ** 3                      # -> world_size 16^3 on the [-1,1]^3 cube
    voxel_size = (8.0 / num_voxels) ** (1.0 / 3.0)   # 0.125
    cfg = {
        "S": S, "K0": K0, "DEMB": DEMB, "W": W, "TN": TN,
        "scene_center": jnp.zeros((3,), jnp.float32),
        "scene_radius": jnp.ones((3,), jnp.float32),
        "voxel_size": float(voxel_size),
        "voxel_size_ratio": 1.0,
        "act_shift": float(np.log(1.0 / (1.0 - alpha_init) - 1.0)),
        "viewfreq": jnp.array([2.0 ** i for i in range(PE)], jnp.float32),
    }

    key = jax.random.PRNGKey(0)
    k_fg, k_bg, k_o, k_d = jax.random.split(key, 4)
    params = {
        "fg": init_branch_params(k_fg, R, K0, DEMB, W),
        "bg": init_branch_params(k_bg, R, K0, DEMB, W),
    }

    rays_o = jax.random.uniform(k_o, (N, 3), jnp.float32, -0.5, 0.5)
    rays_d = jax.random.normal(k_d, (N, 3), jnp.float32)
    viewdirs = rays_d / jnp.linalg.norm(rays_d, axis=-1, keepdims=True)

    out = direct_bivoxgo_forward(params, rays_o, rays_d, viewdirs,
                                 stepsize=0.5, bg=1.0, cfg=cfg)
    jax.block_until_ready(out["rgb_marched"])

    assert out["rgb_marched"].shape == (N, 3)
    assert out["alphainv_last"].shape == (2 * N,)
    assert out["weights"].shape == (2 * N * S,)
    assert out["raw_alpha"].shape == (2 * N * S,)
    assert out["raw_rgb"].shape == (2 * N * S, 3)
    assert out["ray_id"].shape == (2 * N * S,)
    assert bool(jnp.all(jnp.isfinite(out["rgb_marched"])))
    assert bool(jnp.all(out["rgb_marched"] >= 0.0))
    print("KERNEL_OK")
</pallas_src>

<mosaic_0001>
module attributes {stable_mosaic.version = 11 : i64} {
  func.func @_fused_kernel(%arg0: i32, %arg1: i32, %arg2: memref<1x8x128xf32, #tpu.memory_space<vmem>>, %arg3: memref<1x8x128x12xbf16, #tpu.memory_space<vmem>>, %arg4: memref<128x27xbf16, #tpu.memory_space<vmem>>, %arg5: memref<1x12x128xbf16, #tpu.memory_space<vmem>>, %arg6: memref<1x27x128xbf16, #tpu.memory_space<vmem>>, %arg7: memref<1x1x128xf32, #tpu.memory_space<vmem>>, %arg8: memref<1x128x128xbf16, #tpu.memory_space<vmem>>, %arg9: memref<1x1x128xf32, #tpu.memory_space<vmem>>, %arg10: memref<1x128x3xbf16, #tpu.memory_space<vmem>>, %arg11: memref<1x1x3xf32, #tpu.memory_space<vmem>>, %arg12: memref<1x8x128x3xf32, #tpu.memory_space<vmem>>, %arg13: memref<1x8x128xf32, #tpu.memory_space<vmem>>, %arg14: memref<1x8x128xf32, #tpu.memory_space<vmem>>, %arg15: memref<1x1x128xf32, #tpu.memory_space<vmem>>, %arg16: memref<1x128x3xf32, #tpu.memory_space<vmem>>) attributes {dimension_semantics = [#tpu.dimension_semantics<parallel>, #tpu.dimension_semantics<parallel>], iteration_bounds = array<i64: 2, 2>, scalar_prefetch = 0 : i64, scratch_operands = 0 : i64, tpu.core_type = #tpu.core_type<tc>, window_params = [{transform_indices = @transform_0, window_bounds = array<i64: 1, 8, 128>}, {transform_indices = @transform_1, window_bounds = array<i64: 1, 8, 128, 12>}, {transform_indices = @transform_2, window_bounds = array<i64: 128, 27>}, {transform_indices = @transform_3, window_bounds = array<i64: 1, 12, 128>}, {transform_indices = @transform_4, window_bounds = array<i64: 1, 27, 128>}, {transform_indices = @transform_5, window_bounds = array<i64: 1, 1, 128>}, {transform_indices = @transform_6, window_bounds = array<i64: 1, 128, 128>}, {transform_indices = @transform_7, window_bounds = array<i64: 1, 1, 128>}, {transform_indices = @transform_8, window_bounds = array<i64: 1, 128, 3>}, {transform_indices = @transform_9, window_bounds = array<i64: 1, 1, 3>}, {transform_indices = @transform_10, window_bounds = array<i64: 1, 8, 128, 3>}, {transform_indices = @transform_11, window_bounds = array<i64: 1, 8, 128>}, {transform_indices = @transform_12, window_bounds = array<i64: 1, 8, 128>}, {transform_indices = @transform_13, window_bounds = array<i64: 1, 1, 128>}, {transform_indices = @transform_14, window_bounds = array<i64: 1, 128, 3>}]} {
    %c0 = arith.constant 0 : index
    %c0_0 = arith.constant 0 : index
    %c0_1 = arith.constant 0 : index
    %0 = vector.load %arg2[%c0, %c0_0, %c0_1] : memref<1x8x128xf32, #tpu.memory_space<vmem>>, vector<1x8x128xf32>
    %1 = vector.shape_cast %0 : vector<1x8x128xf32> to vector<8x128xf32>
    %cst = arith.constant -4.595120e+00 : f32
    %2 = vector.broadcast %cst : f32 to vector<8x128xf32>
    %3 = arith.addf %1, %2 : vector<8x128xf32>
    %cst_2 = arith.constant 0.000000e+00 : f32
    %4 = vector.broadcast %cst_2 : f32 to vector<8x128xf32>
    %5 = arith.maximumf %3, %4 : vector<8x128xf32>
    %6 = vector.broadcast %cst_2 : f32 to vector<8x128xf32>
    %7 = arith.subf %3, %6 : vector<8x128xf32>
    %8 = arith.cmpf one, %7, %7 : vector<8x128xf32>
    %9 = vector.broadcast %cst_2 : f32 to vector<8x128xf32>
    %10 = arith.addf %3, %9 : vector<8x128xf32>
    %11 = math.absf %7 : vector<8x128xf32>
    %cst_3 = arith.constant 0.000000e+00 : f32
    %12 = vector.broadcast %cst_3 : f32 to vector<8x128xf32>
    %13 = arith.subf %12, %11 : vector<8x128xf32>
    %14 = math.exp %13 : vector<8x128xf32>
    %15 = math.log1p %14 : vector<8x128xf32>
    %16 = arith.addf %5, %15 : vector<8x128xf32>
    %17 = arith.select %8, %10, %16 : vector<8x128xi1>, vector<8x128xf32>
    %cst_4 = arith.constant 0.000000e+00 : f32
    %18 = vector.broadcast %cst_4 : f32 to vector<8x128xf32>
    %19 = arith.subf %18, %17 : vector<8x128xf32>
    %cst_5 = arith.constant 5.000000e-01 : f32
    %20 = vector.broadcast %cst_5 : f32 to vector<8x128xf32>
    %21 = arith.mulf %19, %20 : vector<8x128xf32>
    %22 = math.exp %21 : vector<8x128xf32>
    %cst_6 = arith.constant 1.000000e+00 : f32
    %23 = vector.broadcast %cst_6 : f32 to vector<8x128xf32>
    %24 = arith.subf %23, %22 : vector<8x128xf32>
    %c0_7 = arith.constant 0 : index
    %c0_8 = arith.constant 0 : index
    %c0_9 = arith.constant 0 : index
    %25 = vector.load %arg13[%c0_7, %c0_8, %c0_9] : memref<1x8x128xf32, #tpu.memory_space<vmem>>, vector<1x8x128xf32>
    %26 = vector.shape_cast %25 : vector<1x8x128xf32> to vector<8x128xf32>
    %27 = vector.shape_cast %24 : vector<8x128xf32> to vector<1x8x128xf32>
    tpu.vector_store %arg13[%c0_7, %c0_8, %c0_9], %27 {strides = array<i32>} : memref<1x8x128xf32, #tpu.memory_space<vmem>>, vector<1x8x128xf32>,
    %cst_10 = arith.constant 1.000000e+00 : f32
    %28 = vector.broadcast %cst_10 : f32 to vector<8x128xf32>
    %29 = arith.subf %28, %24 : vector<8x128xf32>
    %cst_11 = arith.constant 1.000000e+00 : f32
    %30 = vector.broadcast %cst_11 : f32 to vector<1x128xf32>
    %31 = vector.extract_strided_slice %24 {offsets = [0, 0], sizes = [1, 128], strides = [1, 1]} : vector<8x128xf32> to vector<1x128xf32>
    %32 = arith.mulf %31, %30 : vector<1x128xf32>
    %33 = vector.extract_strided_slice %29 {offsets = [0, 0], sizes = [1, 128], strides = [1, 1]} : vector<8x128xf32> to vector<1x128xf32>
    %34 = arith.mulf %30, %33 : vector<1x128xf32>
    %35 = vector.extract_strided_slice %24 {offsets = [1, 0], sizes = [1, 128], strides = [1, 1]} : vector<8x128xf32> to vector<1x128xf32>
    %36 = arith.mulf %35, %34 : vector<1x128xf32>
    %37 = vector.extract_strided_slice %29 {offsets = [1, 0], sizes = [1, 128], strides = [1, 1]} : vector<8x128xf32> to vector<1x128xf32>
    %38 = arith.mulf %34, %37 : vector<1x128xf32>
    %39 = vector.extract_strided_slice %24 {offsets = [2, 0], sizes = [1, 128], strides = [1, 1]} : vector<8x128xf32> to vector<1x128xf32>
    %40 = arith.mulf %39, %38 : vector<1x128xf32>
    %41 = vector.extract_strided_slice %29 {offsets = [2, 0], sizes = [1, 128], strides = [1, 1]} : vector<8x128xf32> to vector<1x128xf32>
    %42 = arith.mulf %38, %41 : vector<1x128xf32>
    %43 = vector.extract_strided_slice %24 {offsets = [3, 0], sizes = [1, 128], strides = [1, 1]} : vector<8x128xf32> to vector<1x128xf32>
    %44 = arith.mulf %43, %42 : vector<1x128xf32>
    %45 = vector.extract_strided_slice %29 {offsets = [3, 0], sizes = [1, 128], strides = [1, 1]} : vector<8x128xf32> to vector<1x128xf32>
    %46 = arith.mulf %42, %45 : vector<1x128xf32>
    %47 = vector.extract_strided_slice %24 {offsets = [4, 0], sizes = [1, 128], strides = [1, 1]} : vector<8x128xf32> to vector<1x128xf32>
    %48 = arith.mulf %47, %46 : vector<1x128xf32>
    %49 = vector.extract_strided_slice %29 {offsets = [4, 0], sizes = [1, 128], strides = [1, 1]} : vector<8x128xf32> to vector<1x128xf32>
    %50 = arith.mulf %46, %49 : vector<1x128xf32>
    %51 = vector.extract_strided_slice %24 {offsets = [5, 0], sizes = [1, 128], strides = [1, 1]} : vector<8x128xf32> to vector<1x128xf32>
    %52 = arith.mulf %51, %50 : vector<1x128xf32>
    %53 = vector.extract_strided_slice %29 {offsets = [5, 0], sizes = [1, 128], strides = [1, 1]} : vector<8x128xf32> to vector<1x128xf32>
    %54 = arith.mulf %50, %53 : vector<1x128xf32>
    %55 = vector.extract_strided_slice %24 {offsets = [6, 0], sizes = [1, 128], strides = [1, 1]} : vector<8x128xf32> to vector<1x128xf32>
    %56 = arith.mulf %55, %54 : vector<1x128xf32>
    %57 = vector.extract_strided_slice %29 {offsets = [6, 0], sizes = [1, 128], strides = [1, 1]} : vector<8x128xf32> to vector<1x128xf32>
    %58 = arith.mulf %54, %57 : vector<1x128xf32>
    %59 = vector.extract_strided_slice %24 {offsets = [7, 0], sizes = [1, 128], strides = [1, 1]} : vector<8x128xf32> to vector<1x128xf32>
    %60 = arith.mulf %59, %58 : vector<1x128xf32>
    %61 = vector.extract_strided_slice %29 {offsets = [7, 0], sizes = [1, 128], strides = [1, 1]} : vector<8x128xf32> to vector<1x128xf32>
    %62 = arith.mulf %58, %61 : vector<1x128xf32>
    %63 = tpu.concatenate %32, %36, %40, %44, %48, %52, %56, %60 in 0 : vector<1x128xf32>, vector<1x128xf32>, vector<1x128xf32>, vector<1x128xf32>, vector<1x128xf32>, vector<1x128xf32>, vector<1x128xf32>, vector<1x128xf32> -> vector<8x128xf32>
    %c0_12 = arith.constant 0 : index
    %c0_13 = arith.constant 0 : index
    %c0_14 = arith.constant 0 : index
    %64 = vector.load %arg14[%c0_12, %c0_13, %c0_14] : memref<1x8x128xf32, #tpu.memory_space<vmem>>, vector<1x8x128xf32>
    %65 = vector.shape_cast %64 : vector<1x8x128xf32> to vector<8x128xf32>
    %66 = vector.shape_cast %63 : vector<8x128xf32> to vector<1x8x128xf32>
    tpu.vector_store %arg14[%c0_12, %c0_13, %c0_14], %66 {strides = array<i32>} : memref<1x8x128xf32, #tpu.memory_space<vmem>>, vector<1x8x128xf32>,
    %c0_15 = arith.constant 0 : index
    %c0_16 = arith.constant 0 : index
    %c0_17 = arith.constant 0 : index
    %67 = vector.load %arg15[%c0_15, %c0_16, %c0_17] : memref<1x1x128xf32, #tpu.memory_space<vmem>>, vector<1x1x128xf32>
    %68 = vector.shape_cast %67 : vector<1x1x128xf32> to vector<1x128xf32>
    %69 = vector.shape_cast %62 : vector<1x128xf32> to vector<1x1x128xf32>
    tpu.vector_store %arg15[%c0_15, %c0_16, %c0_17], %69 {strides = array<i32>} : memref<1x1x128xf32, #tpu.memory_space<vmem>>, vector<1x1x128xf32>,
    %c0_18 = arith.constant 0 : index
    %c0_19 = arith.constant 0 : index
    %70 = vector.load %arg4[%c0_18, %c0_19] : memref<128x27xbf16, #tpu.memory_space<vmem>>, vector<128x27xbf16>
    %c0_20 = arith.constant 0 : index
    %c0_21 = arith.constant 0 : index
    %c0_22 = arith.constant 0 : index
    %71 = vector.load %arg6[%c0_20, %c0_21, %c0_22] : memref<1x27x128xbf16, #tpu.memory_space<vmem>>, vector<1x27x128xbf16>
    %72 = vector.shape_cast %71 : vector<1x27x128xbf16> to vector<27x128xbf16>
    %cst_23 = arith.constant dense<0.000000e+00> : vector<128x128xf32>
    %73 = tpu.matmul %70, %72, %cst_23 {dimension_numbers = #tpu.dot_dimension_numbers<[1], [0], [0], [1], [0, 0, 1, 1], [], []>} : vector<128x27xbf16>, vector<27x128xbf16>, vector<128x128xf32> -> vector<128x128xf32>
    %c0_24 = arith.constant 0 : index
    %c0_25 = arith.constant 0 : index
    %c0_26 = arith.constant 0 : index
    %74 = vector.load %arg7[%c0_24, %c0_25, %c0_26] : memref<1x1x128xf32, #tpu.memory_space<vmem>>, vector<1x1x128xf32>
    %75 = vector.shape_cast %74 : vector<1x1x128xf32> to vector<1x128xf32>
    %76 = vector.broadcast %75 : vector<1x128xf32> to vector<128x128xf32>
    %77 = arith.addf %73, %76 : vector<128x128xf32>
    %c0_27 = arith.constant 0 : index
    %c0_28 = arith.constant 0 : index
    %c0_29 = arith.constant 0 : index
    %c0_30 = arith.constant 0 : index
    %78 = vector.load %arg3[%c0_27, %c0_28, %c0_29, %c0_30] : memref<1x8x128x12xbf16, #tpu.memory_space<vmem>>, vector<1x8x128x12xbf16>
    %79 = vector.shape_cast %78 : vector<1x8x128x12xbf16> to vector<8x128x12xbf16>
    %80 = vector.shape_cast %79 : vector<8x128x12xbf16> to vector<1024x12xbf16>
    %c0_31 = arith.constant 0 : index
    %c0_32 = arith.constant 0 : index
    %c0_33 = arith.constant 0 : index
    %81 = vector.load %arg5[%c0_31, %c0_32, %c0_33] : memref<1x12x128xbf16, #tpu.memory_space<vmem>>, vector<1x12x128xbf16>
    %82 = vector.shape_cast %81 : vector<1x12x128xbf16> to vector<12x128xbf16>
    %cst_34 = arith.constant dense<0.000000e+00> : vector<1024x128xf32>
    %83 = tpu.matmul %80, %82, %cst_34 {dimension_numbers = #tpu.dot_dimension_numbers<[1], [0], [0], [1], [0, 0, 1, 1], [], []>} : vector<1024x12xbf16>, vector<12x128xbf16>, vector<1024x128xf32> -> vector<1024x128xf32>
    %84 = vector.shape_cast %83 : vector<1024x128xf32> to vector<8x128x128xf32>
    %85 = vector.shape_cast %77 : vector<128x128xf32> to vector<1x128x128xf32>
    %86 = vector.broadcast %85 : vector<1x128x128xf32> to vector<8x128x128xf32>
    %87 = arith.addf %84, %86 : vector<8x128x128xf32>
    %cst_35 = arith.constant 0.000000e+00 : f32
    %88 = vector.broadcast %cst_35 : f32 to vector<8x128x128xf32>
    %89 = arith.maximumf %87, %88 : vector<8x128x128xf32>
    %90 = arith.truncf %89 : vector<8x128x128xf32> to vector<8x128x128xbf16>
    %91 = vector.shape_cast %90 : vector<8x128x128xbf16> to vector<1024x128xbf16>
    %c0_36 = arith.constant 0 : index
    %c0_37 = arith.constant 0 : index
    %c0_38 = arith.constant 0 : index
    %92 = vector.load %arg8[%c0_36, %c0_37, %c0_38] : memref<1x128x128xbf16, #tpu.memory_space<vmem>>, vector<1x128x128xbf16>
    %93 = vector.shape_cast %92 : vector<1x128x128xbf16> to vector<128x128xbf16>
    %cst_39 = arith.constant dense<0.000000e+00> : vector<1024x128xf32>
    %94 = tpu.matmul %91, %93, %cst_39 {dimension_numbers = #tpu.dot_dimension_numbers<[1], [0], [0], [1], [0, 0, 1, 1], [], []>} : vector<1024x128xbf16>, vector<128x128xbf16>, vector<1024x128xf32> -> vector<1024x128xf32>
    %c0_40 = arith.constant 0 : index
    %c0_41 = arith.constant 0 : index
    %c0_42 = arith.constant 0 : index
    %95 = vector.load %arg9[%c0_40, %c0_41, %c0_42] : memref<1x1x128xf32, #tpu.memory_space<vmem>>, vector<1x1x128xf32>
    %96 = vector.shape_cast %95 : vector<1x1x128xf32> to vector<1x128xf32>
    %97 = vector.broadcast %96 : vector<1x128xf32> to vector<1024x128xf32>
    %98 = arith.addf %94, %97 : vector<1024x128xf32>
    %cst_43 = arith.constant 0.000000e+00 : f32
    %99 = vector.broadcast %cst_43 : f32 to vector<1024x128xf32>
    %100 = arith.maximumf %98, %99 : vector<1024x128xf32>
    %101 = arith.truncf %100 : vector<1024x128xf32> to vector<1024x128xbf16>
    %c0_44 = arith.constant 0 : index
    %c0_45 = arith.constant 0 : index
    %c0_46 = arith.constant 0 : index
    %102 = vector.load %arg10[%c0_44, %c0_45, %c0_46] : memref<1x128x3xbf16, #tpu.memory_space<vmem>>, vector<1x128x3xbf16>
    %103 = vector.shape_cast %102 : vector<1x128x3xbf16> to vector<128x3xbf16>
    %cst_47 = arith.constant dense<0.000000e+00> : vector<1024x3xf32>
    %104 = tpu.matmul %101, %103, %cst_47 {dimension_numbers = #tpu.dot_dimension_numbers<[1], [0], [0], [1], [0, 0, 1, 1], [], []>} : vector<1024x128xbf16>, vector<128x3xbf16>, vector<1024x3xf32> -> vector<1024x3xf32>
    %c0_48 = arith.constant 0 : index
    %c0_49 = arith.constant 0 : index
    %c0_50 = arith.constant 0 : index
    %105 = vector.load %arg11[%c0_48, %c0_49, %c0_50] : memref<1x1x3xf32, #tpu.memory_space<vmem>>, vector<1x1x3xf32>
    %106 = vector.shape_cast %105 : vector<1x1x3xf32> to vector<1x3xf32>
    %107 = vector.broadcast %106 : vector<1x3xf32> to vector<1024x3xf32>
    %108 = arith.addf %104, %107 : vector<1024x3xf32>
    %109 = arith.negf %108 : vector<1024x3xf32>
    %110 = math.exp %109 : vector<1024x3xf32>
    %cst_51 = arith.constant 1.000000e+00 : f32
    %111 = vector.broadcast %cst_51 : f32 to vector<1024x3xf32>
    %112 = arith.addf %111, %110 : vector<1024x3xf32>
    %113 = arith.divf %111, %112 : vector<1024x3xf32>
    %114 = vector.shape_cast %113 : vector<1024x3xf32> to vector<8x128x3xf32>
    %c0_52 = arith.constant 0 : index
    %c0_53 = arith.constant 0 : index
    %c0_54 = arith.constant 0 : index
    %c0_55 = arith.constant 0 : index
    %115 = vector.load %arg12[%c0_52, %c0_53, %c0_54, %c0_55] : memref<1x8x128x3xf32, #tpu.memory_space<vmem>>, vector<1x8x128x3xf32>
    %116 = vector.shape_cast %115 : vector<1x8x128x3xf32> to vector<8x128x3xf32>
    %117 = vector.shape_cast %114 : vector<8x128x3xf32> to vector<1x8x128x3xf32>
    tpu.vector_store %arg12[%c0_52, %c0_53, %c0_54, %c0_55], %117 {strides = array<i32>} : memref<1x8x128x3xf32, #tpu.memory_space<vmem>>, vector<1x8x128x3xf32>,
    %118 = tpu.transpose %63, [1, 0] : vector<8x128xf32> -> vector<128x8xf32>
    %cst_56 = arith.constant 0.000000e+00 : f32
    %119 = vector.broadcast %cst_56 : f32 to vector<128x3xf32>
    %120 = vector.extract_strided_slice %118 {offsets = [0, 0], sizes = [128, 1], strides = [1, 1]} : vector<128x8xf32> to vector<128x1xf32>
    %121 = vector.extract_strided_slice %114 {offsets = [0, 0, 0], sizes = [1, 128, 3], strides = [1, 1, 1]} : vector<8x128x3xf32> to vector<1x128x3xf32>
    %122 = vector.shape_cast %121 : vector<1x128x3xf32> to vector<128x3xf32>
    %123 = vector.broadcast %120 : vector<128x1xf32> to vector<128x3xf32>
    %124 = arith.mulf %123, %122 : vector<128x3xf32>
    %125 = arith.addf %119, %124 : vector<128x3xf32>
    %126 = vector.extract_strided_slice %118 {offsets = [0, 1], sizes = [128, 1], strides = [1, 1]} : vector<128x8xf32> to vector<128x1xf32>
    %127 = vector.extract_strided_slice %114 {offsets = [1, 0, 0], sizes = [1, 128, 3], strides = [1, 1, 1]} : vector<8x128x3xf32> to vector<1x128x3xf32>
    %128 = vector.shape_cast %127 : vector<1x128x3xf32> to vector<128x3xf32>
    %129 = vector.broadcast %126 : vector<128x1xf32> to vector<128x3xf32>
    %130 = arith.mulf %129, %128 : vector<128x3xf32>
    %131 = arith.addf %125, %130 : vector<128x3xf32>
    %132 = vector.extract_strided_slice %118 {offsets = [0, 2], sizes = [128, 1], strides = [1, 1]} : vector<128x8xf32> to vector<128x1xf32>
    %133 = vector.extract_strided_slice %114 {offsets = [2, 0, 0], sizes = [1, 128, 3], strides = [1, 1, 1]} : vector<8x128x3xf32> to vector<1x128x3xf32>
    %134 = vector.shape_cast %133 : vector<1x128x3xf32> to vector<128x3xf32>
    %135 = vector.broadcast %132 : vector<128x1xf32> to vector<128x3xf32>
    %136 = arith.mulf %135, %134 : vector<128x3xf32>
    %137 = arith.addf %131, %136 : vector<128x3xf32>
    %138 = vector.extract_strided_slice %118 {offsets = [0, 3], sizes = [128, 1], strides = [1, 1]} : vector<128x8xf32> to vector<128x1xf32>
    %139 = vector.extract_strided_slice %114 {offsets = [3, 0, 0], sizes = [1, 128, 3], strides = [1, 1, 1]} : vector<8x128x3xf32> to vector<1x128x3xf32>
    %140 = vector.shape_cast %139 : vector<1x128x3xf32> to vector<128x3xf32>
    %141 = vector.broadcast %138 : vector<128x1xf32> to vector<128x3xf32>
    %142 = arith.mulf %141, %140 : vector<128x3xf32>
    %143 = arith.addf %137, %142 : vector<128x3xf32>
    %144 = vector.extract_strided_slice %118 {offsets = [0, 4], sizes = [128, 1], strides = [1, 1]} : vector<128x8xf32> to vector<128x1xf32>
    %145 = vector.extract_strided_slice %114 {offsets = [4, 0, 0], sizes = [1, 128, 3], strides = [1, 1, 1]} : vector<8x128x3xf32> to vector<1x128x3xf32>
    %146 = vector.shape_cast %145 : vector<1x128x3xf32> to vector<128x3xf32>
    %147 = vector.broadcast %144 : vector<128x1xf32> to vector<128x3xf32>
    %148 = arith.mulf %147, %146 : vector<128x3xf32>
    %149 = arith.addf %143, %148 : vector<128x3xf32>
    %150 = vector.extract_strided_slice %118 {offsets = [0, 5], sizes = [128, 1], strides = [1, 1]} : vector<128x8xf32> to vector<128x1xf32>
    %151 = vector.extract_strided_slice %114 {offsets = [5, 0, 0], sizes = [1, 128, 3], strides = [1, 1, 1]} : vector<8x128x3xf32> to vector<1x128x3xf32>
    %152 = vector.shape_cast %151 : vector<1x128x3xf32> to vector<128x3xf32>
    %153 = vector.broadcast %150 : vector<128x1xf32> to vector<128x3xf32>
    %154 = arith.mulf %153, %152 : vector<128x3xf32>
    %155 = arith.addf %149, %154 : vector<128x3xf32>
    %156 = vector.extract_strided_slice %118 {offsets = [0, 6], sizes = [128, 1], strides = [1, 1]} : vector<128x8xf32> to vector<128x1xf32>
    %157 = vector.extract_strided_slice %114 {offsets = [6, 0, 0], sizes = [1, 128, 3], strides = [1, 1, 1]} : vector<8x128x3xf32> to vector<1x128x3xf32>
    %158 = vector.shape_cast %157 : vector<1x128x3xf32> to vector<128x3xf32>
    %159 = vector.broadcast %156 : vector<128x1xf32> to vector<128x3xf32>
    %160 = arith.mulf %159, %158 : vector<128x3xf32>
    %161 = arith.addf %155, %160 : vector<128x3xf32>
    %162 = vector.extract_strided_slice %118 {offsets = [0, 7], sizes = [128, 1], strides = [1, 1]} : vector<128x8xf32> to vector<128x1xf32>
    %163 = vector.extract_strided_slice %114 {offsets = [7, 0, 0], sizes = [1, 128, 3], strides = [1, 1, 1]} : vector<8x128x3xf32> to vector<1x128x3xf32>
    %164 = vector.shape_cast %163 : vector<1x128x3xf32> to vector<128x3xf32>
    %165 = vector.broadcast %162 : vector<128x1xf32> to vector<128x3xf32>
    %166 = arith.mulf %165, %164 : vector<128x3xf32>
    %167 = arith.addf %161, %166 : vector<128x3xf32>
    %c0_57 = arith.constant 0 : index
    %c0_58 = arith.constant 0 : index
    %c0_59 = arith.constant 0 : index
    %168 = vector.load %arg16[%c0_57, %c0_58, %c0_59] : memref<1x128x3xf32, #tpu.memory_space<vmem>>, vector<1x128x3xf32>
    %169 = vector.shape_cast %168 : vector<1x128x3xf32> to vector<128x3xf32>
    %170 = vector.shape_cast %167 : vector<128x3xf32> to vector<1x128x3xf32>
    tpu.vector_store %arg16[%c0_57, %c0_58, %c0_59], %170 {strides = array<i32>} : memref<1x128x3xf32, #tpu.memory_space<vmem>>, vector<1x128x3xf32>,
    return
  }
  func.func @transform_0(%arg0: i32, %arg1: i32) -> (i32, i32, i32) {
    %c0_i32 = arith.constant 0 : i32
    %c0_i32_0 = arith.constant 0 : i32
    return %arg0, %c0_i32, %arg1 : i32, i32, i32
  }
  func.func @transform_1(%arg0: i32, %arg1: i32) -> (i32, i32, i32, i32) {
    %c0_i32 = arith.constant 0 : i32
    %c0_i32_0 = arith.constant 0 : i32
    %c0_i32_1 = arith.constant 0 : i32
    return %arg0, %c0_i32, %arg1, %c0_i32_0 : i32, i32, i32, i32
  }
  func.func @transform_2(%arg0: i32, %arg1: i32) -> (i32, i32) {
    %c0_i32 = arith.constant 0 : i32
    %c0_i32_0 = arith.constant 0 : i32
    return %arg1, %c0_i32 : i32, i32
  }
  func.func @transform_3(%arg0: i32, %arg1: i32) -> (i32, i32, i32) {
    %c0_i32 = arith.constant 0 : i32
    %c0_i32_0 = arith.constant 0 : i32
    %c0_i32_1 = arith.constant 0 : i32
    return %arg0, %c0_i32, %c0_i32_0 : i32, i32, i32
  }
  func.func @transform_4(%arg0: i32, %arg1: i32) -> (i32, i32, i32) {
    %c0_i32 = arith.constant 0 : i32
    %c0_i32_0 = arith.constant 0 : i32
    %c0_i32_1 = arith.constant 0 : i32
    return %arg0, %c0_i32, %c0_i32_0 : i32, i32, i32
  }
  func.func @transform_5(%arg0: i32, %arg1: i32) -> (i32, i32, i32) {
    %c0_i32 = arith.constant 0 : i32
    %c0_i32_0 = arith.constant 0 : i32
    %c0_i32_1 = arith.constant 0 : i32
    return %arg0, %c0_i32, %c0_i32_0 : i32, i32, i32
  }
  func.func @transform_6(%arg0: i32, %arg1: i32) -> (i32, i32, i32) {
    %c0_i32 = arith.constant 0 : i32
    %c0_i32_0 = arith.constant 0 : i32
    %c0_i32_1 = arith.constant 0 : i32
    return %arg0, %c0_i32, %c0_i32_0 : i32, i32, i32
  }
  func.func @transform_7(%arg0: i32, %arg1: i32) -> (i32, i32, i32) {
    %c0_i32 = arith.constant 0 : i32
    %c0_i32_0 = arith.constant 0 : i32
    %c0_i32_1 = arith.constant 0 : i32
    return %arg0, %c0_i32, %c0_i32_0 : i32, i32, i32
  }
  func.func @transform_8(%arg0: i32, %arg1: i32) -> (i32, i32, i32) {
    %c0_i32 = arith.constant 0 : i32
    %c0_i32_0 = arith.constant 0 : i32
    %c0_i32_1 = arith.constant 0 : i32
    return %arg0, %c0_i32, %c0_i32_0 : i32, i32, i32
  }
  func.func @transform_9(%arg0: i32, %arg1: i32) -> (i32, i32, i32) {
    %c0_i32 = arith.constant 0 : i32
    %c0_i32_0 = arith.constant 0 : i32
    %c0_i32_1 = arith.constant 0 : i32
    return %arg0, %c0_i32, %c0_i32_0 : i32, i32, i32
  }
  func.func @transform_10(%arg0: i32, %arg1: i32) -> (i32, i32, i32, i32) {
    %c0_i32 = arith.constant 0 : i32
    %c0_i32_0 = arith.constant 0 : i32
    %c0_i32_1 = arith.constant 0 : i32
    return %arg0, %c0_i32, %arg1, %c0_i32_0 : i32, i32, i32, i32
  }
  func.func @transform_11(%arg0: i32, %arg1: i32) -> (i32, i32, i32) {
    %c0_i32 = arith.constant 0 : i32
    %c0_i32_0 = arith.constant 0 : i32
    return %arg0, %c0_i32, %arg1 : i32, i32, i32
  }
  func.func @transform_12(%arg0: i32, %arg1: i32) -> (i32, i32, i32) {
    %c0_i32 = arith.constant 0 : i32
    %c0_i32_0 = arith.constant 0 : i32
    return %arg0, %c0_i32, %arg1 : i32, i32, i32
  }
  func.func @transform_13(%arg0: i32, %arg1: i32) -> (i32, i32, i32) {
    %c0_i32 = arith.constant 0 : i32
    %c0_i32_0 = arith.constant 0 : i32
    return %arg0, %c0_i32, %arg1 : i32, i32, i32
  }
  func.func @transform_14(%arg0: i32, %arg1: i32) -> (i32, i32, i32) {
    %c0_i32 = arith.constant 0 : i32
    %c0_i32_0 = arith.constant 0 : i32
    return %arg0, %arg1, %c0_i32 : i32, i32, i32
  }
}

</mosaic_0001>

<llo_original>
// kernel: tpu_custom_call.1
$region0: #{tpu_custom_call.1}
  #allocation0 [shape = 'u32[]', space=smem, size = 0x4, offset = 0x4, fixed_abs, tag = 'smem constant byte address 0x4 - core index']
  #allocation1 [shape = 'u32[144,128]{1,0:T(1,128)}', space=vmem, size = 0x12000, scoped, tag = 'internal scratch']
  %s0 = inlined_call_operand.hbm [shape: f32[2,8,256], index: 0, kind: input, shape index: {}]
  %s1 = inlined_call_operand.vmem [shape: bf16[2,8,256,12], index: 1, kind: input, shape index: {}]
  %s2 = inlined_call_operand.vmem [shape: bf16[256,27], index: 2, kind: input, shape index: {}]
  %s3 = inlined_call_operand.vmem [shape: bf16[2,12,128], index: 3, kind: input, shape index: {}]
  %s4 = inlined_call_operand.vmem [shape: bf16[2,27,128], index: 4, kind: input, shape index: {}]
  %s5 = inlined_call_operand.hbm [shape: f32[2,1,128], index: 5, kind: input, shape index: {}]
  %s6 = inlined_call_operand.hbm [shape: bf16[2,128,128], index: 6, kind: input, shape index: {}]
  %s7 = inlined_call_operand.hbm [shape: f32[2,1,128], index: 7, kind: input, shape index: {}]
  %s8 = inlined_call_operand.vmem [shape: bf16[2,128,3], index: 8, kind: input, shape index: {}]
  %s9 = inlined_call_operand.hbm [shape: f32[2,1,3], index: 9, kind: input, shape index: {}]
  %s10 = inlined_call_operand.vmem [shape: f32[2,8,256,3], index: 10, kind: output, shape index: {0}]
  %s11 = inlined_call_operand.hbm [shape: f32[2,8,256], index: 11, kind: output, shape index: {1}]
  %s12 = inlined_call_operand.hbm [shape: f32[2,8,256], index: 12, kind: output, shape index: {2}]
  %s13 = inlined_call_operand.hbm [shape: f32[2,1,256], index: 13, kind: output, shape index: {3}]
  %s14 = inlined_call_operand.vmem [shape: f32[2,256,3], index: 14, kind: output, shape index: {4}]
  %15 = xla_tuple %s10, %s11, %s12, %s13, %s14
  %s16 = sld [smem:[#allocation0]]
  $region200: #{tpu_custom_call.1} parent=0
    _
  %s18 = ssub.s32 1, %s16
  %s19 = scalar_select 0, %s18, %s16
  $region1: #{tpu_custom_call.1} parent=0
    #allocation2 [shape = 'u8[8192]{0}', space=vmem, size = 0x2000, scoped, tag = 'input window, operand 0']
    #allocation3 [shape = 's32[2]{0}', space=sflag, size = 0x8, scoped, tag = 'scoped memory for tpu_custom_call.1']
    #allocation4 [shape = 's32[2]{0}', space=sflag, size = 0x8, scoped, tag = 'scoped memory for tpu_custom_call.1']
    #allocation5 [shape = 'u8[524288]{0}', space=vmem, size = 0x80000, scoped, tag = 'input window, operand 1']
    #allocation6 [shape = 'u8[1024]{0}', space=vmem, size = 0x400, scoped, tag = 'input window, operand 5']
    #allocation7 [shape = 's32[2]{0}', space=sflag, size = 0x8, scoped, tag = 'scoped memory for tpu_custom_call.1']
    #allocation8 [shape = 'u8[65536]{0}', space=vmem, size = 0x10000, scoped, tag = 'input window, operand 6']
    #allocation9 [shape = 'u8[1024]{0}', space=vmem, size = 0x400, scoped, tag = 'input window, operand 7']
    #allocation10 [shape = 's32[2]{0}', space=sflag, size = 0x8, scoped, tag = 'scoped memory for tpu_custom_call.1']
    #allocation11 [shape = 'u8[1024]{0}', space=vmem, size = 0x400, scoped, tag = 'input window, operand 9']
    #allocation12 [shape = 'u8[1048576]{0}', space=vmem, size = 0x100000, scoped, tag = 'output window, operand 0']
    #allocation13 [shape = 'u8[8192]{0}', space=vmem, size = 0x2000, scoped, tag = 'output window, operand 1']
    #allocation14 [shape = 'u8[8192]{0}', space=vmem, size = 0x2000, scoped, tag = 'output window, operand 2']
    #allocation15 [shape = 's32[2]{0}', space=sflag, size = 0x8, scoped, tag = 'scoped memory for tpu_custom_call.1']
    #allocation16 [shape = 'u8[1024]{0}', space=vmem, size = 0x400, scoped, tag = 'output window, operand 3']
    %20 = vsyncpa [#allocation3], 0
    %s21 = scalar_lea.sflag [#allocation3], 1
    %22 = vsyncpa %s21, 0
    %23 = vsyncpa [#allocation7], 0
    %s24 = scalar_lea.sflag [#allocation7], 1
    %25 = vsyncpa %s24, 0
    %26 = vsyncpa [#allocation10], 0
    %s27 = scalar_lea.sflag [#allocation10], 1
    %28 = vsyncpa %s27, 0
    %29 = vsyncpa [#allocation4], 0
    %s30 = scalar_lea.sflag [#allocation4], 1
    %31 = vsyncpa %s30, 0
    %32 = vsyncpa [#allocation15], 0
    %s33 = scalar_lea.sflag [#allocation15], 1
    %34 = vsyncpa %s33, 0
    loop: start=0, step=1, limit=6
    $region2: #{tpu_custom_call.1} parent=1 // loop_pre_header
      _
    $region3: #{tpu_custom_call.1} parent=1 // loop_header
      %s36 = sphi 0, %s40
      %p37 = scmp.ge.s32.totalorder %s36, 6
      %s43 = sphi 0, %s55
      %s44 = sphi 0, %s51
      %s45 = sphi 0, %s43
      %s46 = sphi 0, %s44
      %s47 = sphi 0, %s45
      %s48 = sphi 0, %s46
      %s60 = sphi 0, %s62
      %s63 = sphi 0, %s60
      %s64 = sphi 0, %s63
      %s80 = sphi 0, %s64
      %s88 = sphi 0, %s90
      %s91 = sphi 0, %s88
      %s92 = sphi 0, %s91
      %s108 = sphi 0, %s92
      %s114 = sphi 0, %s116
      %s117 = sphi 0, %s114
      %s118 = sphi 0, %s117
      %s134 = sphi 0, %s118
      %s140 = sphi 0, %s142
      %s143 = sphi 0, %s140
      %s144 = sphi 0, %s143
      %s160 = sphi 0, %s144
      %s166 = sphi 0, %s168
      %s169 = sphi 0, %s166
      %s170 = sphi 0, %s169
      %s186 = sphi 0, %s170
      %s192 = sphi 0, %s194
      %s195 = sphi 0, %s192
      %s196 = sphi 0, %s195
      %s212 = sphi 0, %s196
      %s218 = sphi 0, %s220
      %s221 = sphi 0, %s218
      %s222 = sphi 0, %s221
      %s238 = sphi 0, %s222
      %s244 = sphi 0, %s246
      %s247 = sphi 0, %s244
      %s248 = sphi 0, %s247
      %s264 = sphi 0, %s248
      %s270 = sphi 0, %s272
      %s273 = sphi 0, %s270
      %s274 = sphi 0, %s273
      %s290 = sphi 0, %s274
      %s296 = sphi 0, %s298
      %s299 = sphi 0, %s296
      %s300 = sphi 0, %s299
      %s316 = sphi 0, %s300
      %s324 = sphi 0, %s326
      %s327 = sphi 0, %s324
      %s328 = sphi 0, %s327
      %s344 = sphi 0, %s328
      %s352 = sphi 0, %s354
      %s355 = sphi 0, %s352
      %s356 = sphi 0, %s355
      %s372 = sphi 0, %s356
      %s380 = sphi 0, %s382
      %s383 = sphi 0, %s380
      %s384 = sphi 0, %s383
      %s400 = sphi 0, %s384
      %s408 = sphi 0, %s410
      %s411 = sphi 0, %s408
      %s412 = sphi 0, %s411
      %s428 = sphi 0, %s412
      %s436 = sphi 0, %s438
      %s439 = sphi 0, %s436
      %s440 = sphi 0, %s439
      %s456 = sphi 0, %s440
    $region4: #{tpu_custom_call.1} parent=1 // loop_header_branch
      %39 = sbr.rel (%p37) target = $region8
    $region5: #{tpu_custom_call.1} parent=1 // loop_body
      %s41 = ssub.s32 %s36, 1
      %s42 = ssub.s32 %s36, 2
      %s49 = sadd.s32 1, %s44
      %p50 = scmp.ge.s32.totalorder %s49, 2
      %s51 = scalar_select %p50, 0, %s49
      %s52 = sadd.s32 1, %s43
      %s53 = scalar_select %p50, %s52, %s43
      %p54 = scmp.ge.s32.totalorder %s53, 2
      %s55 = scalar_select %p54, 0, %s53
      %s56 = ssub.s32 %s43, %s55
      %s57 = ssub.s32 %s44, %s51
      %s58 = sor.u32 %s56, %s57
      %p59 = scmp.eq.s32.totalorder %s58, 0
      %s61 = sadd.s32 %s60, 1
      %s62 = scalar_select %p59, %s60, %s61
      %p65 = pneg %p59
      %p66 = scmp.eq.s32.totalorder %s36, 3
      %p67 = por %p65, %p66
      %p68 = scmp.ne.s32.totalorder %s60, %s63
      %p69 = scmp.eq.s32.totalorder %s36, 0
      %p70 = por %p68, %p69
      %p71 = scmp.ne.s32.totalorder %s60, %s63
      %p72 = scmp.eq.s32.totalorder %s41, 3
      %p73 = por %p71, %p72
      %p74 = scmp.ne.s32.totalorder %s63, %s64
      %p75 = scmp.eq.s32.totalorder %s41, 0
      %p76 = por %p74, %p75
      %p77 = scmp.ne.s32.totalorder %s63, %s64
      %p78 = scmp.eq.s32.totalorder %s42, 3
      %p79 = por %p77, %p78
      %p81 = scmp.ne.s32.totalorder %s64, %s80
      %p82 = scmp.eq.s32.totalorder %s42, 0
      %p83 = por %p81, %p82
      %s84 = ssub.s32 %s43, %s55
      %s85 = ssub.s32 %s44, %s51
      %s86 = sor.u32 %s84, %s85
      %p87 = scmp.eq.s32.totalorder %s86, 0
      %s89 = sadd.s32 %s88, 1
      %s90 = scalar_select %p87, %s88, %s89
      %p93 = pneg %p87
      %p94 = scmp.eq.s32.totalorder %s36, 3
      %p95 = por %p93, %p94
      %p96 = scmp.ne.s32.totalorder %s88, %s91
      %p97 = scmp.eq.s32.totalorder %s36, 0
      %p98 = por %p96, %p97
      %p99 = scmp.ne.s32.totalorder %s88, %s91
      %p100 = scmp.eq.s32.totalorder %s41, 3
      %p101 = por %p99, %p100
      %p102 = scmp.ne.s32.totalorder %s91, %s92
      %p103 = scmp.eq.s32.totalorder %s41, 0
      %p104 = por %p102, %p103
      %p105 = scmp.ne.s32.totalorder %s91, %s92
      %p106 = scmp.eq.s32.totalorder %s42, 3
      %p107 = por %p105, %p106
      %p109 = scmp.ne.s32.totalorder %s92, %s108
      %p110 = scmp.eq.s32.totalorder %s42, 0
      %p111 = por %p109, %p110
      %s112 = ssub.s32 %s44, %s51
      %p113 = scmp.eq.s32.totalorder %s112, 0
      %s115 = sadd.s32 %s114, 1
      %s116 = scalar_select %p113, %s114, %s115
      %p119 = pneg %p113
      %p120 = scmp.eq.s32.totalorder %s36, 3
      %p121 = por %p119, %p120
      %p122 = scmp.ne.s32.totalorder %s114, %s117
      %p123 = scmp.eq.s32.totalorder %s36, 0
      %p124 = por %p122, %p123
      %p125 = scmp.ne.s32.totalorder %s114, %s117
      %p126 = scmp.eq.s32.totalorder %s41, 3
      %p127 = por %p125, %p126
      %p128 = scmp.ne.s32.totalorder %s117, %s118
      %p129 = scmp.eq.s32.totalorder %s41, 0
      %p130 = por %p128, %p129
      %p131 = scmp.ne.s32.totalorder %s117, %s118
      %p132 = scmp.eq.s32.totalorder %s42, 3
      %p133 = por %p131, %p132
      %p135 = scmp.ne.s32.totalorder %s118, %s134
      %p136 = scmp.eq.s32.totalorder %s42, 0
      %p137 = por %p135, %p136
      %s138 = ssub.s32 %s43, %s55
      %p139 = scmp.eq.s32.totalorder %s138, 0
      %s141 = sadd.s32 %s140, 1
      %s142 = scalar_select %p139, %s140, %s141
      %p145 = pneg %p139
      %p146 = scmp.eq.s32.totalorder %s36, 3
      %p147 = por %p145, %p146
      %p148 = scmp.ne.s32.totalorder %s140, %s143
      %p149 = scmp.eq.s32.totalorder %s36, 0
      %p150 = por %p148, %p149
      %p151 = scmp.ne.s32.totalorder %s140, %s143
      %p152 = scmp.eq.s32.totalorder %s41, 3
      %p153 = por %p151, %p152
      %p154 = scmp.ne.s32.totalorder %s143, %s144
      %p155 = scmp.eq.s32.totalorder %s41, 0
      %p156 = por %p154, %p155
      %p157 = scmp.ne.s32.totalorder %s143, %s144
      %p158 = scmp.eq.s32.totalorder %s42, 3
      %p159 = por %p157, %p158
      %p161 = scmp.ne.s32.totalorder %s144, %s160
      %p162 = scmp.eq.s32.totalorder %s42, 0
      %p163 = por %p161, %p162
      %s164 = ssub.s32 %s43, %s55
      %p165 = scmp.eq.s32.totalorder %s164, 0
      %s167 = sadd.s32 %s166, 1
      %s168 = scalar_select %p165, %s166, %s167
      %p171 = pneg %p165
      %p172 = scmp.eq.s32.totalorder %s36, 3
      %p173 = por %p171, %p172
      %p174 = scmp.ne.s32.totalorder %s166, %s169
      %p175 = scmp.eq.s32.totalorder %s36, 0
      %p176 = por %p174, %p175
      %p177 = scmp.ne.s32.totalorder %s166, %s169
      %p178 = scmp.eq.s32.totalorder %s41, 3
      %p179 = por %p177, %p178
      %p180 = scmp.ne.s32.totalorder %s169, %s170
      %p181 = scmp.eq.s32.totalorder %s41, 0
      %p182 = por %p180, %p181
      %p183 = scmp.ne.s32.totalorder %s169, %s170
      %p184 = scmp.eq.s32.totalorder %s42, 3
      %p185 = por %p183, %p184
      %p187 = scmp.ne.s32.totalorder %s170, %s186
      %p188 = scmp.eq.s32.totalorder %s42, 0
      %p189 = por %p187, %p188
      %s190 = ssub.s32 %s43, %s55
      %p191 = scmp.eq.s32.totalorder %s190, 0
      %s193 = sadd.s32 %s192, 1
      %s194 = scalar_select %p191, %s192, %s193
      %p197 = pneg %p191
      %p198 = scmp.eq.s32.totalorder %s36, 3
      %p199 = por %p197, %p198
      %p200 = scmp.ne.s32.totalorder %s192, %s195
      %p201 = scmp.eq.s32.totalorder %s36, 0
      %p202 = por %p200, %p201
      %p203 = scmp.ne.s32.totalorder %s192, %s195
      %p204 = scmp.eq.s32.totalorder %s41, 3
      %p205 = por %p203, %p204
      %p206 = scmp.ne.s32.totalorder %s195, %s196
      %p207 = scmp.eq.s32.totalorder %s41, 0
      %p208 = por %p206, %p207
      %p209 = scmp.ne.s32.totalorder %s195, %s196
      %p210 = scmp.eq.s32.totalorder %s42, 3
      %p211 = por %p209, %p210
      %p213 = scmp.ne.s32.totalorder %s196, %s212
      %p214 = scmp.eq.s32.totalorder %s42, 0
      %p215 = por %p213, %p214
      %s216 = ssub.s32 %s43, %s55
      %p217 = scmp.eq.s32.totalorder %s216, 0
      %s219 = sadd.s32 %s218, 1
      %s220 = scalar_select %p217, %s218, %s219
      %p223 = pneg %p217
      %p224 = scmp.eq.s32.totalorder %s36, 3
      %p225 = por %p223, %p224
      %p226 = scmp.ne.s32.totalorder %s218, %s221
      %p227 = scmp.eq.s32.totalorder %s36, 0
      %p228 = por %p226, %p227
      %p229 = scmp.ne.s32.totalorder %s218, %s221
      %p230 = scmp.eq.s32.totalorder %s41, 3
      %p231 = por %p229, %p230
      %p232 = scmp.ne.s32.totalorder %s221, %s222
      %p233 = scmp.eq.s32.totalorder %s41, 0
      %p234 = por %p232, %p233
      %p235 = scmp.ne.s32.totalorder %s221, %s222
      %p236 = scmp.eq.s32.totalorder %s42, 3
      %p237 = por %p235, %p236
      %p239 = scmp.ne.s32.totalorder %s222, %s238
      %p240 = scmp.eq.s32.totalorder %s42, 0
      %p241 = por %p239, %p240
      %s242 = ssub.s32 %s43, %s55
      %p243 = scmp.eq.s32.totalorder %s242, 0
      %s245 = sadd.s32 %s244, 1
      %s246 = scalar_select %p243, %s244, %s245
      %p249 = pneg %p243
      %p250 = scmp.eq.s32.totalorder %s36, 3
      %p251 = por %p249, %p250
      %p252 = scmp.ne.s32.totalorder %s244, %s247
      %p253 = scmp.eq.s32.totalorder %s36, 0
      %p254 = por %p252, %p253
      %p255 = scmp.ne.s32.totalorder %s244, %s247
      %p256 = scmp.eq.s32.totalorder %s41, 3
      %p257 = por %p255, %p256
      %p258 = scmp.ne.s32.totalorder %s247, %s248
      %p259 = scmp.eq.s32.totalorder %s41, 0
      %p260 = por %p258, %p259
      %p261 = scmp.ne.s32.totalorder %s247, %s248
      %p262 = scmp.eq.s32.totalorder %s42, 3
      %p263 = por %p261, %p262
      %p265 = scmp.ne.s32.totalorder %s248, %s264
      %p266 = scmp.eq.s32.totalorder %s42, 0
      %p267 = por %p265, %p266
      %s268 = ssub.s32 %s43, %s55
      %p269 = scmp.eq.s32.totalorder %s268, 0
      %s271 = sadd.s32 %s270, 1
      %s272 = scalar_select %p269, %s270, %s271
      %p275 = pneg %p269
      %p276 = scmp.eq.s32.totalorder %s36, 3
      %p277 = por %p275, %p276
      %p278 = scmp.ne.s32.totalorder %s270, %s273
      %p279 = scmp.eq.s32.totalorder %s36, 0
      %p280 = por %p278, %p279
      %p281 = scmp.ne.s32.totalorder %s270, %s273
      %p282 = scmp.eq.s32.totalorder %s41, 3
      %p283 = por %p281, %p282
      %p284 = scmp.ne.s32.totalorder %s273, %s274
      %p285 = scmp.eq.s32.totalorder %s41, 0
      %p286 = por %p284, %p285
      %p287 = scmp.ne.s32.totalorder %s273, %s274
      %p288 = scmp.eq.s32.totalorder %s42, 3
      %p289 = por %p287, %p288
      %p291 = scmp.ne.s32.totalorder %s274, %s290
      %p292 = scmp.eq.s32.totalorder %s42, 0
      %p293 = por %p291, %p292
      %s294 = ssub.s32 %s43, %s55
      %p295 = scmp.eq.s32.totalorder %s294, 0
      %s297 = sadd.s32 %s296, 1
      %s298 = scalar_select %p295, %s296, %s297
      %p301 = pneg %p295
      %p302 = scmp.eq.s32.totalorder %s36, 3
      %p303 = por %p301, %p302
      %p304 = scmp.ne.s32.totalorder %s296, %s299
      %p305 = scmp.eq.s32.totalorder %s36, 0
      %p306 = por %p304, %p305
      %p307 = scmp.ne.s32.totalorder %s296, %s299
      %p308 = scmp.eq.s32.totalorder %s41, 3
      %p309 = por %p307, %p308
      %p310 = scmp.ne.s32.totalorder %s299, %s300
      %p311 = scmp.eq.s32.totalorder %s41, 0
      %p312 = por %p310, %p311
      %p313 = scmp.ne.s32.totalorder %s299, %s300
      %p314 = scmp.eq.s32.totalorder %s42, 3
      %p315 = por %p313, %p314
      %p317 = scmp.ne.s32.totalorder %s300, %s316
      %p318 = scmp.eq.s32.totalorder %s42, 0
      %p319 = por %p317, %p318
      %s320 = ssub.s32 %s43, %s55
      %s321 = ssub.s32 %s44, %s51
      %s322 = sor.u32 %s320, %s321
      %p323 = scmp.eq.s32.totalorder %s322, 0
      %s325 = sadd.s32 %s324, 1
      %s326 = scalar_select %p323, %s324, %s325
      %p329 = pneg %p323
      %p330 = scmp.eq.s32.totalorder %s36, 3
      %p331 = por %p329, %p330
      %p332 = scmp.ne.s32.totalorder %s324, %s327
      %p333 = scmp.eq.s32.totalorder %s36, 0
      %p334 = por %p332, %p333
      %p335 = scmp.ne.s32.totalorder %s324, %s327
      %p336 = scmp.eq.s32.totalorder %s41, 3
      %p337 = por %p335, %p336
      %p338 = scmp.ne.s32.totalorder %s327, %s328
      %p339 = scmp.eq.s32.totalorder %s41, 0
      %p340 = por %p338, %p339
      %p341 = scmp.ne.s32.totalorder %s327, %s328
      %p342 = scmp.eq.s32.totalorder %s42, 3
      %p343 = por %p341, %p342
      %p345 = scmp.ne.s32.totalorder %s328, %s344
      %p346 = scmp.eq.s32.totalorder %s42, 0
      %p347 = por %p345, %p346
      %s348 = ssub.s32 %s43, %s55
      %s349 = ssub.s32 %s44, %s51
      %s350 = sor.u32 %s348, %s349
      %p351 = scmp.eq.s32.totalorder %s350, 0
      %s353 = sadd.s32 %s352, 1
      %s354 = scalar_select %p351, %s352, %s353
      %p357 = pneg %p351
      %p358 = scmp.eq.s32.totalorder %s36, 3
      %p359 = por %p357, %p358
      %p360 = scmp.ne.s32.totalorder %s352, %s355
      %p361 = scmp.eq.s32.totalorder %s36, 0
      %p362 = por %p360, %p361
      %p363 = scmp.ne.s32.totalorder %s352, %s355
      %p364 = scmp.eq.s32.totalorder %s41, 3
      %p365 = por %p363, %p364
      %p366 = scmp.ne.s32.totalorder %s355, %s356
      %p367 = scmp.eq.s32.totalorder %s41, 0
      %p368 = por %p366, %p367
      %p369 = scmp.ne.s32.totalorder %s355, %s356
      %p370 = scmp.eq.s32.totalorder %s42, 3
      %p371 = por %p369, %p370
      %p373 = scmp.ne.s32.totalorder %s356, %s372
      %p374 = scmp.eq.s32.totalorder %s42, 0
      %p375 = por %p373, %p374
      %s376 = ssub.s32 %s43, %s55
      %s377 = ssub.s32 %s44, %s51
      %s378 = sor.u32 %s376, %s377
      %p379 = scmp.eq.s32.totalorder %s378, 0
      %s381 = sadd.s32 %s380, 1
      %s382 = scalar_select %p379, %s380, %s381
      %p385 = pneg %p379
      %p386 = scmp.eq.s32.totalorder %s36, 3
      %p387 = por %p385, %p386
      %p388 = scmp.ne.s32.totalorder %s380, %s383
      %p389 = scmp.eq.s32.totalorder %s36, 0
      %p390 = por %p388, %p389
      %p391 = scmp.ne.s32.totalorder %s380, %s383
      %p392 = scmp.eq.s32.totalorder %s41, 3
      %p393 = por %p391, %p392
      %p394 = scmp.ne.s32.totalorder %s383, %s384
      %p395 = scmp.eq.s32.totalorder %s41, 0
      %p396 = por %p394, %p395
      %p397 = scmp.ne.s32.totalorder %s383, %s384
      %p398 = scmp.eq.s32.totalorder %s42, 3
      %p399 = por %p397, %p398
      %p401 = scmp.ne.s32.totalorder %s384, %s400
      %p402 = scmp.eq.s32.totalorder %s42, 0
      %p403 = por %p401, %p402
      %s404 = ssub.s32 %s43, %s55
      %s405 = ssub.s32 %s44, %s51
      %s406 = sor.u32 %s404, %s405
      %p407 = scmp.eq.s32.totalorder %s406, 0
      %s409 = sadd.s32 %s408, 1
      %s410 = scalar_select %p407, %s408, %s409
      %p413 = pneg %p407
      %p414 = scmp.eq.s32.totalorder %s36, 3
      %p415 = por %p413, %p414
      %p416 = scmp.ne.s32.totalorder %s408, %s411
      %p417 = scmp.eq.s32.totalorder %s36, 0
      %p418 = por %p416, %p417
      %p419 = scmp.ne.s32.totalorder %s408, %s411
      %p420 = scmp.eq.s32.totalorder %s41, 3
      %p421 = por %p419, %p420
      %p422 = scmp.ne.s32.totalorder %s411, %s412
      %p423 = scmp.eq.s32.totalorder %s41, 0
      %p424 = por %p422, %p423
      %p425 = scmp.ne.s32.totalorder %s411, %s412
      %p426 = scmp.eq.s32.totalorder %s42, 3
      %p427 = por %p425, %p426
      %p429 = scmp.ne.s32.totalorder %s412, %s428
      %p430 = scmp.eq.s32.totalorder %s42, 0
      %p431 = por %p429, %p430
      %s432 = ssub.s32 %s43, %s55
      %s433 = ssub.s32 %s44, %s51
      %s434 = sor.u32 %s432, %s433
      %p435 = scmp.eq.s32.totalorder %s434, 0
      %s437 = sadd.s32 %s436, 1
      %s438 = scalar_select %p435, %s436, %s437
      %p441 = pneg %p435
      %p442 = scmp.eq.s32.totalorder %s36, 3
      %p443 = por %p441, %p442
      %p444 = scmp.ne.s32.totalorder %s436, %s439
      %p445 = scmp.eq.s32.totalorder %s36, 0
      %p446 = por %p444, %p445
      %p447 = scmp.ne.s32.totalorder %s436, %s439
      %p448 = scmp.eq.s32.totalorder %s41, 3
      %p449 = por %p447, %p448
      %p450 = scmp.ne.s32.totalorder %s439, %s440
      %p451 = scmp.eq.s32.totalorder %s41, 0
      %p452 = por %p450, %p451
      %p453 = scmp.ne.s32.totalorder %s439, %s440
      %p454 = scmp.eq.s32.totalorder %s42, 3
      %p455 = por %p453, %p454
      %p457 = scmp.ne.s32.totalorder %s440, %s456
      %p458 = scmp.eq.s32.totalorder %s42, 0
      %p459 = por %p457, %p458
      %p460 = scmp.le.s32.totalorder 1, %s36
      %p461 = scmp.lt.s32.totalorder %s36, 5
      %p462 = pnand %p460, %p461
      %p463 = pneg %p462
      // Predicated region
      $region9: #{tpu_custom_call.1} parent=5 // pred_check
        _
      $region10: #{tpu_custom_call.1} parent=5 // pred_check_branch
        %465 = sbr.rel (%p462) target = $region12
      $region11: #{tpu_custom_call.1} parent=5 // pred_region
        %s466 = ssub.s32 %s36, 1
      $region12: #{tpu_custom_call.1} parent=5 // pred_fallthru
        _
      %p467 = scmp.lt.s32.totalorder %s36, 4
      // Predicated region
      $region13: #{tpu_custom_call.1} parent=5 // pred_check
        %p468 = pneg %p467
      $region14: #{tpu_custom_call.1} parent=5 // pred_check_branch
        %470 = sbr.rel (%p468) target = $region16
      $region15: #{tpu_custom_call.1} parent=5 // pred_region
        // Predicated region
        $region17: #{tpu_custom_call.1} parent=15 // pred_check
          %p471 = pneg %p70
        $region18: #{tpu_custom_call.1} parent=15 // pred_check_branch
          %473 = sbr.rel (%p471) target = $region20
        $region19: #{tpu_custom_call.1} parent=15 // pred_region
          %s474 = sand.u32 %s60, 1
          %s475 = scalar_lea.sflag [#allocation3], %s474
          %s476 = sand.u32 %s60, 1
          %s477 = smul.addr %s476, 8
          %s478 = scalar_lea.vmem [#allocation2], %s477
          %s480 = ssub.s32 128, 128
          %481 = vsyncadd %s475, %s480
          %s482 = smul.addr %s43, 2
          %s483 = sadd.s32 %s44, %s482
          %s484 = smul.addr %s483, 128
          %s485 = scalar_lea.hbm %s0, %s484
          %s487 = sshll.u32 %s478, 4
          %s488 = int_to_ptr.vmem [resolvable:$true] %s487
          %490 = dma.hbm_to_vmem [thread:$0]  %s485, 128, %s488, %s475
        $region20: #{tpu_custom_call.1} parent=15 // pred_fallthru
          _
        // Predicated region
        $region21: #{tpu_custom_call.1} parent=15 // pred_check
          %p491 = pneg %p98
        $region22: #{tpu_custom_call.1} parent=15 // pred_check_branch
          %493 = sbr.rel (%p491) target = $region24
        $region23: #{tpu_custom_call.1} parent=15 // pred_region
          %s494 = sand.u32 %s88, 1
          %s495 = sand.u32 %s88, 1
          %s496 = smul.addr %s495, 512
          %s497 = scalar_lea.vmem [#allocation5], %s496
          %s498 = smul.u32 16, %s44
          %s499 = smul.addr %s43, 256
          %s500 = sadd.s32 %s498, %s499
          %s501 = smul.addr %s500, 4
          %s502 = scalar_lea.vmem %s1, %s501
          // Predicated region
          $region25: #{tpu_custom_call.1} parent=23 // pred_check
            _
          $region26: #{tpu_custom_call.1} parent=23 // pred_check_branch
            %504 = sbr.rel (0) target = $region28
          $region27: #{tpu_custom_call.1} parent=23 // pred_region
            // Predicated region
            $region29: #{tpu_custom_call.1} parent=27 // pred_check
              _
            $region30: #{tpu_custom_call.1} parent=27 // pred_check_branch
              %506 = sbr.rel target = $region32
            $region31: #{tpu_custom_call.1} parent=27 // pred_region
              // Predicated region
              $region44: #{tpu_custom_call.1} parent=31 // pred_check
                _
              $region45: #{tpu_custom_call.1} parent=31 // pred_check_branch
                %775 = sbr.rel (0) target = $region47
              $region46: #{tpu_custom_call.1} parent=31 // pred_region
                loop: start=0, step=1, limit=1
                $region48: #{tpu_custom_call.1} parent=46 // loop_pre_header
                  _
                $region49: #{tpu_custom_call.1} parent=46 // loop_header
                  %s777 = sphi 0, %s781
                  %p778 = scmp.ge.s32.totalorder %s777, 1
                  %s782 = sphi %s502, %s502
                  %s783 = sphi %s497, %s497
                $region50: #{tpu_custom_call.1} parent=46 // loop_header_branch
                  %780 = sbr.rel (%p778) target = $region54
                $region51: #{tpu_custom_call.1} parent=46 // loop_body
                  _
                $region52: #{tpu_custom_call.1} parent=46 // loop_footer
                  %s781 = sadd.s32 1, %s777
                $region53: #{tpu_custom_call.1} parent=46 // loop_footer_branch
                  %776 = sbr.rel target = $region49
                $region54: #{tpu_custom_call.1} parent=46 // loop_exit
                  _
                loop: start=0, step=1, limit=1
                $region55: #{tpu_custom_call.1} parent=46 // loop_pre_header
                  _
                $region56: #{tpu_custom_call.1} parent=46 // loop_header
                  %s786 = sphi 0, %s790
                  %p787 = scmp.ge.s32.totalorder %s786, 1
                  %s791 = sphi %s502, %s502
                  %s792 = sphi %s497, %s497
                $region57: #{tpu_custom_call.1} parent=46 // loop_header_branch
                  %789 = sbr.rel (%p787) target = $region61
                $region58: #{tpu_custom_call.1} parent=46 // loop_body
                  %v793 = vld [vmem:[%s791] sm:$0xf]
                  %794 = vst [vmem:[%s792] sm:$0xf] %v793
                  %v795 = vld [vmem:[%s791 + $0x4] sm:$0xf]
                  %796 = vst [vmem:[%s792 + $0x4] sm:$0xf] %v795
                  %v797 = vld [vmem:[%s791 + $0x8] sm:$0xf]
                  %798 = vst [vmem:[%s792 + $0x8] sm:$0xf] %v797
                  %v799 = vld [vmem:[%s791 + $0xc] sm:$0xf]
                  %800 = vst [vmem:[%s792 + $0xc] sm:$0xf] %v799
                  %v801 = vld [vmem:[%s791 + $0x10] sm:$0xf]
                  %802 = vst [vmem:[%s792 + $0x10] sm:$0xf] %v801
                  %v803 = vld [vmem:[%s791 + $0x14] sm:$0xf]
                  %804 = vst [vmem:[%s792 + $0x14] sm:$0xf] %v803
                  %v805 = vld [vmem:[%s791 + $0x18] sm:$0xf]
                  %806 = vst [vmem:[%s792 + $0x18] sm:$0xf] %v805
                  %v807 = vld [vmem:[%s791 + $0x1c] sm:$0xf]
                  %808 = vst [vmem:[%s792 + $0x1c] sm:$0xf] %v807
                  %v809 = vld [vmem:[%s791 + $0x20] sm:$0xf]
                  %810 = vst [vmem:[%s792 + $0x20] sm:$0xf] %v809
                  %v811 = vld [vmem:[%s791 + $0x24] sm:$0xf]
                  %812 = vst [vmem:[%s792 + $0x24] sm:$0xf] %v811
                  %v813 = vld [vmem:[%s791 + $0x28] sm:$0xf]
                  %814 = vst [vmem:[%s792 + $0x28] sm:$0xf] %v813
                  %v815 = vld [vmem:[%s791 + $0x2c] sm:$0xf]
                  %816 = vst [vmem:[%s792 + $0x2c] sm:$0xf] %v815
                  %v817 = vld [vmem:[%s791 + $0x30] sm:$0xf]
                  %818 = vst [vmem:[%s792 + $0x30] sm:$0xf] %v817
                  %v819 = vld [vmem:[%s791 + $0x34] sm:$0xf]
                  %820 = vst [vmem:[%s792 + $0x34] sm:$0xf] %v819
                  %v821 = vld [vmem:[%s791 + $0x38] sm:$0xf]
                  %822 = vst [vmem:[%s792 + $0x38] sm:$0xf] %v821
                  %v823 = vld [vmem:[%s791 + $0x3c] sm:$0xf]
                  %824 = vst [vmem:[%s792 + $0x3c] sm:$0xf] %v823
                  %v825 = vld [vmem:[%s791 + $0x80] sm:$0xf]
                  %826 = vst [vmem:[%s792 + $0x40] sm:$0xf] %v825
                  %v827 = vld [vmem:[%s791 + $0x84] sm:$0xf]
                  %828 = vst [vmem:[%s792 + $0x44] sm:$0xf] %v827
                  %v829 = vld [vmem:[%s791 + $0x88] sm:$0xf]
                  %830 = vst [vmem:[%s792 + $0x48] sm:$0xf] %v829
                  %v831 = vld [vmem:[%s791 + $0x8c] sm:$0xf]
                  %832 = vst [vmem:[%s792 + $0x4c] sm:$0xf] %v831
                  %v833 = vld [vmem:[%s791 + $0x90] sm:$0xf]
                  %834 = vst [vmem:[%s792 + $0x50] sm:$0xf] %v833
                  %v835 = vld [vmem:[%s791 + $0x94] sm:$0xf]
                  %836 = vst [vmem:[%s792 + $0x54] sm:$0xf] %v835
                  %v837 = vld [vmem:[%s791 + $0x98] sm:$0xf]
                  %838 = vst [vmem:[%s792 + $0x58] sm:$0xf] %v837
                  %v839 = vld [vmem:[%s791 + $0x9c] sm:$0xf]
                  %840 = vst [vmem:[%s792 + $0x5c] sm:$0xf] %v839
                  %v841 = vld [vmem:[%s791 + $0xa0] sm:$0xf]
                  %842 = vst [vmem:[%s792 + $0x60] sm:$0xf] %v841
                  %v843 = vld [vmem:[%s791 + $0xa4] sm:$0xf]
                  %844 = vst [vmem:[%s792 + $0x64] sm:$0xf] %v843
                  %v845 = vld [vmem:[%s791 + $0xa8] sm:$0xf]
                  %846 = vst [vmem:[%s792 + $0x68] sm:$0xf] %v845
                  %v847 = vld [vmem:[%s791 + $0xac] sm:$0xf]
                  %848 = vst [vmem:[%s792 + $0x6c] sm:$0xf] %v847
                  %v849 = vld [vmem:[%s791 + $0xb0] sm:$0xf]
                  %850 = vst [vmem:[%s792 + $0x70] sm:$0xf] %v849
                  %v851 = vld [vmem:[%s791 + $0xb4] sm:$0xf]
                  %852 = vst [vmem:[%s792 + $0x74] sm:$0xf] %v851
                  %v853 = vld [vmem:[%s791 + $0xb8] sm:$0xf]
                  %854 = vst [vmem:[%s792 + $0x78] sm:$0xf] %v853
                  %v855 = vld [vmem:[%s791 + $0xbc] sm:$0xf]
                  %856 = vst [vmem:[%s792 + $0x7c] sm:$0xf] %v855
                  %v857 = vld [vmem:[%s791 + $0x100] sm:$0xf]
                  %858 = vst [vmem:[%s792 + $0x80] sm:$0xf] %v857
                  %v859 = vld [vmem:[%s791 + $0x104] sm:$0xf]
                  %860 = vst [vmem:[%s792 + $0x84] sm:$0xf] %v859
                  %v861 = vld [vmem:[%s791 + $0x108] sm:$0xf]
                  %862 = vst [vmem:[%s792 + $0x88] sm:$0xf] %v861
                  %v863 = vld [vmem:[%s791 + $0x10c] sm:$0xf]
                  %864 = vst [vmem:[%s792 + $0x8c] sm:$0xf] %v863
                  %v865 = vld [vmem:[%s791 + $0x110] sm:$0xf]
                  %866 = vst [vmem:[%s792 + $0x90] sm:$0xf] %v865
                  %v867 = vld [vmem:[%s791 + $0x114] sm:$0xf]
                  %868 = vst [vmem:[%s792 + $0x94] sm:$0xf] %v867
                  %v869 = vld [vmem:[%s791 + $0x118] sm:$0xf]
                  %870 = vst [vmem:[%s792 + $0x98] sm:$0xf] %v869
                  %v871 = vld [vmem:[%s791 + $0x11c] sm:$0xf]
                  %872 = vst [vmem:[%s792 + $0x9c] sm:$0xf] %v871
                  %v873 = vld [vmem:[%s791 + $0x120] sm:$0xf]
                  %874 = vst [vmem:[%s792 + $0xa0] sm:$0xf] %v873
                  %v875 = vld [vmem:[%s791 + $0x124] sm:$0xf]
                  %876 = vst [vmem:[%s792 + $0xa4] sm:$0xf] %v875
                  %v877 = vld [vmem:[%s791 + $0x128] sm:$0xf]
                  %878 = vst [vmem:[%s792 + $0xa8] sm:$0xf] %v877
                  %v879 = vld [vmem:[%s791 + $0x12c] sm:$0xf]
                  %880 = vst [vmem:[%s792 + $0xac] sm:$0xf] %v879
                  %v881 = vld [vmem:[%s791 + $0x130] sm:$0xf]
                  %882 = vst [vmem:[%s792 + $0xb0] sm:$0xf] %v881
                  %v883 = vld [vmem:[%s791 + $0x134] sm:$0xf]
                  %884 = vst [vmem:[%s792 + $0xb4] sm:$0xf] %v883
                  %v885 = vld [vmem:[%s791 + $0x138] sm:$0xf]
                  %886 = vst [vmem:[%s792 + $0xb8] sm:$0xf] %v885
                  %v887 = vld [vmem:[%s791 + $0x13c] sm:$0xf]
                  %888 = vst [vmem:[%s792 + $0xbc] sm:$0xf] %v887
                  %v889 = vld [vmem:[%s791 + $0x180] sm:$0xf]
                  %890 = vst [vmem:[%s792 + $0xc0] sm:$0xf] %v889
                  %v891 = vld [vmem:[%s791 + $0x184] sm:$0xf]
                  %892 = vst [vmem:[%s792 + $0xc4] sm:$0xf] %v891
                  %v893 = vld [vmem:[%s791 + $0x188] sm:$0xf]
                  %894 = vst [vmem:[%s792 + $0xc8] sm:$0xf] %v893
                  %v895 = vld [vmem:[%s791 + $0x18c] sm:$0xf]
                  %896 = vst [vmem:[%s792 + $0xcc] sm:$0xf] %v895
                  %v897 = vld [vmem:[%s791 + $0x190] sm:$0xf]
                  %898 = vst [vmem:[%s792 + $0xd0] sm:$0xf] %v897
                  %v899 = vld [vmem:[%s791 + $0x194] sm:$0xf]
                  %900 = vst [vmem:[%s792 + $0xd4] sm:$0xf] %v899
                  %v901 = vld [vmem:[%s791 + $0x198] sm:$0xf]
                  %902 = vst [vmem:[%s792 + $0xd8] sm:$0xf] %v901
                  %v903 = vld [vmem:[%s791 + $0x19c] sm:$0xf]
                  %904 = vst [vmem:[%s792 + $0xdc] sm:$0xf] %v903
                  %v905 = vld [vmem:[%s791 + $0x1a0] sm:$0xf]
                  %906 = vst [vmem:[%s792 + $0xe0] sm:$0xf] %v905
                  %v907 = vld [vmem:[%s791 + $0x1a4] sm:$0xf]
                  %908 = vst [vmem:[%s792 + $0xe4] sm:$0xf] %v907
                  %v909 = vld [vmem:[%s791 + $0x1a8] sm:$0xf]
                  %910 = vst [vmem:[%s792 + $0xe8] sm:$0xf] %v909
                  %v911 = vld [vmem:[%s791 + $0x1ac] sm:$0xf]
                  %912 = vst [vmem:[%s792 + $0xec] sm:$0xf] %v911
                  %v913 = vld [vmem:[%s791 + $0x1b0] sm:$0xf]
                  %914 = vst [vmem:[%s792 + $0xf0] sm:$0xf] %v913
                  %v915 = vld [vmem:[%s791 + $0x1b4] sm:$0xf]
                  %916 = vst [vmem:[%s792 + $0xf4] sm:$0xf] %v915
                  %v917 = vld [vmem:[%s791 + $0x1b8] sm:$0xf]
                  %918 = vst [vmem:[%s792 + $0xf8] sm:$0xf] %v917
                  %v919 = vld [vmem:[%s791 + $0x1bc] sm:$0xf]
                  %920 = vst [vmem:[%s792 + $0xfc] sm:$0xf] %v919
                  %v921 = vld [vmem:[%s791 + $0x200] sm:$0xf]
                  %922 = vst [vmem:[%s792 + $0x100] sm:$0xf] %v921
                  %v923 = vld [vmem:[%s791 + $0x204] sm:$0xf]
                  %924 = vst [vmem:[%s792 + $0x104] sm:$0xf] %v923
                  %v925 = vld [vmem:[%s791 + $0x208] sm:$0xf]
                  %926 = vst [vmem:[%s792 + $0x108] sm:$0xf] %v925
                  %v927 = vld [vmem:[%s791 + $0x20c] sm:$0xf]
                  %928 = vst [vmem:[%s792 + $0x10c] sm:$0xf] %v927
                  %v929 = vld [vmem:[%s791 + $0x210] sm:$0xf]
                  %930 = vst [vmem:[%s792 + $0x110] sm:$0xf] %v929
                  %v931 = vld [vmem:[%s791 + $0x214] sm:$0xf]
                  %932 = vst [vmem:[%s792 + $0x114] sm:$0xf] %v931
                  %v933 = vld [vmem:[%s791 + $0x218] sm:$0xf]
                  %934 = vst [vmem:[%s792 + $0x118] sm:$0xf] %v933
                  %v935 = vld [vmem:[%s791 + $0x21c] sm:$0xf]
                  %936 = vst [vmem:[%s792 + $0x11c] sm:$0xf] %v935
                  %v937 = vld [vmem:[%s791 + $0x220] sm:$0xf]
                  %938 = vst [vmem:[%s792 + $0x120] sm:$0xf] %v937
                  %v939 = vld [vmem:[%s791 + $0x224] sm:$0xf]
                  %940 = vst [vmem:[%s792 + $0x124] sm:$0xf] %v939
                  %v941 = vld [vmem:[%s791 + $0x228] sm:$0xf]
                  %942 = vst [vmem:[%s792 + $0x128] sm:$0xf] %v941
                  %v943 = vld [vmem:[%s791 + $0x22c] sm:$0xf]
                  %944 = vst [vmem:[%s792 + $0x12c] sm:$0xf] %v943
                  %v945 = vld [vmem:[%s791 + $0x230] sm:$0xf]
                  %946 = vst [vmem:[%s792 + $0x130] sm:$0xf] %v945
                  %v947 = vld [vmem:[%s791 + $0x234] sm:$0xf]
                  %948 = vst [vmem:[%s792 + $0x134] sm:$0xf] %v947
                  %v949 = vld [vmem:[%s791 + $0x238] sm:$0xf]
                  %950 = vst [vmem:[%s792 + $0x138] sm:$0xf] %v949
                  %v951 = vld [vmem:[%s791 + $0x23c] sm:$0xf]
                  %952 = vst [vmem:[%s792 + $0x13c] sm:$0xf] %v951
                  %v953 = vld [vmem:[%s791 + $0x280] sm:$0xf]
                  %954 = vst [vmem:[%s792 + $0x140] sm:$0xf] %v953
                  %v955 = vld [vmem:[%s791 + $0x284] sm:$0xf]
                  %956 = vst [vmem:[%s792 + $0x144] sm:$0xf] %v955
                  %v957 = vld [vmem:[%s791 + $0x288] sm:$0xf]
                  %958 = vst [vmem:[%s792 + $0x148] sm:$0xf] %v957
                  %v959 = vld [vmem:[%s791 + $0x28c] sm:$0xf]
                  %960 = vst [vmem:[%s792 + $0x14c] sm:$0xf] %v959
                  %v961 = vld [vmem:[%s791 + $0x290] sm:$0xf]
                  %962 = vst [vmem:[%s792 + $0x150] sm:$0xf] %v961
                  %v963 = vld [vmem:[%s791 + $0x294] sm:$0xf]
                  %964 = vst [vmem:[%s792 + $0x154] sm:$0xf] %v963
                  %v965 = vld [vmem:[%s791 + $0x298] sm:$0xf]
                  %966 = vst [vmem:[%s792 + $0x158] sm:$0xf] %v965
                  %v967 = vld [vmem:[%s791 + $0x29c] sm:$0xf]
                  %968 = vst [vmem:[%s792 + $0x15c] sm:$0xf] %v967
                  %v969 = vld [vmem:[%s791 + $0x2a0] sm:$0xf]
                  %970 = vst [vmem:[%s792 + $0x160] sm:$0xf] %v969
                  %v971 = vld [vmem:[%s791 + $0x2a4] sm:$0xf]
                  %972 = vst [vmem:[%s792 + $0x164] sm:$0xf] %v971
                  %v973 = vld [vmem:[%s791 + $0x2a8] sm:$0xf]
                  %974 = vst [vmem:[%s792 + $0x168] sm:$0xf] %v973
                  %v975 = vld [vmem:[%s791 + $0x2ac] sm:$0xf]
                  %976 = vst [vmem:[%s792 + $0x16c] sm:$0xf] %v975
                  %v977 = vld [vmem:[%s791 + $0x2b0] sm:$0xf]
                  %978 = vst [vmem:[%s792 + $0x170] sm:$0xf] %v977
                  %v979 = vld [vmem:[%s791 + $0x2b4] sm:$0xf]
                  %980 = vst [vmem:[%s792 + $0x174] sm:$0xf] %v979
                  %v981 = vld [vmem:[%s791 + $0x2b8] sm:$0xf]
                  %982 = vst [vmem:[%s792 + $0x178] sm:$0xf] %v981
                  %v983 = vld [vmem:[%s791 + $0x2bc] sm:$0xf]
                  %984 = vst [vmem:[%s792 + $0x17c] sm:$0xf] %v983
                  %v985 = vld [vmem:[%s791 + $0x300] sm:$0xf]
                  %986 = vst [vmem:[%s792 + $0x180] sm:$0xf] %v985
                  %v987 = vld [vmem:[%s791 + $0x304] sm:$0xf]
                  %988 = vst [vmem:[%s792 + $0x184] sm:$0xf] %v987
                  %v989 = vld [vmem:[%s791 + $0x308] sm:$0xf]
                  %990 = vst [vmem:[%s792 + $0x188] sm:$0xf] %v989
                  %v991 = vld [vmem:[%s791 + $0x30c] sm:$0xf]
                  %992 = vst [vmem:[%s792 + $0x18c] sm:$0xf] %v991
                  %v993 = vld [vmem:[%s791 + $0x310] sm:$0xf]
                  %994 = vst [vmem:[%s792 + $0x190] sm:$0xf] %v993
                  %v995 = vld [vmem:[%s791 + $0x314] sm:$0xf]
                  %996 = vst [vmem:[%s792 + $0x194] sm:$0xf] %v995
                  %v997 = vld [vmem:[%s791 + $0x318] sm:$0xf]
                  %998 = vst [vmem:[%s792 + $0x198] sm:$0xf] %v997
                  %v999 = vld [vmem:[%s791 + $0x31c] sm:$0xf]
                  %1000 = vst [vmem:[%s792 + $0x19c] sm:$0xf] %v999
                  %v1001 = vld [vmem:[%s791 + $0x320] sm:$0xf]
                  %1002 = vst [vmem:[%s792 + $0x1a0] sm:$0xf] %v1001
                  %v1003 = vld [vmem:[%s791 + $0x324] sm:$0xf]
                  %1004 = vst [vmem:[%s792 + $0x1a4] sm:$0xf] %v1003
                  %v1005 = vld [vmem:[%s791 + $0x328] sm:$0xf]
                  %1006 = vst [vmem:[%s792 + $0x1a8] sm:$0xf] %v1005
                  %v1007 = vld [vmem:[%s791 + $0x32c] sm:$0xf]
                  %1008 = vst [vmem:[%s792 + $0x1ac] sm:$0xf] %v1007
                  %v1009 = vld [vmem:[%s791 + $0x330] sm:$0xf]
                  %1010 = vst [vmem:[%s792 + $0x1b0] sm:$0xf] %v1009
                  %v1011 = vld [vmem:[%s791 + $0x334] sm:$0xf]
                  %1012 = vst [vmem:[%s792 + $0x1b4] sm:$0xf] %v1011
                  %v1013 = vld [vmem:[%s791 + $0x338] sm:$0xf]
                  %1014 = vst [vmem:[%s792 + $0x1b8] sm:$0xf] %v1013
                  %v1015 = vld [vmem:[%s791 + $0x33c] sm:$0xf]
                  %1016 = vst [vmem:[%s792 + $0x1bc] sm:$0xf] %v1015
                  %v1017 = vld [vmem:[%s791 + $0x380] sm:$0xf]
                  %1018 = vst [vmem:[%s792 + $0x1c0] sm:$0xf] %v1017
                  %v1019 = vld [vmem:[%s791 + $0x384] sm:$0xf]
                  %1020 = vst [vmem:[%s792 + $0x1c4] sm:$0xf] %v1019
                  %v1021 = vld [vmem:[%s791 + $0x388] sm:$0xf]
                  %1022 = vst [vmem:[%s792 + $0x1c8] sm:$0xf] %v1021
                  %v1023 = vld [vmem:[%s791 + $0x38c] sm:$0xf]
                  %1024 = vst [vmem:[%s792 + $0x1cc] sm:$0xf] %v1023
                  %v1025 = vld [vmem:[%s791 + $0x390] sm:$0xf]
                  %1026 = vst [vmem:[%s792 + $0x1d0] sm:$0xf] %v1025
                  %v1027 = vld [vmem:[%s791 + $0x394] sm:$0xf]
                  %1028 = vst [vmem:[%s792 + $0x1d4] sm:$0xf] %v1027
                  %v1029 = vld [vmem:[%s791 + $0x398] sm:$0xf]
                  %1030 = vst [vmem:[%s792 + $0x1d8] sm:$0xf] %v1029
                  %v1031 = vld [vmem:[%s791 + $0x39c] sm:$0xf]
                  %1032 = vst [vmem:[%s792 + $0x1dc] sm:$0xf] %v1031
                  %v1033 = vld [vmem:[%s791 + $0x3a0] sm:$0xf]
                  %1034 = vst [vmem:[%s792 + $0x1e0] sm:$0xf] %v1033
                  %v1035 = vld [vmem:[%s791 + $0x3a4] sm:$0xf]
                  %1036 = vst [vmem:[%s792 + $0x1e4] sm:$0xf] %v1035
                  %v1037 = vld [vmem:[%s791 + $0x3a8] sm:$0xf]
                  %1038 = vst [vmem:[%s792 + $0x1e8] sm:$0xf] %v1037
                  %v1039 = vld [vmem:[%s791 + $0x3ac] sm:$0xf]
                  %1040 = vst [vmem:[%s792 + $0x1ec] sm:$0xf] %v1039
                  %v1041 = vld [vmem:[%s791 + $0x3b0] sm:$0xf]
                  %1042 = vst [vmem:[%s792 + $0x1f0] sm:$0xf] %v1041
                  %v1043 = vld [vmem:[%s791 + $0x3b4] sm:$0xf]
                  %1044 = vst [vmem:[%s792 + $0x1f4] sm:$0xf] %v1043
                  %v1045 = vld [vmem:[%s791 + $0x3b8] sm:$0xf]
                  %1046 = vst [vmem:[%s792 + $0x1f8] sm:$0xf] %v1045
                  %v1047 = vld [vmem:[%s791 + $0x3bc] sm:$0xf]
                  %1048 = vst [vmem:[%s792 + $0x1fc] sm:$0xf] %v1047
                $region59: #{tpu_custom_call.1} parent=46 // loop_footer
                  %s790 = sadd.s32 1, %s786
                $region60: #{tpu_custom_call.1} parent=46 // loop_footer_branch
                  %785 = sbr.rel target = $region56
                $region61: #{tpu_custom_call.1} parent=46 // loop_exit
                  _
              $region47: #{tpu_custom_call.1} parent=31 // pred_fallthru
                _
            $region32: #{tpu_custom_call.1} parent=27 // pred_fallthru
              _
            // Predicated region
            $region33: #{tpu_custom_call.1} parent=27 // pred_check
              _
            $region34: #{tpu_custom_call.1} parent=27 // pred_check_branch
              %508 = sbr.rel (0) target = $region36
            $region35: #{tpu_custom_call.1} parent=27 // pred_region
              loop: start=0, step=1, limit=1
              $region37: #{tpu_custom_call.1} parent=35 // loop_pre_header
                _
              $region38: #{tpu_custom_call.1} parent=35 // loop_header
                %s511 = sphi 0, %s515
                %p512 = scmp.ge.s32.totalorder %s511, 1
                %s516 = sphi %s502, %s502
                %s517 = sphi %s497, %s497
              $region39: #{tpu_custom_call.1} parent=35 // loop_header_branch
                %514 = sbr.rel (%p512) target = $region43
              $region40: #{tpu_custom_call.1} parent=35 // loop_body
                %v518 = vld [vmem:[%s516] sm:$0xf]
                %519 = vst [vmem:[%s517] sm:$0xf] %v518
                %v520 = vld [vmem:[%s516 + $0x4] sm:$0xf]
                %521 = vst [vmem:[%s517 + $0x4] sm:$0xf] %v520
                %v522 = vld [vmem:[%s516 + $0x8] sm:$0xf]
                %523 = vst [vmem:[%s517 + $0x8] sm:$0xf] %v522
                %v524 = vld [vmem:[%s516 + $0xc] sm:$0xf]
                %525 = vst [vmem:[%s517 + $0xc] sm:$0xf] %v524
                %v526 = vld [vmem:[%s516 + $0x10] sm:$0xf]
                %527 = vst [vmem:[%s517 + $0x10] sm:$0xf] %v526
                %v528 = vld [vmem:[%s516 + $0x14] sm:$0xf]
                %529 = vst [vmem:[%s517 + $0x14] sm:$0xf] %v528
                %v530 = vld [vmem:[%s516 + $0x18] sm:$0xf]
                %531 = vst [vmem:[%s517 + $0x18] sm:$0xf] %v530
                %v532 = vld [vmem:[%s516 + $0x1c] sm:$0xf]
                %533 = vst [vmem:[%s517 + $0x1c] sm:$0xf] %v532
                %v534 = vld [vmem:[%s516 + $0x20] sm:$0xf]
                %535 = vst [vmem:[%s517 + $0x20] sm:$0xf] %v534
                %v536 = vld [vmem:[%s516 + $0x24] sm:$0xf]
                %537 = vst [vmem:[%s517 + $0x24] sm:$0xf] %v536
                %v538 = vld [vmem:[%s516 + $0x28] sm:$0xf]
                %539 = vst [vmem:[%s517 + $0x28] sm:$0xf] %v538
                %v540 = vld [vmem:[%s516 + $0x2c] sm:$0xf]
                %541 = vst [vmem:[%s517 + $0x2c] sm:$0xf] %v540
                %v542 = vld [vmem:[%s516 + $0x30] sm:$0xf]
                %543 = vst [vmem:[%s517 + $0x30] sm:$0xf] %v542
                %v544 = vld [vmem:[%s516 + $0x34] sm:$0xf]
                %545 = vst [vmem:[%s517 + $0x34] sm:$0xf] %v544
                %v546 = vld [vmem:[%s516 + $0x38] sm:$0xf]
                %547 = vst [vmem:[%s517 + $0x38] sm:$0xf] %v546
                %v548 = vld [vmem:[%s516 + $0x3c] sm:$0xf]
                %549 = vst [vmem:[%s517 + $0x3c] sm:$0xf] %v548
                %v550 = vld [vmem:[%s516 + $0x80] sm:$0xf]
                %551 = vst [vmem:[%s517 + $0x40] sm:$0xf] %v550
                %v552 = vld [vmem:[%s516 + $0x84] sm:$0xf]
                %553 = vst [vmem:[%s517 + $0x44] sm:$0xf] %v552
                %v554 = vld [vmem:[%s516 + $0x88] sm:$0xf]
                %555 = vst [vmem:[%s517 + $0x48] sm:$0xf] %v554
                %v556 = vld [vmem:[%s516 + $0x8c] sm:$0xf]
                %557 = vst [vmem:[%s517 + $0x4c] sm:$0xf] %v556
                %v558 = vld [vmem:[%s516 + $0x90] sm:$0xf]
                %559 = vst [vmem:[%s517 + $0x50] sm:$0xf] %v558
                %v560 = vld [vmem:[%s516 + $0x94] sm:$0xf]
                %561 = vst [vmem:[%s517 + $0x54] sm:$0xf] %v560
                %v562 = vld [vmem:[%s516 + $0x98] sm:$0xf]
                %563 = vst [vmem:[%s517 + $0x58] sm:$0xf] %v562
                %v564 = vld [vmem:[%s516 + $0x9c] sm:$0xf]
                %565 = vst [vmem:[%s517 + $0x5c] sm:$0xf] %v564
                %v566 = vld [vmem:[%s516 + $0xa0] sm:$0xf]
                %567 = vst [vmem:[%s517 + $0x60] sm:$0xf] %v566
                %v568 = vld [vmem:[%s516 + $0xa4] sm:$0xf]
                %569 = vst [vmem:[%s517 + $0x64] sm:$0xf] %v568
                %v570 = vld [vmem:[%s516 + $0xa8] sm:$0xf]
                %571 = vst [vmem:[%s517 + $0x68] sm:$0xf] %v570
                %v572 = vld [vmem:[%s516 + $0xac] sm:$0xf]
                %573 = vst [vmem:[%s517 + $0x6c] sm:$0xf] %v572
                %v574 = vld [vmem:[%s516 + $0xb0] sm:$0xf]
                %575 = vst [vmem:[%s517 + $0x70] sm:$0xf] %v574
                %v576 = vld [vmem:[%s516 + $0xb4] sm:$0xf]
                %577 = vst [vmem:[%s517 + $0x74] sm:$0xf] %v576
                %v578 = vld [vmem:[%s516 + $0xb8] sm:$0xf]
                %579 = vst [vmem:[%s517 + $0x78] sm:$0xf] %v578
                %v580 = vld [vmem:[%s516 + $0xbc] sm:$0xf]
                %581 = vst [vmem:[%s517 + $0x7c] sm:$0xf] %v580
                %v582 = vld [vmem:[%s516 + $0x100] sm:$0xf]
                %583 = vst [vmem:[%s517 + $0x80] sm:$0xf] %v582
                %v584 = vld [vmem:[%s516 + $0x104] sm:$0xf]
                %585 = vst [vmem:[%s517 + $0x84] sm:$0xf] %v584
                %v586 = vld [vmem:[%s516 + $0x108] sm:$0xf]
                %587 = vst [vmem:[%s517 + $0x88] sm:$0xf] %v586
                %v588 = vld [vmem:[%s516 + $0x10c] sm:$0xf]
                %589 = vst [vmem:[%s517 + $0x8c] sm:$0xf] %v588
                %v590 = vld [vmem:[%s516 + $0x110] sm:$0xf]
                %591 = vst [vmem:[%s517 + $0x90] sm:$0xf] %v590
                %v592 = vld [vmem:[%s516 + $0x114] sm:$0xf]
                %593 = vst [vmem:[%s517 + $0x94] sm:$0xf] %v592
                %v594 = vld [vmem:[%s516 + $0x118] sm:$0xf]
                %595 = vst [vmem:[%s517 + $0x98] sm:$0xf] %v594
                %v596 = vld [vmem:[%s516 + $0x11c] sm:$0xf]
                %597 = vst [vmem:[%s517 + $0x9c] sm:$0xf] %v596
                %v598 = vld [vmem:[%s516 + $0x120] sm:$0xf]
                %599 = vst [vmem:[%s517 + $0xa0] sm:$0xf] %v598
                %v600 = vld [vmem:[%s516 + $0x124] sm:$0xf]
                %601 = vst [vmem:[%s517 + $0xa4] sm:$0xf] %v600
                %v602 = vld [vmem:[%s516 + $0x128] sm:$0xf]
                %603 = vst [vmem:[%s517 + $0xa8] sm:$0xf] %v602
                %v604 = vld [vmem:[%s516 + $0x12c] sm:$0xf]
                %605 = vst [vmem:[%s517 + $0xac] sm:$0xf] %v604
                %v606 = vld [vmem:[%s516 + $0x130] sm:$0xf]
                %607 = vst [vmem:[%s517 + $0xb0] sm:$0xf] %v606
                %v608 = vld [vmem:[%s516 + $0x134] sm:$0xf]
                %609 = vst [vmem:[%s517 + $0xb4] sm:$0xf] %v608
                %v610 = vld [vmem:[%s516 + $0x138] sm:$0xf]
                %611 = vst [vmem:[%s517 + $0xb8] sm:$0xf] %v610
                %v612 = vld [vmem:[%s516 + $0x13c] sm:$0xf]
                %613 = vst [vmem:[%s517 + $0xbc] sm:$0xf] %v612
                %v614 = vld [vmem:[%s516 + $0x180] sm:$0xf]
                %615 = vst [vmem:[%s517 + $0xc0] sm:$0xf] %v614
                %v616 = vld [vmem:[%s516 + $0x184] sm:$0xf]
                %617 = vst [vmem:[%s517 + $0xc4] sm:$0xf] %v616
                %v618 = vld [vmem:[%s516 + $0x188] sm:$0xf]
                %619 = vst [vmem:[%s517 + $0xc8] sm:$0xf] %v618
                %v620 = vld [vmem:[%s516 + $0x18c] sm:$0xf]
                %621 = vst [vmem:[%s517 + $0xcc] sm:$0xf] %v620
                %v622 = vld [vmem:[%s516 + $0x190] sm:$0xf]
                %623 = vst [vmem:[%s517 + $0xd0] sm:$0xf] %v622
                %v624 = vld [vmem:[%s516 + $0x194] sm:$0xf]
                %625 = vst [vmem:[%s517 + $0xd4] sm:$0xf] %v624
                %v626 = vld [vmem:[%s516 + $0x198] sm:$0xf]
                %627 = vst [vmem:[%s517 + $0xd8] sm:$0xf] %v626
                %v628 = vld [vmem:[%s516 + $0x19c] sm:$0xf]
                %629 = vst [vmem:[%s517 + $0xdc] sm:$0xf] %v628
                %v630 = vld [vmem:[%s516 + $0x1a0] sm:$0xf]
                %631 = vst [vmem:[%s517 + $0xe0] sm:$0xf] %v630
                %v632 = vld [vmem:[%s516 + $0x1a4] sm:$0xf]
                %633 = vst [vmem:[%s517 + $0xe4] sm:$0xf] %v632
                %v634 = vld [vmem:[%s516 + $0x1a8] sm:$0xf]
                %635 = vst [vmem:[%s517 + $0xe8] sm:$0xf] %v634
                %v636 = vld [vmem:[%s516 + $0x1ac] sm:$0xf]
                %637 = vst [vmem:[%s517 + $0xec] sm:$0xf] %v636
                %v638 = vld [vmem:[%s516 + $0x1b0] sm:$0xf]
                %639 = vst [vmem:[%s517 + $0xf0] sm:$0xf] %v638
                %v640 = vld [vmem:[%s516 + $0x1b4] sm:$0xf]
                %641 = vst [vmem:[%s517 + $0xf4] sm:$0xf] %v640
                %v642 = vld [vmem:[%s516 + $0x1b8] sm:$0xf]
                %643 = vst [vmem:[%s517 + $0xf8] sm:$0xf] %v642
                %v644 = vld [vmem:[%s516 + $0x1bc] sm:$0xf]
                %645 = vst [vmem:[%s517 + $0xfc] sm:$0xf] %v644
                %v646 = vld [vmem:[%s516 + $0x200] sm:$0xf]
                %647 = vst [vmem:[%s517 + $0x100] sm:$0xf] %v646
                %v648 = vld [vmem:[%s516 + $0x204] sm:$0xf]
                %649 = vst [vmem:[%s517 + $0x104] sm:$0xf] %v648
                %v650 = vld [vmem:[%s516 + $0x208] sm:$0xf]
                %651 = vst [vmem:[%s517 + $0x108] sm:$0xf] %v650
                %v652 = vld [vmem:[%s516 + $0x20c] sm:$0xf]
                %653 = vst [vmem:[%s517 + $0x10c] sm:$0xf] %v652
                %v654 = vld [vmem:[%s516 + $0x210] sm:$0xf]
                %655 = vst [vmem:[%s517 + $0x110] sm:$0xf] %v654
                %v656 = vld [vmem:[%s516 + $0x214] sm:$0xf]
                %657 = vst [vmem:[%s517 + $0x114] sm:$0xf] %v656
                %v658 = vld [vmem:[%s516 + $0x218] sm:$0xf]
                %659 = vst [vmem:[%s517 + $0x118] sm:$0xf] %v658
                %v660 = vld [vmem:[%s516 + $0x21c] sm:$0xf]
                %661 = vst [vmem:[%s517 + $0x11c] sm:$0xf] %v660
                %v662 = vld [vmem:[%s516 + $0x220] sm:$0xf]
                %663 = vst [vmem:[%s517 + $0x120] sm:$0xf] %v662
                %v664 = vld [vmem:[%s516 + $0x224] sm:$0xf]
                %665 = vst [vmem:[%s517 + $0x124] sm:$0xf] %v664
                %v666 = vld [vmem:[%s516 + $0x228] sm:$0xf]
                %667 = vst [vmem:[%s517 + $0x128] sm:$0xf] %v666
                %v668 = vld [vmem:[%s516 + $0x22c] sm:$0xf]
                %669 = vst [vmem:[%s517 + $0x12c] sm:$0xf] %v668
                %v670 = vld [vmem:[%s516 + $0x230] sm:$0xf]
                %671 = vst [vmem:[%s517 + $0x130] sm:$0xf] %v670
                %v672 = vld [vmem:[%s516 + $0x234] sm:$0xf]
                %673 = vst [vmem:[%s517 + $0x134] sm:$0xf] %v672
                %v674 = vld [vmem:[%s516 + $0x238] sm:$0xf]
                %675 = vst [vmem:[%s517 + $0x138] sm:$0xf] %v674
                %v676 = vld [vmem:[%s516 + $0x23c] sm:$0xf]
                %677 = vst [vmem:[%s517 + $0x13c] sm:$0xf] %v676
                %v678 = vld [vmem:[%s516 + $0x280] sm:$0xf]
                %679 = vst [vmem:[%s517 + $0x140] sm:$0xf] %v678
                %v680 = vld [vmem:[%s516 + $0x284] sm:$0xf]
                %681 = vst [vmem:[%s517 + $0x144] sm:$0xf] %v680
                %v682 = vld [vmem:[%s516 + $0x288] sm:$0xf]
                %683 = vst [vmem:[%s517 + $0x148] sm:$0xf] %v682
                %v684 = vld [vmem:[%s516 + $0x28c] sm:$0xf]
                %685 = vst [vmem:[%s517 + $0x14c] sm:$0xf] %v684
                %v686 = vld [vmem:[%s516 + $0x290] sm:$0xf]
                %687 = vst [vmem:[%s517 + $0x150] sm:$0xf] %v686
                %v688 = vld [vmem:[%s516 + $0x294] sm:$0xf]
                %689 = vst [vmem:[%s517 + $0x154] sm:$0xf] %v688
                %v690 = vld [vmem:[%s516 + $0x298] sm:$0xf]
                %691 = vst [vmem:[%s517 + $0x158] sm:$0xf] %v690
                %v692 = vld [vmem:[%s516 + $0x29c] sm:$0xf]
                %693 = vst [vmem:[%s517 + $0x15c] sm:$0xf] %v692
                %v694 = vld [vmem:[%s516 + $0x2a0] sm:$0xf]
                %695 = vst [vmem:[%s517 + $0x160] sm:$0xf] %v694
                %v696 = vld [vmem:[%s516 + $0x2a4] sm:$0xf]
                %697 = vst [vmem:[%s517 + $0x164] sm:$0xf] %v696
                %v698 = vld [vmem:[%s516 + $0x2a8] sm:$0xf]
                %699 = vst [vmem:[%s517 + $0x168] sm:$0xf] %v698
                %v700 = vld [vmem:[%s516 + $0x2ac] sm:$0xf]
                %701 = vst [vmem:[%s517 + $0x16c] sm:$0xf] %v700
                %v702 = vld [vmem:[%s516 + $0x2b0] sm:$0xf]
                %703 = vst [vmem:[%s517 + $0x170] sm:$0xf] %v702
                %v704 = vld [vmem:[%s516 + $0x2b4] sm:$0xf]
                %705 = vst [vmem:[%s517 + $0x174] sm:$0xf] %v704
                %v706 = vld [vmem:[%s516 + $0x2b8] sm:$0xf]
                %707 = vst [vmem:[%s517 + $0x178] sm:$0xf] %v706
                %v708 = vld [vmem:[%s516 + $0x2bc] sm:$0xf]
                %709 = vst [vmem:[%s517 + $0x17c] sm:$0xf] %v708
                %v710 = vld [vmem:[%s516 + $0x300] sm:$0xf]
                %711 = vst [vmem:[%s517 + $0x180] sm:$0xf] %v710
                %v712 = vld [vmem:[%s516 + $0x304] sm:$0xf]
                %713 = vst [vmem:[%s517 + $0x184] sm:$0xf] %v712
                %v714 = vld [vmem:[%s516 + $0x308] sm:$0xf]
                %715 = vst [vmem:[%s517 + $0x188] sm:$0xf] %v714
                %v716 = vld [vmem:[%s516 + $0x30c] sm:$0xf]
                %717 = vst [vmem:[%s517 + $0x18c] sm:$0xf] %v716
                %v718 = vld [vmem:[%s516 + $0x310] sm:$0xf]
                %719 = vst [vmem:[%s517 + $0x190] sm:$0xf] %v718
                %v720 = vld [vmem:[%s516 + $0x314] sm:$0xf]
                %721 = vst [vmem:[%s517 + $0x194] sm:$0xf] %v720
                %v722 = vld [vmem:[%s516 + $0x318] sm:$0xf]
                %723 = vst [vmem:[%s517 + $0x198] sm:$0xf] %v722
                %v724 = vld [vmem:[%s516 + $0x31c] sm:$0xf]
                %725 = vst [vmem:[%s517 + $0x19c] sm:$0xf] %v724
                %v726 = vld [vmem:[%s516 + $0x320] sm:$0xf]
                %727 = vst [vmem:[%s517 + $0x1a0] sm:$0xf] %v726
                %v728 = vld [vmem:[%s516 + $0x324] sm:$0xf]
                %729 = vst [vmem:[%s517 + $0x1a4] sm:$0xf] %v728
                %v730 = vld [vmem:[%s516 + $0x328] sm:$0xf]
                %731 = vst [vmem:[%s517 + $0x1a8] sm:$0xf] %v730
                %v732 = vld [vmem:[%s516 + $0x32c] sm:$0xf]
                %733 = vst [vmem:[%s517 + $0x1ac] sm:$0xf] %v732
                %v734 = vld [vmem:[%s516 + $0x330] sm:$0xf]
                %735 = vst [vmem:[%s517 + $0x1b0] sm:$0xf] %v734
                %v736 = vld [vmem:[%s516 + $0x334] sm:$0xf]
                %737 = vst [vmem:[%s517 + $0x1b4] sm:$0xf] %v736
                %v738 = vld [vmem:[%s516 + $0x338] sm:$0xf]
                %739 = vst [vmem:[%s517 + $0x1b8] sm:$0xf] %v738
                %v740 = vld [vmem:[%s516 + $0x33c] sm:$0xf]
                %741 = vst [vmem:[%s517 + $0x1bc] sm:$0xf] %v740
                %v742 = vld [vmem:[%s516 + $0x380] sm:$0xf]
                %743 = vst [vmem:[%s517 + $0x1c0] sm:$0xf] %v742
                %v744 = vld [vmem:[%s516 + $0x384] sm:$0xf]
                %745 = vst [vmem:[%s517 + $0x1c4] sm:$0xf] %v744
                %v746 = vld [vmem:[%s516 + $0x388] sm:$0xf]
                %747 = vst [vmem:[%s517 + $0x1c8] sm:$0xf] %v746
                %v748 = vld [vmem:[%s516 + $0x38c] sm:$0xf]
                %749 = vst [vmem:[%s517 + $0x1cc] sm:$0xf] %v748
                %v750 = vld [vmem:[%s516 + $0x390] sm:$0xf]
                %751 = vst [vmem:[%s517 + $0x1d0] sm:$0xf] %v750
                %v752 = vld [vmem:[%s516 + $0x394] sm:$0xf]
                %753 = vst [vmem:[%s517 + $0x1d4] sm:$0xf] %v752
                %v754 = vld [vmem:[%s516 + $0x398] sm:$0xf]
                %755 = vst [vmem:[%s517 + $0x1d8] sm:$0xf] %v754
                %v756 = vld [vmem:[%s516 + $0x39c] sm:$0xf]
                %757 = vst [vmem:[%s517 + $0x1dc] sm:$0xf] %v756
                %v758 = vld [vmem:[%s516 + $0x3a0] sm:$0xf]
                %759 = vst [vmem:[%s517 + $0x1e0] sm:$0xf] %v758
                %v760 = vld [vmem:[%s516 + $0x3a4] sm:$0xf]
                %761 = vst [vmem:[%s517 + $0x1e4] sm:$0xf] %v760
                %v762 = vld [vmem:[%s516 + $0x3a8] sm:$0xf]
                %763 = vst [vmem:[%s517 + $0x1e8] sm:$0xf] %v762
                %v764 = vld [vmem:[%s516 + $0x3ac] sm:$0xf]
                %765 = vst [vmem:[%s517 + $0x1ec] sm:$0xf] %v764
                %v766 = vld [vmem:[%s516 + $0x3b0] sm:$0xf]
                %767 = vst [vmem:[%s517 + $0x1f0] sm:$0xf] %v766
                %v768 = vld [vmem:[%s516 + $0x3b4] sm:$0xf]
                %769 = vst [vmem:[%s517 + $0x1f4] sm:$0xf] %v768
                %v770 = vld [vmem:[%s516 + $0x3b8] sm:$0xf]
                %771 = vst [vmem:[%s517 + $0x1f8] sm:$0xf] %v770
                %v772 = vld [vmem:[%s516 + $0x3bc] sm:$0xf]
                %773 = vst [vmem:[%s517 + $0x1fc] sm:$0xf] %v772
              $region41: #{tpu_custom_call.1} parent=35 // loop_footer
                %s515 = sadd.s32 1, %s511
              $region42: #{tpu_custom_call.1} parent=35 // loop_footer_branch
                %510 = sbr.rel target = $region38
              $region43: #{tpu_custom_call.1} parent=35 // loop_exit
                _
            $region36: #{tpu_custom_call.1} parent=27 // pred_fallthru
              _
          $region28: #{tpu_custom_call.1} parent=23 // pred_fallthru
            _
          %1049 = vnop
        $region24: #{tpu_custom_call.1} parent=15 // pred_fallthru
          _
        // Predicated region
        $region62: #{tpu_custom_call.1} parent=15 // pred_check
          %p1050 = pneg %p124
        $region63: #{tpu_custom_call.1} parent=15 // pred_check_branch
          %1052 = sbr.rel (%p1050) target = $region65
        $region64: #{tpu_custom_call.1} parent=15 // pred_region
          %s1053 = smul.u32 16, %s44
          %p1054 = scmp.lt.s32.totalorder %s1053, 31
          %s1055 = scalar_select %p1054, %s1053, 31
          %s1056 = smul.addr %s1055, 4
          %s1057 = scalar_lea.vmem %s2, %s1056
          %s1058 = smul.u32 16, %s44
        $region65: #{tpu_custom_call.1} parent=15 // pred_fallthru
          _
        // Predicated region
        $region66: #{tpu_custom_call.1} parent=15 // pred_check
          %p1059 = pneg %p150
        $region67: #{tpu_custom_call.1} parent=15 // pred_check_branch
          %1061 = sbr.rel (%p1059) target = $region69
        $region68: #{tpu_custom_call.1} parent=15 // pred_region
          %p1062 = scmp.lt.s32.totalorder %s43, 1
          %s1063 = scalar_select %p1062, %s43, 1
          %s1064 = smul.addr %s1063, 2
          %s1065 = smul.addr %s1064, 4
          %s1066 = scalar_lea.vmem %s3, %s1065
        $region69: #{tpu_custom_call.1} parent=15 // pred_fallthru
          _
        // Predicated region
        $region70: #{tpu_custom_call.1} parent=15 // pred_check
          %p1067 = pneg %p176
        $region71: #{tpu_custom_call.1} parent=15 // pred_check_branch
          %1069 = sbr.rel (%p1067) target = $region73
        $region72: #{tpu_custom_call.1} parent=15 // pred_region
          %p1070 = scmp.lt.s32.totalorder %s43, 1
          %s1071 = scalar_select %p1070, %s43, 1
          %s1072 = smul.addr %s1071, 4
          %s1073 = smul.addr %s1072, 4
          %s1074 = scalar_lea.vmem %s4, %s1073
        $region73: #{tpu_custom_call.1} parent=15 // pred_fallthru
          _
        // Predicated region
        $region74: #{tpu_custom_call.1} parent=15 // pred_check
          %p1075 = pneg %p202
        $region75: #{tpu_custom_call.1} parent=15 // pred_check_branch
          %1077 = sbr.rel (%p1075) target = $region77
        $region76: #{tpu_custom_call.1} parent=15 // pred_region
          %s1078 = sand.u32 %s36, 1
          %s1079 = scalar_lea.sflag [#allocation7], %s1078
          %s1080 = sand.u32 %s192, 1
          %s1081 = scalar_lea.vmem [#allocation6], %s1080
          %s1083 = ssub.s32 16, 16
          %1084 = vsyncadd %s1079, %s1083
          %s1085 = smul.addr %s43, 16
          %s1086 = scalar_lea.hbm %s5, %s1085
          %s1088 = sshll.u32 %s1081, 4
          %s1089 = int_to_ptr.vmem [resolvable:$true] %s1088
          %1091 = dma.hbm_to_vmem [thread:$0]  %s1086, 16, %s1089, %s1079
        $region77: #{tpu_custom_call.1} parent=15 // pred_fallthru
          _
        // Predicated region
        $region78: #{tpu_custom_call.1} parent=15 // pred_check
          %p1092 = pneg %p228
        $region79: #{tpu_custom_call.1} parent=15 // pred_check_branch
          %1094 = sbr.rel (%p1092) target = $region81
        $region80: #{tpu_custom_call.1} parent=15 // pred_region
          %s1095 = sand.u32 %s36, 1
          %s1096 = scalar_lea.sflag [#allocation7], %s1095
          %s1097 = sand.u32 %s218, 1
          %s1098 = smul.addr %s1097, 64
          %s1099 = scalar_lea.vmem [#allocation8], %s1098
          %s1101 = ssub.s32 1024, 1024
          %1102 = vsyncadd %s1096, %s1101
          %s1103 = smul.addr %s43, 16
          %s1104 = smul.addr %s1103, 64
          %s1105 = scalar_lea.hbm %s6, %s1104
          %s1106 = sshll.u32 %s1099, 4
          %s1107 = int_to_ptr.vmem [resolvable:$true] %s1106
          %1112 = dma.hbm_to_vmem [thread:$0]  %s1105, 1024, %s1107, %s1096, 64, 64, 4
        $region81: #{tpu_custom_call.1} parent=15 // pred_fallthru
          _
        // Predicated region
        $region82: #{tpu_custom_call.1} parent=15 // pred_check
          %p1113 = pneg %p254
        $region83: #{tpu_custom_call.1} parent=15 // pred_check_branch
          %1115 = sbr.rel (%p1113) target = $region85
        $region84: #{tpu_custom_call.1} parent=15 // pred_region
          %s1116 = sand.u32 %s36, 1
          %s1117 = scalar_lea.sflag [#allocation10], %s1116
          %s1118 = sand.u32 %s244, 1
          %s1119 = scalar_lea.vmem [#allocation9], %s1118
          %s1121 = ssub.s32 16, 16
          %1122 = vsyncadd %s1117, %s1121
          %s1123 = smul.addr %s43, 16
          %s1124 = scalar_lea.hbm %s7, %s1123
          %s1126 = sshll.u32 %s1119, 4
          %s1127 = int_to_ptr.vmem [resolvable:$true] %s1126
          %1129 = dma.hbm_to_vmem [thread:$0]  %s1124, 16, %s1127, %s1117
        $region85: #{tpu_custom_call.1} parent=15 // pred_fallthru
          _
        // Predicated region
        $region86: #{tpu_custom_call.1} parent=15 // pred_check
          %p1130 = pneg %p280
        $region87: #{tpu_custom_call.1} parent=15 // pred_check_branch
          %1132 = sbr.rel (%p1130) target = $region89
        $region88: #{tpu_custom_call.1} parent=15 // pred_region
          %p1133 = scmp.lt.s32.totalorder %s43, 1
          %s1134 = scalar_select %p1133, %s43, 1
          %s1135 = smul.addr %s1134, 16
          %s1136 = smul.addr %s1135, 4
          %s1137 = scalar_lea.vmem %s8, %s1136
        $region89: #{tpu_custom_call.1} parent=15 // pred_fallthru
          _
        // Predicated region
        $region90: #{tpu_custom_call.1} parent=15 // pred_check
          %p1138 = pneg %p306
        $region91: #{tpu_custom_call.1} parent=15 // pred_check_branch
          %1140 = sbr.rel (%p1138) target = $region93
        $region92: #{tpu_custom_call.1} parent=15 // pred_region
          %s1141 = sand.u32 %s36, 1
          %s1142 = scalar_lea.sflag [#allocation10], %s1141
          %s1143 = sand.u32 %s296, 1
          %s1144 = scalar_lea.vmem [#allocation11], %s1143
          %s1146 = ssub.s32 16, 16
          %1147 = vsyncadd %s1142, %s1146
          %s1148 = smul.addr %s43, 16
          %s1149 = scalar_lea.hbm %s9, %s1148
          %s1151 = sshll.u32 %s1144, 4
          %s1152 = int_to_ptr.vmem [resolvable:$true] %s1151
          %1154 = dma.hbm_to_vmem [thread:$0]  %s1149, 16, %s1152, %s1142
        $region93: #{tpu_custom_call.1} parent=15 // pred_fallthru
          _
      $region16: #{tpu_custom_call.1} parent=5 // pred_fallthru
        _
      %p1155 = scmp.le.s32.totalorder 1, %s36
      %p1156 = scmp.lt.s32.totalorder %s36, 5
      %p1157 = pnand %p1155, %p1156
      %p1158 = pneg %p1157
      // Predicated region
      $region94: #{tpu_custom_call.1} parent=5 // pred_check
        _
      $region95: #{tpu_custom_call.1} parent=5 // pred_check_branch
        %1160 = sbr.rel (%p1157) target = $region97
      $region96: #{tpu_custom_call.1} parent=5 // pred_region
        %s1161 = ssub.s32 %s36, 1
        %s1162 = sand.u32 %s63, 1
        %s1163 = scalar_lea.sflag [#allocation3], %s1162
        %s1164 = sand.u32 %s63, 1
        %s1165 = smul.addr %s1164, 8
        %s1166 = scalar_lea.vmem [#allocation2], %s1165
        // Predicated region
        $region98: #{tpu_custom_call.1} parent=96 // pred_check
          %p1167 = pneg %p76
        $region99: #{tpu_custom_call.1} parent=96 // pred_check_branch
          %1169 = sbr.rel (%p1167) target = $region101
        $region100: #{tpu_custom_call.1} parent=96 // pred_region
          %1170 = dma.done %s1163, 128
        $region101: #{tpu_custom_call.1} parent=96 // pred_fallthru
          _
        %s1171 = sand.u32 %s91, 1
        %s1172 = sand.u32 %s91, 1
        %s1173 = smul.addr %s1172, 512
        %s1174 = scalar_lea.vmem [#allocation5], %s1173
        // Predicated region
        $region102: #{tpu_custom_call.1} parent=96 // pred_check
          %p1175 = pneg %p104
        $region103: #{tpu_custom_call.1} parent=96 // pred_check_branch
          %1177 = sbr.rel (%p1175) target = $region105
        $region104: #{tpu_custom_call.1} parent=96 // pred_region
          _
        $region105: #{tpu_custom_call.1} parent=96 // pred_fallthru
          _
        %s1178 = sand.u32 %s41, 1
        %s1179 = scalar_lea.sflag [#allocation7], %s1178
        %s1180 = sand.u32 %s195, 1
        %s1181 = scalar_lea.vmem [#allocation6], %s1180
        // Predicated region
        $region106: #{tpu_custom_call.1} parent=96 // pred_check
          %p1182 = pneg %p208
        $region107: #{tpu_custom_call.1} parent=96 // pred_check_branch
          %1184 = sbr.rel (%p1182) target = $region109
        $region108: #{tpu_custom_call.1} parent=96 // pred_region
          %1185 = dma.done %s1179, 16
        $region109: #{tpu_custom_call.1} parent=96 // pred_fallthru
          _
        %s1186 = sand.u32 %s41, 1
        %s1187 = scalar_lea.sflag [#allocation7], %s1186
        %s1188 = sand.u32 %s221, 1
        %s1189 = smul.addr %s1188, 64
        %s1190 = scalar_lea.vmem [#allocation8], %s1189
        // Predicated region
        $region110: #{tpu_custom_call.1} parent=96 // pred_check
          %p1191 = pneg %p234
        $region111: #{tpu_custom_call.1} parent=96 // pred_check_branch
          %1193 = sbr.rel (%p1191) target = $region113
        $region112: #{tpu_custom_call.1} parent=96 // pred_region
          %1194 = dma.done %s1187, 1024
        $region113: #{tpu_custom_call.1} parent=96 // pred_fallthru
          _
        %s1195 = sand.u32 %s41, 1
        %s1196 = scalar_lea.sflag [#allocation10], %s1195
        %s1197 = sand.u32 %s247, 1
        %s1198 = scalar_lea.vmem [#allocation9], %s1197
        // Predicated region
        $region114: #{tpu_custom_call.1} parent=96 // pred_check
          %p1199 = pneg %p260
        $region115: #{tpu_custom_call.1} parent=96 // pred_check_branch
          %1201 = sbr.rel (%p1199) target = $region117
        $region116: #{tpu_custom_call.1} parent=96 // pred_region
          %1202 = dma.done %s1196, 16
        $region117: #{tpu_custom_call.1} parent=96 // pred_fallthru
          _
        %s1203 = sand.u32 %s41, 1
        %s1204 = scalar_lea.sflag [#allocation10], %s1203
        %s1205 = sand.u32 %s299, 1
        %s1206 = scalar_lea.vmem [#allocation11], %s1205
        // Predicated region
        $region118: #{tpu_custom_call.1} parent=96 // pred_check
          %p1207 = pneg %p312
        $region119: #{tpu_custom_call.1} parent=96 // pred_check_branch
          %1209 = sbr.rel (%p1207) target = $region121
        $region120: #{tpu_custom_call.1} parent=96 // pred_region
          %1210 = dma.done %s1204, 16
        $region121: #{tpu_custom_call.1} parent=96 // pred_fallthru
          _
        %s1211 = sand.u32 %s63, 1
        %s1212 = scalar_lea.sflag [#allocation3], %s1211
        %s1213 = sand.u32 %s63, 1
        %s1214 = smul.addr %s1213, 8
        %s1215 = scalar_lea.vmem [#allocation2], %s1214
        %p1216 = pneg %p76
        %p1217 = pneg %p73
        %s1218 = sand.u32 %s91, 1
        %s1219 = sand.u32 %s91, 1
        %s1220 = smul.addr %s1219, 512
        %s1221 = scalar_lea.vmem [#allocation5], %s1220
        %p1222 = pneg %p104
        %p1223 = pneg %p101
        %s1224 = smul.u32 16, %s46
        %p1225 = scmp.lt.s32.totalorder %s1224, 31
        %s1226 = scalar_select %p1225, %s1224, 31
        %s1227 = smul.addr %s1226, 4
        %s1228 = scalar_lea.vmem %s2, %s1227
        %p1229 = pneg %p130
        %p1230 = pneg %p127
        %p1231 = scmp.lt.s32.totalorder %s45, 1
        %s1232 = scalar_select %p1231, %s45, 1
        %s1233 = smul.addr %s1232, 2
        %s1234 = smul.addr %s1233, 4
        %s1235 = scalar_lea.vmem %s3, %s1234
        %p1236 = pneg %p156
        %p1237 = pneg %p153
        %p1238 = scmp.lt.s32.totalorder %s45, 1
        %s1239 = scalar_select %p1238, %s45, 1
        %s1240 = smul.addr %s1239, 4
        %s1241 = smul.addr %s1240, 4
        %s1242 = scalar_lea.vmem %s4, %s1241
        %p1243 = pneg %p182
        %p1244 = pneg %p179
        %s1245 = sand.u32 %s41, 1
        %s1246 = scalar_lea.sflag [#allocation7], %s1245
        %s1247 = sand.u32 %s195, 1
        %s1248 = scalar_lea.vmem [#allocation6], %s1247
        %p1249 = pneg %p208
        %p1250 = pneg %p205
        %s1251 = sand.u32 %s41, 1
        %s1252 = scalar_lea.sflag [#allocation7], %s1251
        %s1253 = sand.u32 %s221, 1
        %s1254 = smul.addr %s1253, 64
        %s1255 = scalar_lea.vmem [#allocation8], %s1254
        %p1256 = pneg %p234
        %p1257 = pneg %p231
        %s1258 = sand.u32 %s41, 1
        %s1259 = scalar_lea.sflag [#allocation10], %s1258
        %s1260 = sand.u32 %s247, 1
        %s1261 = scalar_lea.vmem [#allocation9], %s1260
        %p1262 = pneg %p260
        %p1263 = pneg %p257
        %p1264 = scmp.lt.s32.totalorder %s45, 1
        %s1265 = scalar_select %p1264, %s45, 1
        %s1266 = smul.addr %s1265, 16
        %s1267 = smul.addr %s1266, 4
        %s1268 = scalar_lea.vmem %s8, %s1267
        %p1269 = pneg %p286
        %p1270 = pneg %p283
        %s1271 = sand.u32 %s41, 1
        %s1272 = scalar_lea.sflag [#allocation10], %s1271
        %s1273 = sand.u32 %s299, 1
        %s1274 = scalar_lea.vmem [#allocation11], %s1273
        %p1275 = pneg %p312
        %p1276 = pneg %p309
        %p1277 = pneg %p340
        %p1278 = pneg %p337
        %s1279 = sand.u32 %s327, 1
        %s1280 = sand.u32 %s327, 1
        %s1281 = smul.addr %s1280, 1024
        %s1282 = scalar_lea.vmem [#allocation12], %s1281
        %p1283 = pneg %p368
        %p1284 = pneg %p365
        %s1285 = sand.u32 %s355, 1
        %s1286 = scalar_lea.sflag [#allocation4], %s1285
        %s1287 = sand.u32 %s355, 1
        %s1288 = smul.addr %s1287, 8
        %s1289 = scalar_lea.vmem [#allocation13], %s1288
        %p1290 = pneg %p396
        %p1291 = pneg %p393
        %s1292 = sand.u32 %s41, 1
        %s1293 = scalar_lea.sflag [#allocation15], %s1292
        %s1294 = sand.u32 %s383, 1
        %s1295 = smul.addr %s1294, 8
        %s1296 = scalar_lea.vmem [#allocation14], %s1295
        %p1297 = pneg %p424
        %p1298 = pneg %p421
        %s1299 = sand.u32 %s41, 1
        %s1300 = scalar_lea.sflag [#allocation15], %s1299
        %s1301 = sand.u32 %s411, 1
        %s1302 = scalar_lea.vmem [#allocation16], %s1301
        %p1303 = pneg %p452
        %p1304 = pneg %p449
        %s1305 = smul.u32 16, %s46
        %p1306 = scmp.lt.s32.totalorder %s45, 1
        %s1307 = scalar_select %p1306, %s45, 1
        %p1308 = scmp.lt.s32.totalorder %s1305, 31
        %s1309 = scalar_select %p1308, %s1305, 31
        %s1310 = smul.addr %s1307, 32
        %s1311 = sadd.s32 %s1309, %s1310
        %s1312 = smul.addr %s1311, 8
        %s1313 = scalar_lea.vmem %s14, %s1312
        %s1314 = smul.u32 16, %s46
        %s1315 = smul.u32 16, %s46
        %p1316 = scmp.lt.s32.totalorder %s1315, 31
        %s1317 = scalar_select %p1316, %s1315, 31
        %s1318 = smul.addr %s1317, 4
        %s1319 = scalar_lea.vmem %s2, %s1318
        %s1320 = smul.u32 16, %s46
        %p1321 = scmp.lt.s32.totalorder %s45, 1
        %s1322 = scalar_select %p1321, %s45, 1
        %s1323 = smul.addr %s1322, 2
        %s1324 = smul.addr %s1323, 4
        %s1325 = scalar_lea.vmem %s3, %s1324
        %p1326 = scmp.lt.s32.totalorder %s45, 1
        %s1327 = scalar_select %p1326, %s45, 1
        %s1328 = smul.addr %s1327, 4
        %s1329 = smul.addr %s1328, 4
        %s1330 = scalar_lea.vmem %s4, %s1329
        %p1331 = scmp.lt.s32.totalorder %s45, 1
        %s1332 = scalar_select %p1331, %s45, 1
        %s1333 = smul.addr %s1332, 16
        %s1334 = smul.addr %s1333, 4
        %s1335 = scalar_lea.vmem %s8, %s1334
        %s1336 = smul.u32 16, %s46
        %s1337 = smul.u32 16, %s46
        %p1338 = scmp.lt.s32.totalorder %s45, 1
        %s1339 = scalar_select %p1338, %s45, 1
        %p1340 = scmp.lt.s32.totalorder %s1337, 31
        %s1341 = scalar_select %p1340, %s1337, 31
        %s1342 = smul.addr %s1339, 32
        %s1343 = sadd.s32 %s1341, %s1342
        %s1344 = smul.addr %s1343, 8
        %s1345 = scalar_lea.vmem %s14, %s1344
        %s1346 = smul.u32 16, %s46
        %v1348 = vld [vmem:[%s1166] sm:$0xff]
        %v1349 = vadd.f32 %v1348, -4.59512
        %v1350 = vmax.f32 %v1349, 0.0
        %vm1351 = vcmp.ne.f32.partialorder %v1349, %v1349
        %v1352 = vadd.f32 %v1349, 0.0
        %v1353 = vand.u32 2147483647, %v1349
        %v1354 = vsub.f32 0.0, %v1353
        %v1355 = vmul.f32 %v1354, 1.442695
        %v1356 = vpow.pop %v1355
        %v1357 = vadd.f32 %v1356, 1.0
        %v1358 = vlog2.pop %v1357
        %v1359 = vmul.f32 %v1358, 0.6931472
        %v1360 = vmul.f32 -0.5, %v1356
        %v1361 = vadd.f32 %v1360, 1.0
        %v1362 = vmul.f32 %v1361, %v1356
        %v1363 = vand.u32 2147483647, %v1356
        %vm1364 = vcmp.lt.f32.partialorder %v1363, 0.0004427343
        %v1365 = vsel %vm1364, %v1362, %v1359
        %v1366 = vadd.f32 %v1350, %v1365
        %v1367 = vsel %vm1351, %v1352, %v1366
        %v1368 = vsub.f32 0.0, %v1367
        %v1369 = vmul.f32 %v1368, 0.5
        %v1370 = vmul.f32 %v1369, 1.442695
        %v1371 = vpow.pop %v1370
        %v1372 = vsub.f32 1.0, %v1371
        %1373 = vst [vmem:[%s1289] sm:$0xff] %v1372
        %v1374 = vsub.f32 1.0, %v1372
        %v1376 = vrot.slane %v1374, 7
        %v1378 = vmul.f32 %v1372, %v1376
        %v1379 = vrot.slane %v1374, 1
        %v1381 = vmul.f32 %v1374, %v1379
        %v1383 = vrot.slane %v1381, 6
        %v1385 = vmul.f32 %v1372, %v1383
        %v1386 = vrot.slane %v1374, 2
        %v1388 = vmul.f32 %v1381, %v1386
        %v1390 = vrot.slane %v1388, 5
        %v1392 = vmul.f32 %v1372, %v1390
        %v1393 = vrot.slane %v1374, 3
        %v1395 = vmul.f32 %v1388, %v1393
        %v1397 = vrot.slane %v1395, 4
        %v1399 = vmul.f32 %v1372, %v1397
        %v1400 = vrot.slane %v1374, 4
        %v1402 = vmul.f32 %v1395, %v1400
        %v1404 = vrot.slane %v1402, 3
        %v1406 = vmul.f32 %v1372, %v1404
        %v1407 = vrot.slane %v1374, 5
        %v1409 = vmul.f32 %v1402, %v1407
        %v1411 = vrot.slane %v1409, 2
        %v1413 = vmul.f32 %v1372, %v1411
        %v1414 = vrot.slane %v1374, 6
        %v1416 = vmul.f32 %v1409, %v1414
        %v1418 = vrot.slane %v1416, 1
        %v1420 = vmul.f32 %v1372, %v1418
        %v1421 = vmul.f32 %v1416, %v1376
        %vm1422 = vcmask 1040384
        %v1423 = vsel %vm1422, %v1372, %v1378
        %vm1424 = vcmask 1041408
        %v1425 = vsel %vm1424, %v1423, %v1385
        %vm1426 = vcmask 1042432
        %v1427 = vsel %vm1426, %v1425, %v1392
        %vm1428 = vcmask 1043456
        %v1429 = vsel %vm1428, %v1427, %v1399
        %vm1430 = vcmask 1044480
        %v1431 = vsel %vm1430, %v1429, %v1406
        %vm1432 = vcmask 1045504
        %v1433 = vsel %vm1432, %v1431, %v1413
        %vm1434 = vcmask 1046528
        %v1435 = vsel %vm1434, %v1433, %v1420
        %1436 = vst [vmem:[%s1296] sm:$0xff] %v1435
        %1437 = vst [vmem:[%s1302] sm:$0x1] %v1421
        %v1438 = vld [vmem:[%s1319] sm:$0xf]
        %v1439 = vld [vmem:[%s1319 + $0x4] sm:$0xf]
        %v1440 = vld [vmem:[%s1319 + $0x8] sm:$0xf]
        %v1441 = vld [vmem:[%s1319 + $0xc] sm:$0xf]
        %v1442 = vld [vmem:[%s1319 + $0x10] sm:$0xf]
        %v1443 = vld [vmem:[%s1319 + $0x14] sm:$0xf]
        %v1444 = vld [vmem:[%s1319 + $0x18] sm:$0xf]
        %v1445 = vld [vmem:[%s1319 + $0x1c] sm:$0xf]
        %v1446 = vld [vmem:[%s1319 + $0x20] sm:$0xf]
        %v1447 = vld [vmem:[%s1319 + $0x24] sm:$0xf]
        %v1448 = vld [vmem:[%s1319 + $0x28] sm:$0xf]
        %v1449 = vld [vmem:[%s1319 + $0x2c] sm:$0xf]
        %v1450 = vld [vmem:[%s1319 + $0x30] sm:$0xf]
        %v1451 = vld [vmem:[%s1319 + $0x34] sm:$0xf]
        %v1452 = vld [vmem:[%s1319 + $0x38] sm:$0xf]
        %v1453 = vld [vmem:[%s1319 + $0x3c] sm:$0xf]
        %v1454 = vld [vmem:[%s1330] sm:$0xf]
        %v1455 = vld [vmem:[%s1330 + $0x4] sm:$0xf]
        %v1456 = vld [vmem:[%s1330 + $0x8] sm:$0xf]
        %v1457 = vld [vmem:[%s1330 + $0xc] sm:$0x3]
        %v1458 = vld [vmem:[%s1181] sm:$0x1]
        %v1460 = vlaneseq
        %v1461 = vshrl.u32 %v1460, 7
        %v1462 = vsub.s32 0, %v1461
        %v1463 = vrot.slane %v1458, %v1462
        %v1481 = vunpack.c.l.b16 %v1438
        %v1482 = vunpack.c.l.b16 %v1439
        %v1483 = vunpack.c.l.b16 %v1440
        %v1484 = vunpack.c.l.b16 %v1441
        %v1485 = vunpack.c.l.b16 %v1442
        %v1486 = vunpack.c.l.b16 %v1443
        %v1487 = vunpack.c.l.b16 %v1444
        %v1488 = vunpack.c.l.b16 %v1445
        %v1489 = vunpack.c.l.b16 %v1446
        %v1490 = vunpack.c.l.b16 %v1447
        %v1491 = vunpack.c.l.b16 %v1448
        %v1492 = vunpack.c.l.b16 %v1449
        %v1493 = vunpack.c.l.b16 %v1450
        %v1494 = vunpack.c.l.b16 %v1451
        %v1495 = vunpack.c.l.b16 %v1452
        %v1496 = vunpack.c.l.b16 %v1453
        %v1497 = vpack.c.b16 %v1482, %v1481
        %v1498 = vpack.c.b16 %v1484, %v1483
        %v1499 = vpack.c.b16 %v1486, %v1485
        %v1500 = vpack.c.b16 %v1488, %v1487
        %v1501 = vpack.c.b16 %v1490, %v1489
        %v1502 = vpack.c.b16 %v1492, %v1491
        %v1503 = vpack.c.b16 %v1494, %v1493
        %v1504 = vpack.c.b16 %v1496, %v1495
        %v1509 = vunpack.c.l.b16 %v1454
        %v1510 = vunpack.c.l.b16 %v1455
        %v1511 = vunpack.c.l.b16 %v1456
        %v1512 = vunpack.c.l.b16 %v1457
        %v1513 = vpack.c.b16 %v1510, %v1509
        %v1514 = vpack.c.b16 %v1512, %v1511
        %vm1516 = vcmask 220160
        %v1518 = vsel %vm1516, %v1497, 0
        %v1521 = vsel %vm1516, %v1498, 0
        %v1524 = vsel %vm1516, %v1499, 0
        %v1527 = vsel %vm1516, %v1500, 0
        %v1530 = vsel %vm1516, %v1501, 0
        %v1533 = vsel %vm1516, %v1502, 0
        %v1536 = vsel %vm1516, %v1503, 0
        %v1539 = vsel %vm1516, %v1504, 0
        %v1541 = vsel %vm1430, 4294967295, 65535
        %v1542 = vsel %vm1432, %v1541, 0
        %v1544 = vand.u32 %v1514, %v1542
        %1546 = vmatprep.subr.bf16.mxu0 0
        %1547 = vmatpush1.bf16.msra.mxu0 %v1513
        %1548 = vmatprep.subr.bf16.mxu0 0
        %1549 = vmatpush1.bf16.msra.mxu0 %v1544
        %1550 = vmatprep.subr.bf16.mxu0 0
        %1551 = vmatpush1.bf16.msra.mxu0 0
        %1552 = vmatprep.subr.bf16.mxu0 0
        %1553 = vmatpush1.bf16.msra.mxu0 0
        %1554 = vmatprep.subr.bf16.mxu0 0
        %1555 = vmatpush1.bf16.msra.mxu0 0
        %1556 = vmatprep.subr.bf16.mxu0 0
        %1557 = vmatpush1.bf16.msra.mxu0 0
        %1558 = vmatprep.subr.bf16.mxu0 0
        %1559 = vmatpush1.bf16.msra.mxu0 0
        %1560 = vmatprep.subr.bf16.mxu0 0
        %1561 = vmatpush1.bf16.msra.mxu0 0
        %1562 = vmatprep.subr.bf16.mxu0 0
        %1563 = vmatpush1.bf16.msra.mxu0 0
        %1564 = vmatprep.subr.bf16.mxu0 0
        %1565 = vmatpush1.bf16.msra.mxu0 0
        %1566 = vmatprep.subr.bf16.mxu0 0
        %1567 = vmatpush1.bf16.msra.mxu0 0
        %1568 = vmatprep.subr.bf16.mxu0 0
        %1569 = vmatpush1.bf16.msra.mxu0 0
        %1570 = vmatprep.subr.bf16.mxu0 0
        %1571 = vmatpush1.bf16.msra.mxu0 0
        %1572 = vmatprep.subr.bf16.mxu0 0
        %1573 = vmatpush1.bf16.msra.mxu0 0
        %1574 = vmatprep.subr.bf16.mxu0 0
        %1575 = vmatpush1.bf16.msra.mxu0 0
        %1576 = vmatprep.subr.bf16.mxu0 0
        %1577 = vmatpush1.bf16.msra.mxu0 0
        %1578 = vmatprep.mubr.bf16.mxu0 0
        %1579 = vmatmul.mubr.bf16.gmra.mrb[0].mxu0 %v1518
        %v1580 = vpop.f32.mrb[0].mxu0
        %v1581 = vadd.f32 %v1463, %v1580
        %v1582 = vpop.f32.mrb[0].mxu0
        %v1583 = vpop.f32.mrb[0].mxu0
        %v1584 = vadd.f32 %v1463, %v1583
        %v1585 = vpop.f32.mrb[0].mxu0
        %1586 = vmatprep.mubr.bf16.mxu0 0
        %1587 = vmatmul.mubr.bf16.gmra.mrb[0].mxu0 %v1521
        %v1588 = vpop.f32.mrb[0].mxu0
        %v1589 = vadd.f32 %v1463, %v1588
        %v1590 = vpop.f32.mrb[0].mxu0
        %v1591 = vpop.f32.mrb[0].mxu0
        %v1592 = vadd.f32 %v1463, %v1591
        %v1593 = vpop.f32.mrb[0].mxu0
        %1594 = vmatprep.mubr.bf16.mxu0 0
        %1595 = vmatmul.mubr.bf16.gmra.mrb[0].mxu0 %v1524
        %v1596 = vpop.f32.mrb[0].mxu0
        %v1597 = vadd.f32 %v1463, %v1596
        %v1598 = vpop.f32.mrb[0].mxu0
        %v1599 = vpop.f32.mrb[0].mxu0
        %v1600 = vadd.f32 %v1463, %v1599
        %v1601 = vpop.f32.mrb[0].mxu0
        %1602 = vmatprep.mubr.bf16.mxu0 0
        %1603 = vmatmul.mubr.bf16.gmra.mrb[0].mxu0 %v1527
        %v1604 = vpop.f32.mrb[0].mxu0
        %v1605 = vadd.f32 %v1463, %v1604
        %v1606 = vpop.f32.mrb[0].mxu0
        %v1607 = vpop.f32.mrb[0].mxu0
        %v1608 = vadd.f32 %v1463, %v1607
        %v1609 = vpop.f32.mrb[0].mxu0
        %1610 = vmatprep.mubr.bf16.mxu0 0
        %1611 = vmatmul.mubr.bf16.gmra.mrb[0].mxu0 %v1530
        %v1612 = vpop.f32.mrb[0].mxu0
        %v1613 = vadd.f32 %v1463, %v1612
        %v1614 = vpop.f32.mrb[0].mxu0
        %v1615 = vpop.f32.mrb[0].mxu0
        %v1616 = vadd.f32 %v1463, %v1615
        %v1617 = vpop.f32.mrb[0].mxu0
        %1618 = vmatprep.mubr.bf16.mxu0 0
        %1619 = vmatmul.mubr.bf16.gmra.mrb[0].mxu0 %v1533
        %v1620 = vpop.f32.mrb[0].mxu0
        %v1621 = vadd.f32 %v1463, %v1620
        %v1622 = vpop.f32.mrb[0].mxu0
        %v1623 = vpop.f32.mrb[0].mxu0
        %v1624 = vadd.f32 %v1463, %v1623
        %v1625 = vpop.f32.mrb[0].mxu0
        %1626 = vmatprep.mubr.bf16.mxu0 0
        %1627 = vmatmul.mubr.bf16.gmra.mrb[0].mxu0 %v1536
        %v1628 = vpop.f32.mrb[0].mxu0
        %v1629 = vadd.f32 %v1463, %v1628
        %v1630 = vpop.f32.mrb[0].mxu0
        %v1631 = vpop.f32.mrb[0].mxu0
        %v1632 = vadd.f32 %v1463, %v1631
        %v1633 = vpop.f32.mrb[0].mxu0
        %1634 = vmatprep.mubr.bf16.mxu0 0
        %1635 = vmatmul.mubr.bf16.gmra.mrb[0].mxu0 %v1539
        %v1636 = vpop.f32.mrb[0].mxu0
        %v1637 = vadd.f32 %v1463, %v1636
        %v1638 = vpop.f32.mrb[0].mxu0
        %v1639 = vpop.f32.mrb[0].mxu0
        %v1640 = vadd.f32 %v1463, %v1639
        %v1641 = vpop.f32.mrb[0].mxu0
        %1642 = vdwg.mxu0
        %v1643 = vld [vmem:[%s1174] sm:$0xf]
        %v1644 = vld [vmem:[%s1174 + $0x4] sm:$0xf]
        %v1645 = vld [vmem:[%s1174 + $0x8] sm:$0xf]
        %v1646 = vld [vmem:[%s1174 + $0xc] sm:$0xf]
        %v1647 = vld [vmem:[%s1174 + $0x10] sm:$0xf]
        %v1648 = vld [vmem:[%s1174 + $0x14] sm:$0xf]
        %v1649 = vld [vmem:[%s1174 + $0x18] sm:$0xf]
        %v1650 = vld [vmem:[%s1174 + $0x1c] sm:$0xf]
        %v1651 = vld [vmem:[%s1174 + $0x20] sm:$0xf]
        %v1652 = vld [vmem:[%s1174 + $0x24] sm:$0xf]
        %v1653 = vld [vmem:[%s1174 + $0x28] sm:$0xf]
        %v1654 = vld [vmem:[%s1174 + $0x2c] sm:$0xf]
        %v1655 = vld [vmem:[%s1174 + $0x30] sm:$0xf]
        %v1656 = vld [vmem:[%s1174 + $0x34] sm:$0xf]
        %v1657 = vld [vmem:[%s1174 + $0x38] sm:$0xf]
        %v1658 = vld [vmem:[%s1174 + $0x3c] sm:$0xf]
        %v1659 = vld [vmem:[%s1174 + $0x40] sm:$0xf]
        %v1660 = vld [vmem:[%s1174 + $0x44] sm:$0xf]
        %v1661 = vld [vmem:[%s1174 + $0x48] sm:$0xf]
        %v1662 = vld [vmem:[%s1174 + $0x4c] sm:$0xf]
        %v1663 = vld [vmem:[%s1174 + $0x50] sm:$0xf]
        %v1664 = vld [vmem:[%s1174 + $0x54] sm:$0xf]
        %v1665 = vld [vmem:[%s1174 + $0x58] sm:$0xf]
        %v1666 = vld [vmem:[%s1174 + $0x5c] sm:$0xf]
        %v1667 = vld [vmem:[%s1174 + $0x60] sm:$0xf]
        %v1668 = vld [vmem:[%s1174 + $0x64] sm:$0xf]
        %v1669 = vld [vmem:[%s1174 + $0x68] sm:$0xf]
        %v1670 = vld [vmem:[%s1174 + $0x6c] sm:$0xf]
        %v1671 = vld [vmem:[%s1174 + $0x70] sm:$0xf]
        %v1672 = vld [vmem:[%s1174 + $0x74] sm:$0xf]
        %v1673 = vld [vmem:[%s1174 + $0x78] sm:$0xf]
        %v1674 = vld [vmem:[%s1174 + $0x7c] sm:$0xf]
        %v1675 = vld [vmem:[%s1174 + $0x80] sm:$0xf]
        %v1676 = vld [vmem:[%s1174 + $0x84] sm:$0xf]
        %v1677 = vld [vmem:[%s1174 + $0x88] sm:$0xf]
        %v1678 = vld [vmem:[%s1174 + $0x8c] sm:$0xf]
        %v1679 = vld [vmem:[%s1174 + $0x90] sm:$0xf]
        %v1680 = vld [vmem:[%s1174 + $0x94] sm:$0xf]
        %v1681 = vld [vmem:[%s1174 + $0x98] sm:$0xf]
        %v1682 = vld [vmem:[%s1174 + $0x9c] sm:$0xf]
        %v1683 = vld [vmem:[%s1174 + $0xa0] sm:$0xf]
        %v1684 = vld [vmem:[%s1174 + $0xa4] sm:$0xf]
        %v1685 = vld [vmem:[%s1174 + $0xa8] sm:$0xf]
        %v1686 = vld [vmem:[%s1174 + $0xac] sm:$0xf]
        %v1687 = vld [vmem:[%s1174 + $0xb0] sm:$0xf]
        %v1688 = vld [vmem:[%s1174 + $0xb4] sm:$0xf]
        %v1689 = vld [vmem:[%s1174 + $0xb8] sm:$0xf]
        %v1690 = vld [vmem:[%s1174 + $0xbc] sm:$0xf]
        %v1691 = vld [vmem:[%s1174 + $0xc0] sm:$0xf]
        %v1692 = vld [vmem:[%s1174 + $0xc4] sm:$0xf]
        %v1693 = vld [vmem:[%s1174 + $0xc8] sm:$0xf]
        %v1694 = vld [vmem:[%s1174 + $0xcc] sm:$0xf]
        %v1695 = vld [vmem:[%s1174 + $0xd0] sm:$0xf]
        %v1696 = vld [vmem:[%s1174 + $0xd4] sm:$0xf]
        %v1697 = vld [vmem:[%s1174 + $0xd8] sm:$0xf]
        %v1698 = vld [vmem:[%s1174 + $0xdc] sm:$0xf]
        %v1699 = vld [vmem:[%s1174 + $0xe0] sm:$0xf]
        %v1700 = vld [vmem:[%s1174 + $0xe4] sm:$0xf]
        %v1701 = vld [vmem:[%s1174 + $0xe8] sm:$0xf]
        %v1702 = vld [vmem:[%s1174 + $0xec] sm:$0xf]
        %v1703 = vld [vmem:[%s1174 + $0xf0] sm:$0xf]
        %v1704 = vld [vmem:[%s1174 + $0xf4] sm:$0xf]
        %v1705 = vld [vmem:[%s1174 + $0xf8] sm:$0xf]
        %v1706 = vld [vmem:[%s1174 + $0xfc] sm:$0xf]
        %v1707 = vld [vmem:[%s1174 + $0x100] sm:$0xf]
        %v1708 = vld [vmem:[%s1174 + $0x104] sm:$0xf]
        %v1709 = vld [vmem:[%s1174 + $0x108] sm:$0xf]
        %v1710 = vld [vmem:[%s1174 + $0x10c] sm:$0xf]
        %v1711 = vld [vmem:[%s1174 + $0x110] sm:$0xf]
        %v1712 = vld [vmem:[%s1174 + $0x114] sm:$0xf]
        %v1713 = vld [vmem:[%s1174 + $0x118] sm:$0xf]
        %v1714 = vld [vmem:[%s1174 + $0x11c] sm:$0xf]
        %v1715 = vld [vmem:[%s1174 + $0x120] sm:$0xf]
        %v1716 = vld [vmem:[%s1174 + $0x124] sm:$0xf]
        %v1717 = vld [vmem:[%s1174 + $0x128] sm:$0xf]
        %v1718 = vld [vmem:[%s1174 + $0x12c] sm:$0xf]
        %v1719 = vld [vmem:[%s1174 + $0x130] sm:$0xf]
        %v1720 = vld [vmem:[%s1174 + $0x134] sm:$0xf]
        %v1721 = vld [vmem:[%s1174 + $0x138] sm:$0xf]
        %v1722 = vld [vmem:[%s1174 + $0x13c] sm:$0xf]
        %v1723 = vld [vmem:[%s1174 + $0x140] sm:$0xf]
        %v1724 = vld [vmem:[%s1174 + $0x144] sm:$0xf]
        %v1725 = vld [vmem:[%s1174 + $0x148] sm:$0xf]
        %v1726 = vld [vmem:[%s1174 + $0x14c] sm:$0xf]
        %v1727 = vld [vmem:[%s1174 + $0x150] sm:$0xf]
        %v1728 = vld [vmem:[%s1174 + $0x154] sm:$0xf]
        %v1729 = vld [vmem:[%s1174 + $0x158] sm:$0xf]
        %v1730 = vld [vmem:[%s1174 + $0x15c] sm:$0xf]
        %v1731 = vld [vmem:[%s1174 + $0x160] sm:$0xf]
        %v1732 = vld [vmem:[%s1174 + $0x164] sm:$0xf]
        %v1733 = vld [vmem:[%s1174 + $0x168] sm:$0xf]
        %v1734 = vld [vmem:[%s1174 + $0x16c] sm:$0xf]
        %v1735 = vld [vmem:[%s1174 + $0x170] sm:$0xf]
        %v1736 = vld [vmem:[%s1174 + $0x174] sm:$0xf]
        %v1737 = vld [vmem:[%s1174 + $0x178] sm:$0xf]
        %v1738 = vld [vmem:[%s1174 + $0x17c] sm:$0xf]
        %v1739 = vld [vmem:[%s1174 + $0x180] sm:$0xf]
        %v1740 = vld [vmem:[%s1174 + $0x184] sm:$0xf]
        %v1741 = vld [vmem:[%s1174 + $0x188] sm:$0xf]
        %v1742 = vld [vmem:[%s1174 + $0x18c] sm:$0xf]
        %v1743 = vld [vmem:[%s1174 + $0x190] sm:$0xf]
        %v1744 = vld [vmem:[%s1174 + $0x194] sm:$0xf]
        %v1745 = vld [vmem:[%s1174 + $0x198] sm:$0xf]
        %v1746 = vld [vmem:[%s1174 + $0x19c] sm:$0xf]
        %v1747 = vld [vmem:[%s1174 + $0x1a0] sm:$0xf]
        %v1748 = vld [vmem:[%s1174 + $0x1a4] sm:$0xf]
        %v1749 = vld [vmem:[%s1174 + $0x1a8] sm:$0xf]
        %v1750 = vld [vmem:[%s1174 + $0x1ac] sm:$0xf]
        %v1751 = vld [vmem:[%s1174 + $0x1b0] sm:$0xf]
        %v1752 = vld [vmem:[%s1174 + $0x1b4] sm:$0xf]
        %v1753 = vld [vmem:[%s1174 + $0x1b8] sm:$0xf]
        %v1754 = vld [vmem:[%s1174 + $0x1bc] sm:$0xf]
        %v1755 = vld [vmem:[%s1174 + $0x1c0] sm:$0xf]
        %v1756 = vld [vmem:[%s1174 + $0x1c4] sm:$0xf]
        %v1757 = vld [vmem:[%s1174 + $0x1c8] sm:$0xf]
        %v1758 = vld [vmem:[%s1174 + $0x1cc] sm:$0xf]
        %v1759 = vld [vmem:[%s1174 + $0x1d0] sm:$0xf]
        %v1760 = vld [vmem:[%s1174 + $0x1d4] sm:$0xf]
        %v1761 = vld [vmem:[%s1174 + $0x1d8] sm:$0xf]
        %v1762 = vld [vmem:[%s1174 + $0x1dc] sm:$0xf]
        %v1763 = vld [vmem:[%s1174 + $0x1e0] sm:$0xf]
        %v1764 = vld [vmem:[%s1174 + $0x1e4] sm:$0xf]
        %v1765 = vld [vmem:[%s1174 + $0x1e8] sm:$0xf]
        %v1766 = vld [vmem:[%s1174 + $0x1ec] sm:$0xf]
        %v1767 = vld [vmem:[%s1174 + $0x1f0] sm:$0xf]
        %v1768 = vld [vmem:[%s1174 + $0x1f4] sm:$0xf]
        %v1769 = vld [vmem:[%s1174 + $0x1f8] sm:$0xf]
        %v1770 = vld [vmem:[%s1174 + $0x1fc] sm:$0xf]
        %v1771 = vld [vmem:[%s1325] sm:$0xf]
        %v1772 = vld [vmem:[%s1325 + $0x4] sm:$0x3]
        %v1901 = vunpack.c.l.b16 %v1643
        %v1902 = vunpack.c.l.b16 %v1644
        %v1903 = vunpack.c.l.b16 %v1645
        %v1904 = vunpack.c.l.b16 %v1646
        %v1905 = vunpack.c.l.b16 %v1647
        %v1906 = vunpack.c.l.b16 %v1648
        %v1907 = vunpack.c.l.b16 %v1649
        %v1908 = vunpack.c.l.b16 %v1650
        %v1909 = vunpack.c.l.b16 %v1651
        %v1910 = vunpack.c.l.b16 %v1652
        %v1911 = vunpack.c.l.b16 %v1653
        %v1912 = vunpack.c.l.b16 %v1654
        %v1913 = vunpack.c.l.b16 %v1655
        %v1914 = vunpack.c.l.b16 %v1656
        %v1915 = vunpack.c.l.b16 %v1657
        %v1916 = vunpack.c.l.b16 %v1658
        %v1917 = vunpack.c.l.b16 %v1659
        %v1918 = vunpack.c.l.b16 %v1660
        %v1919 = vunpack.c.l.b16 %v1661
        %v1920 = vunpack.c.l.b16 %v1662
        %v1921 = vunpack.c.l.b16 %v1663
        %v1922 = vunpack.c.l.b16 %v1664
        %v1923 = vunpack.c.l.b16 %v1665
        %v1924 = vunpack.c.l.b16 %v1666
        %v1925 = vunpack.c.l.b16 %v1667
        %v1926 = vunpack.c.l.b16 %v1668
        %v1927 = vunpack.c.l.b16 %v1669
        %v1928 = vunpack.c.l.b16 %v1670
        %v1929 = vunpack.c.l.b16 %v1671
        %v1930 = vunpack.c.l.b16 %v1672
        %v1931 = vunpack.c.l.b16 %v1673
        %v1932 = vunpack.c.l.b16 %v1674
        %v1933 = vunpack.c.l.b16 %v1675
        %v1934 = vunpack.c.l.b16 %v1676
        %v1935 = vunpack.c.l.b16 %v1677
        %v1936 = vunpack.c.l.b16 %v1678
        %v1937 = vunpack.c.l.b16 %v1679
        %v1938 = vunpack.c.l.b16 %v1680
        %v1939 = vunpack.c.l.b16 %v1681
        %v1940 = vunpack.c.l.b16 %v1682
        %v1941 = vunpack.c.l.b16 %v1683
        %v1942 = vunpack.c.l.b16 %v1684
        %v1943 = vunpack.c.l.b16 %v1685
        %v1944 = vunpack.c.l.b16 %v1686
        %v1945 = vunpack.c.l.b16 %v1687
        %v1946 = vunpack.c.l.b16 %v1688
        %v1947 = vunpack.c.l.b16 %v1689
        %v1948 = vunpack.c.l.b16 %v1690
        %v1949 = vunpack.c.l.b16 %v1691
        %v1950 = vunpack.c.l.b16 %v1692
        %v1951 = vunpack.c.l.b16 %v1693
        %v1952 = vunpack.c.l.b16 %v1694
        %v1953 = vunpack.c.l.b16 %v1695
        %v1954 = vunpack.c.l.b16 %v1696
        %v1955 = vunpack.c.l.b16 %v1697
        %v1956 = vunpack.c.l.b16 %v1698
        %v1957 = vunpack.c.l.b16 %v1699
        %v1958 = vunpack.c.l.b16 %v1700
        %v1959 = vunpack.c.l.b16 %v1701
        %v1960 = vunpack.c.l.b16 %v1702
        %v1961 = vunpack.c.l.b16 %v1703
        %v1962 = vunpack.c.l.b16 %v1704
        %v1963 = vunpack.c.l.b16 %v1705
        %v1964 = vunpack.c.l.b16 %v1706
        %v1965 = vunpack.c.l.b16 %v1707
        %v1966 = vunpack.c.l.b16 %v1708
        %v1967 = vunpack.c.l.b16 %v1709
        %v1968 = vunpack.c.l.b16 %v1710
        %v1969 = vunpack.c.l.b16 %v1711
        %v1970 = vunpack.c.l.b16 %v1712
        %v1971 = vunpack.c.l.b16 %v1713
        %v1972 = vunpack.c.l.b16 %v1714
        %v1973 = vunpack.c.l.b16 %v1715
        %v1974 = vunpack.c.l.b16 %v1716
        %v1975 = vunpack.c.l.b16 %v1717
        %v1976 = vunpack.c.l.b16 %v1718
        %v1977 = vunpack.c.l.b16 %v1719
        %v1978 = vunpack.c.l.b16 %v1720
        %v1979 = vunpack.c.l.b16 %v1721
        %v1980 = vunpack.c.l.b16 %v1722
        %v1981 = vunpack.c.l.b16 %v1723
        %v1982 = vunpack.c.l.b16 %v1724
        %v1983 = vunpack.c.l.b16 %v1725
        %v1984 = vunpack.c.l.b16 %v1726
        %v1985 = vunpack.c.l.b16 %v1727
        %v1986 = vunpack.c.l.b16 %v1728
        %v1987 = vunpack.c.l.b16 %v1729
        %v1988 = vunpack.c.l.b16 %v1730
        %v1989 = vunpack.c.l.b16 %v1731
        %v1990 = vunpack.c.l.b16 %v1732
        %v1991 = vunpack.c.l.b16 %v1733
        %v1992 = vunpack.c.l.b16 %v1734
        %v1993 = vunpack.c.l.b16 %v1735
        %v1994 = vunpack.c.l.b16 %v1736
        %v1995 = vunpack.c.l.b16 %v1737
        %v1996 = vunpack.c.l.b16 %v1738
        %v1997 = vunpack.c.l.b16 %v1739
        %v1998 = vunpack.c.l.b16 %v1740
        %v1999 = vunpack.c.l.b16 %v1741
        %v2000 = vunpack.c.l.b16 %v1742
        %v2001 = vunpack.c.l.b16 %v1743
        %v2002 = vunpack.c.l.b16 %v1744
        %v2003 = vunpack.c.l.b16 %v1745
        %v2004 = vunpack.c.l.b16 %v1746
        %v2005 = vunpack.c.l.b16 %v1747
        %v2006 = vunpack.c.l.b16 %v1748
        %v2007 = vunpack.c.l.b16 %v1749
        %v2008 = vunpack.c.l.b16 %v1750
        %v2009 = vunpack.c.l.b16 %v1751
        %v2010 = vunpack.c.l.b16 %v1752
        %v2011 = vunpack.c.l.b16 %v1753
        %v2012 = vunpack.c.l.b16 %v1754
        %v2013 = vunpack.c.l.b16 %v1755
        %v2014 = vunpack.c.l.b16 %v1756
        %v2015 = vunpack.c.l.b16 %v1757
        %v2016 = vunpack.c.l.b16 %v1758
        %v2017 = vunpack.c.l.b16 %v1759
        %v2018 = vunpack.c.l.b16 %v1760
        %v2019 = vunpack.c.l.b16 %v1761
        %v2020 = vunpack.c.l.b16 %v1762
        %v2021 = vunpack.c.l.b16 %v1763
        %v2022 = vunpack.c.l.b16 %v1764
        %v2023 = vunpack.c.l.b16 %v1765
        %v2024 = vunpack.c.l.b16 %v1766
        %v2025 = vunpack.c.l.b16 %v1767
        %v2026 = vunpack.c.l.b16 %v1768
        %v2027 = vunpack.c.l.b16 %v1769
        %v2028 = vunpack.c.l.b16 %v1770
        %v2029 = vpack.c.b16 %v1902, %v1901
        %v2030 = vpack.c.b16 %v1904, %v1903
        %v2031 = vpack.c.b16 %v1906, %v1905
        %v2032 = vpack.c.b16 %v1908, %v1907
        %v2033 = vpack.c.b16 %v1910, %v1909
        %v2034 = vpack.c.b16 %v1912, %v1911
        %v2035 = vpack.c.b16 %v1914, %v1913
        %v2036 = vpack.c.b16 %v1916, %v1915
        %v2037 = vpack.c.b16 %v1918, %v1917
        %v2038 = vpack.c.b16 %v1920, %v1919
        %v2039 = vpack.c.b16 %v1922, %v1921
        %v2040 = vpack.c.b16 %v1924, %v1923
        %v2041 = vpack.c.b16 %v1926, %v1925
        %v2042 = vpack.c.b16 %v1928, %v1927
        %v2043 = vpack.c.b16 %v1930, %v1929
        %v2044 = vpack.c.b16 %v1932, %v1931
        %v2045 = vpack.c.b16 %v1934, %v1933
        %v2046 = vpack.c.b16 %v1936, %v1935
        %v2047 = vpack.c.b16 %v1938, %v1937
        %v2048 = vpack.c.b16 %v1940, %v1939
        %v2049 = vpack.c.b16 %v1942, %v1941
        %v2050 = vpack.c.b16 %v1944, %v1943
        %v2051 = vpack.c.b16 %v1946, %v1945
        %v2052 = vpack.c.b16 %v1948, %v1947
        %v2053 = vpack.c.b16 %v1950, %v1949
        %v2054 = vpack.c.b16 %v1952, %v1951
        %v2055 = vpack.c.b16 %v1954, %v1953
        %v2056 = vpack.c.b16 %v1956, %v1955
        %v2057 = vpack.c.b16 %v1958, %v1957
        %v2058 = vpack.c.b16 %v1960, %v1959
        %v2059 = vpack.c.b16 %v1962, %v1961
        %v2060 = vpack.c.b16 %v1964, %v1963
        %v2061 = vpack.c.b16 %v1966, %v1965
        %v2062 = vpack.c.b16 %v1968, %v1967
        %v2063 = vpack.c.b16 %v1970, %v1969
        %v2064 = vpack.c.b16 %v1972, %v1971
        %v2065 = vpack.c.b16 %v1974, %v1973
        %v2066 = vpack.c.b16 %v1976, %v1975
        %v2067 = vpack.c.b16 %v1978, %v1977
        %v2068 = vpack.c.b16 %v1980, %v1979
        %v2069 = vpack.c.b16 %v1982, %v1981
        %v2070 = vpack.c.b16 %v1984, %v1983
        %v2071 = vpack.c.b16 %v1986, %v1985
        %v2072 = vpack.c.b16 %v1988, %v1987
        %v2073 = vpack.c.b16 %v1990, %v1989
        %v2074 = vpack.c.b16 %v1992, %v1991
        %v2075 = vpack.c.b16 %v1994, %v1993
        %v2076 = vpack.c.b16 %v1996, %v1995
        %v2077 = vpack.c.b16 %v1998, %v1997
        %v2078 = vpack.c.b16 %v2000, %v1999
        %v2079 = vpack.c.b16 %v2002, %v2001
        %v2080 = vpack.c.b16 %v2004, %v2003
        %v2081 = vpack.c.b16 %v2006, %v2005
        %v2082 = vpack.c.b16 %v2008, %v2007
        %v2083 = vpack.c.b16 %v2010, %v2009
        %v2084 = vpack.c.b16 %v2012, %v2011
        %v2085 = vpack.c.b16 %v2014, %v2013
        %v2086 = vpack.c.b16 %v2016, %v2015
        %v2087 = vpack.c.b16 %v2018, %v2017
        %v2088 = vpack.c.b16 %v2020, %v2019
        %v2089 = vpack.c.b16 %v2022, %v2021
        %v2090 = vpack.c.b16 %v2024, %v2023
        %v2091 = vpack.c.b16 %v2026, %v2025
        %v2092 = vpack.c.b16 %v2028, %v2027
        %v2095 = vunpack.c.l.b16 %v1771
        %v2096 = vunpack.c.l.b16 %v1772
        %v2097 = vpack.c.b16 %v2096, %v2095
        %vm2098 = vcmask 97280
        %v2100 = vsel %vm2098, %v2029, 0
        %v2103 = vsel %vm2098, %v2030, 0
        %v2106 = vsel %vm2098, %v2031, 0
        %v2109 = vsel %vm2098, %v2032, 0
        %v2112 = vsel %vm2098, %v2033, 0
        %v2115 = vsel %vm2098, %v2034, 0
        %v2118 = vsel %vm2098, %v2035, 0
        %v2121 = vsel %vm2098, %v2036, 0
        %v2124 = vsel %vm2098, %v2037, 0
        %v2127 = vsel %vm2098, %v2038, 0
        %v2130 = vsel %vm2098, %v2039, 0
        %v2133 = vsel %vm2098, %v2040, 0
        %v2136 = vsel %vm2098, %v2041, 0
        %v2139 = vsel %vm2098, %v2042, 0
        %v2142 = vsel %vm2098, %v2043, 0
        %v2145 = vsel %vm2098, %v2044, 0
        %v2148 = vsel %vm2098, %v2045, 0
        %v2151 = vsel %vm2098, %v2046, 0
        %v2154 = vsel %vm2098, %v2047, 0
        %v2157 = vsel %vm2098, %v2048, 0
        %v2160 = vsel %vm2098, %v2049, 0
        %v2163 = vsel %vm2098, %v2050, 0
        %v2166 = vsel %vm2098, %v2051, 0
        %v2169 = vsel %vm2098, %v2052, 0
        %v2172 = vsel %vm2098, %v2053, 0
        %v2175 = vsel %vm2098, %v2054, 0
        %v2178 = vsel %vm2098, %v2055, 0
        %v2181 = vsel %vm2098, %v2056, 0
        %v2184 = vsel %vm2098, %v2057, 0
        %v2187 = vsel %vm2098, %v2058, 0
        %v2190 = vsel %vm2098, %v2059, 0
        %v2193 = vsel %vm2098, %v2060, 0
        %v2196 = vsel %vm2098, %v2061, 0
        %v2199 = vsel %vm2098, %v2062, 0
        %v2202 = vsel %vm2098, %v2063, 0
        %v2205 = vsel %vm2098, %v2064, 0
        %v2208 = vsel %vm2098, %v2065, 0
        %v2211 = vsel %vm2098, %v2066, 0
        %v2214 = vsel %vm2098, %v2067, 0
        %v2217 = vsel %vm2098, %v2068, 0
        %v2220 = vsel %vm2098, %v2069, 0
        %v2223 = vsel %vm2098, %v2070, 0
        %v2226 = vsel %vm2098, %v2071, 0
        %v2229 = vsel %vm2098, %v2072, 0
        %v2232 = vsel %vm2098, %v2073, 0
        %v2235 = vsel %vm2098, %v2074, 0
        %v2238 = vsel %vm2098, %v2075, 0
        %v2241 = vsel %vm2098, %v2076, 0
        %v2244 = vsel %vm2098, %v2077, 0
        %v2247 = vsel %vm2098, %v2078, 0
        %v2250 = vsel %vm2098, %v2079, 0
        %v2253 = vsel %vm2098, %v2080, 0
        %v2256 = vsel %vm2098, %v2081, 0
        %v2259 = vsel %vm2098, %v2082, 0
        %v2262 = vsel %vm2098, %v2083, 0
        %v2265 = vsel %vm2098, %v2084, 0
        %v2268 = vsel %vm2098, %v2085, 0
        %v2271 = vsel %vm2098, %v2086, 0
        %v2274 = vsel %vm2098, %v2087, 0
        %v2277 = vsel %vm2098, %v2088, 0
        %v2280 = vsel %vm2098, %v2089, 0
        %v2283 = vsel %vm2098, %v2090, 0
        %v2286 = vsel %vm2098, %v2091, 0
        %v2289 = vsel %vm2098, %v2092, 0
        %v2292 = vsel %vm1432, %v2097, 0
        %2294 = vmatprep.subr.bf16.mxu0 0
        %2295 = vmatpush1.bf16.msra.mxu0 %v2292
        %2296 = vmatprep.subr.bf16.mxu0 0
        %2297 = vmatpush1.bf16.msra.mxu0 0
        %2298 = vmatprep.subr.bf16.mxu0 0
        %2299 = vmatpush1.bf16.msra.mxu0 0
        %2300 = vmatprep.subr.bf16.mxu0 0
        %2301 = vmatpush1.bf16.msra.mxu0 0
        %2302 = vmatprep.subr.bf16.mxu0 0
        %2303 = vmatpush1.bf16.msra.mxu0 0
        %2304 = vmatprep.subr.bf16.mxu0 0
        %2305 = vmatpush1.bf16.msra.mxu0 0
        %2306 = vmatprep.subr.bf16.mxu0 0
        %2307 = vmatpush1.bf16.msra.mxu0 0
        %2308 = vmatprep.subr.bf16.mxu0 0
        %2309 = vmatpush1.bf16.msra.mxu0 0
        %2310 = vmatprep.subr.bf16.mxu0 0
        %2311 = vmatpush1.bf16.msra.mxu0 0
        %2312 = vmatprep.subr.bf16.mxu0 0
        %2313 = vmatpush1.bf16.msra.mxu0 0
        %2314 = vmatprep.subr.bf16.mxu0 0
        %2315 = vmatpush1.bf16.msra.mxu0 0
        %2316 = vmatprep.subr.bf16.mxu0 0
        %2317 = vmatpush1.bf16.msra.mxu0 0
        %2318 = vmatprep.subr.bf16.mxu0 0
        %2319 = vmatpush1.bf16.msra.mxu0 0
        %2320 = vmatprep.subr.bf16.mxu0 0
        %2321 = vmatpush1.bf16.msra.mxu0 0
        %2322 = vmatprep.subr.bf16.mxu0 0
        %2323 = vmatpush1.bf16.msra.mxu0 0
        %2324 = vmatprep.subr.bf16.mxu0 0
        %2325 = vmatpush1.bf16.msra.mxu0 0
        %2326 = vmatprep.mubr.bf16.mxu0 0
        %2327 = vmatmul.mubr.bf16.gmra.mrb[0].mxu0 %v2100
        %v2328 = vpop.f32.mrb[0].mxu0
        %v2329 = vadd.f32 0.0, %v2328
        %v2330 = vpop.f32.mrb[0].mxu0
        %v2331 = vpop.f32.mrb[0].mxu0
        %v2332 = vadd.f32 0.0, %v2331
        %v2333 = vpop.f32.mrb[0].mxu0
        %2334 = vmatprep.mubr.bf16.mxu0 0
        %2335 = vmatmul.mubr.bf16.gmra.mrb[0].mxu0 %v2103
        %v2336 = vpop.f32.mrb[0].mxu0
        %v2337 = vadd.f32 0.0, %v2336
        %v2338 = vpop.f32.mrb[0].mxu0
        %v2339 = vpop.f32.mrb[0].mxu0
        %v2340 = vadd.f32 0.0, %v2339
        %v2341 = vpop.f32.mrb[0].mxu0
        %2342 = vmatprep.mubr.bf16.mxu0 0
        %2343 = vmatmul.mubr.bf16.gmra.mrb[0].mxu0 %v2106
        %v2344 = vpop.f32.mrb[0].mxu0
        %v2345 = vadd.f32 0.0, %v2344
        %v2346 = vpop.f32.mrb[0].mxu0
        %v2347 = vpop.f32.mrb[0].mxu0
        %v2348 = vadd.f32 0.0, %v2347
        %v2349 = vpop.f32.mrb[0].mxu0
        %2350 = vmatprep.mubr.bf16.mxu0 0
        %2351 = vmatmul.mubr.bf16.gmra.mrb[0].mxu0 %v2109
        %v2352 = vpop.f32.mrb[0].mxu0
        %v2353 = vadd.f32 0.0, %v2352
        %v2354 = vpop.f32.mrb[0].mxu0
        %v2355 = vpop.f32.mrb[0].mxu0
        %v2356 = vadd.f32 0.0, %v2355
        %v2357 = vpop.f32.mrb[0].mxu0
        %2358 = vmatprep.mubr.bf16.mxu0 0
        %2359 = vmatmul.mubr.bf16.gmra.mrb[0].mxu0 %v2112
        %v2360 = vpop.f32.mrb[0].mxu0
        %v2361 = vadd.f32 0.0, %v2360
        %v2362 = vpop.f32.mrb[0].mxu0
        %v2363 = vpop.f32.mrb[0].mxu0
        %v2364 = vadd.f32 0.0, %v2363
        %v2365 = vpop.f32.mrb[0].mxu0
        %2366 = vmatprep.mubr.bf16.mxu0 0
        %2367 = vmatmul.mubr.bf16.gmra.mrb[0].mxu0 %v2115
        %v2368 = vpop.f32.mrb[0].mxu0
        %v2369 = vadd.f32 0.0, %v2368
        %v2370 = vpop.f32.mrb[0].mxu0
        %v2371 = vpop.f32.mrb[0].mxu0
        %v2372 = vadd.f32 0.0, %v2371
        %v2373 = vpop.f32.mrb[0].mxu0
        %2374 = vmatprep.mubr.bf16.mxu0 0
        %2375 = vmatmul.mubr.bf16.gmra.mrb[0].mxu0 %v2118
        %v2376 = vpop.f32.mrb[0].mxu0
        %v2377 = vadd.f32 0.0, %v2376
        %v2378 = vpop.f32.mrb[0].mxu0
        %v2379 = vpop.f32.mrb[0].mxu0
        %v2380 = vadd.f32 0.0, %v2379
        %v2381 = vpop.f32.mrb[0].mxu0
        %2382 = vmatprep.mubr.bf16.mxu0 0
        %2383 = vmatmul.mubr.bf16.gmra.mrb[0].mxu0 %v2121
        %v2384 = vpop.f32.mrb[0].mxu0
        %v2385 = vadd.f32 0.0, %v2384
        %v2386 = vpop.f32.mrb[0].mxu0
        %v2387 = vpop.f32.mrb[0].mxu0
        %v2388 = vadd.f32 0.0, %v2387
        %v2389 = vpop.f32.mrb[0].mxu0
        %2390 = vmatprep.mubr.bf16.mxu0 0
        %2391 = vmatmul.mubr.bf16.gmra.mrb[0].mxu0 %v2124
        %v2392 = vpop.f32.mrb[0].mxu0
        %v2393 = vadd.f32 0.0, %v2392
        %v2394 = vpop.f32.mrb[0].mxu0
        %v2395 = vpop.f32.mrb[0].mxu0
        %v2396 = vadd.f32 0.0, %v2395
        %v2397 = vpop.f32.mrb[0].mxu0
        %2398 = vmatprep.mubr.bf16.mxu0 0
        %2399 = vmatmul.mubr.bf16.gmra.mrb[0].mxu0 %v2127
        %v2400 = vpop.f32.mrb[0].mxu0
        %v2401 = vadd.f32 0.0, %v2400
        %v2402 = vpop.f32.mrb[0].mxu0
        %v2403 = vpop.f32.mrb[0].mxu0
        %v2404 = vadd.f32 0.0, %v2403
        %v2405 = vpop.f32.mrb[0].mxu0
        %2406 = vmatprep.mubr.bf16.mxu0 0
        %2407 = vmatmul.mubr.bf16.gmra.mrb[0].mxu0 %v2130
        %v2408 = vpop.f32.mrb[0].mxu0
        %v2409 = vadd.f32 0.0, %v2408
        %v2410 = vpop.f32.mrb[0].mxu0
        %v2411 = vpop.f32.mrb[0].mxu0
        %v2412 = vadd.f32 0.0, %v2411
        %v2413 = vpop.f32.mrb[0].mxu0
        %2414 = vmatprep.mubr.bf16.mxu0 0
        %2415 = vmatmul.mubr.bf16.gmra.mrb[0].mxu0 %v2133
        %v2416 = vpop.f32.mrb[0].mxu0
        %v2417 = vadd.f32 0.0, %v2416
        %v2418 = vpop.f32.mrb[0].mxu0
        %v2419 = vpop.f32.mrb[0].mxu0
        %v2420 = vadd.f32 0.0, %v2419
        %v2421 = vpop.f32.mrb[0].mxu0
        %2422 = vmatprep.mubr.bf16.mxu0 0
        %2423 = vmatmul.mubr.bf16.gmra.mrb[0].mxu0 %v2136
        %v2424 = vpop.f32.mrb[0].mxu0
        %v2425 = vadd.f32 0.0, %v2424
        %v2426 = vpop.f32.mrb[0].mxu0
        %v2427 = vpop.f32.mrb[0].mxu0
        %v2428 = vadd.f32 0.0, %v2427
        %v2429 = vpop.f32.mrb[0].mxu0
        %2430 = vmatprep.mubr.bf16.mxu0 0
        %2431 = vmatmul.mubr.bf16.gmra.mrb[0].mxu0 %v2139
        %v2432 = vpop.f32.mrb[0].mxu0
        %v2433 = vadd.f32 0.0, %v2432
        %v2434 = vpop.f32.mrb[0].mxu0
        %v2435 = vpop.f32.mrb[0].mxu0
        %v2436 = vadd.f32 0.0, %v2435
        %v2437 = vpop.f32.mrb[0].mxu0
        %2438 = vmatprep.mubr.bf16.mxu0 0
        %2439 = vmatmul.mubr.bf16.gmra.mrb[0].mxu0 %v2142
        %v2440 = vpop.f32.mrb[0].mxu0
        %v2441 = vadd.f32 0.0, %v2440
        %v2442 = vpop.f32.mrb[0].mxu0
        %v2443 = vpop.f32.mrb[0].mxu0
        %v2444 = vadd.f32 0.0, %v2443
        %v2445 = vpop.f32.mrb[0].mxu0
        %2446 = vmatprep.mubr.bf16.mxu0 0
        %2447 = vmatmul.mubr.bf16.gmra.mrb[0].mxu0 %v2145
        %v2448 = vpop.f32.mrb[0].mxu0
        %v2449 = vadd.f32 0.0, %v2448
        %v2450 = vpop.f32.mrb[0].mxu0
        %v2451 = vpop.f32.mrb[0].mxu0
        %v2452 = vadd.f32 0.0, %v2451
        %v2453 = vpop.f32.mrb[0].mxu0
        %2454 = vmatprep.mubr.bf16.mxu0 0
        %2455 = vmatmul.mubr.bf16.gmra.mrb[0].mxu0 %v2148
        %v2456 = vpop.f32.mrb[0].mxu0
        %v2457 = vadd.f32 0.0, %v2456
        %v2458 = vpop.f32.mrb[0].mxu0
        %v2459 = vpop.f32.mrb[0].mxu0
        %v2460 = vadd.f32 0.0, %v2459
        %v2461 = vpop.f32.mrb[0].mxu0
        %2462 = vmatprep.mubr.bf16.mxu0 0
        %2463 = vmatmul.mubr.bf16.gmra.mrb[0].mxu0 %v2151
        %v2464 = vpop.f32.mrb[0].mxu0
        %v2465 = vadd.f32 0.0, %v2464
        %v2466 = vpop.f32.mrb[0].mxu0
        %v2467 = vpop.f32.mrb[0].mxu0
        %v2468 = vadd.f32 0.0, %v2467
        %v2469 = vpop.f32.mrb[0].mxu0
        %2470 = vmatprep.mubr.bf16.mxu0 0
        %2471 = vmatmul.mubr.bf16.gmra.mrb[0].mxu0 %v2154
        %v2472 = vpop.f32.mrb[0].mxu0
        %v2473 = vadd.f32 0.0, %v2472
        %v2474 = vpop.f32.mrb[0].mxu0
        %v2475 = vpop.f32.mrb[0].mxu0
        %v2476 = vadd.f32 0.0, %v2475
        %v2477 = vpop.f32.mrb[0].mxu0
        %2478 = vmatprep.mubr.bf16.mxu0 0
        %2479 = vmatmul.mubr.bf16.gmra.mrb[0].mxu0 %v2157
        %v2480 = vpop.f32.mrb[0].mxu0
        %v2481 = vadd.f32 0.0, %v2480
        %v2482 = vpop.f32.mrb[0].mxu0
        %v2483 = vpop.f32.mrb[0].mxu0
        %v2484 = vadd.f32 0.0, %v2483
        %v2485 = vpop.f32.mrb[0].mxu0
        %2486 = vmatprep.mubr.bf16.mxu0 0
        %2487 = vmatmul.mubr.bf16.gmra.mrb[0].mxu0 %v2160
        %v2488 = vpop.f32.mrb[0].mxu0
        %v2489 = vadd.f32 0.0, %v2488
        %v2490 = vpop.f32.mrb[0].mxu0
        %v2491 = vpop.f32.mrb[0].mxu0
        %v2492 = vadd.f32 0.0, %v2491
        %v2493 = vpop.f32.mrb[0].mxu0
        %2494 = vmatprep.mubr.bf16.mxu0 0
        %2495 = vmatmul.mubr.bf16.gmra.mrb[0].mxu0 %v2163
        %v2496 = vpop.f32.mrb[0].mxu0
        %v2497 = vadd.f32 0.0, %v2496
        %v2498 = vpop.f32.mrb[0].mxu0
        %v2499 = vpop.f32.mrb[0].mxu0
        %v2500 = vadd.f32 0.0, %v2499
        %v2501 = vpop.f32.mrb[0].mxu0
        %2502 = vmatprep.mubr.bf16.mxu0 0
        %2503 = vmatmul.mubr.bf16.gmra.mrb[0].mxu0 %v2166
        %v2504 = vpop.f32.mrb[0].mxu0
        %v2505 = vadd.f32 0.0, %v2504
        %v2506 = vpop.f32.mrb[0].mxu0
        %v2507 = vpop.f32.mrb[0].mxu0
        %v2508 = vadd.f32 0.0, %v2507
        %v2509 = vpop.f32.mrb[0].mxu0
        %2510 = vmatprep.mubr.bf16.mxu0 0
        %2511 = vmatmul.mubr.bf16.gmra.mrb[0].mxu0 %v2169
        %v2512 = vpop.f32.mrb[0].mxu0
        %v2513 = vadd.f32 0.0, %v2512
        %v2514 = vpop.f32.mrb[0].mxu0
        %v2515 = vpop.f32.mrb[0].mxu0
        %v2516 = vadd.f32 0.0, %v2515
        %v2517 = vpop.f32.mrb[0].mxu0
        %2518 = vmatprep.mubr.bf16.mxu0 0
        %2519 = vmatmul.mubr.bf16.gmra.mrb[0].mxu0 %v2172
        %v2520 = vpop.f32.mrb[0].mxu0
        %v2521 = vadd.f32 0.0, %v2520
        %v2522 = vpop.f32.mrb[0].mxu0
        %v2523 = vpop.f32.mrb[0].mxu0
        %v2524 = vadd.f32 0.0, %v2523
        %v2525 = vpop.f32.mrb[0].mxu0
        %2526 = vmatprep.mubr.bf16.mxu0 0
        %2527 = vmatmul.mubr.bf16.gmra.mrb[0].mxu0 %v2175
        %v2528 = vpop.f32.mrb[0].mxu0
        %v2529 = vadd.f32 0.0, %v2528
        %v2530 = vpop.f32.mrb[0].mxu0
        %v2531 = vpop.f32.mrb[0].mxu0
        %v2532 = vadd.f32 0.0, %v2531
        %v2533 = vpop.f32.mrb[0].mxu0
        %2534 = vmatprep.mubr.bf16.mxu0 0
        %2535 = vmatmul.mubr.bf16.gmra.mrb[0].mxu0 %v2178
        %v2536 = vpop.f32.mrb[0].mxu0
        %v2537 = vadd.f32 0.0, %v2536
        %v2538 = vpop.f32.mrb[0].mxu0
        %v2539 = vpop.f32.mrb[0].mxu0
        %v2540 = vadd.f32 0.0, %v2539
        %v2541 = vpop.f32.mrb[0].mxu0
        %2542 = vmatprep.mubr.bf16.mxu0 0
        %2543 = vmatmul.mubr.bf16.gmra.mrb[0].mxu0 %v2181
        %v2544 = vpop.f32.mrb[0].mxu0
        %v2545 = vadd.f32 0.0, %v2544
        %v2546 = vpop.f32.mrb[0].mxu0
        %v2547 = vpop.f32.mrb[0].mxu0
        %v2548 = vadd.f32 0.0, %v2547
        %v2549 = vpop.f32.mrb[0].mxu0
        %2550 = vmatprep.mubr.bf16.mxu0 0
        %2551 = vmatmul.mubr.bf16.gmra.mrb[0].mxu0 %v2184
        %v2552 = vpop.f32.mrb[0].mxu0
        %v2553 = vadd.f32 0.0, %v2552
        %v2554 = vpop.f32.mrb[0].mxu0
        %v2555 = vpop.f32.mrb[0].mxu0
        %v2556 = vadd.f32 0.0, %v2555
        %v2557 = vpop.f32.mrb[0].mxu0
        %2558 = vmatprep.mubr.bf16.mxu0 0
        %2559 = vmatmul.mubr.bf16.gmra.mrb[0].mxu0 %v2187
        %v2560 = vpop.f32.mrb[0].mxu0
        %v2561 = vadd.f32 0.0, %v2560
        %v2562 = vpop.f32.mrb[0].mxu0
        %v2563 = vpop.f32.mrb[0].mxu0
        %v2564 = vadd.f32 0.0, %v2563
        %v2565 = vpop.f32.mrb[0].mxu0
        %2566 = vmatprep.mubr.bf16.mxu0 0
        %2567 = vmatmul.mubr.bf16.gmra.mrb[0].mxu0 %v2190
        %v2568 = vpop.f32.mrb[0].mxu0
        %v2569 = vadd.f32 0.0, %v2568
        %v2570 = vpop.f32.mrb[0].mxu0
        %v2571 = vpop.f32.mrb[0].mxu0
        %v2572 = vadd.f32 0.0, %v2571
        %v2573 = vpop.f32.mrb[0].mxu0
        %2574 = vmatprep.mubr.bf16.mxu0 0
        %2575 = vmatmul.mubr.bf16.gmra.mrb[0].mxu0 %v2193
        %v2576 = vpop.f32.mrb[0].mxu0
        %v2577 = vadd.f32 0.0, %v2576
        %v2578 = vpop.f32.mrb[0].mxu0
        %v2579 = vpop.f32.mrb[0].mxu0
        %v2580 = vadd.f32 0.0, %v2579
        %v2581 = vpop.f32.mrb[0].mxu0
        %2582 = vmatprep.mubr.bf16.mxu0 0
        %2583 = vmatmul.mubr.bf16.gmra.mrb[0].mxu0 %v2196
        %v2584 = vpop.f32.mrb[0].mxu0
        %v2585 = vadd.f32 0.0, %v2584
        %v2586 = vpop.f32.mrb[0].mxu0
        %v2587 = vpop.f32.mrb[0].mxu0
        %v2588 = vadd.f32 0.0, %v2587
        %v2589 = vpop.f32.mrb[0].mxu0
        %2590 = vmatprep.mubr.bf16.mxu0 0
        %2591 = vmatmul.mubr.bf16.gmra.mrb[0].mxu0 %v2199
        %v2592 = vpop.f32.mrb[0].mxu0
        %v2593 = vadd.f32 0.0, %v2592
        %v2594 = vpop.f32.mrb[0].mxu0
        %v2595 = vpop.f32.mrb[0].mxu0
        %v2596 = vadd.f32 0.0, %v2595
        %v2597 = vpop.f32.mrb[0].mxu0
        %2598 = vmatprep.mubr.bf16.mxu0 0
        %2599 = vmatmul.mubr.bf16.gmra.mrb[0].mxu0 %v2202
        %v2600 = vpop.f32.mrb[0].mxu0
        %v2601 = vadd.f32 0.0, %v2600
        %v2602 = vpop.f32.mrb[0].mxu0
        %v2603 = vpop.f32.mrb[0].mxu0
        %v2604 = vadd.f32 0.0, %v2603
        %v2605 = vpop.f32.mrb[0].mxu0
        %2606 = vmatprep.mubr.bf16.mxu0 0
        %2607 = vmatmul.mubr.bf16.gmra.mrb[0].mxu0 %v2205
        %v2608 = vpop.f32.mrb[0].mxu0
        %v2609 = vadd.f32 0.0, %v2608
        %v2610 = vpop.f32.mrb[0].mxu0
        %v2611 = vpop.f32.mrb[0].mxu0
        %v2612 = vadd.f32 0.0, %v2611
        %v2613 = vpop.f32.mrb[0].mxu0
        %2614 = vmatprep.mubr.bf16.mxu0 0
        %2615 = vmatmul.mubr.bf16.gmra.mrb[0].mxu0 %v2208
        %v2616 = vpop.f32.mrb[0].mxu0
        %v2617 = vadd.f32 0.0, %v2616
        %v2618 = vpop.f32.mrb[0].mxu0
        %v2619 = vpop.f32.mrb[0].mxu0
        %v2620 = vadd.f32 0.0, %v2619
        %v2621 = vpop.f32.mrb[0].mxu0
        %2622 = vmatprep.mubr.bf16.mxu0 0
        %2623 = vmatmul.mubr.bf16.gmra.mrb[0].mxu0 %v2211
        %v2624 = vpop.f32.mrb[0].mxu0
        %v2625 = vadd.f32 0.0, %v2624
        %v2626 = vpop.f32.mrb[0].mxu0
        %v2627 = vpop.f32.mrb[0].mxu0
        %v2628 = vadd.f32 0.0, %v2627
        %v2629 = vpop.f32.mrb[0].mxu0
        %2630 = vmatprep.mubr.bf16.mxu0 0
        %2631 = vmatmul.mubr.bf16.gmra.mrb[0].mxu0 %v2214
        %v2632 = vpop.f32.mrb[0].mxu0
        %v2633 = vadd.f32 0.0, %v2632
        %v2634 = vpop.f32.mrb[0].mxu0
        %v2635 = vpop.f32.mrb[0].mxu0
        %v2636 = vadd.f32 0.0, %v2635
        %v2637 = vpop.f32.mrb[0].mxu0
        %2638 = vmatprep.mubr.bf16.mxu0 0
        %2639 = vmatmul.mubr.bf16.gmra.mrb[0].mxu0 %v2217
        %v2640 = vpop.f32.mrb[0].mxu0
        %v2641 = vadd.f32 0.0, %v2640
        %v2642 = vpop.f32.mrb[0].mxu0
        %v2643 = vpop.f32.mrb[0].mxu0
        %v2644 = vadd.f32 0.0, %v2643
        %v2645 = vpop.f32.mrb[0].mxu0
        %2646 = vmatprep.mubr.bf16.mxu0 0
        %2647 = vmatmul.mubr.bf16.gmra.mrb[0].mxu0 %v2220
        %v2648 = vpop.f32.mrb[0].mxu0
        %v2649 = vadd.f32 0.0, %v2648
        %v2650 = vpop.f32.mrb[0].mxu0
        %v2651 = vpop.f32.mrb[0].mxu0
        %v2652 = vadd.f32 0.0, %v2651
        %v2653 = vpop.f32.mrb[0].mxu0
        %2654 = vmatprep.mubr.bf16.mxu0 0
        %2655 = vmatmul.mubr.bf16.gmra.mrb[0].mxu0 %v2223
        %v2656 = vpop.f32.mrb[0].mxu0
        %v2657 = vadd.f32 0.0, %v2656
        %v2658 = vpop.f32.mrb[0].mxu0
        %v2659 = vpop.f32.mrb[0].mxu0
        %v2660 = vadd.f32 0.0, %v2659
        %v2661 = vpop.f32.mrb[0].mxu0
        %2662 = vmatprep.mubr.bf16.mxu0 0
        %2663 = vmatmul.mubr.bf16.gmra.mrb[0].mxu0 %v2226
        %v2664 = vpop.f32.mrb[0].mxu0
        %v2665 = vadd.f32 0.0, %v2664
        %v2666 = vpop.f32.mrb[0].mxu0
        %v2667 = vpop.f32.mrb[0].mxu0
        %v2668 = vadd.f32 0.0, %v2667
        %v2669 = vpop.f32.mrb[0].mxu0
        %2670 = vmatprep.mubr.bf16.mxu0 0
        %2671 = vmatmul.mubr.bf16.gmra.mrb[0].mxu0 %v2229
        %v2672 = vpop.f32.mrb[0].mxu0
        %v2673 = vadd.f32 0.0, %v2672
        %v2674 = vpop.f32.mrb[0].mxu0
        %v2675 = vpop.f32.mrb[0].mxu0
        %v2676 = vadd.f32 0.0, %v2675
        %v2677 = vpop.f32.mrb[0].mxu0
        %2678 = vmatprep.mubr.bf16.mxu0 0
        %2679 = vmatmul.mubr.bf16.gmra.mrb[0].mxu0 %v2232
        %v2680 = vpop.f32.mrb[0].mxu0
        %v2681 = vadd.f32 0.0, %v2680
        %v2682 = vpop.f32.mrb[0].mxu0
        %v2683 = vpop.f32.mrb[0].mxu0
        %v2684 = vadd.f32 0.0, %v2683
        %v2685 = vpop.f32.mrb[0].mxu0
        %2686 = vmatprep.mubr.bf16.mxu0 0
        %2687 = vmatmul.mubr.bf16.gmra.mrb[0].mxu0 %v2235
        %v2688 = vpop.f32.mrb[0].mxu0
        %v2689 = vadd.f32 0.0, %v2688
        %v2690 = vpop.f32.mrb[0].mxu0
        %v2691 = vpop.f32.mrb[0].mxu0
        %v2692 = vadd.f32 0.0, %v2691
        %v2693 = vpop.f32.mrb[0].mxu0
        %2694 = vmatprep.mubr.bf16.mxu0 0
        %2695 = vmatmul.mubr.bf16.gmra.mrb[0].mxu0 %v2238
        %v2696 = vpop.f32.mrb[0].mxu0
        %v2697 = vadd.f32 0.0, %v2696
        %v2698 = vpop.f32.mrb[0].mxu0
        %v2699 = vpop.f32.mrb[0].mxu0
        %v2700 = vadd.f32 0.0, %v2699
        %v2701 = vpop.f32.mrb[0].mxu0
        %2702 = vmatprep.mubr.bf16.mxu0 0
        %2703 = vmatmul.mubr.bf16.gmra.mrb[0].mxu0 %v2241
        %v2704 = vpop.f32.mrb[0].mxu0
        %v2705 = vadd.f32 0.0, %v2704
        %v2706 = vpop.f32.mrb[0].mxu0
        %v2707 = vpop.f32.mrb[0].mxu0
        %v2708 = vadd.f32 0.0, %v2707
        %v2709 = vpop.f32.mrb[0].mxu0
        %2710 = vmatprep.mubr.bf16.mxu0 0
        %2711 = vmatmul.mubr.bf16.gmra.mrb[0].mxu0 %v2244
        %v2712 = vpop.f32.mrb[0].mxu0
        %v2713 = vadd.f32 0.0, %v2712
        %v2714 = vpop.f32.mrb[0].mxu0
        %v2715 = vpop.f32.mrb[0].mxu0
        %v2716 = vadd.f32 0.0, %v2715
        %v2717 = vpop.f32.mrb[0].mxu0
        %2718 = vmatprep.mubr.bf16.mxu0 0
        %2719 = vmatmul.mubr.bf16.gmra.mrb[0].mxu0 %v2247
        %v2720 = vpop.f32.mrb[0].mxu0
        %v2721 = vadd.f32 0.0, %v2720
        %v2722 = vpop.f32.mrb[0].mxu0
        %v2723 = vpop.f32.mrb[0].mxu0
        %v2724 = vadd.f32 0.0, %v2723
        %v2725 = vpop.f32.mrb[0].mxu0
        %2726 = vmatprep.mubr.bf16.mxu0 0
        %2727 = vmatmul.mubr.bf16.gmra.mrb[0].mxu0 %v2250
        %v2728 = vpop.f32.mrb[0].mxu0
        %v2729 = vadd.f32 0.0, %v2728
        %v2730 = vpop.f32.mrb[0].mxu0
        %v2731 = vpop.f32.mrb[0].mxu0
        %v2732 = vadd.f32 0.0, %v2731
        %v2733 = vpop.f32.mrb[0].mxu0
        %2734 = vmatprep.mubr.bf16.mxu0 0
        %2735 = vmatmul.mubr.bf16.gmra.mrb[0].mxu0 %v2253
        %v2736 = vpop.f32.mrb[0].mxu0
        %v2737 = vadd.f32 0.0, %v2736
        %v2738 = vpop.f32.mrb[0].mxu0
        %v2739 = vpop.f32.mrb[0].mxu0
        %v2740 = vadd.f32 0.0, %v2739
        %v2741 = vpop.f32.mrb[0].mxu0
        %2742 = vmatprep.mubr.bf16.mxu0 0
        %2743 = vmatmul.mubr.bf16.gmra.mrb[0].mxu0 %v2256
        %v2744 = vpop.f32.mrb[0].mxu0
        %v2745 = vadd.f32 0.0, %v2744
        %v2746 = vpop.f32.mrb[0].mxu0
        %v2747 = vpop.f32.mrb[0].mxu0
        %v2748 = vadd.f32 0.0, %v2747
        %v2749 = vpop.f32.mrb[0].mxu0
        %2750 = vmatprep.mubr.bf16.mxu0 0
        %2751 = vmatmul.mubr.bf16.gmra.mrb[0].mxu0 %v2259
        %v2752 = vpop.f32.mrb[0].mxu0
        %v2753 = vadd.f32 0.0, %v2752
        %v2754 = vpop.f32.mrb[0].mxu0
        %v2755 = vpop.f32.mrb[0].mxu0
        %v2756 = vadd.f32 0.0, %v2755
        %v2757 = vpop.f32.mrb[0].mxu0
        %2758 = vmatprep.mubr.bf16.mxu0 0
        %2759 = vmatmul.mubr.bf16.gmra.mrb[0].mxu0 %v2262
        %v2760 = vpop.f32.mrb[0].mxu0
        %v2761 = vadd.f32 0.0, %v2760
        %v2762 = vpop.f32.mrb[0].mxu0
        %v2763 = vpop.f32.mrb[0].mxu0
        %v2764 = vadd.f32 0.0, %v2763
        %v2765 = vpop.f32.mrb[0].mxu0
        %2766 = vmatprep.mubr.bf16.mxu0 0
        %2767 = vmatmul.mubr.bf16.gmra.mrb[0].mxu0 %v2265
        %v2768 = vpop.f32.mrb[0].mxu0
        %v2769 = vadd.f32 0.0, %v2768
        %v2770 = vpop.f32.mrb[0].mxu0
        %v2771 = vpop.f32.mrb[0].mxu0
        %v2772 = vadd.f32 0.0, %v2771
        %v2773 = vpop.f32.mrb[0].mxu0
        %2774 = vmatprep.mubr.bf16.mxu0 0
        %2775 = vmatmul.mubr.bf16.gmra.mrb[0].mxu0 %v2268
        %v2776 = vpop.f32.mrb[0].mxu0
        %v2777 = vadd.f32 0.0, %v2776
        %v2778 = vpop.f32.mrb[0].mxu0
        %v2779 = vpop.f32.mrb[0].mxu0
        %v2780 = vadd.f32 0.0, %v2779
        %v2781 = vpop.f32.mrb[0].mxu0
        %2782 = vmatprep.mubr.bf16.mxu0 0
        %2783 = vmatmul.mubr.bf16.gmra.mrb[0].mxu0 %v2271
        %v2784 = vpop.f32.mrb[0].mxu0
        %v2785 = vadd.f32 0.0, %v2784
        %v2786 = vpop.f32.mrb[0].mxu0
        %v2787 = vpop.f32.mrb[0].mxu0
        %v2788 = vadd.f32 0.0, %v2787
        %v2789 = vpop.f32.mrb[0].mxu0
        %2790 = vmatprep.mubr.bf16.mxu0 0
        %2791 = vmatmul.mubr.bf16.gmra.mrb[0].mxu0 %v2274
        %v2792 = vpop.f32.mrb[0].mxu0
        %v2793 = vadd.f32 0.0, %v2792
        %v2794 = vpop.f32.mrb[0].mxu0
        %v2795 = vpop.f32.mrb[0].mxu0
        %v2796 = vadd.f32 0.0, %v2795
        %v2797 = vpop.f32.mrb[0].mxu0
        %2798 = vmatprep.mubr.bf16.mxu0 0
        %2799 = vmatmul.mubr.bf16.gmra.mrb[0].mxu0 %v2277
        %v2800 = vpop.f32.mrb[0].mxu0
        %v2801 = vadd.f32 0.0, %v2800
        %v2802 = vpop.f32.mrb[0].mxu0
        %v2803 = vpop.f32.mrb[0].mxu0
        %v2804 = vadd.f32 0.0, %v2803
        %v2805 = vpop.f32.mrb[0].mxu0
        %2806 = vmatprep.mubr.bf16.mxu0 0
        %2807 = vmatmul.mubr.bf16.gmra.mrb[0].mxu0 %v2280
        %v2808 = vpop.f32.mrb[0].mxu0
        %v2809 = vadd.f32 0.0, %v2808
        %v2810 = vpop.f32.mrb[0].mxu0
        %v2811 = vpop.f32.mrb[0].mxu0
        %v2812 = vadd.f32 0.0, %v2811
        %v2813 = vpop.f32.mrb[0].mxu0
        %2814 = vmatprep.mubr.bf16.mxu0 0
        %2815 = vmatmul.mubr.bf16.gmra.mrb[0].mxu0 %v2283
        %v2816 = vpop.f32.mrb[0].mxu0
        %v2817 = vadd.f32 0.0, %v2816
        %v2818 = vpop.f32.mrb[0].mxu0
        %v2819 = vpop.f32.mrb[0].mxu0
        %v2820 = vadd.f32 0.0, %v2819
        %v2821 = vpop.f32.mrb[0].mxu0
        %2822 = vmatprep.mubr.bf16.mxu0 0
        %2823 = vmatmul.mubr.bf16.gmra.mrb[0].mxu0 %v2286
        %v2824 = vpop.f32.mrb[0].mxu0
        %v2825 = vadd.f32 0.0, %v2824
        %v2826 = vpop.f32.mrb[0].mxu0
        %v2827 = vpop.f32.mrb[0].mxu0
        %v2828 = vadd.f32 0.0, %v2827
        %v2829 = vpop.f32.mrb[0].mxu0
        %2830 = vmatprep.mubr.bf16.mxu0 0
        %2831 = vmatmul.mubr.bf16.gmra.mrb[0].mxu0 %v2289
        %v2832 = vpop.f32.mrb[0].mxu0
        %v2833 = vadd.f32 0.0, %v2832
        %v2834 = vpop.f32.mrb[0].mxu0
        %v2835 = vpop.f32.mrb[0].mxu0
        %v2836 = vadd.f32 0.0, %v2835
        %v2837 = vpop.f32.mrb[0].mxu0
        %2838 = vdwg.mxu0
        %v2839 = vadd.f32 %v2329, %v1581
        %v2840 = vadd.f32 %v2332, %v1584
        %v2841 = vadd.f32 %v2337, %v1589
        %v2842 = vadd.f32 %v2340, %v1592
        %v2843 = vadd.f32 %v2345, %v1597
        %v2844 = vadd.f32 %v2348, %v1600
        %v2845 = vadd.f32 %v2353, %v1605
        %v2846 = vadd.f32 %v2356, %v1608
        %v2847 = vadd.f32 %v2361, %v1613
        %v2848 = vadd.f32 %v2364, %v1616
        %v2849 = vadd.f32 %v2369, %v1621
        %v2850 = vadd.f32 %v2372, %v1624
        %v2851 = vadd.f32 %v2377, %v1629
        %v2852 = vadd.f32 %v2380, %v1632
        %v2853 = vadd.f32 %v2385, %v1637
        %v2854 = vadd.f32 %v2388, %v1640
        %v2855 = vadd.f32 %v2393, %v1581
        %v2856 = vadd.f32 %v2396, %v1584
        %v2857 = vadd.f32 %v2401, %v1589
        %v2858 = vadd.f32 %v2404, %v1592
        %v2859 = vadd.f32 %v2409, %v1597
        %v2860 = vadd.f32 %v2412, %v1600
        %v2861 = vadd.f32 %v2417, %v1605
        %v2862 = vadd.f32 %v2420, %v1608
        %v2863 = vadd.f32 %v2425, %v1613
        %v2864 = vadd.f32 %v2428, %v1616
        %v2865 = vadd.f32 %v2433, %v1621
        %v2866 = vadd.f32 %v2436, %v1624
        %v2867 = vadd.f32 %v2441, %v1629
        %v2868 = vadd.f32 %v2444, %v1632
        %v2869 = vadd.f32 %v2449, %v1637
        %v2870 = vadd.f32 %v2452, %v1640
        %v2871 = vadd.f32 %v2457, %v1581
        %v2872 = vadd.f32 %v2460, %v1584
        %v2873 = vadd.f32 %v2465, %v1589
        %v2874 = vadd.f32 %v2468, %v1592
        %v2875 = vadd.f32 %v2473, %v1597
        %v2876 = vadd.f32 %v2476, %v1600
        %v2877 = vadd.f32 %v2481, %v1605
        %v2878 = vadd.f32 %v2484, %v1608
        %v2879 = vadd.f32 %v2489, %v1613
        %v2880 = vadd.f32 %v2492, %v1616
        %v2881 = vadd.f32 %v2497, %v1621
        %v2882 = vadd.f32 %v2500, %v1624
        %v2883 = vadd.f32 %v2505, %v1629
        %v2884 = vadd.f32 %v2508, %v1632
        %v2885 = vadd.f32 %v2513, %v1637
        %v2886 = vadd.f32 %v2516, %v1640
        %v2887 = vadd.f32 %v2521, %v1581
        %v2888 = vadd.f32 %v2524, %v1584
        %v2889 = vadd.f32 %v2529, %v1589
        %v2890 = vadd.f32 %v2532, %v1592
        %v2891 = vadd.f32 %v2537, %v1597
        %v2892 = vadd.f32 %v2540, %v1600
        %v2893 = vadd.f32 %v2545, %v1605
        %v2894 = vadd.f32 %v2548, %v1608
        %v2895 = vadd.f32 %v2553, %v1613
        %v2896 = vadd.f32 %v2556, %v1616
        %v2897 = vadd.f32 %v2561, %v1621
        %v2898 = vadd.f32 %v2564, %v1624
        %v2899 = vadd.f32 %v2569, %v1629
        %v2900 = vadd.f32 %v2572, %v1632
        %v2901 = vadd.f32 %v2577, %v1637
        %v2902 = vadd.f32 %v2580, %v1640
        %v2903 = vadd.f32 %v2585, %v1581
        %v2904 = vadd.f32 %v2588, %v1584
        %v2905 = vadd.f32 %v2593, %v1589
        %v2906 = vadd.f32 %v2596, %v1592
        %v2907 = vadd.f32 %v2601, %v1597
        %v2908 = vadd.f32 %v2604, %v1600
        %v2909 = vadd.f32 %v2609, %v1605
        %v2910 = vadd.f32 %v2612, %v1608
        %v2911 = vadd.f32 %v2617, %v1613
        %v2912 = vadd.f32 %v2620, %v1616
        %v2913 = vadd.f32 %v2625, %v1621
        %v2914 = vadd.f32 %v2628, %v1624
        %v2915 = vadd.f32 %v2633, %v1629
        %v2916 = vadd.f32 %v2636, %v1632
        %v2917 = vadd.f32 %v2641, %v1637
        %v2918 = vadd.f32 %v2644, %v1640
        %v2919 = vadd.f32 %v2649, %v1581
        %v2920 = vadd.f32 %v2652, %v1584
        %v2921 = vadd.f32 %v2657, %v1589
        %v2922 = vadd.f32 %v2660, %v1592
        %v2923 = vadd.f32 %v2665, %v1597
        %v2924 = vadd.f32 %v2668, %v1600
        %v2925 = vadd.f32 %v2673, %v1605
        %v2926 = vadd.f32 %v2676, %v1608
        %v2927 = vadd.f32 %v2681, %v1613
        %v2928 = vadd.f32 %v2684, %v1616
        %v2929 = vadd.f32 %v2689, %v1621
        %v2930 = vadd.f32 %v2692, %v1624
        %v2931 = vadd.f32 %v2697, %v1629
        %v2932 = vadd.f32 %v2700, %v1632
        %v2933 = vadd.f32 %v2705, %v1637
        %v2934 = vadd.f32 %v2708, %v1640
        %v2935 = vadd.f32 %v2713, %v1581
        %v2936 = vadd.f32 %v2716, %v1584
        %v2937 = vadd.f32 %v2721, %v1589
        %v2938 = vadd.f32 %v2724, %v1592
        %v2939 = vadd.f32 %v2729, %v1597
        %v2940 = vadd.f32 %v2732, %v1600
        %v2941 = vadd.f32 %v2737, %v1605
        %v2942 = vadd.f32 %v2740, %v1608
        %v2943 = vadd.f32 %v2745, %v1613
        %v2944 = vadd.f32 %v2748, %v1616
        %v2945 = vadd.f32 %v2753, %v1621
        %v2946 = vadd.f32 %v2756, %v1624
        %v2947 = vadd.f32 %v2761, %v1629
        %v2948 = vadd.f32 %v2764, %v1632
        %v2949 = vadd.f32 %v2769, %v1637
        %v2950 = vadd.f32 %v2772, %v1640
        %v2951 = vadd.f32 %v2777, %v1581
        %v2952 = vadd.f32 %v2780, %v1584
        %v2953 = vadd.f32 %v2785, %v1589
        %v2954 = vadd.f32 %v2788, %v1592
        %v2955 = vadd.f32 %v2793, %v1597
        %v2956 = vadd.f32 %v2796, %v1600
        %v2957 = vadd.f32 %v2801, %v1605
        %v2958 = vadd.f32 %v2804, %v1608
        %v2959 = vadd.f32 %v2809, %v1613
        %v2960 = vadd.f32 %v2812, %v1616
        %v2961 = vadd.f32 %v2817, %v1621
        %v2962 = vadd.f32 %v2820, %v1624
        %v2963 = vadd.f32 %v2825, %v1629
        %v2964 = vadd.f32 %v2828, %v1632
        %v2965 = vadd.f32 %v2833, %v1637
        %v2966 = vadd.f32 %v2836, %v1640
        %v2967 = vmax.f32 %v2839, 0.0
        %v2968 = vmax.f32 %v2840, 0.0
        %v2969 = vmax.f32 %v2841, 0.0
        %v2970 = vmax.f32 %v2842, 0.0
        %v2971 = vmax.f32 %v2843, 0.0
        %v2972 = vmax.f32 %v2844, 0.0
        %v2973 = vmax.f32 %v2845, 0.0
        %v2974 = vmax.f32 %v2846, 0.0
        %v2975 = vmax.f32 %v2847, 0.0
        %v2976 = vmax.f32 %v2848, 0.0
        %v2977 = vmax.f32 %v2849, 0.0
        %v2978 = vmax.f32 %v2850, 0.0
        %v2979 = vmax.f32 %v2851, 0.0
        %v2980 = vmax.f32 %v2852, 0.0
        %v2981 = vmax.f32 %v2853, 0.0
        %v2982 = vmax.f32 %v2854, 0.0
        %v2983 = vmax.f32 %v2855, 0.0
        %v2984 = vmax.f32 %v2856, 0.0
        %v2985 = vmax.f32 %v2857, 0.0
        %v2986 = vmax.f32 %v2858, 0.0
        %v2987 = vmax.f32 %v2859, 0.0
        %v2988 = vmax.f32 %v2860, 0.0
        %v2989 = vmax.f32 %v2861, 0.0
        %v2990 = vmax.f32 %v2862, 0.0
        %v2991 = vmax.f32 %v2863, 0.0
        %v2992 = vmax.f32 %v2864, 0.0
        %v2993 = vmax.f32 %v2865, 0.0
        %v2994 = vmax.f32 %v2866, 0.0
        %v2995 = vmax.f32 %v2867, 0.0
        %v2996 = vmax.f32 %v2868, 0.0
        %v2997 = vmax.f32 %v2869, 0.0
        %v2998 = vmax.f32 %v2870, 0.0
        %v2999 = vmax.f32 %v2871, 0.0
        %v3000 = vmax.f32 %v2872, 0.0
        %v3001 = vmax.f32 %v2873, 0.0
        %v3002 = vmax.f32 %v2874, 0.0
        %v3003 = vmax.f32 %v2875, 0.0
        %v3004 = vmax.f32 %v2876, 0.0
        %v3005 = vmax.f32 %v2877, 0.0
        %v3006 = vmax.f32 %v2878, 0.0
        %v3007 = vmax.f32 %v2879, 0.0
        %v3008 = vmax.f32 %v2880, 0.0
        %v3009 = vmax.f32 %v2881, 0.0
        %v3010 = vmax.f32 %v2882, 0.0
        %v3011 = vmax.f32 %v2883, 0.0
        %v3012 = vmax.f32 %v2884, 0.0
        %v3013 = vmax.f32 %v2885, 0.0
        %v3014 = vmax.f32 %v2886, 0.0
        %v3015 = vmax.f32 %v2887, 0.0
        %v3016 = vmax.f32 %v2888, 0.0
        %v3017 = vmax.f32 %v2889, 0.0
        %v3018 = vmax.f32 %v2890, 0.0
        %v3019 = vmax.f32 %v2891, 0.0
        %v3020 = vmax.f32 %v2892, 0.0
        %v3021 = vmax.f32 %v2893, 0.0
        %v3022 = vmax.f32 %v2894, 0.0
        %v3023 = vmax.f32 %v2895, 0.0
        %v3024 = vmax.f32 %v2896, 0.0
        %v3025 = vmax.f32 %v2897, 0.0
        %v3026 = vmax.f32 %v2898, 0.0
        %v3027 = vmax.f32 %v2899, 0.0
        %v3028 = vmax.f32 %v2900, 0.0
        %v3029 = vmax.f32 %v2901, 0.0
        %v3030 = vmax.f32 %v2902, 0.0
        %v3031 = vmax.f32 %v2903, 0.0
        %v3032 = vmax.f32 %v2904, 0.0
        %v3033 = vmax.f32 %v2905, 0.0
        %v3034 = vmax.f32 %v2906, 0.0
        %v3035 = vmax.f32 %v2907, 0.0
        %v3036 = vmax.f32 %v2908, 0.0
        %v3037 = vmax.f32 %v2909, 0.0
        %v3038 = vmax.f32 %v2910, 0.0
        %v3039 = vmax.f32 %v2911, 0.0
        %v3040 = vmax.f32 %v2912, 0.0
        %v3041 = vmax.f32 %v2913, 0.0
        %v3042 = vmax.f32 %v2914, 0.0
        %v3043 = vmax.f32 %v2915, 0.0
        %v3044 = vmax.f32 %v2916, 0.0
        %v3045 = vmax.f32 %v2917, 0.0
        %v3046 = vmax.f32 %v2918, 0.0
        %v3047 = vmax.f32 %v2919, 0.0
        %v3048 = vmax.f32 %v2920, 0.0
        %v3049 = vmax.f32 %v2921, 0.0
        %v3050 = vmax.f32 %v2922, 0.0
        %v3051 = vmax.f32 %v2923, 0.0
        %v3052 = vmax.f32 %v2924, 0.0
        %v3053 = vmax.f32 %v2925, 0.0
        %v3054 = vmax.f32 %v2926, 0.0
        %v3055 = vmax.f32 %v2927, 0.0
        %v3056 = vmax.f32 %v2928, 0.0
        %v3057 = vmax.f32 %v2929, 0.0
        %v3058 = vmax.f32 %v2930, 0.0
        %v3059 = vmax.f32 %v2931, 0.0
        %v3060 = vmax.f32 %v2932, 0.0
        %v3061 = vmax.f32 %v2933, 0.0
        %v3062 = vmax.f32 %v2934, 0.0
        %v3063 = vmax.f32 %v2935, 0.0
        %v3064 = vmax.f32 %v2936, 0.0
        %v3065 = vmax.f32 %v2937, 0.0
        %v3066 = vmax.f32 %v2938, 0.0
        %v3067 = vmax.f32 %v2939, 0.0
        %v3068 = vmax.f32 %v2940, 0.0
        %v3069 = vmax.f32 %v2941, 0.0
        %v3070 = vmax.f32 %v2942, 0.0
        %v3071 = vmax.f32 %v2943, 0.0
        %v3072 = vmax.f32 %v2944, 0.0
        %v3073 = vmax.f32 %v2945, 0.0
        %v3074 = vmax.f32 %v2946, 0.0
        %v3075 = vmax.f32 %v2947, 0.0
        %v3076 = vmax.f32 %v2948, 0.0
        %v3077 = vmax.f32 %v2949, 0.0
        %v3078 = vmax.f32 %v2950, 0.0
        %v3079 = vmax.f32 %v2951, 0.0
        %v3080 = vmax.f32 %v2952, 0.0
        %v3081 = vmax.f32 %v2953, 0.0
        %v3082 = vmax.f32 %v2954, 0.0
        %v3083 = vmax.f32 %v2955, 0.0
        %v3084 = vmax.f32 %v2956, 0.0
        %v3085 = vmax.f32 %v2957, 0.0
        %v3086 = vmax.f32 %v2958, 0.0
        %v3087 = vmax.f32 %v2959, 0.0
        %v3088 = vmax.f32 %v2960, 0.0
        %v3089 = vmax.f32 %v2961, 0.0
        %v3090 = vmax.f32 %v2962, 0.0
        %v3091 = vmax.f32 %v2963, 0.0
        %v3092 = vmax.f32 %v2964, 0.0
        %v3093 = vmax.f32 %v2965, 0.0
        %v3094 = vmax.f32 %v2966, 0.0
        %v3095 = vpack.c.bf16 %v2968, %v2967
        %v3096 = vpack.c.bf16 %v2970, %v2969
        %v3097 = vpack.c.bf16 %v2972, %v2971
        %v3098 = vpack.c.bf16 %v2974, %v2973
        %v3099 = vpack.c.bf16 %v2976, %v2975
        %v3100 = vpack.c.bf16 %v2978, %v2977
        %v3101 = vpack.c.bf16 %v2980, %v2979
        %v3102 = vpack.c.bf16 %v2982, %v2981
        %v3103 = vpack.c.bf16 %v2984, %v2983
        %v3104 = vpack.c.bf16 %v2986, %v2985
        %v3105 = vpack.c.bf16 %v2988, %v2987
        %v3106 = vpack.c.bf16 %v2990, %v2989
        %v3107 = vpack.c.bf16 %v2992, %v2991
        %v3108 = vpack.c.bf16 %v2994, %v2993
        %v3109 = vpack.c.bf16 %v2996, %v2995
        %v3110 = vpack.c.bf16 %v2998, %v2997
        %v3111 = vpack.c.bf16 %v3000, %v2999
        %v3112 = vpack.c.bf16 %v3002, %v3001
        %v3113 = vpack.c.bf16 %v3004, %v3003
        %v3114 = vpack.c.bf16 %v3006, %v3005
        %v3115 = vpack.c.bf16 %v3008, %v3007
        %v3116 = vpack.c.bf16 %v3010, %v3009
        %v3117 = vpack.c.bf16 %v3012, %v3011
        %v3118 = vpack.c.bf16 %v3014, %v3013
        %v3119 = vpack.c.bf16 %v3016, %v3015
        %v3120 = vpack.c.bf16 %v3018, %v3017
        %v3121 = vpack.c.bf16 %v3020, %v3019
        %v3122 = vpack.c.bf16 %v3022, %v3021
        %v3123 = vpack.c.bf16 %v3024, %v3023
        %v3124 = vpack.c.bf16 %v3026, %v3025
        %v3125 = vpack.c.bf16 %v3028, %v3027
        %v3126 = vpack.c.bf16 %v3030, %v3029
        %v3127 = vpack.c.bf16 %v3032, %v3031
        %v3128 = vpack.c.bf16 %v3034, %v3033
        %v3129 = vpack.c.bf16 %v3036, %v3035
        %v3130 = vpack.c.bf16 %v3038, %v3037
        %v3131 = vpack.c.bf16 %v3040, %v3039
        %v3132 = vpack.c.bf16 %v3042, %v3041
        %v3133 = vpack.c.bf16 %v3044, %v3043
        %v3134 = vpack.c.bf16 %v3046, %v3045
        %v3135 = vpack.c.bf16 %v3048, %v3047
        %v3136 = vpack.c.bf16 %v3050, %v3049
        %v3137 = vpack.c.bf16 %v3052, %v3051
        %v3138 = vpack.c.bf16 %v3054, %v3053
        %v3139 = vpack.c.bf16 %v3056, %v3055
        %v3140 = vpack.c.bf16 %v3058, %v3057
        %v3141 = vpack.c.bf16 %v3060, %v3059
        %v3142 = vpack.c.bf16 %v3062, %v3061
        %v3143 = vpack.c.bf16 %v3064, %v3063
        %v3144 = vpack.c.bf16 %v3066, %v3065
        %v3145 = vpack.c.bf16 %v3068, %v3067
        %v3146 = vpack.c.bf16 %v3070, %v3069
        %v3147 = vpack.c.bf16 %v3072, %v3071
        %v3148 = vpack.c.bf16 %v3074, %v3073
        %v3149 = vpack.c.bf16 %v3076, %v3075
        %v3150 = vpack.c.bf16 %v3078, %v3077
        %v3151 = vpack.c.bf16 %v3080, %v3079
        %v3152 = vpack.c.bf16 %v3082, %v3081
        %v3153 = vpack.c.bf16 %v3084, %v3083
        %v3154 = vpack.c.bf16 %v3086, %v3085
        %v3155 = vpack.c.bf16 %v3088, %v3087
        %v3156 = vpack.c.bf16 %v3090, %v3089
        %v3157 = vpack.c.bf16 %v3092, %v3091
        %v3158 = vpack.c.bf16 %v3094, %v3093
        %v3159 = vld [vmem:[%s1190] sm:$0xf]
        %v3160 = vld [vmem:[%s1190 + $0x4] sm:$0xf]
        %v3161 = vld [vmem:[%s1190 + $0x8] sm:$0xf]
        %v3162 = vld [vmem:[%s1190 + $0xc] sm:$0xf]
        %v3163 = vld [vmem:[%s1190 + $0x10] sm:$0xf]
        %v3164 = vld [vmem:[%s1190 + $0x14] sm:$0xf]
        %v3165 = vld [vmem:[%s1190 + $0x18] sm:$0xf]
        %v3166 = vld [vmem:[%s1190 + $0x1c] sm:$0xf]
        %v3167 = vld [vmem:[%s1190 + $0x20] sm:$0xf]
        %v3168 = vld [vmem:[%s1190 + $0x24] sm:$0xf]
        %v3169 = vld [vmem:[%s1190 + $0x28] sm:$0xf]
        %v3170 = vld [vmem:[%s1190 + $0x2c] sm:$0xf]
        %v3171 = vld [vmem:[%s1190 + $0x30] sm:$0xf]
        %v3172 = vld [vmem:[%s1190 + $0x34] sm:$0xf]
        %v3173 = vld [vmem:[%s1190 + $0x38] sm:$0xf]
        %v3174 = vld [vmem:[%s1190 + $0x3c] sm:$0xf]
        %v3175 = vld [vmem:[%s1198] sm:$0x1]
        %v3177 = vlaneseq
        %v3178 = vshrl.u32 %v3177, 7
        %v3179 = vsub.s32 0, %v3178
        %v3180 = vrot.slane %v3175, %v3179
        %v3198 = vunpack.c.l.b16 %v3159
        %v3199 = vunpack.c.l.b16 %v3160
        %v3200 = vunpack.c.l.b16 %v3161
        %v3201 = vunpack.c.l.b16 %v3162
        %v3202 = vunpack.c.l.b16 %v3163
        %v3203 = vunpack.c.l.b16 %v3164
        %v3204 = vunpack.c.l.b16 %v3165
        %v3205 = vunpack.c.l.b16 %v3166
        %v3206 = vunpack.c.l.b16 %v3167
        %v3207 = vunpack.c.l.b16 %v3168
        %v3208 = vunpack.c.l.b16 %v3169
        %v3209 = vunpack.c.l.b16 %v3170
        %v3210 = vunpack.c.l.b16 %v3171
        %v3211 = vunpack.c.l.b16 %v3172
        %v3212 = vunpack.c.l.b16 %v3173
        %v3213 = vunpack.c.l.b16 %v3174
        %v3214 = vpack.c.b16 %v3199, %v3198
        %v3215 = vpack.c.b16 %v3201, %v3200
        %v3216 = vpack.c.b16 %v3203, %v3202
        %v3217 = vpack.c.b16 %v3205, %v3204
        %v3218 = vpack.c.b16 %v3207, %v3206
        %v3219 = vpack.c.b16 %v3209, %v3208
        %v3220 = vpack.c.b16 %v3211, %v3210
        %v3221 = vpack.c.b16 %v3213, %v3212
        %3230 = vmatprep.subr.bf16.mxu0 0
        %3231 = vmatpush1.bf16.msra.mxu0 %v3214
        %3232 = vmatprep.subr.bf16.mxu0 0
        %3233 = vmatpush1.bf16.msra.mxu0 %v3215
        %3234 = vmatprep.subr.bf16.mxu0 0
        %3235 = vmatpush1.bf16.msra.mxu0 %v3216
        %3236 = vmatprep.subr.bf16.mxu0 0
        %3237 = vmatpush1.bf16.msra.mxu0 %v3217
        %3238 = vmatprep.subr.bf16.mxu0 0
        %3239 = vmatpush1.bf16.msra.mxu0 %v3218
        %3240 = vmatprep.subr.bf16.mxu0 0
        %3241 = vmatpush1.bf16.msra.mxu0 %v3219
        %3242 = vmatprep.subr.bf16.mxu0 0
        %3243 = vmatpush1.bf16.msra.mxu0 %v3220
        %3244 = vmatprep.subr.bf16.mxu0 0
        %3245 = vmatpush1.bf16.msra.mxu0 %v3221
        %3246 = vmatprep.subr.bf16.mxu0 0
        %3247 = vmatpush1.bf16.msra.mxu0 0
        %3248 = vmatprep.subr.bf16.mxu0 0
        %3249 = vmatpush1.bf16.msra.mxu0 0
        %3250 = vmatprep.subr.bf16.mxu0 0
        %3251 = vmatpush1.bf16.msra.mxu0 0
        %3252 = vmatprep.subr.bf16.mxu0 0
        %3253 = vmatpush1.bf16.msra.mxu0 0
        %3254 = vmatprep.subr.bf16.mxu0 0
        %3255 = vmatpush1.bf16.msra.mxu0 0
        %3256 = vmatprep.subr.bf16.mxu0 0
        %3257 = vmatpush1.bf16.msra.mxu0 0
        %3258 = vmatprep.subr.bf16.mxu0 0
        %3259 = vmatpush1.bf16.msra.mxu0 0
        %3260 = vmatprep.subr.bf16.mxu0 0
        %3261 = vmatpush1.bf16.msra.mxu0 0
        %3262 = vmatprep.mubr.bf16.mxu0 0
        %3263 = vmatmul.mubr.bf16.gmra.mrb[0].mxu0 %v3095
        %v3264 = vpop.f32.mrb[0].mxu0
        %v3265 = vadd.f32 %v3180, %v3264
        %v3266 = vpop.f32.mrb[0].mxu0
        %v3267 = vpop.f32.mrb[0].mxu0
        %v3268 = vadd.f32 %v3180, %v3267
        %v3269 = vpop.f32.mrb[0].mxu0
        %3270 = vmatprep.mubr.bf16.mxu0 0
        %3271 = vmatmul.mubr.bf16.gmra.mrb[0].mxu0 %v3096
        %v3272 = vpop.f32.mrb[0].mxu0
        %v3273 = vadd.f32 %v3180, %v3272
        %v3274 = vpop.f32.mrb[0].mxu0
        %v3275 = vpop.f32.mrb[0].mxu0
        %v3276 = vadd.f32 %v3180, %v3275
        %v3277 = vpop.f32.mrb[0].mxu0
        %3278 = vmatprep.mubr.bf16.mxu0 0
        %3279 = vmatmul.mubr.bf16.gmra.mrb[0].mxu0 %v3097
        %v3280 = vpop.f32.mrb[0].mxu0
        %v3281 = vadd.f32 %v3180, %v3280
        %v3282 = vpop.f32.mrb[0].mxu0
        %v3283 = vpop.f32.mrb[0].mxu0
        %v3284 = vadd.f32 %v3180, %v3283
        %v3285 = vpop.f32.mrb[0].mxu0
        %3286 = vmatprep.mubr.bf16.mxu0 0
        %3287 = vmatmul.mubr.bf16.gmra.mrb[0].mxu0 %v3098
        %v3288 = vpop.f32.mrb[0].mxu0
        %v3289 = vadd.f32 %v3180, %v3288
        %v3290 = vpop.f32.mrb[0].mxu0
        %v3291 = vpop.f32.mrb[0].mxu0
        %v3292 = vadd.f32 %v3180, %v3291
        %v3293 = vpop.f32.mrb[0].mxu0
        %3294 = vmatprep.mubr.bf16.mxu0 0
        %3295 = vmatmul.mubr.bf16.gmra.mrb[0].mxu0 %v3099
        %v3296 = vpop.f32.mrb[0].mxu0
        %v3297 = vadd.f32 %v3180, %v3296
        %v3298 = vpop.f32.mrb[0].mxu0
        %v3299 = vpop.f32.mrb[0].mxu0
        %v3300 = vadd.f32 %v3180, %v3299
        %v3301 = vpop.f32.mrb[0].mxu0
        %3302 = vmatprep.mubr.bf16.mxu0 0
        %3303 = vmatmul.mubr.bf16.gmra.mrb[0].mxu0 %v3100
        %v3304 = vpop.f32.mrb[0].mxu0
        %v3305 = vadd.f32 %v3180, %v3304
        %v3306 = vpop.f32.mrb[0].mxu0
        %v3307 = vpop.f32.mrb[0].mxu0
        %v3308 = vadd.f32 %v3180, %v3307
        %v3309 = vpop.f32.mrb[0].mxu0
        %3310 = vmatprep.mubr.bf16.mxu0 0
        %3311 = vmatmul.mubr.bf16.gmra.mrb[0].mxu0 %v3101
        %v3312 = vpop.f32.mrb[0].mxu0
        %v3313 = vadd.f32 %v3180, %v3312
        %v3314 = vpop.f32.mrb[0].mxu0
        %v3315 = vpop.f32.mrb[0].mxu0
        %v3316 = vadd.f32 %v3180, %v3315
        %v3317 = vpop.f32.mrb[0].mxu0
        %3318 = vmatprep.mubr.bf16.mxu0 0
        %3319 = vmatmul.mubr.bf16.gmra.mrb[0].mxu0 %v3102
        %v3320 = vpop.f32.mrb[0].mxu0
        %v3321 = vadd.f32 %v3180, %v3320
        %v3322 = vpop.f32.mrb[0].mxu0
        %v3323 = vpop.f32.mrb[0].mxu0
        %v3324 = vadd.f32 %v3180, %v3323
        %v3325 = vpop.f32.mrb[0].mxu0
        %3326 = vmatprep.mubr.bf16.mxu0 0
        %3327 = vmatmul.mubr.bf16.gmra.mrb[0].mxu0 %v3103
        %v3328 = vpop.f32.mrb[0].mxu0
        %v3329 = vadd.f32 %v3180, %v3328
        %v3330 = vpop.f32.mrb[0].mxu0
        %v3331 = vpop.f32.mrb[0].mxu0
        %v3332 = vadd.f32 %v3180, %v3331
        %v3333 = vpop.f32.mrb[0].mxu0
        %3334 = vmatprep.mubr.bf16.mxu0 0
        %3335 = vmatmul.mubr.bf16.gmra.mrb[0].mxu0 %v3104
        %v3336 = vpop.f32.mrb[0].mxu0
        %v3337 = vadd.f32 %v3180, %v3336
        %v3338 = vpop.f32.mrb[0].mxu0
        %v3339 = vpop.f32.mrb[0].mxu0
        %v3340 = vadd.f32 %v3180, %v3339
        %v3341 = vpop.f32.mrb[0].mxu0
        %3342 = vmatprep.mubr.bf16.mxu0 0
        %3343 = vmatmul.mubr.bf16.gmra.mrb[0].mxu0 %v3105
        %v3344 = vpop.f32.mrb[0].mxu0
        %v3345 = vadd.f32 %v3180, %v3344
        %v3346 = vpop.f32.mrb[0].mxu0
        %v3347 = vpop.f32.mrb[0].mxu0
        %v3348 = vadd.f32 %v3180, %v3347
        %v3349 = vpop.f32.mrb[0].mxu0
        %3350 = vmatprep.mubr.bf16.mxu0 0
        %3351 = vmatmul.mubr.bf16.gmra.mrb[0].mxu0 %v3106
        %v3352 = vpop.f32.mrb[0].mxu0
        %v3353 = vadd.f32 %v3180, %v3352
        %v3354 = vpop.f32.mrb[0].mxu0
        %v3355 = vpop.f32.mrb[0].mxu0
        %v3356 = vadd.f32 %v3180, %v3355
        %v3357 = vpop.f32.mrb[0].mxu0
        %3358 = vmatprep.mubr.bf16.mxu0 0
        %3359 = vmatmul.mubr.bf16.gmra.mrb[0].mxu0 %v3107
        %v3360 = vpop.f32.mrb[0].mxu0
        %v3361 = vadd.f32 %v3180, %v3360
        %v3362 = vpop.f32.mrb[0].mxu0
        %v3363 = vpop.f32.mrb[0].mxu0
        %v3364 = vadd.f32 %v3180, %v3363
        %v3365 = vpop.f32.mrb[0].mxu0
        %3366 = vmatprep.mubr.bf16.mxu0 0
        %3367 = vmatmul.mubr.bf16.gmra.mrb[0].mxu0 %v3108
        %v3368 = vpop.f32.mrb[0].mxu0
        %v3369 = vadd.f32 %v3180, %v3368
        %v3370 = vpop.f32.mrb[0].mxu0
        %v3371 = vpop.f32.mrb[0].mxu0
        %v3372 = vadd.f32 %v3180, %v3371
        %v3373 = vpop.f32.mrb[0].mxu0
        %3374 = vmatprep.mubr.bf16.mxu0 0
        %3375 = vmatmul.mubr.bf16.gmra.mrb[0].mxu0 %v3109
        %v3376 = vpop.f32.mrb[0].mxu0
        %v3377 = vadd.f32 %v3180, %v3376
        %v3378 = vpop.f32.mrb[0].mxu0
        %v3379 = vpop.f32.mrb[0].mxu0
        %v3380 = vadd.f32 %v3180, %v3379
        %v3381 = vpop.f32.mrb[0].mxu0
        %3382 = vmatprep.mubr.bf16.mxu0 0
        %3383 = vmatmul.mubr.bf16.gmra.mrb[0].mxu0 %v3110
        %v3384 = vpop.f32.mrb[0].mxu0
        %v3385 = vadd.f32 %v3180, %v3384
        %v3386 = vpop.f32.mrb[0].mxu0
        %v3387 = vpop.f32.mrb[0].mxu0
        %v3388 = vadd.f32 %v3180, %v3387
        %v3389 = vpop.f32.mrb[0].mxu0
        %3390 = vmatprep.mubr.bf16.mxu0 0
        %3391 = vmatmul.mubr.bf16.gmra.mrb[0].mxu0 %v3111
        %v3392 = vpop.f32.mrb[0].mxu0
        %v3393 = vadd.f32 %v3180, %v3392
        %v3394 = vpop.f32.mrb[0].mxu0
        %v3395 = vpop.f32.mrb[0].mxu0
        %v3396 = vadd.f32 %v3180, %v3395
        %v3397 = vpop.f32.mrb[0].mxu0
        %3398 = vmatprep.mubr.bf16.mxu0 0
        %3399 = vmatmul.mubr.bf16.gmra.mrb[0].mxu0 %v3112
        %v3400 = vpop.f32.mrb[0].mxu0
        %v3401 = vadd.f32 %v3180, %v3400
        %v3402 = vpop.f32.mrb[0].mxu0
        %v3403 = vpop.f32.mrb[0].mxu0
        %v3404 = vadd.f32 %v3180, %v3403
        %v3405 = vpop.f32.mrb[0].mxu0
        %3406 = vmatprep.mubr.bf16.mxu0 0
        %3407 = vmatmul.mubr.bf16.gmra.mrb[0].mxu0 %v3113
        %v3408 = vpop.f32.mrb[0].mxu0
        %v3409 = vadd.f32 %v3180, %v3408
        %v3410 = vpop.f32.mrb[0].mxu0
        %v3411 = vpop.f32.mrb[0].mxu0
        %v3412 = vadd.f32 %v3180, %v3411
        %v3413 = vpop.f32.mrb[0].mxu0
        %3414 = vmatprep.mubr.bf16.mxu0 0
        %3415 = vmatmul.mubr.bf16.gmra.mrb[0].mxu0 %v3114
        %v3416 = vpop.f32.mrb[0].mxu0
        %v3417 = vadd.f32 %v3180, %v3416
        %v3418 = vpop.f32.mrb[0].mxu0
        %v3419 = vpop.f32.mrb[0].mxu0
        %v3420 = vadd.f32 %v3180, %v3419
        %v3421 = vpop.f32.mrb[0].mxu0
        %3422 = vmatprep.mubr.bf16.mxu0 0
        %3423 = vmatmul.mubr.bf16.gmra.mrb[0].mxu0 %v3115
        %v3424 = vpop.f32.mrb[0].mxu0
        %v3425 = vadd.f32 %v3180, %v3424
        %v3426 = vpop.f32.mrb[0].mxu0
        %v3427 = vpop.f32.mrb[0].mxu0
        %v3428 = vadd.f32 %v3180, %v3427
        %v3429 = vpop.f32.mrb[0].mxu0
        %3430 = vmatprep.mubr.bf16.mxu0 0
        %3431 = vmatmul.mubr.bf16.gmra.mrb[0].mxu0 %v3116
        %v3432 = vpop.f32.mrb[0].mxu0
        %v3433 = vadd.f32 %v3180, %v3432
        %v3434 = vpop.f32.mrb[0].mxu0
        %v3435 = vpop.f32.mrb[0].mxu0
        %v3436 = vadd.f32 %v3180, %v3435
        %v3437 = vpop.f32.mrb[0].mxu0
        %3438 = vmatprep.mubr.bf16.mxu0 0
        %3439 = vmatmul.mubr.bf16.gmra.mrb[0].mxu0 %v3117
        %v3440 = vpop.f32.mrb[0].mxu0
        %v3441 = vadd.f32 %v3180, %v3440
        %v3442 = vpop.f32.mrb[0].mxu0
        %v3443 = vpop.f32.mrb[0].mxu0
        %v3444 = vadd.f32 %v3180, %v3443
        %v3445 = vpop.f32.mrb[0].mxu0
        %3446 = vmatprep.mubr.bf16.mxu0 0
        %3447 = vmatmul.mubr.bf16.gmra.mrb[0].mxu0 %v3118
        %v3448 = vpop.f32.mrb[0].mxu0
        %v3449 = vadd.f32 %v3180, %v3448
        %v3450 = vpop.f32.mrb[0].mxu0
        %v3451 = vpop.f32.mrb[0].mxu0
        %v3452 = vadd.f32 %v3180, %v3451
        %v3453 = vpop.f32.mrb[0].mxu0
        %3454 = vmatprep.mubr.bf16.mxu0 0
        %3455 = vmatmul.mubr.bf16.gmra.mrb[0].mxu0 %v3119
        %v3456 = vpop.f32.mrb[0].mxu0
        %v3457 = vadd.f32 %v3180, %v3456
        %v3458 = vpop.f32.mrb[0].mxu0
        %v3459 = vpop.f32.mrb[0].mxu0
        %v3460 = vadd.f32 %v3180, %v3459
        %v3461 = vpop.f32.mrb[0].mxu0
        %3462 = vmatprep.mubr.bf16.mxu0 0
        %3463 = vmatmul.mubr.bf16.gmra.mrb[0].mxu0 %v3120
        %v3464 = vpop.f32.mrb[0].mxu0
        %v3465 = vadd.f32 %v3180, %v3464
        %v3466 = vpop.f32.mrb[0].mxu0
        %v3467 = vpop.f32.mrb[0].mxu0
        %v3468 = vadd.f32 %v3180, %v3467
        %v3469 = vpop.f32.mrb[0].mxu0
        %3470 = vmatprep.mubr.bf16.mxu0 0
        %3471 = vmatmul.mubr.bf16.gmra.mrb[0].mxu0 %v3121
        %v3472 = vpop.f32.mrb[0].mxu0
        %v3473 = vadd.f32 %v3180, %v3472
        %v3474 = vpop.f32.mrb[0].mxu0
        %v3475 = vpop.f32.mrb[0].mxu0
        %v3476 = vadd.f32 %v3180, %v3475
        %v3477 = vpop.f32.mrb[0].mxu0
        %3478 = vmatprep.mubr.bf16.mxu0 0
        %3479 = vmatmul.mubr.bf16.gmra.mrb[0].mxu0 %v3122
        %v3480 = vpop.f32.mrb[0].mxu0
        %v3481 = vadd.f32 %v3180, %v3480
        %v3482 = vpop.f32.mrb[0].mxu0
        %v3483 = vpop.f32.mrb[0].mxu0
        %v3484 = vadd.f32 %v3180, %v3483
        %v3485 = vpop.f32.mrb[0].mxu0
        %3486 = vmatprep.mubr.bf16.mxu0 0
        %3487 = vmatmul.mubr.bf16.gmra.mrb[0].mxu0 %v3123
        %v3488 = vpop.f32.mrb[0].mxu0
        %v3489 = vadd.f32 %v3180, %v3488
        %v3490 = vpop.f32.mrb[0].mxu0
        %v3491 = vpop.f32.mrb[0].mxu0
        %v3492 = vadd.f32 %v3180, %v3491
        %v3493 = vpop.f32.mrb[0].mxu0
        %3494 = vmatprep.mubr.bf16.mxu0 0
        %3495 = vmatmul.mubr.bf16.gmra.mrb[0].mxu0 %v3124
        %v3496 = vpop.f32.mrb[0].mxu0
        %v3497 = vadd.f32 %v3180, %v3496
        %v3498 = vpop.f32.mrb[0].mxu0
        %v3499 = vpop.f32.mrb[0].mxu0
        %v3500 = vadd.f32 %v3180, %v3499
        %v3501 = vpop.f32.mrb[0].mxu0
        %3502 = vmatprep.mubr.bf16.mxu0 0
        %3503 = vmatmul.mubr.bf16.gmra.mrb[0].mxu0 %v3125
        %v3504 = vpop.f32.mrb[0].mxu0
        %v3505 = vadd.f32 %v3180, %v3504
        %v3506 = vpop.f32.mrb[0].mxu0
        %v3507 = vpop.f32.mrb[0].mxu0
        %v3508 = vadd.f32 %v3180, %v3507
        %v3509 = vpop.f32.mrb[0].mxu0
        %3510 = vmatprep.mubr.bf16.mxu0 0
        %3511 = vmatmul.mubr.bf16.gmra.mrb[0].mxu0 %v3126
        %v3512 = vpop.f32.mrb[0].mxu0
        %v3513 = vadd.f32 %v3180, %v3512
        %v3514 = vpop.f32.mrb[0].mxu0
        %v3515 = vpop.f32.mrb[0].mxu0
        %v3516 = vadd.f32 %v3180, %v3515
        %v3517 = vpop.f32.mrb[0].mxu0
        %3518 = vmatprep.mubr.bf16.mxu0 0
        %3519 = vmatmul.mubr.bf16.gmra.mrb[0].mxu0 %v3127
        %v3520 = vpop.f32.mrb[0].mxu0
        %v3521 = vadd.f32 %v3180, %v3520
        %v3522 = vpop.f32.mrb[0].mxu0
        %v3523 = vpop.f32.mrb[0].mxu0
        %v3524 = vadd.f32 %v3180, %v3523
        %v3525 = vpop.f32.mrb[0].mxu0
        %3526 = vmatprep.mubr.bf16.mxu0 0
        %3527 = vmatmul.mubr.bf16.gmra.mrb[0].mxu0 %v3128
        %v3528 = vpop.f32.mrb[0].mxu0
        %v3529 = vadd.f32 %v3180, %v3528
        %v3530 = vpop.f32.mrb[0].mxu0
        %v3531 = vpop.f32.mrb[0].mxu0
        %v3532 = vadd.f32 %v3180, %v3531
        %v3533 = vpop.f32.mrb[0].mxu0
        %3534 = vmatprep.mubr.bf16.mxu0 0
        %3535 = vmatmul.mubr.bf16.gmra.mrb[0].mxu0 %v3129
        %v3536 = vpop.f32.mrb[0].mxu0
        %v3537 = vadd.f32 %v3180, %v3536
        %v3538 = vpop.f32.mrb[0].mxu0
        %v3539 = vpop.f32.mrb[0].mxu0
        %v3540 = vadd.f32 %v3180, %v3539
        %v3541 = vpop.f32.mrb[0].mxu0
        %3542 = vmatprep.mubr.bf16.mxu0 0
        %3543 = vmatmul.mubr.bf16.gmra.mrb[0].mxu0 %v3130
        %v3544 = vpop.f32.mrb[0].mxu0
        %v3545 = vadd.f32 %v3180, %v3544
        %v3546 = vpop.f32.mrb[0].mxu0
        %v3547 = vpop.f32.mrb[0].mxu0
        %v3548 = vadd.f32 %v3180, %v3547
        %v3549 = vpop.f32.mrb[0].mxu0
        %3550 = vmatprep.mubr.bf16.mxu0 0
        %3551 = vmatmul.mubr.bf16.gmra.mrb[0].mxu0 %v3131
        %v3552 = vpop.f32.mrb[0].mxu0
        %v3553 = vadd.f32 %v3180, %v3552
        %v3554 = vpop.f32.mrb[0].mxu0
        %v3555 = vpop.f32.mrb[0].mxu0
        %v3556 = vadd.f32 %v3180, %v3555
        %v3557 = vpop.f32.mrb[0].mxu0
        %3558 = vmatprep.mubr.bf16.mxu0 0
        %3559 = vmatmul.mubr.bf16.gmra.mrb[0].mxu0 %v3132
        %v3560 = vpop.f32.mrb[0].mxu0
        %v3561 = vadd.f32 %v3180, %v3560
        %v3562 = vpop.f32.mrb[0].mxu0
        %v3563 = vpop.f32.mrb[0].mxu0
        %v3564 = vadd.f32 %v3180, %v3563
        %v3565 = vpop.f32.mrb[0].mxu0
        %3566 = vmatprep.mubr.bf16.mxu0 0
        %3567 = vmatmul.mubr.bf16.gmra.mrb[0].mxu0 %v3133
        %v3568 = vpop.f32.mrb[0].mxu0
        %v3569 = vadd.f32 %v3180, %v3568
        %v3570 = vpop.f32.mrb[0].mxu0
        %v3571 = vpop.f32.mrb[0].mxu0
        %v3572 = vadd.f32 %v3180, %v3571
        %v3573 = vpop.f32.mrb[0].mxu0
        %3574 = vmatprep.mubr.bf16.mxu0 0
        %3575 = vmatmul.mubr.bf16.gmra.mrb[0].mxu0 %v3134
        %v3576 = vpop.f32.mrb[0].mxu0
        %v3577 = vadd.f32 %v3180, %v3576
        %v3578 = vpop.f32.mrb[0].mxu0
        %v3579 = vpop.f32.mrb[0].mxu0
        %v3580 = vadd.f32 %v3180, %v3579
        %v3581 = vpop.f32.mrb[0].mxu0
        %3582 = vmatprep.mubr.bf16.mxu0 0
        %3583 = vmatmul.mubr.bf16.gmra.mrb[0].mxu0 %v3135
        %v3584 = vpop.f32.mrb[0].mxu0
        %v3585 = vadd.f32 %v3180, %v3584
        %v3586 = vpop.f32.mrb[0].mxu0
        %v3587 = vpop.f32.mrb[0].mxu0
        %v3588 = vadd.f32 %v3180, %v3587
        %v3589 = vpop.f32.mrb[0].mxu0
        %3590 = vmatprep.mubr.bf16.mxu0 0
        %3591 = vmatmul.mubr.bf16.gmra.mrb[0].mxu0 %v3136
        %v3592 = vpop.f32.mrb[0].mxu0
        %v3593 = vadd.f32 %v3180, %v3592
        %v3594 = vpop.f32.mrb[0].mxu0
        %v3595 = vpop.f32.mrb[0].mxu0
        %v3596 = vadd.f32 %v3180, %v3595
        %v3597 = vpop.f32.mrb[0].mxu0
        %3598 = vmatprep.mubr.bf16.mxu0 0
        %3599 = vmatmul.mubr.bf16.gmra.mrb[0].mxu0 %v3137
        %v3600 = vpop.f32.mrb[0].mxu0
        %v3601 = vadd.f32 %v3180, %v3600
        %v3602 = vpop.f32.mrb[0].mxu0
        %v3603 = vpop.f32.mrb[0].mxu0
        %v3604 = vadd.f32 %v3180, %v3603
        %v3605 = vpop.f32.mrb[0].mxu0
        %3606 = vmatprep.mubr.bf16.mxu0 0
        %3607 = vmatmul.mubr.bf16.gmra.mrb[0].mxu0 %v3138
        %v3608 = vpop.f32.mrb[0].mxu0
        %v3609 = vadd.f32 %v3180, %v3608
        %v3610 = vpop.f32.mrb[0].mxu0
        %v3611 = vpop.f32.mrb[0].mxu0
        %v3612 = vadd.f32 %v3180, %v3611
        %v3613 = vpop.f32.mrb[0].mxu0
        %3614 = vmatprep.mubr.bf16.mxu0 0
        %3615 = vmatmul.mubr.bf16.gmra.mrb[0].mxu0 %v3139
        %v3616 = vpop.f32.mrb[0].mxu0
        %v3617 = vadd.f32 %v3180, %v3616
        %v3618 = vpop.f32.mrb[0].mxu0
        %v3619 = vpop.f32.mrb[0].mxu0
        %v3620 = vadd.f32 %v3180, %v3619
        %v3621 = vpop.f32.mrb[0].mxu0
        %3622 = vmatprep.mubr.bf16.mxu0 0
        %3623 = vmatmul.mubr.bf16.gmra.mrb[0].mxu0 %v3140
        %v3624 = vpop.f32.mrb[0].mxu0
        %v3625 = vadd.f32 %v3180, %v3624
        %v3626 = vpop.f32.mrb[0].mxu0
        %v3627 = vpop.f32.mrb[0].mxu0
        %v3628 = vadd.f32 %v3180, %v3627
        %v3629 = vpop.f32.mrb[0].mxu0
        %3630 = vmatprep.mubr.bf16.mxu0 0
        %3631 = vmatmul.mubr.bf16.gmra.mrb[0].mxu0 %v3141
        %v3632 = vpop.f32.mrb[0].mxu0
        %v3633 = vadd.f32 %v3180, %v3632
        %v3634 = vpop.f32.mrb[0].mxu0
        %v3635 = vpop.f32.mrb[0].mxu0
        %v3636 = vadd.f32 %v3180, %v3635
        %v3637 = vpop.f32.mrb[0].mxu0
        %3638 = vmatprep.mubr.bf16.mxu0 0
        %3639 = vmatmul.mubr.bf16.gmra.mrb[0].mxu0 %v3142
        %v3640 = vpop.f32.mrb[0].mxu0
        %v3641 = vadd.f32 %v3180, %v3640
        %v3642 = vpop.f32.mrb[0].mxu0
        %v3643 = vpop.f32.mrb[0].mxu0
        %v3644 = vadd.f32 %v3180, %v3643
        %v3645 = vpop.f32.mrb[0].mxu0
        %3646 = vmatprep.mubr.bf16.mxu0 0
        %3647 = vmatmul.mubr.bf16.gmra.mrb[0].mxu0 %v3143
        %v3648 = vpop.f32.mrb[0].mxu0
        %v3649 = vadd.f32 %v3180, %v3648
        %v3650 = vpop.f32.mrb[0].mxu0
        %v3651 = vpop.f32.mrb[0].mxu0
        %v3652 = vadd.f32 %v3180, %v3651
        %v3653 = vpop.f32.mrb[0].mxu0
        %3654 = vmatprep.mubr.bf16.mxu0 0
        %3655 = vmatmul.mubr.bf16.gmra.mrb[0].mxu0 %v3144
        %v3656 = vpop.f32.mrb[0].mxu0
        %v3657 = vadd.f32 %v3180, %v3656
        %v3658 = vpop.f32.mrb[0].mxu0
        %v3659 = vpop.f32.mrb[0].mxu0
        %v3660 = vadd.f32 %v3180, %v3659
        %v3661 = vpop.f32.mrb[0].mxu0
        %3662 = vmatprep.mubr.bf16.mxu0 0
        %3663 = vmatmul.mubr.bf16.gmra.mrb[0].mxu0 %v3145
        %v3664 = vpop.f32.mrb[0].mxu0
        %v3665 = vadd.f32 %v3180, %v3664
        %v3666 = vpop.f32.mrb[0].mxu0
        %v3667 = vpop.f32.mrb[0].mxu0
        %v3668 = vadd.f32 %v3180, %v3667
        %v3669 = vpop.f32.mrb[0].mxu0
        %3670 = vmatprep.mubr.bf16.mxu0 0
        %3671 = vmatmul.mubr.bf16.gmra.mrb[0].mxu0 %v3146
        %v3672 = vpop.f32.mrb[0].mxu0
        %v3673 = vadd.f32 %v3180, %v3672
        %v3674 = vpop.f32.mrb[0].mxu0
        %v3675 = vpop.f32.mrb[0].mxu0
        %v3676 = vadd.f32 %v3180, %v3675
        %v3677 = vpop.f32.mrb[0].mxu0
        %3678 = vmatprep.mubr.bf16.mxu0 0
        %3679 = vmatmul.mubr.bf16.gmra.mrb[0].mxu0 %v3147
        %v3680 = vpop.f32.mrb[0].mxu0
        %v3681 = vadd.f32 %v3180, %v3680
        %v3682 = vpop.f32.mrb[0].mxu0
        %v3683 = vpop.f32.mrb[0].mxu0
        %v3684 = vadd.f32 %v3180, %v3683
        %v3685 = vpop.f32.mrb[0].mxu0
        %3686 = vmatprep.mubr.bf16.mxu0 0
        %3687 = vmatmul.mubr.bf16.gmra.mrb[0].mxu0 %v3148
        %v3688 = vpop.f32.mrb[0].mxu0
        %v3689 = vadd.f32 %v3180, %v3688
        %v3690 = vpop.f32.mrb[0].mxu0
        %v3691 = vpop.f32.mrb[0].mxu0
        %v3692 = vadd.f32 %v3180, %v3691
        %v3693 = vpop.f32.mrb[0].mxu0
        %3694 = vmatprep.mubr.bf16.mxu0 0
        %3695 = vmatmul.mubr.bf16.gmra.mrb[0].mxu0 %v3149
        %v3696 = vpop.f32.mrb[0].mxu0
        %v3697 = vadd.f32 %v3180, %v3696
        %v3698 = vpop.f32.mrb[0].mxu0
        %v3699 = vpop.f32.mrb[0].mxu0
        %v3700 = vadd.f32 %v3180, %v3699
        %v3701 = vpop.f32.mrb[0].mxu0
        %3702 = vmatprep.mubr.bf16.mxu0 0
        %3703 = vmatmul.mubr.bf16.gmra.mrb[0].mxu0 %v3150
        %v3704 = vpop.f32.mrb[0].mxu0
        %v3705 = vadd.f32 %v3180, %v3704
        %v3706 = vpop.f32.mrb[0].mxu0
        %v3707 = vpop.f32.mrb[0].mxu0
        %v3708 = vadd.f32 %v3180, %v3707
        %v3709 = vpop.f32.mrb[0].mxu0
        %3710 = vmatprep.mubr.bf16.mxu0 0
        %3711 = vmatmul.mubr.bf16.gmra.mrb[0].mxu0 %v3151
        %v3712 = vpop.f32.mrb[0].mxu0
        %v3713 = vadd.f32 %v3180, %v3712
        %v3714 = vpop.f32.mrb[0].mxu0
        %v3715 = vpop.f32.mrb[0].mxu0
        %v3716 = vadd.f32 %v3180, %v3715
        %v3717 = vpop.f32.mrb[0].mxu0
        %3718 = vmatprep.mubr.bf16.mxu0 0
        %3719 = vmatmul.mubr.bf16.gmra.mrb[0].mxu0 %v3152
        %v3720 = vpop.f32.mrb[0].mxu0
        %v3721 = vadd.f32 %v3180, %v3720
        %v3722 = vpop.f32.mrb[0].mxu0
        %v3723 = vpop.f32.mrb[0].mxu0
        %v3724 = vadd.f32 %v3180, %v3723
        %v3725 = vpop.f32.mrb[0].mxu0
        %3726 = vmatprep.mubr.bf16.mxu0 0
        %3727 = vmatmul.mubr.bf16.gmra.mrb[0].mxu0 %v3153
        %v3728 = vpop.f32.mrb[0].mxu0
        %v3729 = vadd.f32 %v3180, %v3728
        %v3730 = vpop.f32.mrb[0].mxu0
        %v3731 = vpop.f32.mrb[0].mxu0
        %v3732 = vadd.f32 %v3180, %v3731
        %v3733 = vpop.f32.mrb[0].mxu0
        %3734 = vmatprep.mubr.bf16.mxu0 0
        %3735 = vmatmul.mubr.bf16.gmra.mrb[0].mxu0 %v3154
        %v3736 = vpop.f32.mrb[0].mxu0
        %v3737 = vadd.f32 %v3180, %v3736
        %v3738 = vpop.f32.mrb[0].mxu0
        %v3739 = vpop.f32.mrb[0].mxu0
        %v3740 = vadd.f32 %v3180, %v3739
        %v3741 = vpop.f32.mrb[0].mxu0
        %3742 = vmatprep.mubr.bf16.mxu0 0
        %3743 = vmatmul.mubr.bf16.gmra.mrb[0].mxu0 %v3155
        %v3744 = vpop.f32.mrb[0].mxu0
        %v3745 = vadd.f32 %v3180, %v3744
        %v3746 = vpop.f32.mrb[0].mxu0
        %v3747 = vpop.f32.mrb[0].mxu0
        %v3748 = vadd.f32 %v3180, %v3747
        %v3749 = vpop.f32.mrb[0].mxu0
        %3750 = vmatprep.mubr.bf16.mxu0 0
        %3751 = vmatmul.mubr.bf16.gmra.mrb[0].mxu0 %v3156
        %v3752 = vpop.f32.mrb[0].mxu0
        %v3753 = vadd.f32 %v3180, %v3752
        %v3754 = vpop.f32.mrb[0].mxu0
        %v3755 = vpop.f32.mrb[0].mxu0
        %v3756 = vadd.f32 %v3180, %v3755
        %v3757 = vpop.f32.mrb[0].mxu0
        %3758 = vmatprep.mubr.bf16.mxu0 0
        %3759 = vmatmul.mubr.bf16.gmra.mrb[0].mxu0 %v3157
        %v3760 = vpop.f32.mrb[0].mxu0
        %v3761 = vadd.f32 %v3180, %v3760
        %v3762 = vpop.f32.mrb[0].mxu0
        %v3763 = vpop.f32.mrb[0].mxu0
        %v3764 = vadd.f32 %v3180, %v3763
        %v3765 = vpop.f32.mrb[0].mxu0
        %3766 = vmatprep.mubr.bf16.mxu0 0
        %3767 = vmatmul.mubr.bf16.gmra.mrb[0].mxu0 %v3158
        %v3768 = vpop.f32.mrb[0].mxu0
        %v3769 = vadd.f32 %v3180, %v3768
        %v3770 = vpop.f32.mrb[0].mxu0
        %v3771 = vpop.f32.mrb[0].mxu0
        %v3772 = vadd.f32 %v3180, %v3771
        %v3773 = vpop.f32.mrb[0].mxu0
        %3774 = vdwg.mxu0
        %v3775 = vmax.f32 %v3265, 0.0
        %v3776 = vmax.f32 %v3268, 0.0
        %v3777 = vmax.f32 %v3273, 0.0
        %v3778 = vmax.f32 %v3276, 0.0
        %v3779 = vmax.f32 %v3281, 0.0
        %v3780 = vmax.f32 %v3284, 0.0
        %v3781 = vmax.f32 %v3289, 0.0
        %v3782 = vmax.f32 %v3292, 0.0
        %v3783 = vmax.f32 %v3297, 0.0
        %v3784 = vmax.f32 %v3300, 0.0
        %v3785 = vmax.f32 %v3305, 0.0
        %v3786 = vmax.f32 %v3308, 0.0
        %v3787 = vmax.f32 %v3313, 0.0
        %v3788 = vmax.f32 %v3316, 0.0
        %v3789 = vmax.f32 %v3321, 0.0
        %v3790 = vmax.f32 %v3324, 0.0
        %v3791 = vmax.f32 %v3329, 0.0
        %v3792 = vmax.f32 %v3332, 0.0
        %v3793 = vmax.f32 %v3337, 0.0
        %v3794 = vmax.f32 %v3340, 0.0
        %v3795 = vmax.f32 %v3345, 0.0
        %v3796 = vmax.f32 %v3348, 0.0
        %v3797 = vmax.f32 %v3353, 0.0
        %v3798 = vmax.f32 %v3356, 0.0
        %v3799 = vmax.f32 %v3361, 0.0
        %v3800 = vmax.f32 %v3364, 0.0
        %v3801 = vmax.f32 %v3369, 0.0
        %v3802 = vmax.f32 %v3372, 0.0
        %v3803 = vmax.f32 %v3377, 0.0
        %v3804 = vmax.f32 %v3380, 0.0
        %v3805 = vmax.f32 %v3385, 0.0
        %v3806 = vmax.f32 %v3388, 0.0
        %v3807 = vmax.f32 %v3393, 0.0
        %v3808 = vmax.f32 %v3396, 0.0
        %v3809 = vmax.f32 %v3401, 0.0
        %v3810 = vmax.f32 %v3404, 0.0
        %v3811 = vmax.f32 %v3409, 0.0
        %v3812 = vmax.f32 %v3412, 0.0
        %v3813 = vmax.f32 %v3417, 0.0
        %v3814 = vmax.f32 %v3420, 0.0
        %v3815 = vmax.f32 %v3425, 0.0
        %v3816 = vmax.f32 %v3428, 0.0
        %v3817 = vmax.f32 %v3433, 0.0
        %v3818 = vmax.f32 %v3436, 0.0
        %v3819 = vmax.f32 %v3441, 0.0
        %v3820 = vmax.f32 %v3444, 0.0
        %v3821 = vmax.f32 %v3449, 0.0
        %v3822 = vmax.f32 %v3452, 0.0
        %v3823 = vmax.f32 %v3457, 0.0
        %v3824 = vmax.f32 %v3460, 0.0
        %v3825 = vmax.f32 %v3465, 0.0
        %v3826 = vmax.f32 %v3468, 0.0
        %v3827 = vmax.f32 %v3473, 0.0
        %v3828 = vmax.f32 %v3476, 0.0
        %v3829 = vmax.f32 %v3481, 0.0
        %v3830 = vmax.f32 %v3484, 0.0
        %v3831 = vmax.f32 %v3489, 0.0
        %v3832 = vmax.f32 %v3492, 0.0
        %v3833 = vmax.f32 %v3497, 0.0
        %v3834 = vmax.f32 %v3500, 0.0
        %v3835 = vmax.f32 %v3505, 0.0
        %v3836 = vmax.f32 %v3508, 0.0
        %v3837 = vmax.f32 %v3513, 0.0
        %v3838 = vmax.f32 %v3516, 0.0
        %v3839 = vmax.f32 %v3521, 0.0
        %v3840 = vmax.f32 %v3524, 0.0
        %v3841 = vmax.f32 %v3529, 0.0
        %v3842 = vmax.f32 %v3532, 0.0
        %v3843 = vmax.f32 %v3537, 0.0
        %v3844 = vmax.f32 %v3540, 0.0
        %v3845 = vmax.f32 %v3545, 0.0
        %v3846 = vmax.f32 %v3548, 0.0
        %v3847 = vmax.f32 %v3553, 0.0
        %v3848 = vmax.f32 %v3556, 0.0
        %v3849 = vmax.f32 %v3561, 0.0
        %v3850 = vmax.f32 %v3564, 0.0
        %v3851 = vmax.f32 %v3569, 0.0
        %v3852 = vmax.f32 %v3572, 0.0
        %v3853 = vmax.f32 %v3577, 0.0
        %v3854 = vmax.f32 %v3580, 0.0
        %v3855 = vmax.f32 %v3585, 0.0
        %v3856 = vmax.f32 %v3588, 0.0
        %v3857 = vmax.f32 %v3593, 0.0
        %v3858 = vmax.f32 %v3596, 0.0
        %v3859 = vmax.f32 %v3601, 0.0
        %v3860 = vmax.f32 %v3604, 0.0
        %v3861 = vmax.f32 %v3609, 0.0
        %v3862 = vmax.f32 %v3612, 0.0
        %v3863 = vmax.f32 %v3617, 0.0
        %v3864 = vmax.f32 %v3620, 0.0
        %v3865 = vmax.f32 %v3625, 0.0
        %v3866 = vmax.f32 %v3628, 0.0
        %v3867 = vmax.f32 %v3633, 0.0
        %v3868 = vmax.f32 %v3636, 0.0
        %v3869 = vmax.f32 %v3641, 0.0
        %v3870 = vmax.f32 %v3644, 0.0
        %v3871 = vmax.f32 %v3649, 0.0
        %v3872 = vmax.f32 %v3652, 0.0
        %v3873 = vmax.f32 %v3657, 0.0
        %v3874 = vmax.f32 %v3660, 0.0
        %v3875 = vmax.f32 %v3665, 0.0
        %v3876 = vmax.f32 %v3668, 0.0
        %v3877 = vmax.f32 %v3673, 0.0
        %v3878 = vmax.f32 %v3676, 0.0
        %v3879 = vmax.f32 %v3681, 0.0
        %v3880 = vmax.f32 %v3684, 0.0
        %v3881 = vmax.f32 %v3689, 0.0
        %v3882 = vmax.f32 %v3692, 0.0
        %v3883 = vmax.f32 %v3697, 0.0
        %v3884 = vmax.f32 %v3700, 0.0
        %v3885 = vmax.f32 %v3705, 0.0
        %v3886 = vmax.f32 %v3708, 0.0
        %v3887 = vmax.f32 %v3713, 0.0
        %v3888 = vmax.f32 %v3716, 0.0
        %v3889 = vmax.f32 %v3721, 0.0
        %v3890 = vmax.f32 %v3724, 0.0
        %v3891 = vmax.f32 %v3729, 0.0
        %v3892 = vmax.f32 %v3732, 0.0
        %v3893 = vmax.f32 %v3737, 0.0
        %v3894 = vmax.f32 %v3740, 0.0
        %v3895 = vmax.f32 %v3745, 0.0
        %v3896 = vmax.f32 %v3748, 0.0
        %v3897 = vmax.f32 %v3753, 0.0
        %v3898 = vmax.f32 %v3756, 0.0
        %v3899 = vmax.f32 %v3761, 0.0
        %v3900 = vmax.f32 %v3764, 0.0
        %v3901 = vmax.f32 %v3769, 0.0
        %v3902 = vmax.f32 %v3772, 0.0
        %v3903 = vpack.c.bf16 %v3776, %v3775
        %v3904 = vpack.c.bf16 %v3778, %v3777
        %v3905 = vpack.c.bf16 %v3780, %v3779
        %v3906 = vpack.c.bf16 %v3782, %v3781
        %v3907 = vpack.c.bf16 %v3784, %v3783
        %v3908 = vpack.c.bf16 %v3786, %v3785
        %v3909 = vpack.c.bf16 %v3788, %v3787
        %v3910 = vpack.c.bf16 %v3790, %v3789
        %v3911 = vpack.c.bf16 %v3792, %v3791
        %v3912 = vpack.c.bf16 %v3794, %v3793
        %v3913 = vpack.c.bf16 %v3796, %v3795
        %v3914 = vpack.c.bf16 %v3798, %v3797
        %v3915 = vpack.c.bf16 %v3800, %v3799
        %v3916 = vpack.c.bf16 %v3802, %v3801
        %v3917 = vpack.c.bf16 %v3804, %v3803
        %v3918 = vpack.c.bf16 %v3806, %v3805
        %v3919 = vpack.c.bf16 %v3808, %v3807
        %v3920 = vpack.c.bf16 %v3810, %v3809
        %v3921 = vpack.c.bf16 %v3812, %v3811
        %v3922 = vpack.c.bf16 %v3814, %v3813
        %v3923 = vpack.c.bf16 %v3816, %v3815
        %v3924 = vpack.c.bf16 %v3818, %v3817
        %v3925 = vpack.c.bf16 %v3820, %v3819
        %v3926 = vpack.c.bf16 %v3822, %v3821
        %v3927 = vpack.c.bf16 %v3824, %v3823
        %v3928 = vpack.c.bf16 %v3826, %v3825
        %v3929 = vpack.c.bf16 %v3828, %v3827
        %v3930 = vpack.c.bf16 %v3830, %v3829
        %v3931 = vpack.c.bf16 %v3832, %v3831
        %v3932 = vpack.c.bf16 %v3834, %v3833
        %v3933 = vpack.c.bf16 %v3836, %v3835
        %v3934 = vpack.c.bf16 %v3838, %v3837
        %v3935 = vpack.c.bf16 %v3840, %v3839
        %v3936 = vpack.c.bf16 %v3842, %v3841
        %v3937 = vpack.c.bf16 %v3844, %v3843
        %v3938 = vpack.c.bf16 %v3846, %v3845
        %v3939 = vpack.c.bf16 %v3848, %v3847
        %v3940 = vpack.c.bf16 %v3850, %v3849
        %v3941 = vpack.c.bf16 %v3852, %v3851
        %v3942 = vpack.c.bf16 %v3854, %v3853
        %v3943 = vpack.c.bf16 %v3856, %v3855
        %v3944 = vpack.c.bf16 %v3858, %v3857
        %v3945 = vpack.c.bf16 %v3860, %v3859
        %v3946 = vpack.c.bf16 %v3862, %v3861
        %v3947 = vpack.c.bf16 %v3864, %v3863
        %v3948 = vpack.c.bf16 %v3866, %v3865
        %v3949 = vpack.c.bf16 %v3868, %v3867
        %v3950 = vpack.c.bf16 %v3870, %v3869
        %v3951 = vpack.c.bf16 %v3872, %v3871
        %v3952 = vpack.c.bf16 %v3874, %v3873
        %v3953 = vpack.c.bf16 %v3876, %v3875
        %v3954 = vpack.c.bf16 %v3878, %v3877
        %v3955 = vpack.c.bf16 %v3880, %v3879
        %v3956 = vpack.c.bf16 %v3882, %v3881
        %v3957 = vpack.c.bf16 %v3884, %v3883
        %v3958 = vpack.c.bf16 %v3886, %v3885
        %v3959 = vpack.c.bf16 %v3888, %v3887
        %v3960 = vpack.c.bf16 %v3890, %v3889
        %v3961 = vpack.c.bf16 %v3892, %v3891
        %v3962 = vpack.c.bf16 %v3894, %v3893
        %v3963 = vpack.c.bf16 %v3896, %v3895
        %v3964 = vpack.c.bf16 %v3898, %v3897
        %v3965 = vpack.c.bf16 %v3900, %v3899
        %v3966 = vpack.c.bf16 %v3902, %v3901
        %v3967 = vld [vmem:[%s1335] sm:$0xf]
        %v3968 = vld [vmem:[%s1335 + $0x4] sm:$0xf]
        %v3969 = vld [vmem:[%s1335 + $0x8] sm:$0xf]
        %v3970 = vld [vmem:[%s1335 + $0xc] sm:$0xf]
        %v3971 = vld [vmem:[%s1335 + $0x10] sm:$0xf]
        %v3972 = vld [vmem:[%s1335 + $0x14] sm:$0xf]
        %v3973 = vld [vmem:[%s1335 + $0x18] sm:$0xf]
        %v3974 = vld [vmem:[%s1335 + $0x1c] sm:$0xf]
        %v3975 = vld [vmem:[%s1335 + $0x20] sm:$0xf]
        %v3976 = vld [vmem:[%s1335 + $0x24] sm:$0xf]
        %v3977 = vld [vmem:[%s1335 + $0x28] sm:$0xf]
        %v3978 = vld [vmem:[%s1335 + $0x2c] sm:$0xf]
        %v3979 = vld [vmem:[%s1335 + $0x30] sm:$0xf]
        %v3980 = vld [vmem:[%s1335 + $0x34] sm:$0xf]
        %v3981 = vld [vmem:[%s1335 + $0x38] sm:$0xf]
        %v3982 = vld [vmem:[%s1335 + $0x3c] sm:$0xf]
        %v3983 = vld [vmem:[%s1206] sm:$0x1]
        %v3985 = vlaneseq
        %v3986 = vshrl.u32 %v3985, 7
        %v3987 = vsub.s32 0, %v3986
        %v3988 = vrot.slane %v3983, %v3987
        %v4006 = vunpack.c.l.b16 %v3967
        %v4007 = vunpack.c.l.b16 %v3968
        %v4008 = vunpack.c.l.b16 %v3969
        %v4009 = vunpack.c.l.b16 %v3970
        %v4010 = vunpack.c.l.b16 %v3971
        %v4011 = vunpack.c.l.b16 %v3972
        %v4012 = vunpack.c.l.b16 %v3973
        %v4013 = vunpack.c.l.b16 %v3974
        %v4014 = vunpack.c.l.b16 %v3975
        %v4015 = vunpack.c.l.b16 %v3976
        %v4016 = vunpack.c.l.b16 %v3977
        %v4017 = vunpack.c.l.b16 %v3978
        %v4018 = vunpack.c.l.b16 %v3979
        %v4019 = vunpack.c.l.b16 %v3980
        %v4020 = vunpack.c.l.b16 %v3981
        %v4021 = vunpack.c.l.b16 %v3982
        %v4022 = vpack.c.b16 %v4007, %v4006
        %v4023 = vpack.c.b16 %v4009, %v4008
        %v4024 = vpack.c.b16 %v4011, %v4010
        %v4025 = vpack.c.b16 %v4013, %v4012
        %v4026 = vpack.c.b16 %v4015, %v4014
        %v4027 = vpack.c.b16 %v4017, %v4016
        %v4028 = vpack.c.b16 %v4019, %v4018
        %v4029 = vpack.c.b16 %v4021, %v4020
        %4038 = vmatprep.subr.bf16.mxu0 0
        %4039 = vmatpush1.bf16.msra.mxu0 %v4022
        %4040 = vmatprep.subr.bf16.mxu0 0
        %4041 = vmatpush1.bf16.msra.mxu0 %v4023
        %4042 = vmatprep.subr.bf16.mxu0 0
        %4043 = vmatpush1.bf16.msra.mxu0 %v4024
        %4044 = vmatprep.subr.bf16.mxu0 0
        %4045 = vmatpush1.bf16.msra.mxu0 %v4025
        %4046 = vmatprep.subr.bf16.mxu0 0
        %4047 = vmatpush1.bf16.msra.mxu0 %v4026
        %4048 = vmatprep.subr.bf16.mxu0 0
        %4049 = vmatpush1.bf16.msra.mxu0 %v4027
        %4050 = vmatprep.subr.bf16.mxu0 0
        %4051 = vmatpush1.bf16.msra.mxu0 %v4028
        %4052 = vmatprep.subr.bf16.mxu0 0
        %4053 = vmatpush1.bf16.msra.mxu0 %v4029
        %4054 = vmatprep.subr.bf16.mxu0 0
        %4055 = vmatpush1.bf16.msra.mxu0 0
        %4056 = vmatprep.subr.bf16.mxu0 0
        %4057 = vmatpush1.bf16.msra.mxu0 0
        %4058 = vmatprep.subr.bf16.mxu0 0
        %4059 = vmatpush1.bf16.msra.mxu0 0
        %4060 = vmatprep.subr.bf16.mxu0 0
        %4061 = vmatpush1.bf16.msra.mxu0 0
        %4062 = vmatprep.subr.bf16.mxu0 0
        %4063 = vmatpush1.bf16.msra.mxu0 0
        %4064 = vmatprep.subr.bf16.mxu0 0
        %4065 = vmatpush1.bf16.msra.mxu0 0
        %4066 = vmatprep.subr.bf16.mxu0 0
        %4067 = vmatpush1.bf16.msra.mxu0 0
        %4068 = vmatprep.subr.bf16.mxu0 0
        %4069 = vmatpush1.bf16.msra.mxu0 0
        %4070 = vmatprep.mubr.bf16.mxu0 0
        %4071 = vmatmul.mubr.bf16.gmra.mrb[0].mxu0 %v3903
        %v4072 = vpop.f32.mrb[0].mxu0
        %v4073 = vadd.f32 %v3988, %v4072
        %v4074 = vpop.f32.mrb[0].mxu0
        %v4075 = vpop.f32.mrb[0].mxu0
        %v4076 = vadd.f32 %v3988, %v4075
        %v4077 = vpop.f32.mrb[0].mxu0
        %4078 = vmatprep.mubr.bf16.mxu0 0
        %4079 = vmatmul.mubr.bf16.gmra.mrb[0].mxu0 %v3904
        %v4080 = vpop.f32.mrb[0].mxu0
        %v4081 = vadd.f32 %v3988, %v4080
        %v4082 = vpop.f32.mrb[0].mxu0
        %v4083 = vpop.f32.mrb[0].mxu0
        %v4084 = vadd.f32 %v3988, %v4083
        %v4085 = vpop.f32.mrb[0].mxu0
        %4086 = vmatprep.mubr.bf16.mxu0 0
        %4087 = vmatmul.mubr.bf16.gmra.mrb[0].mxu0 %v3905
        %v4088 = vpop.f32.mrb[0].mxu0
        %v4089 = vadd.f32 %v3988, %v4088
        %v4090 = vpop.f32.mrb[0].mxu0
        %v4091 = vpop.f32.mrb[0].mxu0
        %v4092 = vadd.f32 %v3988, %v4091
        %v4093 = vpop.f32.mrb[0].mxu0
        %4094 = vmatprep.mubr.bf16.mxu0 0
        %4095 = vmatmul.mubr.bf16.gmra.mrb[0].mxu0 %v3906
        %v4096 = vpop.f32.mrb[0].mxu0
        %v4097 = vadd.f32 %v3988, %v4096
        %v4098 = vpop.f32.mrb[0].mxu0
        %v4099 = vpop.f32.mrb[0].mxu0
        %v4100 = vadd.f32 %v3988, %v4099
        %v4101 = vpop.f32.mrb[0].mxu0
        %4102 = vmatprep.mubr.bf16.mxu0 0
        %4103 = vmatmul.mubr.bf16.gmra.mrb[0].mxu0 %v3907
        %v4104 = vpop.f32.mrb[0].mxu0
        %v4105 = vadd.f32 %v3988, %v4104
        %v4106 = vpop.f32.mrb[0].mxu0
        %v4107 = vpop.f32.mrb[0].mxu0
        %v4108 = vadd.f32 %v3988, %v4107
        %v4109 = vpop.f32.mrb[0].mxu0
        %4110 = vmatprep.mubr.bf16.mxu0 0
        %4111 = vmatmul.mubr.bf16.gmra.mrb[0].mxu0 %v3908
        %v4112 = vpop.f32.mrb[0].mxu0
        %v4113 = vadd.f32 %v3988, %v4112
        %v4114 = vpop.f32.mrb[0].mxu0
        %v4115 = vpop.f32.mrb[0].mxu0
        %v4116 = vadd.f32 %v3988, %v4115
        %v4117 = vpop.f32.mrb[0].mxu0
        %4118 = vmatprep.mubr.bf16.mxu0 0
        %4119 = vmatmul.mubr.bf16.gmra.mrb[0].mxu0 %v3909
        %v4120 = vpop.f32.mrb[0].mxu0
        %v4121 = vadd.f32 %v3988, %v4120
        %v4122 = vpop.f32.mrb[0].mxu0
        %v4123 = vpop.f32.mrb[0].mxu0
        %v4124 = vadd.f32 %v3988, %v4123
        %v4125 = vpop.f32.mrb[0].mxu0
        %4126 = vmatprep.mubr.bf16.mxu0 0
        %4127 = vmatmul.mubr.bf16.gmra.mrb[0].mxu0 %v3910
        %v4128 = vpop.f32.mrb[0].mxu0
        %v4129 = vadd.f32 %v3988, %v4128
        %v4130 = vpop.f32.mrb[0].mxu0
        %v4131 = vpop.f32.mrb[0].mxu0
        %v4132 = vadd.f32 %v3988, %v4131
        %v4133 = vpop.f32.mrb[0].mxu0
        %4134 = vmatprep.mubr.bf16.mxu0 0
        %4135 = vmatmul.mubr.bf16.gmra.mrb[0].mxu0 %v3911
        %v4136 = vpop.f32.mrb[0].mxu0
        %v4137 = vadd.f32 %v3988, %v4136
        %v4138 = vpop.f32.mrb[0].mxu0
        %v4139 = vpop.f32.mrb[0].mxu0
        %v4140 = vadd.f32 %v3988, %v4139
        %v4141 = vpop.f32.mrb[0].mxu0
        %4142 = vmatprep.mubr.bf16.mxu0 0
        %4143 = vmatmul.mubr.bf16.gmra.mrb[0].mxu0 %v3912
        %v4144 = vpop.f32.mrb[0].mxu0
        %v4145 = vadd.f32 %v3988, %v4144
        %v4146 = vpop.f32.mrb[0].mxu0
        %v4147 = vpop.f32.mrb[0].mxu0
        %v4148 = vadd.f32 %v3988, %v4147
        %v4149 = vpop.f32.mrb[0].mxu0
        %4150 = vmatprep.mubr.bf16.mxu0 0
        %4151 = vmatmul.mubr.bf16.gmra.mrb[0].mxu0 %v3913
        %v4152 = vpop.f32.mrb[0].mxu0
        %v4153 = vadd.f32 %v3988, %v4152
        %v4154 = vpop.f32.mrb[0].mxu0
        %v4155 = vpop.f32.mrb[0].mxu0
        %v4156 = vadd.f32 %v3988, %v4155
        %v4157 = vpop.f32.mrb[0].mxu0
        %4158 = vmatprep.mubr.bf16.mxu0 0
        %4159 = vmatmul.mubr.bf16.gmra.mrb[0].mxu0 %v3914
        %v4160 = vpop.f32.mrb[0].mxu0
        %v4161 = vadd.f32 %v3988, %v4160
        %v4162 = vpop.f32.mrb[0].mxu0
        %v4163 = vpop.f32.mrb[0].mxu0
        %v4164 = vadd.f32 %v3988, %v4163
        %v4165 = vpop.f32.mrb[0].mxu0
        %4166 = vmatprep.mubr.bf16.mxu0 0
        %4167 = vmatmul.mubr.bf16.gmra.mrb[0].mxu0 %v3915
        %v4168 = vpop.f32.mrb[0].mxu0
        %v4169 = vadd.f32 %v3988, %v4168
        %v4170 = vpop.f32.mrb[0].mxu0
        %v4171 = vpop.f32.mrb[0].mxu0
        %v4172 = vadd.f32 %v3988, %v4171
        %v4173 = vpop.f32.mrb[0].mxu0
        %4174 = vmatprep.mubr.bf16.mxu0 0
        %4175 = vmatmul.mubr.bf16.gmra.mrb[0].mxu0 %v3916
        %v4176 = vpop.f32.mrb[0].mxu0
        %v4177 = vadd.f32 %v3988, %v4176
        %v4178 = vpop.f32.mrb[0].mxu0
        %v4179 = vpop.f32.mrb[0].mxu0
        %v4180 = vadd.f32 %v3988, %v4179
        %v4181 = vpop.f32.mrb[0].mxu0
        %4182 = vmatprep.mubr.bf16.mxu0 0
        %4183 = vmatmul.mubr.bf16.gmra.mrb[0].mxu0 %v3917
        %v4184 = vpop.f32.mrb[0].mxu0
        %v4185 = vadd.f32 %v3988, %v4184
        %v4186 = vpop.f32.mrb[0].mxu0
        %v4187 = vpop.f32.mrb[0].mxu0
        %v4188 = vadd.f32 %v3988, %v4187
        %v4189 = vpop.f32.mrb[0].mxu0
        %4190 = vmatprep.mubr.bf16.mxu0 0
        %4191 = vmatmul.mubr.bf16.gmra.mrb[0].mxu0 %v3918
        %v4192 = vpop.f32.mrb[0].mxu0
        %v4193 = vadd.f32 %v3988, %v4192
        %v4194 = vpop.f32.mrb[0].mxu0
        %v4195 = vpop.f32.mrb[0].mxu0
        %v4196 = vadd.f32 %v3988, %v4195
        %v4197 = vpop.f32.mrb[0].mxu0
        %4198 = vmatprep.mubr.bf16.mxu0 0
        %4199 = vmatmul.mubr.bf16.gmra.mrb[0].mxu0 %v3919
        %v4200 = vpop.f32.mrb[0].mxu0
        %v4201 = vadd.f32 %v3988, %v4200
        %v4202 = vpop.f32.mrb[0].mxu0
        %v4203 = vpop.f32.mrb[0].mxu0
        %v4204 = vadd.f32 %v3988, %v4203
        %v4205 = vpop.f32.mrb[0].mxu0
        %4206 = vmatprep.mubr.bf16.mxu0 0
        %4207 = vmatmul.mubr.bf16.gmra.mrb[0].mxu0 %v3920
        %v4208 = vpop.f32.mrb[0].mxu0
        %v4209 = vadd.f32 %v3988, %v4208
        %v4210 = vpop.f32.mrb[0].mxu0
        %v4211 = vpop.f32.mrb[0].mxu0
        %v4212 = vadd.f32 %v3988, %v4211
        %v4213 = vpop.f32.mrb[0].mxu0
        %4214 = vmatprep.mubr.bf16.mxu0 0
        %4215 = vmatmul.mubr.bf16.gmra.mrb[0].mxu0 %v3921
        %v4216 = vpop.f32.mrb[0].mxu0
        %v4217 = vadd.f32 %v3988, %v4216
        %v4218 = vpop.f32.mrb[0].mxu0
        %v4219 = vpop.f32.mrb[0].mxu0
        %v4220 = vadd.f32 %v3988, %v4219
        %v4221 = vpop.f32.mrb[0].mxu0
        %4222 = vmatprep.mubr.bf16.mxu0 0
        %4223 = vmatmul.mubr.bf16.gmra.mrb[0].mxu0 %v3922
        %v4224 = vpop.f32.mrb[0].mxu0
        %v4225 = vadd.f32 %v3988, %v4224
        %v4226 = vpop.f32.mrb[0].mxu0
        %v4227 = vpop.f32.mrb[0].mxu0
        %v4228 = vadd.f32 %v3988, %v4227
        %v4229 = vpop.f32.mrb[0].mxu0
        %4230 = vmatprep.mubr.bf16.mxu0 0
        %4231 = vmatmul.mubr.bf16.gmra.mrb[0].mxu0 %v3923
        %v4232 = vpop.f32.mrb[0].mxu0
        %v4233 = vadd.f32 %v3988, %v4232
        %v4234 = vpop.f32.mrb[0].mxu0
        %v4235 = vpop.f32.mrb[0].mxu0
        %v4236 = vadd.f32 %v3988, %v4235
        %v4237 = vpop.f32.mrb[0].mxu0
        %4238 = vmatprep.mubr.bf16.mxu0 0
        %4239 = vmatmul.mubr.bf16.gmra.mrb[0].mxu0 %v3924
        %v4240 = vpop.f32.mrb[0].mxu0
        %v4241 = vadd.f32 %v3988, %v4240
        %v4242 = vpop.f32.mrb[0].mxu0
        %v4243 = vpop.f32.mrb[0].mxu0
        %v4244 = vadd.f32 %v3988, %v4243
        %v4245 = vpop.f32.mrb[0].mxu0
        %4246 = vmatprep.mubr.bf16.mxu0 0
        %4247 = vmatmul.mubr.bf16.gmra.mrb[0].mxu0 %v3925
        %v4248 = vpop.f32.mrb[0].mxu0
        %v4249 = vadd.f32 %v3988, %v4248
        %v4250 = vpop.f32.mrb[0].mxu0
        %v4251 = vpop.f32.mrb[0].mxu0
        %v4252 = vadd.f32 %v3988, %v4251
        %v4253 = vpop.f32.mrb[0].mxu0
        %4254 = vmatprep.mubr.bf16.mxu0 0
        %4255 = vmatmul.mubr.bf16.gmra.mrb[0].mxu0 %v3926
        %v4256 = vpop.f32.mrb[0].mxu0
        %v4257 = vadd.f32 %v3988, %v4256
        %v4258 = vpop.f32.mrb[0].mxu0
        %v4259 = vpop.f32.mrb[0].mxu0
        %v4260 = vadd.f32 %v3988, %v4259
        %v4261 = vpop.f32.mrb[0].mxu0
        %4262 = vmatprep.mubr.bf16.mxu0 0
        %4263 = vmatmul.mubr.bf16.gmra.mrb[0].mxu0 %v3927
        %v4264 = vpop.f32.mrb[0].mxu0
        %v4265 = vadd.f32 %v3988, %v4264
        %v4266 = vpop.f32.mrb[0].mxu0
        %v4267 = vpop.f32.mrb[0].mxu0
        %v4268 = vadd.f32 %v3988, %v4267
        %v4269 = vpop.f32.mrb[0].mxu0
        %4270 = vmatprep.mubr.bf16.mxu0 0
        %4271 = vmatmul.mubr.bf16.gmra.mrb[0].mxu0 %v3928
        %v4272 = vpop.f32.mrb[0].mxu0
        %v4273 = vadd.f32 %v3988, %v4272
        %v4274 = vpop.f32.mrb[0].mxu0
        %v4275 = vpop.f32.mrb[0].mxu0
        %v4276 = vadd.f32 %v3988, %v4275
        %v4277 = vpop.f32.mrb[0].mxu0
        %4278 = vmatprep.mubr.bf16.mxu0 0
        %4279 = vmatmul.mubr.bf16.gmra.mrb[0].mxu0 %v3929
        %v4280 = vpop.f32.mrb[0].mxu0
        %v4281 = vadd.f32 %v3988, %v4280
        %v4282 = vpop.f32.mrb[0].mxu0
        %v4283 = vpop.f32.mrb[0].mxu0
        %v4284 = vadd.f32 %v3988, %v4283
        %v4285 = vpop.f32.mrb[0].mxu0
        %4286 = vmatprep.mubr.bf16.mxu0 0
        %4287 = vmatmul.mubr.bf16.gmra.mrb[0].mxu0 %v3930
        %v4288 = vpop.f32.mrb[0].mxu0
        %v4289 = vadd.f32 %v3988, %v4288
        %v4290 = vpop.f32.mrb[0].mxu0
        %v4291 = vpop.f32.mrb[0].mxu0
        %v4292 = vadd.f32 %v3988, %v4291
        %v4293 = vpop.f32.mrb[0].mxu0
        %4294 = vmatprep.mubr.bf16.mxu0 0
        %4295 = vmatmul.mubr.bf16.gmra.mrb[0].mxu0 %v3931
        %v4296 = vpop.f32.mrb[0].mxu0
        %v4297 = vadd.f32 %v3988, %v4296
        %v4298 = vpop.f32.mrb[0].mxu0
        %v4299 = vpop.f32.mrb[0].mxu0
        %v4300 = vadd.f32 %v3988, %v4299
        %v4301 = vpop.f32.mrb[0].mxu0
        %4302 = vmatprep.mubr.bf16.mxu0 0
        %4303 = vmatmul.mubr.bf16.gmra.mrb[0].mxu0 %v3932
        %v4304 = vpop.f32.mrb[0].mxu0
        %v4305 = vadd.f32 %v3988, %v4304
        %v4306 = vpop.f32.mrb[0].mxu0
        %v4307 = vpop.f32.mrb[0].mxu0
        %v4308 = vadd.f32 %v3988, %v4307
        %v4309 = vpop.f32.mrb[0].mxu0
        %4310 = vmatprep.mubr.bf16.mxu0 0
        %4311 = vmatmul.mubr.bf16.gmra.mrb[0].mxu0 %v3933
        %v4312 = vpop.f32.mrb[0].mxu0
        %v4313 = vadd.f32 %v3988, %v4312
        %v4314 = vpop.f32.mrb[0].mxu0
        %v4315 = vpop.f32.mrb[0].mxu0
        %v4316 = vadd.f32 %v3988, %v4315
        %v4317 = vpop.f32.mrb[0].mxu0
        %4318 = vmatprep.mubr.bf16.mxu0 0
        %4319 = vmatmul.mubr.bf16.gmra.mrb[0].mxu0 %v3934
        %v4320 = vpop.f32.mrb[0].mxu0
        %v4321 = vadd.f32 %v3988, %v4320
        %v4322 = vpop.f32.mrb[0].mxu0
        %v4323 = vpop.f32.mrb[0].mxu0
        %v4324 = vadd.f32 %v3988, %v4323
        %v4325 = vpop.f32.mrb[0].mxu0
        %4326 = vmatprep.mubr.bf16.mxu0 0
        %4327 = vmatmul.mubr.bf16.gmra.mrb[0].mxu0 %v3935
        %v4328 = vpop.f32.mrb[0].mxu0
        %v4329 = vadd.f32 %v3988, %v4328
        %v4330 = vpop.f32.mrb[0].mxu0
        %v4331 = vpop.f32.mrb[0].mxu0
        %v4332 = vadd.f32 %v3988, %v4331
        %v4333 = vpop.f32.mrb[0].mxu0
        %4334 = vmatprep.mubr.bf16.mxu0 0
        %4335 = vmatmul.mubr.bf16.gmra.mrb[0].mxu0 %v3936
        %v4336 = vpop.f32.mrb[0].mxu0
        %v4337 = vadd.f32 %v3988, %v4336
        %v4338 = vpop.f32.mrb[0].mxu0
        %v4339 = vpop.f32.mrb[0].mxu0
        %v4340 = vadd.f32 %v3988, %v4339
        %v4341 = vpop.f32.mrb[0].mxu0
        %4342 = vmatprep.mubr.bf16.mxu0 0
        %4343 = vmatmul.mubr.bf16.gmra.mrb[0].mxu0 %v3937
        %v4344 = vpop.f32.mrb[0].mxu0
        %v4345 = vadd.f32 %v3988, %v4344
        %v4346 = vpop.f32.mrb[0].mxu0
        %v4347 = vpop.f32.mrb[0].mxu0
        %v4348 = vadd.f32 %v3988, %v4347
        %v4349 = vpop.f32.mrb[0].mxu0
        %4350 = vmatprep.mubr.bf16.mxu0 0
        %4351 = vmatmul.mubr.bf16.gmra.mrb[0].mxu0 %v3938
        %v4352 = vpop.f32.mrb[0].mxu0
        %v4353 = vadd.f32 %v3988, %v4352
        %v4354 = vpop.f32.mrb[0].mxu0
        %v4355 = vpop.f32.mrb[0].mxu0
        %v4356 = vadd.f32 %v3988, %v4355
        %v4357 = vpop.f32.mrb[0].mxu0
        %4358 = vmatprep.mubr.bf16.mxu0 0
        %4359 = vmatmul.mubr.bf16.gmra.mrb[0].mxu0 %v3939
        %v4360 = vpop.f32.mrb[0].mxu0
        %v4361 = vadd.f32 %v3988, %v4360
        %v4362 = vpop.f32.mrb[0].mxu0
        %v4363 = vpop.f32.mrb[0].mxu0
        %v4364 = vadd.f32 %v3988, %v4363
        %v4365 = vpop.f32.mrb[0].mxu0
        %4366 = vmatprep.mubr.bf16.mxu0 0
        %4367 = vmatmul.mubr.bf16.gmra.mrb[0].mxu0 %v3940
        %v4368 = vpop.f32.mrb[0].mxu0
        %v4369 = vadd.f32 %v3988, %v4368
        %v4370 = vpop.f32.mrb[0].mxu0
        %v4371 = vpop.f32.mrb[0].mxu0
        %v4372 = vadd.f32 %v3988, %v4371
        %v4373 = vpop.f32.mrb[0].mxu0
        %4374 = vmatprep.mubr.bf16.mxu0 0
        %4375 = vmatmul.mubr.bf16.gmra.mrb[0].mxu0 %v3941
        %v4376 = vpop.f32.mrb[0].mxu0
        %v4377 = vadd.f32 %v3988, %v4376
        %v4378 = vpop.f32.mrb[0].mxu0
        %v4379 = vpop.f32.mrb[0].mxu0
        %v4380 = vadd.f32 %v3988, %v4379
        %v4381 = vpop.f32.mrb[0].mxu0
        %4382 = vmatprep.mubr.bf16.mxu0 0
        %4383 = vmatmul.mubr.bf16.gmra.mrb[0].mxu0 %v3942
        %v4384 = vpop.f32.mrb[0].mxu0
        %v4385 = vadd.f32 %v3988, %v4384
        %v4386 = vpop.f32.mrb[0].mxu0
        %v4387 = vpop.f32.mrb[0].mxu0
        %v4388 = vadd.f32 %v3988, %v4387
        %v4389 = vpop.f32.mrb[0].mxu0
        %4390 = vmatprep.mubr.bf16.mxu0 0
        %4391 = vmatmul.mubr.bf16.gmra.mrb[0].mxu0 %v3943
        %v4392 = vpop.f32.mrb[0].mxu0
        %v4393 = vadd.f32 %v3988, %v4392
        %v4394 = vpop.f32.mrb[0].mxu0
        %v4395 = vpop.f32.mrb[0].mxu0
        %v4396 = vadd.f32 %v3988, %v4395
        %v4397 = vpop.f32.mrb[0].mxu0
        %4398 = vmatprep.mubr.bf16.mxu0 0
        %4399 = vmatmul.mubr.bf16.gmra.mrb[0].mxu0 %v3944
        %v4400 = vpop.f32.mrb[0].mxu0
        %v4401 = vadd.f32 %v3988, %v4400
        %v4402 = vpop.f32.mrb[0].mxu0
        %v4403 = vpop.f32.mrb[0].mxu0
        %v4404 = vadd.f32 %v3988, %v4403
        %v4405 = vpop.f32.mrb[0].mxu0
        %4406 = vmatprep.mubr.bf16.mxu0 0
        %4407 = vmatmul.mubr.bf16.gmra.mrb[0].mxu0 %v3945
        %v4408 = vpop.f32.mrb[0].mxu0
        %v4409 = vadd.f32 %v3988, %v4408
        %v4410 = vpop.f32.mrb[0].mxu0
        %v4411 = vpop.f32.mrb[0].mxu0
        %v4412 = vadd.f32 %v3988, %v4411
        %v4413 = vpop.f32.mrb[0].mxu0
        %4414 = vmatprep.mubr.bf16.mxu0 0
        %4415 = vmatmul.mubr.bf16.gmra.mrb[0].mxu0 %v3946
        %v4416 = vpop.f32.mrb[0].mxu0
        %v4417 = vadd.f32 %v3988, %v4416
        %v4418 = vpop.f32.mrb[0].mxu0
        %v4419 = vpop.f32.mrb[0].mxu0
        %v4420 = vadd.f32 %v3988, %v4419
        %v4421 = vpop.f32.mrb[0].mxu0
        %4422 = vmatprep.mubr.bf16.mxu0 0
        %4423 = vmatmul.mubr.bf16.gmra.mrb[0].mxu0 %v3947
        %v4424 = vpop.f32.mrb[0].mxu0
        %v4425 = vadd.f32 %v3988, %v4424
        %v4426 = vpop.f32.mrb[0].mxu0
        %v4427 = vpop.f32.mrb[0].mxu0
        %v4428 = vadd.f32 %v3988, %v4427
        %v4429 = vpop.f32.mrb[0].mxu0
        %4430 = vmatprep.mubr.bf16.mxu0 0
        %4431 = vmatmul.mubr.bf16.gmra.mrb[0].mxu0 %v3948
        %v4432 = vpop.f32.mrb[0].mxu0
        %v4433 = vadd.f32 %v3988, %v4432
        %v4434 = vpop.f32.mrb[0].mxu0
        %v4435 = vpop.f32.mrb[0].mxu0
        %v4436 = vadd.f32 %v3988, %v4435
        %v4437 = vpop.f32.mrb[0].mxu0
        %4438 = vmatprep.mubr.bf16.mxu0 0
        %4439 = vmatmul.mubr.bf16.gmra.mrb[0].mxu0 %v3949
        %v4440 = vpop.f32.mrb[0].mxu0
        %v4441 = vadd.f32 %v3988, %v4440
        %v4442 = vpop.f32.mrb[0].mxu0
        %v4443 = vpop.f32.mrb[0].mxu0
        %v4444 = vadd.f32 %v3988, %v4443
        %v4445 = vpop.f32.mrb[0].mxu0
        %4446 = vmatprep.mubr.bf16.mxu0 0
        %4447 = vmatmul.mubr.bf16.gmra.mrb[0].mxu0 %v3950
        %v4448 = vpop.f32.mrb[0].mxu0
        %v4449 = vadd.f32 %v3988, %v4448
        %v4450 = vpop.f32.mrb[0].mxu0
        %v4451 = vpop.f32.mrb[0].mxu0
        %v4452 = vadd.f32 %v3988, %v4451
        %v4453 = vpop.f32.mrb[0].mxu0
        %4454 = vmatprep.mubr.bf16.mxu0 0
        %4455 = vmatmul.mubr.bf16.gmra.mrb[0].mxu0 %v3951
        %v4456 = vpop.f32.mrb[0].mxu0
        %v4457 = vadd.f32 %v3988, %v4456
        %v4458 = vpop.f32.mrb[0].mxu0
        %v4459 = vpop.f32.mrb[0].mxu0
        %v4460 = vadd.f32 %v3988, %v4459
        %v4461 = vpop.f32.mrb[0].mxu0
        %4462 = vmatprep.mubr.bf16.mxu0 0
        %4463 = vmatmul.mubr.bf16.gmra.mrb[0].mxu0 %v3952
        %v4464 = vpop.f32.mrb[0].mxu0
        %v4465 = vadd.f32 %v3988, %v4464
        %v4466 = vpop.f32.mrb[0].mxu0
        %v4467 = vpop.f32.mrb[0].mxu0
        %v4468 = vadd.f32 %v3988, %v4467
        %v4469 = vpop.f32.mrb[0].mxu0
        %4470 = vmatprep.mubr.bf16.mxu0 0
        %4471 = vmatmul.mubr.bf16.gmra.mrb[0].mxu0 %v3953
        %v4472 = vpop.f32.mrb[0].mxu0
        %v4473 = vadd.f32 %v3988, %v4472
        %v4474 = vpop.f32.mrb[0].mxu0
        %v4475 = vpop.f32.mrb[0].mxu0
        %v4476 = vadd.f32 %v3988, %v4475
        %v4477 = vpop.f32.mrb[0].mxu0
        %4478 = vmatprep.mubr.bf16.mxu0 0
        %4479 = vmatmul.mubr.bf16.gmra.mrb[0].mxu0 %v3954
        %v4480 = vpop.f32.mrb[0].mxu0
        %v4481 = vadd.f32 %v3988, %v4480
        %v4482 = vpop.f32.mrb[0].mxu0
        %v4483 = vpop.f32.mrb[0].mxu0
        %v4484 = vadd.f32 %v3988, %v4483
        %v4485 = vpop.f32.mrb[0].mxu0
        %4486 = vmatprep.mubr.bf16.mxu0 0
        %4487 = vmatmul.mubr.bf16.gmra.mrb[0].mxu0 %v3955
        %v4488 = vpop.f32.mrb[0].mxu0
        %v4489 = vadd.f32 %v3988, %v4488
        %v4490 = vpop.f32.mrb[0].mxu0
        %v4491 = vpop.f32.mrb[0].mxu0
        %v4492 = vadd.f32 %v3988, %v4491
        %v4493 = vpop.f32.mrb[0].mxu0
        %4494 = vmatprep.mubr.bf16.mxu0 0
        %4495 = vmatmul.mubr.bf16.gmra.mrb[0].mxu0 %v3956
        %v4496 = vpop.f32.mrb[0].mxu0
        %v4497 = vadd.f32 %v3988, %v4496
        %v4498 = vpop.f32.mrb[0].mxu0
        %v4499 = vpop.f32.mrb[0].mxu0
        %v4500 = vadd.f32 %v3988, %v4499
        %v4501 = vpop.f32.mrb[0].mxu0
        %4502 = vmatprep.mubr.bf16.mxu0 0
        %4503 = vmatmul.mubr.bf16.gmra.mrb[0].mxu0 %v3957
        %v4504 = vpop.f32.mrb[0].mxu0
        %v4505 = vadd.f32 %v3988, %v4504
        %v4506 = vpop.f32.mrb[0].mxu0
        %v4507 = vpop.f32.mrb[0].mxu0
        %v4508 = vadd.f32 %v3988, %v4507
        %v4509 = vpop.f32.mrb[0].mxu0
        %4510 = vmatprep.mubr.bf16.mxu0 0
        %4511 = vmatmul.mubr.bf16.gmra.mrb[0].mxu0 %v3958
        %v4512 = vpop.f32.mrb[0].mxu0
        %v4513 = vadd.f32 %v3988, %v4512
        %v4514 = vpop.f32.mrb[0].mxu0
        %v4515 = vpop.f32.mrb[0].mxu0
        %v4516 = vadd.f32 %v3988, %v4515
        %v4517 = vpop.f32.mrb[0].mxu0
        %4518 = vmatprep.mubr.bf16.mxu0 0
        %4519 = vmatmul.mubr.bf16.gmra.mrb[0].mxu0 %v3959
        %v4520 = vpop.f32.mrb[0].mxu0
        %v4521 = vadd.f32 %v3988, %v4520
        %v4522 = vpop.f32.mrb[0].mxu0
        %v4523 = vpop.f32.mrb[0].mxu0
        %v4524 = vadd.f32 %v3988, %v4523
        %v4525 = vpop.f32.mrb[0].mxu0
        %4526 = vmatprep.mubr.bf16.mxu0 0
        %4527 = vmatmul.mubr.bf16.gmra.mrb[0].mxu0 %v3960
        %v4528 = vpop.f32.mrb[0].mxu0
        %v4529 = vadd.f32 %v3988, %v4528
        %v4530 = vpop.f32.mrb[0].mxu0
        %v4531 = vpop.f32.mrb[0].mxu0
        %v4532 = vadd.f32 %v3988, %v4531
        %v4533 = vpop.f32.mrb[0].mxu0
        %4534 = vmatprep.mubr.bf16.mxu0 0
        %4535 = vmatmul.mubr.bf16.gmra.mrb[0].mxu0 %v3961
        %v4536 = vpop.f32.mrb[0].mxu0
        %v4537 = vadd.f32 %v3988, %v4536
        %v4538 = vpop.f32.mrb[0].mxu0
        %v4539 = vpop.f32.mrb[0].mxu0
        %v4540 = vadd.f32 %v3988, %v4539
        %v4541 = vpop.f32.mrb[0].mxu0
        %4542 = vmatprep.mubr.bf16.mxu0 0
        %4543 = vmatmul.mubr.bf16.gmra.mrb[0].mxu0 %v3962
        %v4544 = vpop.f32.mrb[0].mxu0
        %v4545 = vadd.f32 %v3988, %v4544
        %v4546 = vpop.f32.mrb[0].mxu0
        %v4547 = vpop.f32.mrb[0].mxu0
        %v4548 = vadd.f32 %v3988, %v4547
        %v4549 = vpop.f32.mrb[0].mxu0
        %4550 = vmatprep.mubr.bf16.mxu0 0
        %4551 = vmatmul.mubr.bf16.gmra.mrb[0].mxu0 %v3963
        %v4552 = vpop.f32.mrb[0].mxu0
        %v4553 = vadd.f32 %v3988, %v4552
        %v4554 = vpop.f32.mrb[0].mxu0
        %v4555 = vpop.f32.mrb[0].mxu0
        %v4556 = vadd.f32 %v3988, %v4555
        %v4557 = vpop.f32.mrb[0].mxu0
        %4558 = vmatprep.mubr.bf16.mxu0 0
        %4559 = vmatmul.mubr.bf16.gmra.mrb[0].mxu0 %v3964
        %v4560 = vpop.f32.mrb[0].mxu0
        %v4561 = vadd.f32 %v3988, %v4560
        %v4562 = vpop.f32.mrb[0].mxu0
        %v4563 = vpop.f32.mrb[0].mxu0
        %v4564 = vadd.f32 %v3988, %v4563
        %v4565 = vpop.f32.mrb[0].mxu0
        %4566 = vmatprep.mubr.bf16.mxu0 0
        %4567 = vmatmul.mubr.bf16.gmra.mrb[0].mxu0 %v3965
        %v4568 = vpop.f32.mrb[0].mxu0
        %v4569 = vadd.f32 %v3988, %v4568
        %v4570 = vpop.f32.mrb[0].mxu0
        %v4571 = vpop.f32.mrb[0].mxu0
        %v4572 = vadd.f32 %v3988, %v4571
        %v4573 = vpop.f32.mrb[0].mxu0
        %4574 = vmatprep.mubr.bf16.mxu0 0
        %4575 = vmatmul.mubr.bf16.gmra.mrb[0].mxu0 %v3966
        %v4576 = vpop.f32.mrb[0].mxu0
        %v4577 = vadd.f32 %v3988, %v4576
        %v4578 = vpop.f32.mrb[0].mxu0
        %v4579 = vpop.f32.mrb[0].mxu0
        %v4580 = vadd.f32 %v3988, %v4579
        %v4581 = vpop.f32.mrb[0].mxu0
        %4582 = vdwg.mxu0
        %v4583 = vxor.u32 %v4073, 2147483648
        %v4584 = vxor.u32 %v4076, 2147483648
        %v4585 = vxor.u32 %v4081, 2147483648
        %v4586 = vxor.u32 %v4084, 2147483648
        %v4587 = vxor.u32 %v4089, 2147483648
        %v4588 = vxor.u32 %v4092, 2147483648
        %v4589 = vxor.u32 %v4097, 2147483648
        %v4590 = vxor.u32 %v4100, 2147483648
        %v4591 = vxor.u32 %v4105, 2147483648
        %v4592 = vxor.u32 %v4108, 2147483648
        %v4593 = vxor.u32 %v4113, 2147483648
        %v4594 = vxor.u32 %v4116, 2147483648
        %v4595 = vxor.u32 %v4121, 2147483648
        %v4596 = vxor.u32 %v4124, 2147483648
        %v4597 = vxor.u32 %v4129, 2147483648
        %v4598 = vxor.u32 %v4132, 2147483648
        %v4599 = vxor.u32 %v4137, 2147483648
        %v4600 = vxor.u32 %v4140, 2147483648
        %v4601 = vxor.u32 %v4145, 2147483648
        %v4602 = vxor.u32 %v4148, 2147483648
        %v4603 = vxor.u32 %v4153, 2147483648
        %v4604 = vxor.u32 %v4156, 2147483648
        %v4605 = vxor.u32 %v4161, 2147483648
        %v4606 = vxor.u32 %v4164, 2147483648
        %v4607 = vxor.u32 %v4169, 2147483648
        %v4608 = vxor.u32 %v4172, 2147483648
        %v4609 = vxor.u32 %v4177, 2147483648
        %v4610 = vxor.u32 %v4180, 2147483648
        %v4611 = vxor.u32 %v4185, 2147483648
        %v4612 = vxor.u32 %v4188, 2147483648
        %v4613 = vxor.u32 %v4193, 2147483648
        %v4614 = vxor.u32 %v4196, 2147483648
        %v4615 = vxor.u32 %v4201, 2147483648
        %v4616 = vxor.u32 %v4204, 2147483648
        %v4617 = vxor.u32 %v4209, 2147483648
        %v4618 = vxor.u32 %v4212, 2147483648
        %v4619 = vxor.u32 %v4217, 2147483648
        %v4620 = vxor.u32 %v4220, 2147483648
        %v4621 = vxor.u32 %v4225, 2147483648
        %v4622 = vxor.u32 %v4228, 2147483648
        %v4623 = vxor.u32 %v4233, 2147483648
        %v4624 = vxor.u32 %v4236, 2147483648
        %v4625 = vxor.u32 %v4241, 2147483648
        %v4626 = vxor.u32 %v4244, 2147483648
        %v4627 = vxor.u32 %v4249, 2147483648
        %v4628 = vxor.u32 %v4252, 2147483648
        %v4629 = vxor.u32 %v4257, 2147483648
        %v4630 = vxor.u32 %v4260, 2147483648
        %v4631 = vxor.u32 %v4265, 2147483648
        %v4632 = vxor.u32 %v4268, 2147483648
        %v4633 = vxor.u32 %v4273, 2147483648
        %v4634 = vxor.u32 %v4276, 2147483648
        %v4635 = vxor.u32 %v4281, 2147483648
        %v4636 = vxor.u32 %v4284, 2147483648
        %v4637 = vxor.u32 %v4289, 2147483648
        %v4638 = vxor.u32 %v4292, 2147483648
        %v4639 = vxor.u32 %v4297, 2147483648
        %v4640 = vxor.u32 %v4300, 2147483648
        %v4641 = vxor.u32 %v4305, 2147483648
        %v4642 = vxor.u32 %v4308, 2147483648
        %v4643 = vxor.u32 %v4313, 2147483648
        %v4644 = vxor.u32 %v4316, 2147483648
        %v4645 = vxor.u32 %v4321, 2147483648
        %v4646 = vxor.u32 %v4324, 2147483648
        %v4647 = vxor.u32 %v4329, 2147483648
        %v4648 = vxor.u32 %v4332, 2147483648
        %v4649 = vxor.u32 %v4337, 2147483648
        %v4650 = vxor.u32 %v4340, 2147483648
        %v4651 = vxor.u32 %v4345, 2147483648
        %v4652 = vxor.u32 %v4348, 2147483648
        %v4653 = vxor.u32 %v4353, 2147483648
        %v4654 = vxor.u32 %v4356, 2147483648
        %v4655 = vxor.u32 %v4361, 2147483648
        %v4656 = vxor.u32 %v4364, 2147483648
        %v4657 = vxor.u32 %v4369, 2147483648
        %v4658 = vxor.u32 %v4372, 2147483648
        %v4659 = vxor.u32 %v4377, 2147483648
        %v4660 = vxor.u32 %v4380, 2147483648
        %v4661 = vxor.u32 %v4385, 2147483648
        %v4662 = vxor.u32 %v4388, 2147483648
        %v4663 = vxor.u32 %v4393, 2147483648
        %v4664 = vxor.u32 %v4396, 2147483648
        %v4665 = vxor.u32 %v4401, 2147483648
        %v4666 = vxor.u32 %v4404, 2147483648
        %v4667 = vxor.u32 %v4409, 2147483648
        %v4668 = vxor.u32 %v4412, 2147483648
        %v4669 = vxor.u32 %v4417, 2147483648
        %v4670 = vxor.u32 %v4420, 2147483648
        %v4671 = vxor.u32 %v4425, 2147483648
        %v4672 = vxor.u32 %v4428, 2147483648
        %v4673 = vxor.u32 %v4433, 2147483648
        %v4674 = vxor.u32 %v4436, 2147483648
        %v4675 = vxor.u32 %v4441, 2147483648
        %v4676 = vxor.u32 %v4444, 2147483648
        %v4677 = vxor.u32 %v4449, 2147483648
        %v4678 = vxor.u32 %v4452, 2147483648
        %v4679 = vxor.u32 %v4457, 2147483648
        %v4680 = vxor.u32 %v4460, 2147483648
        %v4681 = vxor.u32 %v4465, 2147483648
        %v4682 = vxor.u32 %v4468, 2147483648
        %v4683 = vxor.u32 %v4473, 2147483648
        %v4684 = vxor.u32 %v4476, 2147483648
        %v4685 = vxor.u32 %v4481, 2147483648
        %v4686 = vxor.u32 %v4484, 2147483648
        %v4687 = vxor.u32 %v4489, 2147483648
        %v4688 = vxor.u32 %v4492, 2147483648
        %v4689 = vxor.u32 %v4497, 2147483648
        %v4690 = vxor.u32 %v4500, 2147483648
        %v4691 = vxor.u32 %v4505, 2147483648
        %v4692 = vxor.u32 %v4508, 2147483648
        %v4693 = vxor.u32 %v4513, 2147483648
        %v4694 = vxor.u32 %v4516, 2147483648
        %v4695 = vxor.u32 %v4521, 2147483648
        %v4696 = vxor.u32 %v4524, 2147483648
        %v4697 = vxor.u32 %v4529, 2147483648
        %v4698 = vxor.u32 %v4532, 2147483648
        %v4699 = vxor.u32 %v4537, 2147483648
        %v4700 = vxor.u32 %v4540, 2147483648
        %v4701 = vxor.u32 %v4545, 2147483648
        %v4702 = vxor.u32 %v4548, 2147483648
        %v4703 = vxor.u32 %v4553, 2147483648
        %v4704 = vxor.u32 %v4556, 2147483648
        %v4705 = vxor.u32 %v4561, 2147483648
        %v4706 = vxor.u32 %v4564, 2147483648
        %v4707 = vxor.u32 %v4569, 2147483648
        %v4708 = vxor.u32 %v4572, 2147483648
        %v4709 = vxor.u32 %v4577, 2147483648
        %v4710 = vxor.u32 %v4580, 2147483648
        %v4711 = vmul.f32 %v4583, 1.442695
        %v4712 = vpow.pop %v4711
        %v4713 = vmul.f32 %v4584, 1.442695
        %v4714 = vpow.pop %v4713
        %v4715 = vmul.f32 %v4585, 1.442695
        %v4716 = vpow.pop %v4715
        %v4717 = vmul.f32 %v4586, 1.442695
        %v4718 = vpow.pop %v4717
        %v4719 = vmul.f32 %v4587, 1.442695
        %v4720 = vpow.pop %v4719
        %v4721 = vmul.f32 %v4588, 1.442695
        %v4722 = vpow.pop %v4721
        %v4723 = vmul.f32 %v4589, 1.442695
        %v4724 = vpow.pop %v4723
        %v4725 = vmul.f32 %v4590, 1.442695
        %v4726 = vpow.pop %v4725
        %v4727 = vmul.f32 %v4591, 1.442695
        %v4728 = vpow.pop %v4727
        %v4729 = vmul.f32 %v4592, 1.442695
        %v4730 = vpow.pop %v4729
        %v4731 = vmul.f32 %v4593, 1.442695
        %v4732 = vpow.pop %v4731
        %v4733 = vmul.f32 %v4594, 1.442695
        %v4734 = vpow.pop %v4733
        %v4735 = vmul.f32 %v4595, 1.442695
        %v4736 = vpow.pop %v4735
        %v4737 = vmul.f32 %v4596, 1.442695
        %v4738 = vpow.pop %v4737
        %v4739 = vmul.f32 %v4597, 1.442695
        %v4740 = vpow.pop %v4739
        %v4741 = vmul.f32 %v4598, 1.442695
        %v4742 = vpow.pop %v4741
        %v4743 = vmul.f32 %v4599, 1.442695
        %v4744 = vpow.pop %v4743
        %v4745 = vmul.f32 %v4600, 1.442695
        %v4746 = vpow.pop %v4745
        %v4747 = vmul.f32 %v4601, 1.442695
        %v4748 = vpow.pop %v4747
        %v4749 = vmul.f32 %v4602, 1.442695
        %v4750 = vpow.pop %v4749
        %v4751 = vmul.f32 %v4603, 1.442695
        %v4752 = vpow.pop %v4751
        %v4753 = vmul.f32 %v4604, 1.442695
        %v4754 = vpow.pop %v4753
        %v4755 = vmul.f32 %v4605, 1.442695
        %v4756 = vpow.pop %v4755
        %v4757 = vmul.f32 %v4606, 1.442695
        %v4758 = vpow.pop %v4757
        %v4759 = vmul.f32 %v4607, 1.442695
        %v4760 = vpow.pop %v4759
        %v4761 = vmul.f32 %v4608, 1.442695
        %v4762 = vpow.pop %v4761
        %v4763 = vmul.f32 %v4609, 1.442695
        %v4764 = vpow.pop %v4763
        %v4765 = vmul.f32 %v4610, 1.442695
        %v4766 = vpow.pop %v4765
        %v4767 = vmul.f32 %v4611, 1.442695
        %v4768 = vpow.pop %v4767
        %v4769 = vmul.f32 %v4612, 1.442695
        %v4770 = vpow.pop %v4769
        %v4771 = vmul.f32 %v4613, 1.442695
        %v4772 = vpow.pop %v4771
        %v4773 = vmul.f32 %v4614, 1.442695
        %v4774 = vpow.pop %v4773
        %v4775 = vmul.f32 %v4615, 1.442695
        %v4776 = vpow.pop %v4775
        %v4777 = vmul.f32 %v4616, 1.442695
        %v4778 = vpow.pop %v4777
        %v4779 = vmul.f32 %v4617, 1.442695
        %v4780 = vpow.pop %v4779
        %v4781 = vmul.f32 %v4618, 1.442695
        %v4782 = vpow.pop %v4781
        %v4783 = vmul.f32 %v4619, 1.442695
        %v4784 = vpow.pop %v4783
        %v4785 = vmul.f32 %v4620, 1.442695
        %v4786 = vpow.pop %v4785
        %v4787 = vmul.f32 %v4621, 1.442695
        %v4788 = vpow.pop %v4787
        %v4789 = vmul.f32 %v4622, 1.442695
        %v4790 = vpow.pop %v4789
        %v4791 = vmul.f32 %v4623, 1.442695
        %v4792 = vpow.pop %v4791
        %v4793 = vmul.f32 %v4624, 1.442695
        %v4794 = vpow.pop %v4793
        %v4795 = vmul.f32 %v4625, 1.442695
        %v4796 = vpow.pop %v4795
        %v4797 = vmul.f32 %v4626, 1.442695
        %v4798 = vpow.pop %v4797
        %v4799 = vmul.f32 %v4627, 1.442695
        %v4800 = vpow.pop %v4799
        %v4801 = vmul.f32 %v4628, 1.442695
        %v4802 = vpow.pop %v4801
        %v4803 = vmul.f32 %v4629, 1.442695
        %v4804 = vpow.pop %v4803
        %v4805 = vmul.f32 %v4630, 1.442695
        %v4806 = vpow.pop %v4805
        %v4807 = vmul.f32 %v4631, 1.442695
        %v4808 = vpow.pop %v4807
        %v4809 = vmul.f32 %v4632, 1.442695
        %v4810 = vpow.pop %v4809
        %v4811 = vmul.f32 %v4633, 1.442695
        %v4812 = vpow.pop %v4811
        %v4813 = vmul.f32 %v4634, 1.442695
        %v4814 = vpow.pop %v4813
        %v4815 = vmul.f32 %v4635, 1.442695
        %v4816 = vpow.pop %v4815
        %v4817 = vmul.f32 %v4636, 1.442695
        %v4818 = vpow.pop %v4817
        %v4819 = vmul.f32 %v4637, 1.442695
        %v4820 = vpow.pop %v4819
        %v4821 = vmul.f32 %v4638, 1.442695
        %v4822 = vpow.pop %v4821
        %v4823 = vmul.f32 %v4639, 1.442695
        %v4824 = vpow.pop %v4823
        %v4825 = vmul.f32 %v4640, 1.442695
        %v4826 = vpow.pop %v4825
        %v4827 = vmul.f32 %v4641, 1.442695
        %v4828 = vpow.pop %v4827
        %v4829 = vmul.f32 %v4642, 1.442695
        %v4830 = vpow.pop %v4829
        %v4831 = vmul.f32 %v4643, 1.442695
        %v4832 = vpow.pop %v4831
        %v4833 = vmul.f32 %v4644, 1.442695
        %v4834 = vpow.pop %v4833
        %v4835 = vmul.f32 %v4645, 1.442695
        %v4836 = vpow.pop %v4835
        %v4837 = vmul.f32 %v4646, 1.442695
        %v4838 = vpow.pop %v4837
        %v4839 = vmul.f32 %v4647, 1.442695
        %v4840 = vpow.pop %v4839
        %v4841 = vmul.f32 %v4648, 1.442695
        %v4842 = vpow.pop %v4841
        %v4843 = vmul.f32 %v4649, 1.442695
        %v4844 = vpow.pop %v4843
        %v4845 = vmul.f32 %v4650, 1.442695
        %v4846 = vpow.pop %v4845
        %v4847 = vmul.f32 %v4651, 1.442695
        %v4848 = vpow.pop %v4847
        %v4849 = vmul.f32 %v4652, 1.442695
        %v4850 = vpow.pop %v4849
        %v4851 = vmul.f32 %v4653, 1.442695
        %v4852 = vpow.pop %v4851
        %v4853 = vmul.f32 %v4654, 1.442695
        %v4854 = vpow.pop %v4853
        %v4855 = vmul.f32 %v4655, 1.442695
        %v4856 = vpow.pop %v4855
        %v4857 = vmul.f32 %v4656, 1.442695
        %v4858 = vpow.pop %v4857
        %v4859 = vmul.f32 %v4657, 1.442695
        %v4860 = vpow.pop %v4859
        %v4861 = vmul.f32 %v4658, 1.442695
        %v4862 = vpow.pop %v4861
        %v4863 = vmul.f32 %v4659, 1.442695
        %v4864 = vpow.pop %v4863
        %v4865 = vmul.f32 %v4660, 1.442695
        %v4866 = vpow.pop %v4865
        %v4867 = vmul.f32 %v4661, 1.442695
        %v4868 = vpow.pop %v4867
        %v4869 = vmul.f32 %v4662, 1.442695
        %v4870 = vpow.pop %v4869
        %v4871 = vmul.f32 %v4663, 1.442695
        %v4872 = vpow.pop %v4871
        %v4873 = vmul.f32 %v4664, 1.442695
        %v4874 = vpow.pop %v4873
        %v4875 = vmul.f32 %v4665, 1.442695
        %v4876 = vpow.pop %v4875
        %v4877 = vmul.f32 %v4666, 1.442695
        %v4878 = vpow.pop %v4877
        %v4879 = vmul.f32 %v4667, 1.442695
        %v4880 = vpow.pop %v4879
        %v4881 = vmul.f32 %v4668, 1.442695
        %v4882 = vpow.pop %v4881
        %v4883 = vmul.f32 %v4669, 1.442695
        %v4884 = vpow.pop %v4883
        %v4885 = vmul.f32 %v4670, 1.442695
        %v4886 = vpow.pop %v4885
        %v4887 = vmul.f32 %v4671, 1.442695
        %v4888 = vpow.pop %v4887
        %v4889 = vmul.f32 %v4672, 1.442695
        %v4890 = vpow.pop %v4889
        %v4891 = vmul.f32 %v4673, 1.442695
        %v4892 = vpow.pop %v4891
        %v4893 = vmul.f32 %v4674, 1.442695
        %v4894 = vpow.pop %v4893
        %v4895 = vmul.f32 %v4675, 1.442695
        %v4896 = vpow.pop %v4895
        %v4897 = vmul.f32 %v4676, 1.442695
        %v4898 = vpow.pop %v4897
        %v4899 = vmul.f32 %v4677, 1.442695
        %v4900 = vpow.pop %v4899
        %v4901 = vmul.f32 %v4678, 1.442695
        %v4902 = vpow.pop %v4901
        %v4903 = vmul.f32 %v4679, 1.442695
        %v4904 = vpow.pop %v4903
        %v4905 = vmul.f32 %v4680, 1.442695
        %v4906 = vpow.pop %v4905
        %v4907 = vmul.f32 %v4681, 1.442695
        %v4908 = vpow.pop %v4907
        %v4909 = vmul.f32 %v4682, 1.442695
        %v4910 = vpow.pop %v4909
        %v4911 = vmul.f32 %v4683, 1.442695
        %v4912 = vpow.pop %v4911
        %v4913 = vmul.f32 %v4684, 1.442695
        %v4914 = vpow.pop %v4913
        %v4915 = vmul.f32 %v4685, 1.442695
        %v4916 = vpow.pop %v4915
        %v4917 = vmul.f32 %v4686, 1.442695
        %v4918 = vpow.pop %v4917
        %v4919 = vmul.f32 %v4687, 1.442695
        %v4920 = vpow.pop %v4919
        %v4921 = vmul.f32 %v4688, 1.442695
        %v4922 = vpow.pop %v4921
        %v4923 = vmul.f32 %v4689, 1.442695
        %v4924 = vpow.pop %v4923
        %v4925 = vmul.f32 %v4690, 1.442695
        %v4926 = vpow.pop %v4925
        %v4927 = vmul.f32 %v4691, 1.442695
        %v4928 = vpow.pop %v4927
        %v4929 = vmul.f32 %v4692, 1.442695
        %v4930 = vpow.pop %v4929
        %v4931 = vmul.f32 %v4693, 1.442695
        %v4932 = vpow.pop %v4931
        %v4933 = vmul.f32 %v4694, 1.442695
        %v4934 = vpow.pop %v4933
        %v4935 = vmul.f32 %v4695, 1.442695
        %v4936 = vpow.pop %v4935
        %v4937 = vmul.f32 %v4696, 1.442695
        %v4938 = vpow.pop %v4937
        %v4939 = vmul.f32 %v4697, 1.442695
        %v4940 = vpow.pop %v4939
        %v4941 = vmul.f32 %v4698, 1.442695
        %v4942 = vpow.pop %v4941
        %v4943 = vmul.f32 %v4699, 1.442695
        %v4944 = vpow.pop %v4943
        %v4945 = vmul.f32 %v4700, 1.442695
        %v4946 = vpow.pop %v4945
        %v4947 = vmul.f32 %v4701, 1.442695
        %v4948 = vpow.pop %v4947
        %v4949 = vmul.f32 %v4702, 1.442695
        %v4950 = vpow.pop %v4949
        %v4951 = vmul.f32 %v4703, 1.442695
        %v4952 = vpow.pop %v4951
        %v4953 = vmul.f32 %v4704, 1.442695
        %v4954 = vpow.pop %v4953
        %v4955 = vmul.f32 %v4705, 1.442695
        %v4956 = vpow.pop %v4955
        %v4957 = vmul.f32 %v4706, 1.442695
        %v4958 = vpow.pop %v4957
        %v4959 = vmul.f32 %v4707, 1.442695
        %v4960 = vpow.pop %v4959
        %v4961 = vmul.f32 %v4708, 1.442695
        %v4962 = vpow.pop %v4961
        %v4963 = vmul.f32 %v4709, 1.442695
        %v4964 = vpow.pop %v4963
        %v4965 = vmul.f32 %v4710, 1.442695
        %v4966 = vpow.pop %v4965
        %v4967 = vadd.f32 %v4712, 1.0
        %v4968 = vadd.f32 %v4714, 1.0
        %v4969 = vadd.f32 %v4716, 1.0
        %v4970 = vadd.f32 %v4718, 1.0
        %v4971 = vadd.f32 %v4720, 1.0
        %v4972 = vadd.f32 %v4722, 1.0
        %v4973 = vadd.f32 %v4724, 1.0
        %v4974 = vadd.f32 %v4726, 1.0
        %v4975 = vadd.f32 %v4728, 1.0
        %v4976 = vadd.f32 %v4730, 1.0
        %v4977 = vadd.f32 %v4732, 1.0
        %v4978 = vadd.f32 %v4734, 1.0
        %v4979 = vadd.f32 %v4736, 1.0
        %v4980 = vadd.f32 %v4738, 1.0
        %v4981 = vadd.f32 %v4740, 1.0
        %v4982 = vadd.f32 %v4742, 1.0
        %v4983 = vadd.f32 %v4744, 1.0
        %v4984 = vadd.f32 %v4746, 1.0
        %v4985 = vadd.f32 %v4748, 1.0
        %v4986 = vadd.f32 %v4750, 1.0
        %v4987 = vadd.f32 %v4752, 1.0
        %v4988 = vadd.f32 %v4754, 1.0
        %v4989 = vadd.f32 %v4756, 1.0
        %v4990 = vadd.f32 %v4758, 1.0
        %v4991 = vadd.f32 %v4760, 1.0
        %v4992 = vadd.f32 %v4762, 1.0
        %v4993 = vadd.f32 %v4764, 1.0
        %v4994 = vadd.f32 %v4766, 1.0
        %v4995 = vadd.f32 %v4768, 1.0
        %v4996 = vadd.f32 %v4770, 1.0
        %v4997 = vadd.f32 %v4772, 1.0
        %v4998 = vadd.f32 %v4774, 1.0
        %v4999 = vadd.f32 %v4776, 1.0
        %v5000 = vadd.f32 %v4778, 1.0
        %v5001 = vadd.f32 %v4780, 1.0
        %v5002 = vadd.f32 %v4782, 1.0
        %v5003 = vadd.f32 %v4784, 1.0
        %v5004 = vadd.f32 %v4786, 1.0
        %v5005 = vadd.f32 %v4788, 1.0
        %v5006 = vadd.f32 %v4790, 1.0
        %v5007 = vadd.f32 %v4792, 1.0
        %v5008 = vadd.f32 %v4794, 1.0
        %v5009 = vadd.f32 %v4796, 1.0
        %v5010 = vadd.f32 %v4798, 1.0
        %v5011 = vadd.f32 %v4800, 1.0
        %v5012 = vadd.f32 %v4802, 1.0
        %v5013 = vadd.f32 %v4804, 1.0
        %v5014 = vadd.f32 %v4806, 1.0
        %v5015 = vadd.f32 %v4808, 1.0
        %v5016 = vadd.f32 %v4810, 1.0
        %v5017 = vadd.f32 %v4812, 1.0
        %v5018 = vadd.f32 %v4814, 1.0
        %v5019 = vadd.f32 %v4816, 1.0
        %v5020 = vadd.f32 %v4818, 1.0
        %v5021 = vadd.f32 %v4820, 1.0
        %v5022 = vadd.f32 %v4822, 1.0
        %v5023 = vadd.f32 %v4824, 1.0
        %v5024 = vadd.f32 %v4826, 1.0
        %v5025 = vadd.f32 %v4828, 1.0
        %v5026 = vadd.f32 %v4830, 1.0
        %v5027 = vadd.f32 %v4832, 1.0
        %v5028 = vadd.f32 %v4834, 1.0
        %v5029 = vadd.f32 %v4836, 1.0
        %v5030 = vadd.f32 %v4838, 1.0
        %v5031 = vadd.f32 %v4840, 1.0
        %v5032 = vadd.f32 %v4842, 1.0
        %v5033 = vadd.f32 %v4844, 1.0
        %v5034 = vadd.f32 %v4846, 1.0
        %v5035 = vadd.f32 %v4848, 1.0
        %v5036 = vadd.f32 %v4850, 1.0
        %v5037 = vadd.f32 %v4852, 1.0
        %v5038 = vadd.f32 %v4854, 1.0
        %v5039 = vadd.f32 %v4856, 1.0
        %v5040 = vadd.f32 %v4858, 1.0
        %v5041 = vadd.f32 %v4860, 1.0
        %v5042 = vadd.f32 %v4862, 1.0
        %v5043 = vadd.f32 %v4864, 1.0
        %v5044 = vadd.f32 %v4866, 1.0
        %v5045 = vadd.f32 %v4868, 1.0
        %v5046 = vadd.f32 %v4870, 1.0
        %v5047 = vadd.f32 %v4872, 1.0
        %v5048 = vadd.f32 %v4874, 1.0
        %v5049 = vadd.f32 %v4876, 1.0
        %v5050 = vadd.f32 %v4878, 1.0
        %v5051 = vadd.f32 %v4880, 1.0
        %v5052 = vadd.f32 %v4882, 1.0
        %v5053 = vadd.f32 %v4884, 1.0
        %v5054 = vadd.f32 %v4886, 1.0
        %v5055 = vadd.f32 %v4888, 1.0
        %v5056 = vadd.f32 %v4890, 1.0
        %v5057 = vadd.f32 %v4892, 1.0
        %v5058 = vadd.f32 %v4894, 1.0
        %v5059 = vadd.f32 %v4896, 1.0
        %v5060 = vadd.f32 %v4898, 1.0
        %v5061 = vadd.f32 %v4900, 1.0
        %v5062 = vadd.f32 %v4902, 1.0
        %v5063 = vadd.f32 %v4904, 1.0
        %v5064 = vadd.f32 %v4906, 1.0
        %v5065 = vadd.f32 %v4908, 1.0
        %v5066 = vadd.f32 %v4910, 1.0
        %v5067 = vadd.f32 %v4912, 1.0
        %v5068 = vadd.f32 %v4914, 1.0
        %v5069 = vadd.f32 %v4916, 1.0
        %v5070 = vadd.f32 %v4918, 1.0
        %v5071 = vadd.f32 %v4920, 1.0
        %v5072 = vadd.f32 %v4922, 1.0
        %v5073 = vadd.f32 %v4924, 1.0
        %v5074 = vadd.f32 %v4926, 1.0
        %v5075 = vadd.f32 %v4928, 1.0
        %v5076 = vadd.f32 %v4930, 1.0
        %v5077 = vadd.f32 %v4932, 1.0
        %v5078 = vadd.f32 %v4934, 1.0
        %v5079 = vadd.f32 %v4936, 1.0
        %v5080 = vadd.f32 %v4938, 1.0
        %v5081 = vadd.f32 %v4940, 1.0
        %v5082 = vadd.f32 %v4942, 1.0
        %v5083 = vadd.f32 %v4944, 1.0
        %v5084 = vadd.f32 %v4946, 1.0
        %v5085 = vadd.f32 %v4948, 1.0
        %v5086 = vadd.f32 %v4950, 1.0
        %v5087 = vadd.f32 %v4952, 1.0
        %v5088 = vadd.f32 %v4954, 1.0
        %v5089 = vadd.f32 %v4956, 1.0
        %v5090 = vadd.f32 %v4958, 1.0
        %v5091 = vadd.f32 %v4960, 1.0
        %v5092 = vadd.f32 %v4962, 1.0
        %v5093 = vadd.f32 %v4964, 1.0
        %v5094 = vadd.f32 %v4966, 1.0
        %v5095 = vrcp.pop %v4967
        %v5096 = vmul.f32 1.0, %v5095
        %v5097 = vrcp.pop %v4968
        %v5098 = vmul.f32 1.0, %v5097
        %v5099 = vrcp.pop %v4969
        %v5100 = vmul.f32 1.0, %v5099
        %v5101 = vrcp.pop %v4970
        %v5102 = vmul.f32 1.0, %v5101
        %v5103 = vrcp.pop %v4971
        %v5104 = vmul.f32 1.0, %v5103
        %v5105 = vrcp.pop %v4972
        %v5106 = vmul.f32 1.0, %v5105
        %v5107 = vrcp.pop %v4973
        %v5108 = vmul.f32 1.0, %v5107
        %v5109 = vrcp.pop %v4974
        %v5110 = vmul.f32 1.0, %v5109
        %v5111 = vrcp.pop %v4975
        %v5112 = vmul.f32 1.0, %v5111
        %v5113 = vrcp.pop %v4976
        %v5114 = vmul.f32 1.0, %v5113
        %v5115 = vrcp.pop %v4977
        %v5116 = vmul.f32 1.0, %v5115
        %v5117 = vrcp.pop %v4978
        %v5118 = vmul.f32 1.0, %v5117
        %v5119 = vrcp.pop %v4979
        %v5120 = vmul.f32 1.0, %v5119
        %v5121 = vrcp.pop %v4980
        %v5122 = vmul.f32 1.0, %v5121
        %v5123 = vrcp.pop %v4981
        %v5124 = vmul.f32 1.0, %v5123
        %v5125 = vrcp.pop %v4982
        %v5126 = vmul.f32 1.0, %v5125
        %v5127 = vrcp.pop %v4983
        %v5128 = vmul.f32 1.0, %v5127
        %v5129 = vrcp.pop %v4984
        %v5130 = vmul.f32 1.0, %v5129
        %v5131 = vrcp.pop %v4985
        %v5132 = vmul.f32 1.0, %v5131
        %v5133 = vrcp.pop %v4986
        %v5134 = vmul.f32 1.0, %v5133
        %v5135 = vrcp.pop %v4987
        %v5136 = vmul.f32 1.0, %v5135
        %v5137 = vrcp.pop %v4988
        %v5138 = vmul.f32 1.0, %v5137
        %v5139 = vrcp.pop %v4989
        %v5140 = vmul.f32 1.0, %v5139
        %v5141 = vrcp.pop %v4990
        %v5142 = vmul.f32 1.0, %v5141
        %v5143 = vrcp.pop %v4991
        %v5144 = vmul.f32 1.0, %v5143
        %v5145 = vrcp.pop %v4992
        %v5146 = vmul.f32 1.0, %v5145
        %v5147 = vrcp.pop %v4993
        %v5148 = vmul.f32 1.0, %v5147
        %v5149 = vrcp.pop %v4994
        %v5150 = vmul.f32 1.0, %v5149
        %v5151 = vrcp.pop %v4995
        %v5152 = vmul.f32 1.0, %v5151
        %v5153 = vrcp.pop %v4996
        %v5154 = vmul.f32 1.0, %v5153
        %v5155 = vrcp.pop %v4997
        %v5156 = vmul.f32 1.0, %v5155
        %v5157 = vrcp.pop %v4998
        %v5158 = vmul.f32 1.0, %v5157
        %v5159 = vrcp.pop %v4999
        %v5160 = vmul.f32 1.0, %v5159
        %v5161 = vrcp.pop %v5000
        %v5162 = vmul.f32 1.0, %v5161
        %v5163 = vrcp.pop %v5001
        %v5164 = vmul.f32 1.0, %v5163
        %v5165 = vrcp.pop %v5002
        %v5166 = vmul.f32 1.0, %v5165
        %v5167 = vrcp.pop %v5003
        %v5168 = vmul.f32 1.0, %v5167
        %v5169 = vrcp.pop %v5004
        %v5170 = vmul.f32 1.0, %v5169
        %v5171 = vrcp.pop %v5005
        %v5172 = vmul.f32 1.0, %v5171
        %v5173 = vrcp.pop %v5006
        %v5174 = vmul.f32 1.0, %v5173
        %v5175 = vrcp.pop %v5007
        %v5176 = vmul.f32 1.0, %v5175
        %v5177 = vrcp.pop %v5008
        %v5178 = vmul.f32 1.0, %v5177
        %v5179 = vrcp.pop %v5009
        %v5180 = vmul.f32 1.0, %v5179
        %v5181 = vrcp.pop %v5010
        %v5182 = vmul.f32 1.0, %v5181
        %v5183 = vrcp.pop %v5011
        %v5184 = vmul.f32 1.0, %v5183
        %v5185 = vrcp.pop %v5012
        %v5186 = vmul.f32 1.0, %v5185
        %v5187 = vrcp.pop %v5013
        %v5188 = vmul.f32 1.0, %v5187
        %v5189 = vrcp.pop %v5014
        %v5190 = vmul.f32 1.0, %v5189
        %v5191 = vrcp.pop %v5015
        %v5192 = vmul.f32 1.0, %v5191
        %v5193 = vrcp.pop %v5016
        %v5194 = vmul.f32 1.0, %v5193
        %v5195 = vrcp.pop %v5017
        %v5196 = vmul.f32 1.0, %v5195
        %v5197 = vrcp.pop %v5018
        %v5198 = vmul.f32 1.0, %v5197
        %v5199 = vrcp.pop %v5019
        %v5200 = vmul.f32 1.0, %v5199
        %v5201 = vrcp.pop %v5020
        %v5202 = vmul.f32 1.0, %v5201
        %v5203 = vrcp.pop %v5021
        %v5204 = vmul.f32 1.0, %v5203
        %v5205 = vrcp.pop %v5022
        %v5206 = vmul.f32 1.0, %v5205
        %v5207 = vrcp.pop %v5023
        %v5208 = vmul.f32 1.0, %v5207
        %v5209 = vrcp.pop %v5024
        %v5210 = vmul.f32 1.0, %v5209
        %v5211 = vrcp.pop %v5025
        %v5212 = vmul.f32 1.0, %v5211
        %v5213 = vrcp.pop %v5026
        %v5214 = vmul.f32 1.0, %v5213
        %v5215 = vrcp.pop %v5027
        %v5216 = vmul.f32 1.0, %v5215
        %v5217 = vrcp.pop %v5028
        %v5218 = vmul.f32 1.0, %v5217
        %v5219 = vrcp.pop %v5029
        %v5220 = vmul.f32 1.0, %v5219
        %v5221 = vrcp.pop %v5030
        %v5222 = vmul.f32 1.0, %v5221
        %v5223 = vrcp.pop %v5031
        %v5224 = vmul.f32 1.0, %v5223
        %v5225 = vrcp.pop %v5032
        %v5226 = vmul.f32 1.0, %v5225
        %v5227 = vrcp.pop %v5033
        %v5228 = vmul.f32 1.0, %v5227
        %v5229 = vrcp.pop %v5034
        %v5230 = vmul.f32 1.0, %v5229
        %v5231 = vrcp.pop %v5035
        %v5232 = vmul.f32 1.0, %v5231
        %v5233 = vrcp.pop %v5036
        %v5234 = vmul.f32 1.0, %v5233
        %v5235 = vrcp.pop %v5037
        %v5236 = vmul.f32 1.0, %v5235
        %v5237 = vrcp.pop %v5038
        %v5238 = vmul.f32 1.0, %v5237
        %v5239 = vrcp.pop %v5039
        %v5240 = vmul.f32 1.0, %v5239
        %v5241 = vrcp.pop %v5040
        %v5242 = vmul.f32 1.0, %v5241
        %v5243 = vrcp.pop %v5041
        %v5244 = vmul.f32 1.0, %v5243
        %v5245 = vrcp.pop %v5042
        %v5246 = vmul.f32 1.0, %v5245
        %v5247 = vrcp.pop %v5043
        %v5248 = vmul.f32 1.0, %v5247
        %v5249 = vrcp.pop %v5044
        %v5250 = vmul.f32 1.0, %v5249
        %v5251 = vrcp.pop %v5045
        %v5252 = vmul.f32 1.0, %v5251
        %v5253 = vrcp.pop %v5046
        %v5254 = vmul.f32 1.0, %v5253
        %v5255 = vrcp.pop %v5047
        %v5256 = vmul.f32 1.0, %v5255
        %v5257 = vrcp.pop %v5048
        %v5258 = vmul.f32 1.0, %v5257
        %v5259 = vrcp.pop %v5049
        %v5260 = vmul.f32 1.0, %v5259
        %v5261 = vrcp.pop %v5050
        %v5262 = vmul.f32 1.0, %v5261
        %v5263 = vrcp.pop %v5051
        %v5264 = vmul.f32 1.0, %v5263
        %v5265 = vrcp.pop %v5052
        %v5266 = vmul.f32 1.0, %v5265
        %v5267 = vrcp.pop %v5053
        %v5268 = vmul.f32 1.0, %v5267
        %v5269 = vrcp.pop %v5054
        %v5270 = vmul.f32 1.0, %v5269
        %v5271 = vrcp.pop %v5055
        %v5272 = vmul.f32 1.0, %v5271
        %v5273 = vrcp.pop %v5056
        %v5274 = vmul.f32 1.0, %v5273
        %v5275 = vrcp.pop %v5057
        %v5276 = vmul.f32 1.0, %v5275
        %v5277 = vrcp.pop %v5058
        %v5278 = vmul.f32 1.0, %v5277
        %v5279 = vrcp.pop %v5059
        %v5280 = vmul.f32 1.0, %v5279
        %v5281 = vrcp.pop %v5060
        %v5282 = vmul.f32 1.0, %v5281
        %v5283 = vrcp.pop %v5061
        %v5284 = vmul.f32 1.0, %v5283
        %v5285 = vrcp.pop %v5062
        %v5286 = vmul.f32 1.0, %v5285
        %v5287 = vrcp.pop %v5063
        %v5288 = vmul.f32 1.0, %v5287
        %v5289 = vrcp.pop %v5064
        %v5290 = vmul.f32 1.0, %v5289
        %v5291 = vrcp.pop %v5065
        %v5292 = vmul.f32 1.0, %v5291
        %v5293 = vrcp.pop %v5066
        %v5294 = vmul.f32 1.0, %v5293
        %v5295 = vrcp.pop %v5067
        %v5296 = vmul.f32 1.0, %v5295
        %v5297 = vrcp.pop %v5068
        %v5298 = vmul.f32 1.0, %v5297
        %v5299 = vrcp.pop %v5069
        %v5300 = vmul.f32 1.0, %v5299
        %v5301 = vrcp.pop %v5070
        %v5302 = vmul.f32 1.0, %v5301
        %v5303 = vrcp.pop %v5071
        %v5304 = vmul.f32 1.0, %v5303
        %v5305 = vrcp.pop %v5072
        %v5306 = vmul.f32 1.0, %v5305
        %v5307 = vrcp.pop %v5073
        %v5308 = vmul.f32 1.0, %v5307
        %v5309 = vrcp.pop %v5074
        %v5310 = vmul.f32 1.0, %v5309
        %v5311 = vrcp.pop %v5075
        %v5312 = vmul.f32 1.0, %v5311
        %v5313 = vrcp.pop %v5076
        %v5314 = vmul.f32 1.0, %v5313
        %v5315 = vrcp.pop %v5077
        %v5316 = vmul.f32 1.0, %v5315
        %v5317 = vrcp.pop %v5078
        %v5318 = vmul.f32 1.0, %v5317
        %v5319 = vrcp.pop %v5079
        %v5320 = vmul.f32 1.0, %v5319
        %v5321 = vrcp.pop %v5080
        %v5322 = vmul.f32 1.0, %v5321
        %v5323 = vrcp.pop %v5081
        %v5324 = vmul.f32 1.0, %v5323
        %v5325 = vrcp.pop %v5082
        %v5326 = vmul.f32 1.0, %v5325
        %v5327 = vrcp.pop %v5083
        %v5328 = vmul.f32 1.0, %v5327
        %v5329 = vrcp.pop %v5084
        %v5330 = vmul.f32 1.0, %v5329
        %v5331 = vrcp.pop %v5085
        %v5332 = vmul.f32 1.0, %v5331
        %v5333 = vrcp.pop %v5086
        %v5334 = vmul.f32 1.0, %v5333
        %v5335 = vrcp.pop %v5087
        %v5336 = vmul.f32 1.0, %v5335
        %v5337 = vrcp.pop %v5088
        %v5338 = vmul.f32 1.0, %v5337
        %v5339 = vrcp.pop %v5089
        %v5340 = vmul.f32 1.0, %v5339
        %v5341 = vrcp.pop %v5090
        %v5342 = vmul.f32 1.0, %v5341
        %v5343 = vrcp.pop %v5091
        %v5344 = vmul.f32 1.0, %v5343
        %v5345 = vrcp.pop %v5092
        %v5346 = vmul.f32 1.0, %v5345
        %v5347 = vrcp.pop %v5093
        %v5348 = vmul.f32 1.0, %v5347
        %v5349 = vrcp.pop %v5094
        %v5350 = vmul.f32 1.0, %v5349
        %vm5351 = vcmask 23552
        %5352 = vst.msk [vmem:[%s1282] sm:$0xff] %vm5351, %v5096
        %5353 = vst.msk [vmem:[%s1282 + $0x8] sm:$0xff] %vm5351, %v5098
        %5354 = vst.msk [vmem:[%s1282 + $0x10] sm:$0xff] %vm5351, %v5100
        %5355 = vst.msk [vmem:[%s1282 + $0x18] sm:$0xff] %vm5351, %v5102
        %5356 = vst.msk [vmem:[%s1282 + $0x20] sm:$0xff] %vm5351, %v5104
        %5357 = vst.msk [vmem:[%s1282 + $0x28] sm:$0xff] %vm5351, %v5106
        %5358 = vst.msk [vmem:[%s1282 + $0x30] sm:$0xff] %vm5351, %v5108
        %5359 = vst.msk [vmem:[%s1282 + $0x38] sm:$0xff] %vm5351, %v5110
        %5360 = vst.msk [vmem:[%s1282 + $0x40] sm:$0xff] %vm5351, %v5112
        %5361 = vst.msk [vmem:[%s1282 + $0x48] sm:$0xff] %vm5351, %v5114
        %5362 = vst.msk [vmem:[%s1282 + $0x50] sm:$0xff] %vm5351, %v5116
        %5363 = vst.msk [vmem:[%s1282 + $0x58] sm:$0xff] %vm5351, %v5118
        %5364 = vst.msk [vmem:[%s1282 + $0x60] sm:$0xff] %vm5351, %v5120
        %5365 = vst.msk [vmem:[%s1282 + $0x68] sm:$0xff] %vm5351, %v5122
        %5366 = vst.msk [vmem:[%s1282 + $0x70] sm:$0xff] %vm5351, %v5124
        %5367 = vst.msk [vmem:[%s1282 + $0x78] sm:$0xff] %vm5351, %v5126
        %5368 = vst.msk [vmem:[%s1282 + $0x80] sm:$0xff] %vm5351, %v5128
        %5369 = vst.msk [vmem:[%s1282 + $0x88] sm:$0xff] %vm5351, %v5130
        %5370 = vst.msk [vmem:[%s1282 + $0x90] sm:$0xff] %vm5351, %v5132
        %5371 = vst.msk [vmem:[%s1282 + $0x98] sm:$0xff] %vm5351, %v5134
        %5372 = vst.msk [vmem:[%s1282 + $0xa0] sm:$0xff] %vm5351, %v5136
        %5373 = vst.msk [vmem:[%s1282 + $0xa8] sm:$0xff] %vm5351, %v5138
        %5374 = vst.msk [vmem:[%s1282 + $0xb0] sm:$0xff] %vm5351, %v5140
        %5375 = vst.msk [vmem:[%s1282 + $0xb8] sm:$0xff] %vm5351, %v5142
        %5376 = vst.msk [vmem:[%s1282 + $0xc0] sm:$0xff] %vm5351, %v5144
        %5377 = vst.msk [vmem:[%s1282 + $0xc8] sm:$0xff] %vm5351, %v5146
        %5378 = vst.msk [vmem:[%s1282 + $0xd0] sm:$0xff] %vm5351, %v5148
        %5379 = vst.msk [vmem:[%s1282 + $0xd8] sm:$0xff] %vm5351, %v5150
        %5380 = vst.msk [vmem:[%s1282 + $0xe0] sm:$0xff] %vm5351, %v5152
        %5381 = vst.msk [vmem:[%s1282 + $0xe8] sm:$0xff] %vm5351, %v5154
        %5382 = vst.msk [vmem:[%s1282 + $0xf0] sm:$0xff] %vm5351, %v5156
        %5383 = vst.msk [vmem:[%s1282 + $0xf8] sm:$0xff] %vm5351, %v5158
        %5384 = vst.msk [vmem:[%s1282 + $0x100] sm:$0xff] %vm5351, %v5160
        %5385 = vst.msk [vmem:[%s1282 + $0x108] sm:$0xff] %vm5351, %v5162
        %5386 = vst.msk [vmem:[%s1282 + $0x110] sm:$0xff] %vm5351, %v5164
        %5387 = vst.msk [vmem:[%s1282 + $0x118] sm:$0xff] %vm5351, %v5166
        %5388 = vst.msk [vmem:[%s1282 + $0x120] sm:$0xff] %vm5351, %v5168
        %5389 = vst.msk [vmem:[%s1282 + $0x128] sm:$0xff] %vm5351, %v5170
        %5390 = vst.msk [vmem:[%s1282 + $0x130] sm:$0xff] %vm5351, %v5172
        %5391 = vst.msk [vmem:[%s1282 + $0x138] sm:$0xff] %vm5351, %v5174
        %5392 = vst.msk [vmem:[%s1282 + $0x140] sm:$0xff] %vm5351, %v5176
        %5393 = vst.msk [vmem:[%s1282 + $0x148] sm:$0xff] %vm5351, %v5178
        %5394 = vst.msk [vmem:[%s1282 + $0x150] sm:$0xff] %vm5351, %v5180
        %5395 = vst.msk [vmem:[%s1282 + $0x158] sm:$0xff] %vm5351, %v5182
        %5396 = vst.msk [vmem:[%s1282 + $0x160] sm:$0xff] %vm5351, %v5184
        %5397 = vst.msk [vmem:[%s1282 + $0x168] sm:$0xff] %vm5351, %v5186
        %5398 = vst.msk [vmem:[%s1282 + $0x170] sm:$0xff] %vm5351, %v5188
        %5399 = vst.msk [vmem:[%s1282 + $0x178] sm:$0xff] %vm5351, %v5190
        %5400 = vst.msk [vmem:[%s1282 + $0x180] sm:$0xff] %vm5351, %v5192
        %5401 = vst.msk [vmem:[%s1282 + $0x188] sm:$0xff] %vm5351, %v5194
        %5402 = vst.msk [vmem:[%s1282 + $0x190] sm:$0xff] %vm5351, %v5196
        %5403 = vst.msk [vmem:[%s1282 + $0x198] sm:$0xff] %vm5351, %v5198
        %5404 = vst.msk [vmem:[%s1282 + $0x1a0] sm:$0xff] %vm5351, %v5200
        %5405 = vst.msk [vmem:[%s1282 + $0x1a8] sm:$0xff] %vm5351, %v5202
        %5406 = vst.msk [vmem:[%s1282 + $0x1b0] sm:$0xff] %vm5351, %v5204
        %5407 = vst.msk [vmem:[%s1282 + $0x1b8] sm:$0xff] %vm5351, %v5206
        %5408 = vst.msk [vmem:[%s1282 + $0x1c0] sm:$0xff] %vm5351, %v5208
        %5409 = vst.msk [vmem:[%s1282 + $0x1c8] sm:$0xff] %vm5351, %v5210
        %5410 = vst.msk [vmem:[%s1282 + $0x1d0] sm:$0xff] %vm5351, %v5212
        %5411 = vst.msk [vmem:[%s1282 + $0x1d8] sm:$0xff] %vm5351, %v5214
        %5412 = vst.msk [vmem:[%s1282 + $0x1e0] sm:$0xff] %vm5351, %v5216
        %5413 = vst.msk [vmem:[%s1282 + $0x1e8] sm:$0xff] %vm5351, %v5218
        %5414 = vst.msk [vmem:[%s1282 + $0x1f0] sm:$0xff] %vm5351, %v5220
        %5415 = vst.msk [vmem:[%s1282 + $0x1f8] sm:$0xff] %vm5351, %v5222
        %5416 = vst.msk [vmem:[%s1282 + $0x200] sm:$0xff] %vm5351, %v5224
        %5417 = vst.msk [vmem:[%s1282 + $0x208] sm:$0xff] %vm5351, %v5226
        %5418 = vst.msk [vmem:[%s1282 + $0x210] sm:$0xff] %vm5351, %v5228
        %5419 = vst.msk [vmem:[%s1282 + $0x218] sm:$0xff] %vm5351, %v5230
        %5420 = vst.msk [vmem:[%s1282 + $0x220] sm:$0xff] %vm5351, %v5232
        %5421 = vst.msk [vmem:[%s1282 + $0x228] sm:$0xff] %vm5351, %v5234
        %5422 = vst.msk [vmem:[%s1282 + $0x230] sm:$0xff] %vm5351, %v5236
        %5423 = vst.msk [vmem:[%s1282 + $0x238] sm:$0xff] %vm5351, %v5238
        %5424 = vst.msk [vmem:[%s1282 + $0x240] sm:$0xff] %vm5351, %v5240
        %5425 = vst.msk [vmem:[%s1282 + $0x248] sm:$0xff] %vm5351, %v5242
        %5426 = vst.msk [vmem:[%s1282 + $0x250] sm:$0xff] %vm5351, %v5244
        %5427 = vst.msk [vmem:[%s1282 + $0x258] sm:$0xff] %vm5351, %v5246
        %5428 = vst.msk [vmem:[%s1282 + $0x260] sm:$0xff] %vm5351, %v5248
        %5429 = vst.msk [vmem:[%s1282 + $0x268] sm:$0xff] %vm5351, %v5250
        %5430 = vst.msk [vmem:[%s1282 + $0x270] sm:$0xff] %vm5351, %v5252
        %5431 = vst.msk [vmem:[%s1282 + $0x278] sm:$0xff] %vm5351, %v5254
        %5432 = vst.msk [vmem:[%s1282 + $0x280] sm:$0xff] %vm5351, %v5256
        %5433 = vst.msk [vmem:[%s1282 + $0x288] sm:$0xff] %vm5351, %v5258
        %5434 = vst.msk [vmem:[%s1282 + $0x290] sm:$0xff] %vm5351, %v5260
        %5435 = vst.msk [vmem:[%s1282 + $0x298] sm:$0xff] %vm5351, %v5262
        %5436 = vst.msk [vmem:[%s1282 + $0x2a0] sm:$0xff] %vm5351, %v5264
        %5437 = vst.msk [vmem:[%s1282 + $0x2a8] sm:$0xff] %vm5351, %v5266
        %5438 = vst.msk [vmem:[%s1282 + $0x2b0] sm:$0xff] %vm5351, %v5268
        %5439 = vst.msk [vmem:[%s1282 + $0x2b8] sm:$0xff] %vm5351, %v5270
        %5440 = vst.msk [vmem:[%s1282 + $0x2c0] sm:$0xff] %vm5351, %v5272
        %5441 = vst.msk [vmem:[%s1282 + $0x2c8] sm:$0xff] %vm5351, %v5274
        %5442 = vst.msk [vmem:[%s1282 + $0x2d0] sm:$0xff] %vm5351, %v5276
        %5443 = vst.msk [vmem:[%s1282 + $0x2d8] sm:$0xff] %vm5351, %v5278
        %5444 = vst.msk [vmem:[%s1282 + $0x2e0] sm:$0xff] %vm5351, %v5280
        %5445 = vst.msk [vmem:[%s1282 + $0x2e8] sm:$0xff] %vm5351, %v5282
        %5446 = vst.msk [vmem:[%s1282 + $0x2f0] sm:$0xff] %vm5351, %v5284
        %5447 = vst.msk [vmem:[%s1282 + $0x2f8] sm:$0xff] %vm5351, %v5286
        %5448 = vst.msk [vmem:[%s1282 + $0x300] sm:$0xff] %vm5351, %v5288
        %5449 = vst.msk [vmem:[%s1282 + $0x308] sm:$0xff] %vm5351, %v5290
        %5450 = vst.msk [vmem:[%s1282 + $0x310] sm:$0xff] %vm5351, %v5292
        %5451 = vst.msk [vmem:[%s1282 + $0x318] sm:$0xff] %vm5351, %v5294
        %5452 = vst.msk [vmem:[%s1282 + $0x320] sm:$0xff] %vm5351, %v5296
        %5453 = vst.msk [vmem:[%s1282 + $0x328] sm:$0xff] %vm5351, %v5298
        %5454 = vst.msk [vmem:[%s1282 + $0x330] sm:$0xff] %vm5351, %v5300
        %5455 = vst.msk [vmem:[%s1282 + $0x338] sm:$0xff] %vm5351, %v5302
        %5456 = vst.msk [vmem:[%s1282 + $0x340] sm:$0xff] %vm5351, %v5304
        %5457 = vst.msk [vmem:[%s1282 + $0x348] sm:$0xff] %vm5351, %v5306
        %5458 = vst.msk [vmem:[%s1282 + $0x350] sm:$0xff] %vm5351, %v5308
        %5459 = vst.msk [vmem:[%s1282 + $0x358] sm:$0xff] %vm5351, %v5310
        %5460 = vst.msk [vmem:[%s1282 + $0x360] sm:$0xff] %vm5351, %v5312
        %5461 = vst.msk [vmem:[%s1282 + $0x368] sm:$0xff] %vm5351, %v5314
        %5462 = vst.msk [vmem:[%s1282 + $0x370] sm:$0xff] %vm5351, %v5316
        %5463 = vst.msk [vmem:[%s1282 + $0x378] sm:$0xff] %vm5351, %v5318
        %5464 = vst.msk [vmem:[%s1282 + $0x380] sm:$0xff] %vm5351, %v5320
        %5465 = vst.msk [vmem:[%s1282 + $0x388] sm:$0xff] %vm5351, %v5322
        %5466 = vst.msk [vmem:[%s1282 + $0x390] sm:$0xff] %vm5351, %v5324
        %5467 = vst.msk [vmem:[%s1282 + $0x398] sm:$0xff] %vm5351, %v5326
        %5468 = vst.msk [vmem:[%s1282 + $0x3a0] sm:$0xff] %vm5351, %v5328
        %5469 = vst.msk [vmem:[%s1282 + $0x3a8] sm:$0xff] %vm5351, %v5330
        %5470 = vst.msk [vmem:[%s1282 + $0x3b0] sm:$0xff] %vm5351, %v5332
        %5471 = vst.msk [vmem:[%s1282 + $0x3b8] sm:$0xff] %vm5351, %v5334
        %5472 = vst.msk [vmem:[%s1282 + $0x3c0] sm:$0xff] %vm5351, %v5336
        %5473 = vst.msk [vmem:[%s1282 + $0x3c8] sm:$0xff] %vm5351, %v5338
        %5474 = vst.msk [vmem:[%s1282 + $0x3d0] sm:$0xff] %vm5351, %v5340
        %5475 = vst.msk [vmem:[%s1282 + $0x3d8] sm:$0xff] %vm5351, %v5342
        %5476 = vst.msk [vmem:[%s1282 + $0x3e0] sm:$0xff] %vm5351, %v5344
        %5477 = vst.msk [vmem:[%s1282 + $0x3e8] sm:$0xff] %vm5351, %v5346
        %5478 = vst.msk [vmem:[%s1282 + $0x3f0] sm:$0xff] %vm5351, %v5348
        %5479 = vst.msk [vmem:[%s1282 + $0x3f8] sm:$0xff] %vm5351, %v5350
        %5480 = vxpose.xlu0.b32.start [1/16] %v1435, 128
        %5481 = vxpose.xlu0.b32.cont [2/16] 0.0, 128
        %5482 = vxpose.xlu0.b32.cont [3/16] 0.0, 128
        %5483 = vxpose.xlu0.b32.cont [4/16] 0.0, 128
        %5484 = vxpose.xlu0.b32.cont [5/16] 0.0, 128
        %5485 = vxpose.xlu0.b32.cont [6/16] 0.0, 128
        %5486 = vxpose.xlu0.b32.cont [7/16] 0.0, 128
        %5487 = vxpose.xlu0.b32.cont [8/16] 0.0, 128
        %5488 = vxpose.xlu0.b32.cont [9/16] 0.0, 128
        %5489 = vxpose.xlu0.b32.cont [10/16] 0.0, 128
        %5490 = vxpose.xlu0.b32.cont [11/16] 0.0, 128
        %5491 = vxpose.xlu0.b32.cont [12/16] 0.0, 128
        %5492 = vxpose.xlu0.b32.cont [13/16] 0.0, 128
        %5493 = vxpose.xlu0.b32.cont [14/16] 0.0, 128
        %5494 = vxpose.xlu0.b32.cont [15/16] 0.0, 128
        %5495 = vxpose.xlu0.b32.end [16/16] 0.0, 128
        %v5496 = vpop.trf.xlu0
        %v5497 = vpop.trf.xlu0
        %v5498 = vpop.trf.xlu0
        %v5499 = vpop.trf.xlu0
        %v5500 = vpop.trf.xlu0
        %v5501 = vpop.trf.xlu0
        %v5502 = vpop.trf.xlu0
        %v5503 = vpop.trf.xlu0
        %v5504 = vpop.trf.xlu0
        %v5505 = vpop.trf.xlu0
        %v5506 = vpop.trf.xlu0
        %v5507 = vpop.trf.xlu0
        %v5508 = vpop.trf.xlu0
        %v5509 = vpop.trf.xlu0
        %v5510 = vpop.trf.xlu0
        %v5511 = vpop.trf.xlu0
        %5513 = vset.pattern.permute.xlu0 0
        %5514 = vperm.xlu0 %5513, %v5496
        %v5515 = vpop.permute.xlu0 %5514
        %5518 = vset.pattern.permute.xlu0 0
        %5519 = vperm.xlu0 %5518, %v5497
        %v5520 = vpop.permute.xlu0 %5519
        %5523 = vset.pattern.permute.xlu0 0
        %5524 = vperm.xlu0 %5523, %v5498
        %v5525 = vpop.permute.xlu0 %5524
        %5528 = vset.pattern.permute.xlu0 0
        %5529 = vperm.xlu0 %5528, %v5499
        %v5530 = vpop.permute.xlu0 %5529
        %5533 = vset.pattern.permute.xlu0 0
        %5534 = vperm.xlu0 %5533, %v5500
        %v5535 = vpop.permute.xlu0 %5534
        %5538 = vset.pattern.permute.xlu0 0
        %5539 = vperm.xlu0 %5538, %v5501
        %v5540 = vpop.permute.xlu0 %5539
        %5543 = vset.pattern.permute.xlu0 0
        %5544 = vperm.xlu0 %5543, %v5502
        %v5545 = vpop.permute.xlu0 %5544
        %5548 = vset.pattern.permute.xlu0 0
        %5549 = vperm.xlu0 %5548, %v5503
        %v5550 = vpop.permute.xlu0 %5549
        %5553 = vset.pattern.permute.xlu0 0
        %5554 = vperm.xlu0 %5553, %v5504
        %v5555 = vpop.permute.xlu0 %5554
        %5558 = vset.pattern.permute.xlu0 0
        %5559 = vperm.xlu0 %5558, %v5505
        %v5560 = vpop.permute.xlu0 %5559
        %5563 = vset.pattern.permute.xlu0 0
        %5564 = vperm.xlu0 %5563, %v5506
        %v5565 = vpop.permute.xlu0 %5564
        %5568 = vset.pattern.permute.xlu0 0
        %5569 = vperm.xlu0 %5568, %v5507
        %v5570 = vpop.permute.xlu0 %5569
        %5573 = vset.pattern.permute.xlu0 0
        %5574 = vperm.xlu0 %5573, %v5508
        %v5575 = vpop.permute.xlu0 %5574
        %5578 = vset.pattern.permute.xlu0 0
        %5579 = vperm.xlu0 %5578, %v5509
        %v5580 = vpop.permute.xlu0 %5579
        %5583 = vset.pattern.permute.xlu0 0
        %5584 = vperm.xlu0 %5583, %v5510
        %v5585 = vpop.permute.xlu0 %5584
        %5588 = vset.pattern.permute.xlu0 0
        %5589 = vperm.xlu0 %5588, %v5511
        %v5590 = vpop.permute.xlu0 %5589
        %v5592 = vmul.f32 %v5515, %v5096
        %v5593 = vmul.f32 %v5520, %v5098
        %v5594 = vmul.f32 %v5525, %v5100
        %v5595 = vmul.f32 %v5530, %v5102
        %v5596 = vmul.f32 %v5535, %v5104
        %v5597 = vmul.f32 %v5540, %v5106
        %v5598 = vmul.f32 %v5545, %v5108
        %v5599 = vmul.f32 %v5550, %v5110
        %v5600 = vmul.f32 %v5555, %v5112
        %v5601 = vmul.f32 %v5560, %v5114
        %v5602 = vmul.f32 %v5565, %v5116
        %v5603 = vmul.f32 %v5570, %v5118
        %v5604 = vmul.f32 %v5575, %v5120
        %v5605 = vmul.f32 %v5580, %v5122
        %v5606 = vmul.f32 %v5585, %v5124
        %v5607 = vmul.f32 %v5590, %v5126
        %v5608 = vadd.f32 %v5592, 0.0
        %v5609 = vadd.f32 %v5593, 0.0
        %v5610 = vadd.f32 %v5594, 0.0
        %v5611 = vadd.f32 %v5595, 0.0
        %v5612 = vadd.f32 %v5596, 0.0
        %v5613 = vadd.f32 %v5597, 0.0
        %v5614 = vadd.f32 %v5598, 0.0
        %v5615 = vadd.f32 %v5599, 0.0
        %v5616 = vadd.f32 %v5600, 0.0
        %v5617 = vadd.f32 %v5601, 0.0
        %v5618 = vadd.f32 %v5602, 0.0
        %v5619 = vadd.f32 %v5603, 0.0
        %v5620 = vadd.f32 %v5604, 0.0
        %v5621 = vadd.f32 %v5605, 0.0
        %v5622 = vadd.f32 %v5606, 0.0
        %v5623 = vadd.f32 %v5607, 0.0
        %5624 = vset.pattern.permute.xlu0 1
        %5625 = vperm.xlu0 %5624, %v5496
        %v5626 = vpop.permute.xlu0 %5625
        %5628 = vset.pattern.permute.xlu0 1
        %5629 = vperm.xlu0 %5628, %v5497
        %v5630 = vpop.permute.xlu0 %5629
        %5632 = vset.pattern.permute.xlu0 1
        %5633 = vperm.xlu0 %5632, %v5498
        %v5634 = vpop.permute.xlu0 %5633
        %5636 = vset.pattern.permute.xlu0 1
        %5637 = vperm.xlu0 %5636, %v5499
        %v5638 = vpop.permute.xlu0 %5637
        %5640 = vset.pattern.permute.xlu0 1
        %5641 = vperm.xlu0 %5640, %v5500
        %v5642 = vpop.permute.xlu0 %5641
        %5644 = vset.pattern.permute.xlu0 1
        %5645 = vperm.xlu0 %5644, %v5501
        %v5646 = vpop.permute.xlu0 %5645
        %5648 = vset.pattern.permute.xlu0 1
        %5649 = vperm.xlu0 %5648, %v5502
        %v5650 = vpop.permute.xlu0 %5649
        %5652 = vset.pattern.permute.xlu0 1
        %5653 = vperm.xlu0 %5652, %v5503
        %v5654 = vpop.permute.xlu0 %5653
        %5656 = vset.pattern.permute.xlu0 1
        %5657 = vperm.xlu0 %5656, %v5504
        %v5658 = vpop.permute.xlu0 %5657
        %5660 = vset.pattern.permute.xlu0 1
        %5661 = vperm.xlu0 %5660, %v5505
        %v5662 = vpop.permute.xlu0 %5661
        %5664 = vset.pattern.permute.xlu0 1
        %5665 = vperm.xlu0 %5664, %v5506
        %v5666 = vpop.permute.xlu0 %5665
        %5668 = vset.pattern.permute.xlu0 1
        %5669 = vperm.xlu0 %5668, %v5507
        %v5670 = vpop.permute.xlu0 %5669
        %5672 = vset.pattern.permute.xlu0 1
        %5673 = vperm.xlu0 %5672, %v5508
        %v5674 = vpop.permute.xlu0 %5673
        %5676 = vset.pattern.permute.xlu0 1
        %5677 = vperm.xlu0 %5676, %v5509
        %v5678 = vpop.permute.xlu0 %5677
        %5680 = vset.pattern.permute.xlu0 1
        %5681 = vperm.xlu0 %5680, %v5510
        %v5682 = vpop.permute.xlu0 %5681
        %5684 = vset.pattern.permute.xlu0 1
        %5685 = vperm.xlu0 %5684, %v5511
        %v5686 = vpop.permute.xlu0 %5685
        %v5688 = vmul.f32 %v5626, %v5128
        %v5689 = vmul.f32 %v5630, %v5130
        %v5690 = vmul.f32 %v5634, %v5132
        %v5691 = vmul.f32 %v5638, %v5134
        %v5692 = vmul.f32 %v5642, %v5136
        %v5693 = vmul.f32 %v5646, %v5138
        %v5694 = vmul.f32 %v5650, %v5140
        %v5695 = vmul.f32 %v5654, %v5142
        %v5696 = vmul.f32 %v5658, %v5144
        %v5697 = vmul.f32 %v5662, %v5146
        %v5698 = vmul.f32 %v5666, %v5148
        %v5699 = vmul.f32 %v5670, %v5150
        %v5700 = vmul.f32 %v5674, %v5152
        %v5701 = vmul.f32 %v5678, %v5154
        %v5702 = vmul.f32 %v5682, %v5156
        %v5703 = vmul.f32 %v5686, %v5158
        %v5704 = vadd.f32 %v5608, %v5688
        %v5705 = vadd.f32 %v5609, %v5689
        %v5706 = vadd.f32 %v5610, %v5690
        %v5707 = vadd.f32 %v5611, %v5691
        %v5708 = vadd.f32 %v5612, %v5692
        %v5709 = vadd.f32 %v5613, %v5693
        %v5710 = vadd.f32 %v5614, %v5694
        %v5711 = vadd.f32 %v5615, %v5695
        %v5712 = vadd.f32 %v5616, %v5696
        %v5713 = vadd.f32 %v5617, %v5697
        %v5714 = vadd.f32 %v5618, %v5698
        %v5715 = vadd.f32 %v5619, %v5699
        %v5716 = vadd.f32 %v5620, %v5700
        %v5717 = vadd.f32 %v5621, %v5701
        %v5718 = vadd.f32 %v5622, %v5702
        %v5719 = vadd.f32 %v5623, %v5703
        %5720 = vset.pattern.permute.xlu0 2
        %5721 = vperm.xlu0 %5720, %v5496
        %v5722 = vpop.permute.xlu0 %5721
        %5724 = vset.pattern.permute.xlu0 2
        %5725 = vperm.xlu0 %5724, %v5497
        %v5726 = vpop.permute.xlu0 %5725
        %5728 = vset.pattern.permute.xlu0 2
        %5729 = vperm.xlu0 %5728, %v5498
        %v5730 = vpop.permute.xlu0 %5729
        %5732 = vset.pattern.permute.xlu0 2
        %5733 = vperm.xlu0 %5732, %v5499
        %v5734 = vpop.permute.xlu0 %5733
        %5736 = vset.pattern.permute.xlu0 2
        %5737 = vperm.xlu0 %5736, %v5500
        %v5738 = vpop.permute.xlu0 %5737
        %5740 = vset.pattern.permute.xlu0 2
        %5741 = vperm.xlu0 %5740, %v5501
        %v5742 = vpop.permute.xlu0 %5741
        %5744 = vset.pattern.permute.xlu0 2
        %5745 = vperm.xlu0 %5744, %v5502
        %v5746 = vpop.permute.xlu0 %5745
        %5748 = vset.pattern.permute.xlu0 2
        %5749 = vperm.xlu0 %5748, %v5503
        %v5750 = vpop.permute.xlu0 %5749
        %5752 = vset.pattern.permute.xlu0 2
        %5753 = vperm.xlu0 %5752, %v5504
        %v5754 = vpop.permute.xlu0 %5753
        %5756 = vset.pattern.permute.xlu0 2
        %5757 = vperm.xlu0 %5756, %v5505
        %v5758 = vpop.permute.xlu0 %5757
        %5760 = vset.pattern.permute.xlu0 2
        %5761 = vperm.xlu0 %5760, %v5506
        %v5762 = vpop.permute.xlu0 %5761
        %5764 = vset.pattern.permute.xlu0 2
        %5765 = vperm.xlu0 %5764, %v5507
        %v5766 = vpop.permute.xlu0 %5765
        %5768 = vset.pattern.permute.xlu0 2
        %5769 = vperm.xlu0 %5768, %v5508
        %v5770 = vpop.permute.xlu0 %5769
        %5772 = vset.pattern.permute.xlu0 2
        %5773 = vperm.xlu0 %5772, %v5509
        %v5774 = vpop.permute.xlu0 %5773
        %5776 = vset.pattern.permute.xlu0 2
        %5777 = vperm.xlu0 %5776, %v5510
        %v5778 = vpop.permute.xlu0 %5777
        %5780 = vset.pattern.permute.xlu0 2
        %5781 = vperm.xlu0 %5780, %v5511
        %v5782 = vpop.permute.xlu0 %5781
        %v5784 = vmul.f32 %v5722, %v5160
        %v5785 = vmul.f32 %v5726, %v5162
        %v5786 = vmul.f32 %v5730, %v5164
        %v5787 = vmul.f32 %v5734, %v5166
        %v5788 = vmul.f32 %v5738, %v5168
        %v5789 = vmul.f32 %v5742, %v5170
        %v5790 = vmul.f32 %v5746, %v5172
        %v5791 = vmul.f32 %v5750, %v5174
        %v5792 = vmul.f32 %v5754, %v5176
        %v5793 = vmul.f32 %v5758, %v5178
        %v5794 = vmul.f32 %v5762, %v5180
        %v5795 = vmul.f32 %v5766, %v5182
        %v5796 = vmul.f32 %v5770, %v5184
        %v5797 = vmul.f32 %v5774, %v5186
        %v5798 = vmul.f32 %v5778, %v5188
        %v5799 = vmul.f32 %v5782, %v5190
        %v5800 = vadd.f32 %v5704, %v5784
        %v5801 = vadd.f32 %v5705, %v5785
        %v5802 = vadd.f32 %v5706, %v5786
        %v5803 = vadd.f32 %v5707, %v5787
        %v5804 = vadd.f32 %v5708, %v5788
        %v5805 = vadd.f32 %v5709, %v5789
        %v5806 = vadd.f32 %v5710, %v5790
        %v5807 = vadd.f32 %v5711, %v5791
        %v5808 = vadd.f32 %v5712, %v5792
        %v5809 = vadd.f32 %v5713, %v5793
        %v5810 = vadd.f32 %v5714, %v5794
        %v5811 = vadd.f32 %v5715, %v5795
        %v5812 = vadd.f32 %v5716, %v5796
        %v5813 = vadd.f32 %v5717, %v5797
        %v5814 = vadd.f32 %v5718, %v5798
        %v5815 = vadd.f32 %v5719, %v5799
        %5816 = vset.pattern.permute.xlu0 3
        %5817 = vperm.xlu0 %5816, %v5496
        %v5818 = vpop.permute.xlu0 %5817
        %5820 = vset.pattern.permute.xlu0 3
        %5821 = vperm.xlu0 %5820, %v5497
        %v5822 = vpop.permute.xlu0 %5821
        %5824 = vset.pattern.permute.xlu0 3
        %5825 = vperm.xlu0 %5824, %v5498
        %v5826 = vpop.permute.xlu0 %5825
        %5828 = vset.pattern.permute.xlu0 3
        %5829 = vperm.xlu0 %5828, %v5499
        %v5830 = vpop.permute.xlu0 %5829
        %5832 = vset.pattern.permute.xlu0 3
        %5833 = vperm.xlu0 %5832, %v5500
        %v5834 = vpop.permute.xlu0 %5833
        %5836 = vset.pattern.permute.xlu0 3
        %5837 = vperm.xlu0 %5836, %v5501
        %v5838 = vpop.permute.xlu0 %5837
        %5840 = vset.pattern.permute.xlu0 3
        %5841 = vperm.xlu0 %5840, %v5502
        %v5842 = vpop.permute.xlu0 %5841
        %5844 = vset.pattern.permute.xlu0 3
        %5845 = vperm.xlu0 %5844, %v5503
        %v5846 = vpop.permute.xlu0 %5845
        %5848 = vset.pattern.permute.xlu0 3
        %5849 = vperm.xlu0 %5848, %v5504
        %v5850 = vpop.permute.xlu0 %5849
        %5852 = vset.pattern.permute.xlu0 3
        %5853 = vperm.xlu0 %5852, %v5505
        %v5854 = vpop.permute.xlu0 %5853
        %5856 = vset.pattern.permute.xlu0 3
        %5857 = vperm.xlu0 %5856, %v5506
        %v5858 = vpop.permute.xlu0 %5857
        %5860 = vset.pattern.permute.xlu0 3
        %5861 = vperm.xlu0 %5860, %v5507
        %v5862 = vpop.permute.xlu0 %5861
        %5864 = vset.pattern.permute.xlu0 3
        %5865 = vperm.xlu0 %5864, %v5508
        %v5866 = vpop.permute.xlu0 %5865
        %5868 = vset.pattern.permute.xlu0 3
        %5869 = vperm.xlu0 %5868, %v5509
        %v5870 = vpop.permute.xlu0 %5869
        %5872 = vset.pattern.permute.xlu0 3
        %5873 = vperm.xlu0 %5872, %v5510
        %v5874 = vpop.permute.xlu0 %5873
        %5876 = vset.pattern.permute.xlu0 3
        %5877 = vperm.xlu0 %5876, %v5511
        %v5878 = vpop.permute.xlu0 %5877
        %v5880 = vmul.f32 %v5818, %v5192
        %v5881 = vmul.f32 %v5822, %v5194
        %v5882 = vmul.f32 %v5826, %v5196
        %v5883 = vmul.f32 %v5830, %v5198
        %v5884 = vmul.f32 %v5834, %v5200
        %v5885 = vmul.f32 %v5838, %v5202
        %v5886 = vmul.f32 %v5842, %v5204
        %v5887 = vmul.f32 %v5846, %v5206
        %v5888 = vmul.f32 %v5850, %v5208
        %v5889 = vmul.f32 %v5854, %v5210
        %v5890 = vmul.f32 %v5858, %v5212
        %v5891 = vmul.f32 %v5862, %v5214
        %v5892 = vmul.f32 %v5866, %v5216
        %v5893 = vmul.f32 %v5870, %v5218
        %v5894 = vmul.f32 %v5874, %v5220
        %v5895 = vmul.f32 %v5878, %v5222
        %v5896 = vadd.f32 %v5800, %v5880
        %v5897 = vadd.f32 %v5801, %v5881
        %v5898 = vadd.f32 %v5802, %v5882
        %v5899 = vadd.f32 %v5803, %v5883
        %v5900 = vadd.f32 %v5804, %v5884
        %v5901 = vadd.f32 %v5805, %v5885
        %v5902 = vadd.f32 %v5806, %v5886
        %v5903 = vadd.f32 %v5807, %v5887
        %v5904 = vadd.f32 %v5808, %v5888
        %v5905 = vadd.f32 %v5809, %v5889
        %v5906 = vadd.f32 %v5810, %v5890
        %v5907 = vadd.f32 %v5811, %v5891
        %v5908 = vadd.f32 %v5812, %v5892
        %v5909 = vadd.f32 %v5813, %v5893
        %v5910 = vadd.f32 %v5814, %v5894
        %v5911 = vadd.f32 %v5815, %v5895
        %5912 = vset.pattern.permute.xlu0 4
        %5913 = vperm.xlu0 %5912, %v5496
        %v5914 = vpop.permute.xlu0 %5913
        %5916 = vset.pattern.permute.xlu0 4
        %5917 = vperm.xlu0 %5916, %v5497
        %v5918 = vpop.permute.xlu0 %5917
        %5920 = vset.pattern.permute.xlu0 4
        %5921 = vperm.xlu0 %5920, %v5498
        %v5922 = vpop.permute.xlu0 %5921
        %5924 = vset.pattern.permute.xlu0 4
        %5925 = vperm.xlu0 %5924, %v5499
        %v5926 = vpop.permute.xlu0 %5925
        %5928 = vset.pattern.permute.xlu0 4
        %5929 = vperm.xlu0 %5928, %v5500
        %v5930 = vpop.permute.xlu0 %5929
        %5932 = vset.pattern.permute.xlu0 4
        %5933 = vperm.xlu0 %5932, %v5501
        %v5934 = vpop.permute.xlu0 %5933
        %5936 = vset.pattern.permute.xlu0 4
        %5937 = vperm.xlu0 %5936, %v5502
        %v5938 = vpop.permute.xlu0 %5937
        %5940 = vset.pattern.permute.xlu0 4
        %5941 = vperm.xlu0 %5940, %v5503
        %v5942 = vpop.permute.xlu0 %5941
        %5944 = vset.pattern.permute.xlu0 4
        %5945 = vperm.xlu0 %5944, %v5504
        %v5946 = vpop.permute.xlu0 %5945
        %5948 = vset.pattern.permute.xlu0 4
        %5949 = vperm.xlu0 %5948, %v5505
        %v5950 = vpop.permute.xlu0 %5949
        %5952 = vset.pattern.permute.xlu0 4
        %5953 = vperm.xlu0 %5952, %v5506
        %v5954 = vpop.permute.xlu0 %5953
        %5956 = vset.pattern.permute.xlu0 4
        %5957 = vperm.xlu0 %5956, %v5507
        %v5958 = vpop.permute.xlu0 %5957
        %5960 = vset.pattern.permute.xlu0 4
        %5961 = vperm.xlu0 %5960, %v5508
        %v5962 = vpop.permute.xlu0 %5961
        %5964 = vset.pattern.permute.xlu0 4
        %5965 = vperm.xlu0 %5964, %v5509
        %v5966 = vpop.permute.xlu0 %5965
        %5968 = vset.pattern.permute.xlu0 4
        %5969 = vperm.xlu0 %5968, %v5510
        %v5970 = vpop.permute.xlu0 %5969
        %5972 = vset.pattern.permute.xlu0 4
        %5973 = vperm.xlu0 %5972, %v5511
        %v5974 = vpop.permute.xlu0 %5973
        %v5976 = vmul.f32 %v5914, %v5224
        %v5977 = vmul.f32 %v5918, %v5226
        %v5978 = vmul.f32 %v5922, %v5228
        %v5979 = vmul.f32 %v5926, %v5230
        %v5980 = vmul.f32 %v5930, %v5232
        %v5981 = vmul.f32 %v5934, %v5234
        %v5982 = vmul.f32 %v5938, %v5236
        %v5983 = vmul.f32 %v5942, %v5238
        %v5984 = vmul.f32 %v5946, %v5240
        %v5985 = vmul.f32 %v5950, %v5242
        %v5986 = vmul.f32 %v5954, %v5244
        %v5987 = vmul.f32 %v5958, %v5246
        %v5988 = vmul.f32 %v5962, %v5248
        %v5989 = vmul.f32 %v5966, %v5250
        %v5990 = vmul.f32 %v5970, %v5252
        %v5991 = vmul.f32 %v5974, %v5254
        %v5992 = vadd.f32 %v5896, %v5976
        %v5993 = vadd.f32 %v5897, %v5977
        %v5994 = vadd.f32 %v5898, %v5978
        %v5995 = vadd.f32 %v5899, %v5979
        %v5996 = vadd.f32 %v5900, %v5980
        %v5997 = vadd.f32 %v5901, %v5981
        %v5998 = vadd.f32 %v5902, %v5982
        %v5999 = vadd.f32 %v5903, %v5983
        %v6000 = vadd.f32 %v5904, %v5984
        %v6001 = vadd.f32 %v5905, %v5985
        %v6002 = vadd.f32 %v5906, %v5986
        %v6003 = vadd.f32 %v5907, %v5987
        %v6004 = vadd.f32 %v5908, %v5988
        %v6005 = vadd.f32 %v5909, %v5989
        %v6006 = vadd.f32 %v5910, %v5990
        %v6007 = vadd.f32 %v5911, %v5991
        %6008 = vset.pattern.permute.xlu0 5
        %6009 = vperm.xlu0 %6008, %v5496
        %v6010 = vpop.permute.xlu0 %6009
        %6012 = vset.pattern.permute.xlu0 5
        %6013 = vperm.xlu0 %6012, %v5497
        %v6014 = vpop.permute.xlu0 %6013
        %6016 = vset.pattern.permute.xlu0 5
        %6017 = vperm.xlu0 %6016, %v5498
        %v6018 = vpop.permute.xlu0 %6017
        %6020 = vset.pattern.permute.xlu0 5
        %6021 = vperm.xlu0 %6020, %v5499
        %v6022 = vpop.permute.xlu0 %6021
        %6024 = vset.pattern.permute.xlu0 5
        %6025 = vperm.xlu0 %6024, %v5500
        %v6026 = vpop.permute.xlu0 %6025
        %6028 = vset.pattern.permute.xlu0 5
        %6029 = vperm.xlu0 %6028, %v5501
        %v6030 = vpop.permute.xlu0 %6029
        %6032 = vset.pattern.permute.xlu0 5
        %6033 = vperm.xlu0 %6032, %v5502
        %v6034 = vpop.permute.xlu0 %6033
        %6036 = vset.pattern.permute.xlu0 5
        %6037 = vperm.xlu0 %6036, %v5503
        %v6038 = vpop.permute.xlu0 %6037
        %6040 = vset.pattern.permute.xlu0 5
        %6041 = vperm.xlu0 %6040, %v5504
        %v6042 = vpop.permute.xlu0 %6041
        %6044 = vset.pattern.permute.xlu0 5
        %6045 = vperm.xlu0 %6044, %v5505
        %v6046 = vpop.permute.xlu0 %6045
        %6048 = vset.pattern.permute.xlu0 5
        %6049 = vperm.xlu0 %6048, %v5506
        %v6050 = vpop.permute.xlu0 %6049
        %6052 = vset.pattern.permute.xlu0 5
        %6053 = vperm.xlu0 %6052, %v5507
        %v6054 = vpop.permute.xlu0 %6053
        %6056 = vset.pattern.permute.xlu0 5
        %6057 = vperm.xlu0 %6056, %v5508
        %v6058 = vpop.permute.xlu0 %6057
        %6060 = vset.pattern.permute.xlu0 5
        %6061 = vperm.xlu0 %6060, %v5509
        %v6062 = vpop.permute.xlu0 %6061
        %6064 = vset.pattern.permute.xlu0 5
        %6065 = vperm.xlu0 %6064, %v5510
        %v6066 = vpop.permute.xlu0 %6065
        %6068 = vset.pattern.permute.xlu0 5
        %6069 = vperm.xlu0 %6068, %v5511
        %v6070 = vpop.permute.xlu0 %6069
        %v6072 = vmul.f32 %v6010, %v5256
        %v6073 = vmul.f32 %v6014, %v5258
        %v6074 = vmul.f32 %v6018, %v5260
        %v6075 = vmul.f32 %v6022, %v5262
        %v6076 = vmul.f32 %v6026, %v5264
        %v6077 = vmul.f32 %v6030, %v5266
        %v6078 = vmul.f32 %v6034, %v5268
        %v6079 = vmul.f32 %v6038, %v5270
        %v6080 = vmul.f32 %v6042, %v5272
        %v6081 = vmul.f32 %v6046, %v5274
        %v6082 = vmul.f32 %v6050, %v5276
        %v6083 = vmul.f32 %v6054, %v5278
        %v6084 = vmul.f32 %v6058, %v5280
        %v6085 = vmul.f32 %v6062, %v5282
        %v6086 = vmul.f32 %v6066, %v5284
        %v6087 = vmul.f32 %v6070, %v5286
        %v6088 = vadd.f32 %v5992, %v6072
        %v6089 = vadd.f32 %v5993, %v6073
        %v6090 = vadd.f32 %v5994, %v6074
        %v6091 = vadd.f32 %v5995, %v6075
        %v6092 = vadd.f32 %v5996, %v6076
        %v6093 = vadd.f32 %v5997, %v6077
        %v6094 = vadd.f32 %v5998, %v6078
        %v6095 = vadd.f32 %v5999, %v6079
        %v6096 = vadd.f32 %v6000, %v6080
        %v6097 = vadd.f32 %v6001, %v6081
        %v6098 = vadd.f32 %v6002, %v6082
        %v6099 = vadd.f32 %v6003, %v6083
        %v6100 = vadd.f32 %v6004, %v6084
        %v6101 = vadd.f32 %v6005, %v6085
        %v6102 = vadd.f32 %v6006, %v6086
        %v6103 = vadd.f32 %v6007, %v6087
        %6104 = vset.pattern.permute.xlu0 6
        %6105 = vperm.xlu0 %6104, %v5496
        %v6106 = vpop.permute.xlu0 %6105
        %6108 = vset.pattern.permute.xlu0 6
        %6109 = vperm.xlu0 %6108, %v5497
        %v6110 = vpop.permute.xlu0 %6109
        %6112 = vset.pattern.permute.xlu0 6
        %6113 = vperm.xlu0 %6112, %v5498
        %v6114 = vpop.permute.xlu0 %6113
        %6116 = vset.pattern.permute.xlu0 6
        %6117 = vperm.xlu0 %6116, %v5499
        %v6118 = vpop.permute.xlu0 %6117
        %6120 = vset.pattern.permute.xlu0 6
        %6121 = vperm.xlu0 %6120, %v5500
        %v6122 = vpop.permute.xlu0 %6121
        %6124 = vset.pattern.permute.xlu0 6
        %6125 = vperm.xlu0 %6124, %v5501
        %v6126 = vpop.permute.xlu0 %6125
        %6128 = vset.pattern.permute.xlu0 6
        %6129 = vperm.xlu0 %6128, %v5502
        %v6130 = vpop.permute.xlu0 %6129
        %6132 = vset.pattern.permute.xlu0 6
        %6133 = vperm.xlu0 %6132, %v5503
        %v6134 = vpop.permute.xlu0 %6133
        %6136 = vset.pattern.permute.xlu0 6
        %6137 = vperm.xlu0 %6136, %v5504
        %v6138 = vpop.permute.xlu0 %6137
        %6140 = vset.pattern.permute.xlu0 6
        %6141 = vperm.xlu0 %6140, %v5505
        %v6142 = vpop.permute.xlu0 %6141
        %6144 = vset.pattern.permute.xlu0 6
        %6145 = vperm.xlu0 %6144, %v5506
        %v6146 = vpop.permute.xlu0 %6145
        %6148 = vset.pattern.permute.xlu0 6
        %6149 = vperm.xlu0 %6148, %v5507
        %v6150 = vpop.permute.xlu0 %6149
        %6152 = vset.pattern.permute.xlu0 6
        %6153 = vperm.xlu0 %6152, %v5508
        %v6154 = vpop.permute.xlu0 %6153
        %6156 = vset.pattern.permute.xlu0 6
        %6157 = vperm.xlu0 %6156, %v5509
        %v6158 = vpop.permute.xlu0 %6157
        %6160 = vset.pattern.permute.xlu0 6
        %6161 = vperm.xlu0 %6160, %v5510
        %v6162 = vpop.permute.xlu0 %6161
        %6164 = vset.pattern.permute.xlu0 6
        %6165 = vperm.xlu0 %6164, %v5511
        %v6166 = vpop.permute.xlu0 %6165
        %v6168 = vmul.f32 %v6106, %v5288
        %v6169 = vmul.f32 %v6110, %v5290
        %v6170 = vmul.f32 %v6114, %v5292
        %v6171 = vmul.f32 %v6118, %v5294
        %v6172 = vmul.f32 %v6122, %v5296
        %v6173 = vmul.f32 %v6126, %v5298
        %v6174 = vmul.f32 %v6130, %v5300
        %v6175 = vmul.f32 %v6134, %v5302
        %v6176 = vmul.f32 %v6138, %v5304
        %v6177 = vmul.f32 %v6142, %v5306
        %v6178 = vmul.f32 %v6146, %v5308
        %v6179 = vmul.f32 %v6150, %v5310
        %v6180 = vmul.f32 %v6154, %v5312
        %v6181 = vmul.f32 %v6158, %v5314
        %v6182 = vmul.f32 %v6162, %v5316
        %v6183 = vmul.f32 %v6166, %v5318
        %v6184 = vadd.f32 %v6088, %v6168
        %v6185 = vadd.f32 %v6089, %v6169
        %v6186 = vadd.f32 %v6090, %v6170
        %v6187 = vadd.f32 %v6091, %v6171
        %v6188 = vadd.f32 %v6092, %v6172
        %v6189 = vadd.f32 %v6093, %v6173
        %v6190 = vadd.f32 %v6094, %v6174
        %v6191 = vadd.f32 %v6095, %v6175
        %v6192 = vadd.f32 %v6096, %v6176
        %v6193 = vadd.f32 %v6097, %v6177
        %v6194 = vadd.f32 %v6098, %v6178
        %v6195 = vadd.f32 %v6099, %v6179
        %v6196 = vadd.f32 %v6100, %v6180
        %v6197 = vadd.f32 %v6101, %v6181
        %v6198 = vadd.f32 %v6102, %v6182
        %v6199 = vadd.f32 %v6103, %v6183
        %6200 = vset.pattern.permute.xlu0 7
        %6201 = vperm.xlu0 %6200, %v5496
        %v6202 = vpop.permute.xlu0 %6201
        %6204 = vset.pattern.permute.xlu0 7
        %6205 = vperm.xlu0 %6204, %v5497
        %v6206 = vpop.permute.xlu0 %6205
        %6208 = vset.pattern.permute.xlu0 7
        %6209 = vperm.xlu0 %6208, %v5498
        %v6210 = vpop.permute.xlu0 %6209
        %6212 = vset.pattern.permute.xlu0 7
        %6213 = vperm.xlu0 %6212, %v5499
        %v6214 = vpop.permute.xlu0 %6213
        %6216 = vset.pattern.permute.xlu0 7
        %6217 = vperm.xlu0 %6216, %v5500
        %v6218 = vpop.permute.xlu0 %6217
        %6220 = vset.pattern.permute.xlu0 7
        %6221 = vperm.xlu0 %6220, %v5501
        %v6222 = vpop.permute.xlu0 %6221
        %6224 = vset.pattern.permute.xlu0 7
        %6225 = vperm.xlu0 %6224, %v5502
        %v6226 = vpop.permute.xlu0 %6225
        %6228 = vset.pattern.permute.xlu0 7
        %6229 = vperm.xlu0 %6228, %v5503
        %v6230 = vpop.permute.xlu0 %6229
        %6232 = vset.pattern.permute.xlu0 7
        %6233 = vperm.xlu0 %6232, %v5504
        %v6234 = vpop.permute.xlu0 %6233
        %6236 = vset.pattern.permute.xlu0 7
        %6237 = vperm.xlu0 %6236, %v5505
        %v6238 = vpop.permute.xlu0 %6237
        %6240 = vset.pattern.permute.xlu0 7
        %6241 = vperm.xlu0 %6240, %v5506
        %v6242 = vpop.permute.xlu0 %6241
        %6244 = vset.pattern.permute.xlu0 7
        %6245 = vperm.xlu0 %6244, %v5507
        %v6246 = vpop.permute.xlu0 %6245
        %6248 = vset.pattern.permute.xlu0 7
        %6249 = vperm.xlu0 %6248, %v5508
        %v6250 = vpop.permute.xlu0 %6249
        %6252 = vset.pattern.permute.xlu0 7
        %6253 = vperm.xlu0 %6252, %v5509
        %v6254 = vpop.permute.xlu0 %6253
        %6256 = vset.pattern.permute.xlu0 7
        %6257 = vperm.xlu0 %6256, %v5510
        %v6258 = vpop.permute.xlu0 %6257
        %6260 = vset.pattern.permute.xlu0 7
        %6261 = vperm.xlu0 %6260, %v5511
        %v6262 = vpop.permute.xlu0 %6261
        %v6264 = vmul.f32 %v6202, %v5320
        %v6265 = vmul.f32 %v6206, %v5322
        %v6266 = vmul.f32 %v6210, %v5324
        %v6267 = vmul.f32 %v6214, %v5326
        %v6268 = vmul.f32 %v6218, %v5328
        %v6269 = vmul.f32 %v6222, %v5330
        %v6270 = vmul.f32 %v6226, %v5332
        %v6271 = vmul.f32 %v6230, %v5334
        %v6272 = vmul.f32 %v6234, %v5336
        %v6273 = vmul.f32 %v6238, %v5338
        %v6274 = vmul.f32 %v6242, %v5340
        %v6275 = vmul.f32 %v6246, %v5342
        %v6276 = vmul.f32 %v6250, %v5344
        %v6277 = vmul.f32 %v6254, %v5346
        %v6278 = vmul.f32 %v6258, %v5348
        %v6279 = vmul.f32 %v6262, %v5350
        %v6280 = vadd.f32 %v6184, %v6264
        %v6281 = vadd.f32 %v6185, %v6265
        %v6282 = vadd.f32 %v6186, %v6266
        %v6283 = vadd.f32 %v6187, %v6267
        %v6284 = vadd.f32 %v6188, %v6268
        %v6285 = vadd.f32 %v6189, %v6269
        %v6286 = vadd.f32 %v6190, %v6270
        %v6287 = vadd.f32 %v6191, %v6271
        %v6288 = vadd.f32 %v6192, %v6272
        %v6289 = vadd.f32 %v6193, %v6273
        %v6290 = vadd.f32 %v6194, %v6274
        %v6291 = vadd.f32 %v6195, %v6275
        %v6292 = vadd.f32 %v6196, %v6276
        %v6293 = vadd.f32 %v6197, %v6277
        %v6294 = vadd.f32 %v6198, %v6278
        %v6295 = vadd.f32 %v6199, %v6279
        %6296 = vst.msk [vmem:[%s1345] sm:$0xff] %vm5351, %v6280
        %6297 = vst.msk [vmem:[%s1345 + $0x8] sm:$0xff] %vm5351, %v6281
        %6298 = vst.msk [vmem:[%s1345 + $0x10] sm:$0xff] %vm5351, %v6282
        %6299 = vst.msk [vmem:[%s1345 + $0x18] sm:$0xff] %vm5351, %v6283
        %6300 = vst.msk [vmem:[%s1345 + $0x20] sm:$0xff] %vm5351, %v6284
        %6301 = vst.msk [vmem:[%s1345 + $0x28] sm:$0xff] %vm5351, %v6285
        %6302 = vst.msk [vmem:[%s1345 + $0x30] sm:$0xff] %vm5351, %v6286
        %6303 = vst.msk [vmem:[%s1345 + $0x38] sm:$0xff] %vm5351, %v6287
        %6304 = vst.msk [vmem:[%s1345 + $0x40] sm:$0xff] %vm5351, %v6288
        %6305 = vst.msk [vmem:[%s1345 + $0x48] sm:$0xff] %vm5351, %v6289
        %6306 = vst.msk [vmem:[%s1345 + $0x50] sm:$0xff] %vm5351, %v6290
        %6307 = vst.msk [vmem:[%s1345 + $0x58] sm:$0xff] %vm5351, %v6291
        %6308 = vst.msk [vmem:[%s1345 + $0x60] sm:$0xff] %vm5351, %v6292
        %6309 = vst.msk [vmem:[%s1345 + $0x68] sm:$0xff] %vm5351, %v6293
        %6310 = vst.msk [vmem:[%s1345 + $0x70] sm:$0xff] %vm5351, %v6294
        %6311 = vst.msk [vmem:[%s1345 + $0x78] sm:$0xff] %vm5351, %v6295
        %s6312 = sand.u32 %s327, 1
        %s6313 = sand.u32 %s327, 1
        %s6314 = smul.addr %s6313, 1024
        %s6315 = scalar_lea.vmem [#allocation12], %s6314
        %s6316 = sand.u32 %s355, 1
        %s6317 = scalar_lea.sflag [#allocation4], %s6316
        %s6318 = sand.u32 %s355, 1
        %s6319 = smul.addr %s6318, 8
        %s6320 = scalar_lea.vmem [#allocation13], %s6319
        %s6321 = sand.u32 %s41, 1
        %s6322 = scalar_lea.sflag [#allocation15], %s6321
        %s6323 = sand.u32 %s383, 1
        %s6324 = smul.addr %s6323, 8
        %s6325 = scalar_lea.vmem [#allocation14], %s6324
        %s6326 = sand.u32 %s41, 1
        %s6327 = scalar_lea.sflag [#allocation15], %s6326
        %s6328 = sand.u32 %s411, 1
        %s6329 = scalar_lea.vmem [#allocation16], %s6328
        %s6330 = smul.u32 16, %s46
        %p6331 = scmp.lt.s32.totalorder %s45, 1
        %s6332 = scalar_select %p6331, %s45, 1
        %p6333 = scmp.lt.s32.totalorder %s6330, 31
        %s6334 = scalar_select %p6333, %s6330, 31
        %s6335 = smul.addr %s6332, 32
        %s6336 = sadd.s32 %s6334, %s6335
        %s6337 = smul.addr %s6336, 8
        %s6338 = scalar_lea.vmem %s14, %s6337
        // Predicated region
        $region122: #{tpu_custom_call.1} parent=96 // pred_check
          %p6339 = pneg %p337
        $region123: #{tpu_custom_call.1} parent=96 // pred_check_branch
          %6341 = sbr.rel (%p6339) target = $region125
        $region124: #{tpu_custom_call.1} parent=96 // pred_region
          %s6342 = smul.u32 16, %s46
          %s6343 = smul.addr %s45, 256
          %s6344 = sadd.s32 %s6342, %s6343
          %s6345 = smul.addr %s6344, 8
          %s6346 = scalar_lea.vmem %s10, %s6345
          // Predicated region
          $region126: #{tpu_custom_call.1} parent=124 // pred_check
            _
          $region127: #{tpu_custom_call.1} parent=124 // pred_check_branch
            %6348 = sbr.rel (0) target = $region129
          $region128: #{tpu_custom_call.1} parent=124 // pred_region
            // Predicated region
            $region130: #{tpu_custom_call.1} parent=128 // pred_check
              _
            $region131: #{tpu_custom_call.1} parent=128 // pred_check_branch
              %6350 = sbr.rel (0) target = $region133
            $region132: #{tpu_custom_call.1} parent=128 // pred_region
              // Predicated region
              $region145: #{tpu_custom_call.1} parent=132 // pred_check
                _
              $region146: #{tpu_custom_call.1} parent=132 // pred_check_branch
                %6619 = sbr.rel (0) target = $region148
              $region147: #{tpu_custom_call.1} parent=132 // pred_region
                loop: start=0, step=1, limit=1
                $region149: #{tpu_custom_call.1} parent=147 // loop_pre_header
                  _
                $region150: #{tpu_custom_call.1} parent=147 // loop_header
                  %s6621 = sphi 0, %s6625
                  %p6622 = scmp.ge.s32.totalorder %s6621, 1
                  %s6626 = sphi %s6315, %s6315
                  %s6627 = sphi %s6346, %s6346
                $region151: #{tpu_custom_call.1} parent=147 // loop_header_branch
                  %6624 = sbr.rel (%p6622) target = $region155
                $region152: #{tpu_custom_call.1} parent=147 // loop_body
                  %v6628 = vld [vmem:[%s6626] sm:$0xff]
                  %6629 = vst [vmem:[%s6627] sm:$0xff] %v6628
                  %v6630 = vld [vmem:[%s6626 + $0x8] sm:$0xff]
                  %6631 = vst [vmem:[%s6627 + $0x8] sm:$0xff] %v6630
                  %v6632 = vld [vmem:[%s6626 + $0x10] sm:$0xff]
                  %6633 = vst [vmem:[%s6627 + $0x10] sm:$0xff] %v6632
                  %v6634 = vld [vmem:[%s6626 + $0x18] sm:$0xff]
                  %6635 = vst [vmem:[%s6627 + $0x18] sm:$0xff] %v6634
                  %v6636 = vld [vmem:[%s6626 + $0x20] sm:$0xff]
                  %6637 = vst [vmem:[%s6627 + $0x20] sm:$0xff] %v6636
                  %v6638 = vld [vmem:[%s6626 + $0x28] sm:$0xff]
                  %6639 = vst [vmem:[%s6627 + $0x28] sm:$0xff] %v6638
                  %v6640 = vld [vmem:[%s6626 + $0x30] sm:$0xff]
                  %6641 = vst [vmem:[%s6627 + $0x30] sm:$0xff] %v6640
                  %v6642 = vld [vmem:[%s6626 + $0x38] sm:$0xff]
                  %6643 = vst [vmem:[%s6627 + $0x38] sm:$0xff] %v6642
                  %v6644 = vld [vmem:[%s6626 + $0x40] sm:$0xff]
                  %6645 = vst [vmem:[%s6627 + $0x40] sm:$0xff] %v6644
                  %v6646 = vld [vmem:[%s6626 + $0x48] sm:$0xff]
                  %6647 = vst [vmem:[%s6627 + $0x48] sm:$0xff] %v6646
                  %v6648 = vld [vmem:[%s6626 + $0x50] sm:$0xff]
                  %6649 = vst [vmem:[%s6627 + $0x50] sm:$0xff] %v6648
                  %v6650 = vld [vmem:[%s6626 + $0x58] sm:$0xff]
                  %6651 = vst [vmem:[%s6627 + $0x58] sm:$0xff] %v6650
                  %v6652 = vld [vmem:[%s6626 + $0x60] sm:$0xff]
                  %6653 = vst [vmem:[%s6627 + $0x60] sm:$0xff] %v6652
                  %v6654 = vld [vmem:[%s6626 + $0x68] sm:$0xff]
                  %6655 = vst [vmem:[%s6627 + $0x68] sm:$0xff] %v6654
                  %v6656 = vld [vmem:[%s6626 + $0x70] sm:$0xff]
                  %6657 = vst [vmem:[%s6627 + $0x70] sm:$0xff] %v6656
                  %v6658 = vld [vmem:[%s6626 + $0x78] sm:$0xff]
                  %6659 = vst [vmem:[%s6627 + $0x78] sm:$0xff] %v6658
                  %v6660 = vld [vmem:[%s6626 + $0x80] sm:$0xff]
                  %6661 = vst [vmem:[%s6627 + $0x100] sm:$0xff] %v6660
                  %v6662 = vld [vmem:[%s6626 + $0x88] sm:$0xff]
                  %6663 = vst [vmem:[%s6627 + $0x108] sm:$0xff] %v6662
                  %v6664 = vld [vmem:[%s6626 + $0x90] sm:$0xff]
                  %6665 = vst [vmem:[%s6627 + $0x110] sm:$0xff] %v6664
                  %v6666 = vld [vmem:[%s6626 + $0x98] sm:$0xff]
                  %6667 = vst [vmem:[%s6627 + $0x118] sm:$0xff] %v6666
                  %v6668 = vld [vmem:[%s6626 + $0xa0] sm:$0xff]
                  %6669 = vst [vmem:[%s6627 + $0x120] sm:$0xff] %v6668
                  %v6670 = vld [vmem:[%s6626 + $0xa8] sm:$0xff]
                  %6671 = vst [vmem:[%s6627 + $0x128] sm:$0xff] %v6670
                  %v6672 = vld [vmem:[%s6626 + $0xb0] sm:$0xff]
                  %6673 = vst [vmem:[%s6627 + $0x130] sm:$0xff] %v6672
                  %v6674 = vld [vmem:[%s6626 + $0xb8] sm:$0xff]
                  %6675 = vst [vmem:[%s6627 + $0x138] sm:$0xff] %v6674
                  %v6676 = vld [vmem:[%s6626 + $0xc0] sm:$0xff]
                  %6677 = vst [vmem:[%s6627 + $0x140] sm:$0xff] %v6676
                  %v6678 = vld [vmem:[%s6626 + $0xc8] sm:$0xff]
                  %6679 = vst [vmem:[%s6627 + $0x148] sm:$0xff] %v6678
                  %v6680 = vld [vmem:[%s6626 + $0xd0] sm:$0xff]
                  %6681 = vst [vmem:[%s6627 + $0x150] sm:$0xff] %v6680
                  %v6682 = vld [vmem:[%s6626 + $0xd8] sm:$0xff]
                  %6683 = vst [vmem:[%s6627 + $0x158] sm:$0xff] %v6682
                  %v6684 = vld [vmem:[%s6626 + $0xe0] sm:$0xff]
                  %6685 = vst [vmem:[%s6627 + $0x160] sm:$0xff] %v6684
                  %v6686 = vld [vmem:[%s6626 + $0xe8] sm:$0xff]
                  %6687 = vst [vmem:[%s6627 + $0x168] sm:$0xff] %v6686
                  %v6688 = vld [vmem:[%s6626 + $0xf0] sm:$0xff]
                  %6689 = vst [vmem:[%s6627 + $0x170] sm:$0xff] %v6688
                  %v6690 = vld [vmem:[%s6626 + $0xf8] sm:$0xff]
                  %6691 = vst [vmem:[%s6627 + $0x178] sm:$0xff] %v6690
                  %v6692 = vld [vmem:[%s6626 + $0x100] sm:$0xff]
                  %6693 = vst [vmem:[%s6627 + $0x200] sm:$0xff] %v6692
                  %v6694 = vld [vmem:[%s6626 + $0x108] sm:$0xff]
                  %6695 = vst [vmem:[%s6627 + $0x208] sm:$0xff] %v6694
                  %v6696 = vld [vmem:[%s6626 + $0x110] sm:$0xff]
                  %6697 = vst [vmem:[%s6627 + $0x210] sm:$0xff] %v6696
                  %v6698 = vld [vmem:[%s6626 + $0x118] sm:$0xff]
                  %6699 = vst [vmem:[%s6627 + $0x218] sm:$0xff] %v6698
                  %v6700 = vld [vmem:[%s6626 + $0x120] sm:$0xff]
                  %6701 = vst [vmem:[%s6627 + $0x220] sm:$0xff] %v6700
                  %v6702 = vld [vmem:[%s6626 + $0x128] sm:$0xff]
                  %6703 = vst [vmem:[%s6627 + $0x228] sm:$0xff] %v6702
                  %v6704 = vld [vmem:[%s6626 + $0x130] sm:$0xff]
                  %6705 = vst [vmem:[%s6627 + $0x230] sm:$0xff] %v6704
                  %v6706 = vld [vmem:[%s6626 + $0x138] sm:$0xff]
                  %6707 = vst [vmem:[%s6627 + $0x238] sm:$0xff] %v6706
                  %v6708 = vld [vmem:[%s6626 + $0x140] sm:$0xff]
                  %6709 = vst [vmem:[%s6627 + $0x240] sm:$0xff] %v6708
                  %v6710 = vld [vmem:[%s6626 + $0x148] sm:$0xff]
                  %6711 = vst [vmem:[%s6627 + $0x248] sm:$0xff] %v6710
                  %v6712 = vld [vmem:[%s6626 + $0x150] sm:$0xff]
                  %6713 = vst [vmem:[%s6627 + $0x250] sm:$0xff] %v6712
                  %v6714 = vld [vmem:[%s6626 + $0x158] sm:$0xff]
                  %6715 = vst [vmem:[%s6627 + $0x258] sm:$0xff] %v6714
                  %v6716 = vld [vmem:[%s6626 + $0x160] sm:$0xff]
                  %6717 = vst [vmem:[%s6627 + $0x260] sm:$0xff] %v6716
                  %v6718 = vld [vmem:[%s6626 + $0x168] sm:$0xff]
                  %6719 = vst [vmem:[%s6627 + $0x268] sm:$0xff] %v6718
                  %v6720 = vld [vmem:[%s6626 + $0x170] sm:$0xff]
                  %6721 = vst [vmem:[%s6627 + $0x270] sm:$0xff] %v6720
                  %v6722 = vld [vmem:[%s6626 + $0x178] sm:$0xff]
                  %6723 = vst [vmem:[%s6627 + $0x278] sm:$0xff] %v6722
                  %v6724 = vld [vmem:[%s6626 + $0x180] sm:$0xff]
                  %6725 = vst [vmem:[%s6627 + $0x300] sm:$0xff] %v6724
                  %v6726 = vld [vmem:[%s6626 + $0x188] sm:$0xff]
                  %6727 = vst [vmem:[%s6627 + $0x308] sm:$0xff] %v6726
                  %v6728 = vld [vmem:[%s6626 + $0x190] sm:$0xff]
                  %6729 = vst [vmem:[%s6627 + $0x310] sm:$0xff] %v6728
                  %v6730 = vld [vmem:[%s6626 + $0x198] sm:$0xff]
                  %6731 = vst [vmem:[%s6627 + $0x318] sm:$0xff] %v6730
                  %v6732 = vld [vmem:[%s6626 + $0x1a0] sm:$0xff]
                  %6733 = vst [vmem:[%s6627 + $0x320] sm:$0xff] %v6732
                  %v6734 = vld [vmem:[%s6626 + $0x1a8] sm:$0xff]
                  %6735 = vst [vmem:[%s6627 + $0x328] sm:$0xff] %v6734
                  %v6736 = vld [vmem:[%s6626 + $0x1b0] sm:$0xff]
                  %6737 = vst [vmem:[%s6627 + $0x330] sm:$0xff] %v6736
                  %v6738 = vld [vmem:[%s6626 + $0x1b8] sm:$0xff]
                  %6739 = vst [vmem:[%s6627 + $0x338] sm:$0xff] %v6738
                  %v6740 = vld [vmem:[%s6626 + $0x1c0] sm:$0xff]
                  %6741 = vst [vmem:[%s6627 + $0x340] sm:$0xff] %v6740
                  %v6742 = vld [vmem:[%s6626 + $0x1c8] sm:$0xff]
                  %6743 = vst [vmem:[%s6627 + $0x348] sm:$0xff] %v6742
                  %v6744 = vld [vmem:[%s6626 + $0x1d0] sm:$0xff]
                  %6745 = vst [vmem:[%s6627 + $0x350] sm:$0xff] %v6744
                  %v6746 = vld [vmem:[%s6626 + $0x1d8] sm:$0xff]
                  %6747 = vst [vmem:[%s6627 + $0x358] sm:$0xff] %v6746
                  %v6748 = vld [vmem:[%s6626 + $0x1e0] sm:$0xff]
                  %6749 = vst [vmem:[%s6627 + $0x360] sm:$0xff] %v6748
                  %v6750 = vld [vmem:[%s6626 + $0x1e8] sm:$0xff]
                  %6751 = vst [vmem:[%s6627 + $0x368] sm:$0xff] %v6750
                  %v6752 = vld [vmem:[%s6626 + $0x1f0] sm:$0xff]
                  %6753 = vst [vmem:[%s6627 + $0x370] sm:$0xff] %v6752
                  %v6754 = vld [vmem:[%s6626 + $0x1f8] sm:$0xff]
                  %6755 = vst [vmem:[%s6627 + $0x378] sm:$0xff] %v6754
                  %v6756 = vld [vmem:[%s6626 + $0x200] sm:$0xff]
                  %6757 = vst [vmem:[%s6627 + $0x400] sm:$0xff] %v6756
                  %v6758 = vld [vmem:[%s6626 + $0x208] sm:$0xff]
                  %6759 = vst [vmem:[%s6627 + $0x408] sm:$0xff] %v6758
                  %v6760 = vld [vmem:[%s6626 + $0x210] sm:$0xff]
                  %6761 = vst [vmem:[%s6627 + $0x410] sm:$0xff] %v6760
                  %v6762 = vld [vmem:[%s6626 + $0x218] sm:$0xff]
                  %6763 = vst [vmem:[%s6627 + $0x418] sm:$0xff] %v6762
                  %v6764 = vld [vmem:[%s6626 + $0x220] sm:$0xff]
                  %6765 = vst [vmem:[%s6627 + $0x420] sm:$0xff] %v6764
                  %v6766 = vld [vmem:[%s6626 + $0x228] sm:$0xff]
                  %6767 = vst [vmem:[%s6627 + $0x428] sm:$0xff] %v6766
                  %v6768 = vld [vmem:[%s6626 + $0x230] sm:$0xff]
                  %6769 = vst [vmem:[%s6627 + $0x430] sm:$0xff] %v6768
                  %v6770 = vld [vmem:[%s6626 + $0x238] sm:$0xff]
                  %6771 = vst [vmem:[%s6627 + $0x438] sm:$0xff] %v6770
                  %v6772 = vld [vmem:[%s6626 + $0x240] sm:$0xff]
                  %6773 = vst [vmem:[%s6627 + $0x440] sm:$0xff] %v6772
                  %v6774 = vld [vmem:[%s6626 + $0x248] sm:$0xff]
                  %6775 = vst [vmem:[%s6627 + $0x448] sm:$0xff] %v6774
                  %v6776 = vld [vmem:[%s6626 + $0x250] sm:$0xff]
                  %6777 = vst [vmem:[%s6627 + $0x450] sm:$0xff] %v6776
                  %v6778 = vld [vmem:[%s6626 + $0x258] sm:$0xff]
                  %6779 = vst [vmem:[%s6627 + $0x458] sm:$0xff] %v6778
                  %v6780 = vld [vmem:[%s6626 + $0x260] sm:$0xff]
                  %6781 = vst [vmem:[%s6627 + $0x460] sm:$0xff] %v6780
                  %v6782 = vld [vmem:[%s6626 + $0x268] sm:$0xff]
                  %6783 = vst [vmem:[%s6627 + $0x468] sm:$0xff] %v6782
                  %v6784 = vld [vmem:[%s6626 + $0x270] sm:$0xff]
                  %6785 = vst [vmem:[%s6627 + $0x470] sm:$0xff] %v6784
                  %v6786 = vld [vmem:[%s6626 + $0x278] sm:$0xff]
                  %6787 = vst [vmem:[%s6627 + $0x478] sm:$0xff] %v6786
                  %v6788 = vld [vmem:[%s6626 + $0x280] sm:$0xff]
                  %6789 = vst [vmem:[%s6627 + $0x500] sm:$0xff] %v6788
                  %v6790 = vld [vmem:[%s6626 + $0x288] sm:$0xff]
                  %6791 = vst [vmem:[%s6627 + $0x508] sm:$0xff] %v6790
                  %v6792 = vld [vmem:[%s6626 + $0x290] sm:$0xff]
                  %6793 = vst [vmem:[%s6627 + $0x510] sm:$0xff] %v6792
                  %v6794 = vld [vmem:[%s6626 + $0x298] sm:$0xff]
                  %6795 = vst [vmem:[%s6627 + $0x518] sm:$0xff] %v6794
                  %v6796 = vld [vmem:[%s6626 + $0x2a0] sm:$0xff]
                  %6797 = vst [vmem:[%s6627 + $0x520] sm:$0xff] %v6796
                  %v6798 = vld [vmem:[%s6626 + $0x2a8] sm:$0xff]
                  %6799 = vst [vmem:[%s6627 + $0x528] sm:$0xff] %v6798
                  %v6800 = vld [vmem:[%s6626 + $0x2b0] sm:$0xff]
                  %6801 = vst [vmem:[%s6627 + $0x530] sm:$0xff] %v6800
                  %v6802 = vld [vmem:[%s6626 + $0x2b8] sm:$0xff]
                  %6803 = vst [vmem:[%s6627 + $0x538] sm:$0xff] %v6802
                  %v6804 = vld [vmem:[%s6626 + $0x2c0] sm:$0xff]
                  %6805 = vst [vmem:[%s6627 + $0x540] sm:$0xff] %v6804
                  %v6806 = vld [vmem:[%s6626 + $0x2c8] sm:$0xff]
                  %6807 = vst [vmem:[%s6627 + $0x548] sm:$0xff] %v6806
                  %v6808 = vld [vmem:[%s6626 + $0x2d0] sm:$0xff]
                  %6809 = vst [vmem:[%s6627 + $0x550] sm:$0xff] %v6808
                  %v6810 = vld [vmem:[%s6626 + $0x2d8] sm:$0xff]
                  %6811 = vst [vmem:[%s6627 + $0x558] sm:$0xff] %v6810
                  %v6812 = vld [vmem:[%s6626 + $0x2e0] sm:$0xff]
                  %6813 = vst [vmem:[%s6627 + $0x560] sm:$0xff] %v6812
                  %v6814 = vld [vmem:[%s6626 + $0x2e8] sm:$0xff]
                  %6815 = vst [vmem:[%s6627 + $0x568] sm:$0xff] %v6814
                  %v6816 = vld [vmem:[%s6626 + $0x2f0] sm:$0xff]
                  %6817 = vst [vmem:[%s6627 + $0x570] sm:$0xff] %v6816
                  %v6818 = vld [vmem:[%s6626 + $0x2f8] sm:$0xff]
                  %6819 = vst [vmem:[%s6627 + $0x578] sm:$0xff] %v6818
                  %v6820 = vld [vmem:[%s6626 + $0x300] sm:$0xff]
                  %6821 = vst [vmem:[%s6627 + $0x600] sm:$0xff] %v6820
                  %v6822 = vld [vmem:[%s6626 + $0x308] sm:$0xff]
                  %6823 = vst [vmem:[%s6627 + $0x608] sm:$0xff] %v6822
                  %v6824 = vld [vmem:[%s6626 + $0x310] sm:$0xff]
                  %6825 = vst [vmem:[%s6627 + $0x610] sm:$0xff] %v6824
                  %v6826 = vld [vmem:[%s6626 + $0x318] sm:$0xff]
                  %6827 = vst [vmem:[%s6627 + $0x618] sm:$0xff] %v6826
                  %v6828 = vld [vmem:[%s6626 + $0x320] sm:$0xff]
                  %6829 = vst [vmem:[%s6627 + $0x620] sm:$0xff] %v6828
                  %v6830 = vld [vmem:[%s6626 + $0x328] sm:$0xff]
                  %6831 = vst [vmem:[%s6627 + $0x628] sm:$0xff] %v6830
                  %v6832 = vld [vmem:[%s6626 + $0x330] sm:$0xff]
                  %6833 = vst [vmem:[%s6627 + $0x630] sm:$0xff] %v6832
                  %v6834 = vld [vmem:[%s6626 + $0x338] sm:$0xff]
                  %6835 = vst [vmem:[%s6627 + $0x638] sm:$0xff] %v6834
                  %v6836 = vld [vmem:[%s6626 + $0x340] sm:$0xff]
                  %6837 = vst [vmem:[%s6627 + $0x640] sm:$0xff] %v6836
                  %v6838 = vld [vmem:[%s6626 + $0x348] sm:$0xff]
                  %6839 = vst [vmem:[%s6627 + $0x648] sm:$0xff] %v6838
                  %v6840 = vld [vmem:[%s6626 + $0x350] sm:$0xff]
                  %6841 = vst [vmem:[%s6627 + $0x650] sm:$0xff] %v6840
                  %v6842 = vld [vmem:[%s6626 + $0x358] sm:$0xff]
                  %6843 = vst [vmem:[%s6627 + $0x658] sm:$0xff] %v6842
                  %v6844 = vld [vmem:[%s6626 + $0x360] sm:$0xff]
                  %6845 = vst [vmem:[%s6627 + $0x660] sm:$0xff] %v6844
                  %v6846 = vld [vmem:[%s6626 + $0x368] sm:$0xff]
                  %6847 = vst [vmem:[%s6627 + $0x668] sm:$0xff] %v6846
                  %v6848 = vld [vmem:[%s6626 + $0x370] sm:$0xff]
                  %6849 = vst [vmem:[%s6627 + $0x670] sm:$0xff] %v6848
                  %v6850 = vld [vmem:[%s6626 + $0x378] sm:$0xff]
                  %6851 = vst [vmem:[%s6627 + $0x678] sm:$0xff] %v6850
                  %v6852 = vld [vmem:[%s6626 + $0x380] sm:$0xff]
                  %6853 = vst [vmem:[%s6627 + $0x700] sm:$0xff] %v6852
                  %v6854 = vld [vmem:[%s6626 + $0x388] sm:$0xff]
                  %6855 = vst [vmem:[%s6627 + $0x708] sm:$0xff] %v6854
                  %v6856 = vld [vmem:[%s6626 + $0x390] sm:$0xff]
                  %6857 = vst [vmem:[%s6627 + $0x710] sm:$0xff] %v6856
                  %v6858 = vld [vmem:[%s6626 + $0x398] sm:$0xff]
                  %6859 = vst [vmem:[%s6627 + $0x718] sm:$0xff] %v6858
                  %v6860 = vld [vmem:[%s6626 + $0x3a0] sm:$0xff]
                  %6861 = vst [vmem:[%s6627 + $0x720] sm:$0xff] %v6860
                  %v6862 = vld [vmem:[%s6626 + $0x3a8] sm:$0xff]
                  %6863 = vst [vmem:[%s6627 + $0x728] sm:$0xff] %v6862
                  %v6864 = vld [vmem:[%s6626 + $0x3b0] sm:$0xff]
                  %6865 = vst [vmem:[%s6627 + $0x730] sm:$0xff] %v6864
                  %v6866 = vld [vmem:[%s6626 + $0x3b8] sm:$0xff]
                  %6867 = vst [vmem:[%s6627 + $0x738] sm:$0xff] %v6866
                  %v6868 = vld [vmem:[%s6626 + $0x3c0] sm:$0xff]
                  %6869 = vst [vmem:[%s6627 + $0x740] sm:$0xff] %v6868
                  %v6870 = vld [vmem:[%s6626 + $0x3c8] sm:$0xff]
                  %6871 = vst [vmem:[%s6627 + $0x748] sm:$0xff] %v6870
                  %v6872 = vld [vmem:[%s6626 + $0x3d0] sm:$0xff]
                  %6873 = vst [vmem:[%s6627 + $0x750] sm:$0xff] %v6872
                  %v6874 = vld [vmem:[%s6626 + $0x3d8] sm:$0xff]
                  %6875 = vst [vmem:[%s6627 + $0x758] sm:$0xff] %v6874
                  %v6876 = vld [vmem:[%s6626 + $0x3e0] sm:$0xff]
                  %6877 = vst [vmem:[%s6627 + $0x760] sm:$0xff] %v6876
                  %v6878 = vld [vmem:[%s6626 + $0x3e8] sm:$0xff]
                  %6879 = vst [vmem:[%s6627 + $0x768] sm:$0xff] %v6878
                  %v6880 = vld [vmem:[%s6626 + $0x3f0] sm:$0xff]
                  %6881 = vst [vmem:[%s6627 + $0x770] sm:$0xff] %v6880
                  %v6882 = vld [vmem:[%s6626 + $0x3f8] sm:$0xff]
                  %6883 = vst [vmem:[%s6627 + $0x778] sm:$0xff] %v6882
                $region153: #{tpu_custom_call.1} parent=147 // loop_footer
                  %s6625 = sadd.s32 1, %s6621
                $region154: #{tpu_custom_call.1} parent=147 // loop_footer_branch
                  %6620 = sbr.rel target = $region150
                $region155: #{tpu_custom_call.1} parent=147 // loop_exit
                  _
              $region148: #{tpu_custom_call.1} parent=132 // pred_fallthru
                _
              // Predicated region
              $region156: #{tpu_custom_call.1} parent=132 // pred_check
                _
              $region157: #{tpu_custom_call.1} parent=132 // pred_check_branch
                %6885 = sbr.rel target = $region159
              $region158: #{tpu_custom_call.1} parent=132 // pred_region
                _
              $region159: #{tpu_custom_call.1} parent=132 // pred_fallthru
                _
            $region133: #{tpu_custom_call.1} parent=128 // pred_fallthru
              _
            // Predicated region
            $region134: #{tpu_custom_call.1} parent=128 // pred_check
              _
            $region135: #{tpu_custom_call.1} parent=128 // pred_check_branch
              %6352 = sbr.rel target = $region137
            $region136: #{tpu_custom_call.1} parent=128 // pred_region
              loop: start=0, step=1, limit=1
              $region138: #{tpu_custom_call.1} parent=136 // loop_pre_header
                _
              $region139: #{tpu_custom_call.1} parent=136 // loop_header
                %s6355 = sphi 0, %s6359
                %p6356 = scmp.ge.s32.totalorder %s6355, 1
                %s6360 = sphi %s6315, %s6315
                %s6361 = sphi %s6346, %s6346
              $region140: #{tpu_custom_call.1} parent=136 // loop_header_branch
                %6358 = sbr.rel (%p6356) target = $region144
              $region141: #{tpu_custom_call.1} parent=136 // loop_body
                %v6362 = vld [vmem:[%s6360] sm:$0xff]
                %6363 = vst [vmem:[%s6361] sm:$0xff] %v6362
                %v6364 = vld [vmem:[%s6360 + $0x8] sm:$0xff]
                %6365 = vst [vmem:[%s6361 + $0x8] sm:$0xff] %v6364
                %v6366 = vld [vmem:[%s6360 + $0x10] sm:$0xff]
                %6367 = vst [vmem:[%s6361 + $0x10] sm:$0xff] %v6366
                %v6368 = vld [vmem:[%s6360 + $0x18] sm:$0xff]
                %6369 = vst [vmem:[%s6361 + $0x18] sm:$0xff] %v6368
                %v6370 = vld [vmem:[%s6360 + $0x20] sm:$0xff]
                %6371 = vst [vmem:[%s6361 + $0x20] sm:$0xff] %v6370
                %v6372 = vld [vmem:[%s6360 + $0x28] sm:$0xff]
                %6373 = vst [vmem:[%s6361 + $0x28] sm:$0xff] %v6372
                %v6374 = vld [vmem:[%s6360 + $0x30] sm:$0xff]
                %6375 = vst [vmem:[%s6361 + $0x30] sm:$0xff] %v6374
                %v6376 = vld [vmem:[%s6360 + $0x38] sm:$0xff]
                %6377 = vst [vmem:[%s6361 + $0x38] sm:$0xff] %v6376
                %v6378 = vld [vmem:[%s6360 + $0x40] sm:$0xff]
                %6379 = vst [vmem:[%s6361 + $0x40] sm:$0xff] %v6378
                %v6380 = vld [vmem:[%s6360 + $0x48] sm:$0xff]
                %6381 = vst [vmem:[%s6361 + $0x48] sm:$0xff] %v6380
                %v6382 = vld [vmem:[%s6360 + $0x50] sm:$0xff]
                %6383 = vst [vmem:[%s6361 + $0x50] sm:$0xff] %v6382
                %v6384 = vld [vmem:[%s6360 + $0x58] sm:$0xff]
                %6385 = vst [vmem:[%s6361 + $0x58] sm:$0xff] %v6384
                %v6386 = vld [vmem:[%s6360 + $0x60] sm:$0xff]
                %6387 = vst [vmem:[%s6361 + $0x60] sm:$0xff] %v6386
                %v6388 = vld [vmem:[%s6360 + $0x68] sm:$0xff]
                %6389 = vst [vmem:[%s6361 + $0x68] sm:$0xff] %v6388
                %v6390 = vld [vmem:[%s6360 + $0x70] sm:$0xff]
                %6391 = vst [vmem:[%s6361 + $0x70] sm:$0xff] %v6390
                %v6392 = vld [vmem:[%s6360 + $0x78] sm:$0xff]
                %6393 = vst [vmem:[%s6361 + $0x78] sm:$0xff] %v6392
                %v6394 = vld [vmem:[%s6360 + $0x80] sm:$0xff]
                %6395 = vst [vmem:[%s6361 + $0x100] sm:$0xff] %v6394
                %v6396 = vld [vmem:[%s6360 + $0x88] sm:$0xff]
                %6397 = vst [vmem:[%s6361 + $0x108] sm:$0xff] %v6396
                %v6398 = vld [vmem:[%s6360 + $0x90] sm:$0xff]
                %6399 = vst [vmem:[%s6361 + $0x110] sm:$0xff] %v6398
                %v6400 = vld [vmem:[%s6360 + $0x98] sm:$0xff]
                %6401 = vst [vmem:[%s6361 + $0x118] sm:$0xff] %v6400
                %v6402 = vld [vmem:[%s6360 + $0xa0] sm:$0xff]
                %6403 = vst [vmem:[%s6361 + $0x120] sm:$0xff] %v6402
                %v6404 = vld [vmem:[%s6360 + $0xa8] sm:$0xff]
                %6405 = vst [vmem:[%s6361 + $0x128] sm:$0xff] %v6404
                %v6406 = vld [vmem:[%s6360 + $0xb0] sm:$0xff]
                %6407 = vst [vmem:[%s6361 + $0x130] sm:$0xff] %v6406
                %v6408 = vld [vmem:[%s6360 + $0xb8] sm:$0xff]
                %6409 = vst [vmem:[%s6361 + $0x138] sm:$0xff] %v6408
                %v6410 = vld [vmem:[%s6360 + $0xc0] sm:$0xff]
                %6411 = vst [vmem:[%s6361 + $0x140] sm:$0xff] %v6410
                %v6412 = vld [vmem:[%s6360 + $0xc8] sm:$0xff]
                %6413 = vst [vmem:[%s6361 + $0x148] sm:$0xff] %v6412
                %v6414 = vld [vmem:[%s6360 + $0xd0] sm:$0xff]
                %6415 = vst [vmem:[%s6361 + $0x150] sm:$0xff] %v6414
                %v6416 = vld [vmem:[%s6360 + $0xd8] sm:$0xff]
                %6417 = vst [vmem:[%s6361 + $0x158] sm:$0xff] %v6416
                %v6418 = vld [vmem:[%s6360 + $0xe0] sm:$0xff]
                %6419 = vst [vmem:[%s6361 + $0x160] sm:$0xff] %v6418
                %v6420 = vld [vmem:[%s6360 + $0xe8] sm:$0xff]
                %6421 = vst [vmem:[%s6361 + $0x168] sm:$0xff] %v6420
                %v6422 = vld [vmem:[%s6360 + $0xf0] sm:$0xff]
                %6423 = vst [vmem:[%s6361 + $0x170] sm:$0xff] %v6422
                %v6424 = vld [vmem:[%s6360 + $0xf8] sm:$0xff]
                %6425 = vst [vmem:[%s6361 + $0x178] sm:$0xff] %v6424
                %v6426 = vld [vmem:[%s6360 + $0x100] sm:$0xff]
                %6427 = vst [vmem:[%s6361 + $0x200] sm:$0xff] %v6426
                %v6428 = vld [vmem:[%s6360 + $0x108] sm:$0xff]
                %6429 = vst [vmem:[%s6361 + $0x208] sm:$0xff] %v6428
                %v6430 = vld [vmem:[%s6360 + $0x110] sm:$0xff]
                %6431 = vst [vmem:[%s6361 + $0x210] sm:$0xff] %v6430
                %v6432 = vld [vmem:[%s6360 + $0x118] sm:$0xff]
                %6433 = vst [vmem:[%s6361 + $0x218] sm:$0xff] %v6432
                %v6434 = vld [vmem:[%s6360 + $0x120] sm:$0xff]
                %6435 = vst [vmem:[%s6361 + $0x220] sm:$0xff] %v6434
                %v6436 = vld [vmem:[%s6360 + $0x128] sm:$0xff]
                %6437 = vst [vmem:[%s6361 + $0x228] sm:$0xff] %v6436
                %v6438 = vld [vmem:[%s6360 + $0x130] sm:$0xff]
                %6439 = vst [vmem:[%s6361 + $0x230] sm:$0xff] %v6438
                %v6440 = vld [vmem:[%s6360 + $0x138] sm:$0xff]
                %6441 = vst [vmem:[%s6361 + $0x238] sm:$0xff] %v6440
                %v6442 = vld [vmem:[%s6360 + $0x140] sm:$0xff]
                %6443 = vst [vmem:[%s6361 + $0x240] sm:$0xff] %v6442
                %v6444 = vld [vmem:[%s6360 + $0x148] sm:$0xff]
                %6445 = vst [vmem:[%s6361 + $0x248] sm:$0xff] %v6444
                %v6446 = vld [vmem:[%s6360 + $0x150] sm:$0xff]
                %6447 = vst [vmem:[%s6361 + $0x250] sm:$0xff] %v6446
                %v6448 = vld [vmem:[%s6360 + $0x158] sm:$0xff]
                %6449 = vst [vmem:[%s6361 + $0x258] sm:$0xff] %v6448
                %v6450 = vld [vmem:[%s6360 + $0x160] sm:$0xff]
                %6451 = vst [vmem:[%s6361 + $0x260] sm:$0xff] %v6450
                %v6452 = vld [vmem:[%s6360 + $0x168] sm:$0xff]
                %6453 = vst [vmem:[%s6361 + $0x268] sm:$0xff] %v6452
                %v6454 = vld [vmem:[%s6360 + $0x170] sm:$0xff]
                %6455 = vst [vmem:[%s6361 + $0x270] sm:$0xff] %v6454
                %v6456 = vld [vmem:[%s6360 + $0x178] sm:$0xff]
                %6457 = vst [vmem:[%s6361 + $0x278] sm:$0xff] %v6456
                %v6458 = vld [vmem:[%s6360 + $0x180] sm:$0xff]
                %6459 = vst [vmem:[%s6361 + $0x300] sm:$0xff] %v6458
                %v6460 = vld [vmem:[%s6360 + $0x188] sm:$0xff]
                %6461 = vst [vmem:[%s6361 + $0x308] sm:$0xff] %v6460
                %v6462 = vld [vmem:[%s6360 + $0x190] sm:$0xff]
                %6463 = vst [vmem:[%s6361 + $0x310] sm:$0xff] %v6462
                %v6464 = vld [vmem:[%s6360 + $0x198] sm:$0xff]
                %6465 = vst [vmem:[%s6361 + $0x318] sm:$0xff] %v6464
                %v6466 = vld [vmem:[%s6360 + $0x1a0] sm:$0xff]
                %6467 = vst [vmem:[%s6361 + $0x320] sm:$0xff] %v6466
                %v6468 = vld [vmem:[%s6360 + $0x1a8] sm:$0xff]
                %6469 = vst [vmem:[%s6361 + $0x328] sm:$0xff] %v6468
                %v6470 = vld [vmem:[%s6360 + $0x1b0] sm:$0xff]
                %6471 = vst [vmem:[%s6361 + $0x330] sm:$0xff] %v6470
                %v6472 = vld [vmem:[%s6360 + $0x1b8] sm:$0xff]
                %6473 = vst [vmem:[%s6361 + $0x338] sm:$0xff] %v6472
                %v6474 = vld [vmem:[%s6360 + $0x1c0] sm:$0xff]
                %6475 = vst [vmem:[%s6361 + $0x340] sm:$0xff] %v6474
                %v6476 = vld [vmem:[%s6360 + $0x1c8] sm:$0xff]
                %6477 = vst [vmem:[%s6361 + $0x348] sm:$0xff] %v6476
                %v6478 = vld [vmem:[%s6360 + $0x1d0] sm:$0xff]
                %6479 = vst [vmem:[%s6361 + $0x350] sm:$0xff] %v6478
                %v6480 = vld [vmem:[%s6360 + $0x1d8] sm:$0xff]
                %6481 = vst [vmem:[%s6361 + $0x358] sm:$0xff] %v6480
                %v6482 = vld [vmem:[%s6360 + $0x1e0] sm:$0xff]
                %6483 = vst [vmem:[%s6361 + $0x360] sm:$0xff] %v6482
                %v6484 = vld [vmem:[%s6360 + $0x1e8] sm:$0xff]
                %6485 = vst [vmem:[%s6361 + $0x368] sm:$0xff] %v6484
                %v6486 = vld [vmem:[%s6360 + $0x1f0] sm:$0xff]
                %6487 = vst [vmem:[%s6361 + $0x370] sm:$0xff] %v6486
                %v6488 = vld [vmem:[%s6360 + $0x1f8] sm:$0xff]
                %6489 = vst [vmem:[%s6361 + $0x378] sm:$0xff] %v6488
                %v6490 = vld [vmem:[%s6360 + $0x200] sm:$0xff]
                %6491 = vst [vmem:[%s6361 + $0x400] sm:$0xff] %v6490
                %v6492 = vld [vmem:[%s6360 + $0x208] sm:$0xff]
                %6493 = vst [vmem:[%s6361 + $0x408] sm:$0xff] %v6492
                %v6494 = vld [vmem:[%s6360 + $0x210] sm:$0xff]
                %6495 = vst [vmem:[%s6361 + $0x410] sm:$0xff] %v6494
                %v6496 = vld [vmem:[%s6360 + $0x218] sm:$0xff]
                %6497 = vst [vmem:[%s6361 + $0x418] sm:$0xff] %v6496
                %v6498 = vld [vmem:[%s6360 + $0x220] sm:$0xff]
                %6499 = vst [vmem:[%s6361 + $0x420] sm:$0xff] %v6498
                %v6500 = vld [vmem:[%s6360 + $0x228] sm:$0xff]
                %6501 = vst [vmem:[%s6361 + $0x428] sm:$0xff] %v6500
                %v6502 = vld [vmem:[%s6360 + $0x230] sm:$0xff]
                %6503 = vst [vmem:[%s6361 + $0x430] sm:$0xff] %v6502
                %v6504 = vld [vmem:[%s6360 + $0x238] sm:$0xff]
                %6505 = vst [vmem:[%s6361 + $0x438] sm:$0xff] %v6504
                %v6506 = vld [vmem:[%s6360 + $0x240] sm:$0xff]
                %6507 = vst [vmem:[%s6361 + $0x440] sm:$0xff] %v6506
                %v6508 = vld [vmem:[%s6360 + $0x248] sm:$0xff]
                %6509 = vst [vmem:[%s6361 + $0x448] sm:$0xff] %v6508
                %v6510 = vld [vmem:[%s6360 + $0x250] sm:$0xff]
                %6511 = vst [vmem:[%s6361 + $0x450] sm:$0xff] %v6510
                %v6512 = vld [vmem:[%s6360 + $0x258] sm:$0xff]
                %6513 = vst [vmem:[%s6361 + $0x458] sm:$0xff] %v6512
                %v6514 = vld [vmem:[%s6360 + $0x260] sm:$0xff]
                %6515 = vst [vmem:[%s6361 + $0x460] sm:$0xff] %v6514
                %v6516 = vld [vmem:[%s6360 + $0x268] sm:$0xff]
                %6517 = vst [vmem:[%s6361 + $0x468] sm:$0xff] %v6516
                %v6518 = vld [vmem:[%s6360 + $0x270] sm:$0xff]
                %6519 = vst [vmem:[%s6361 + $0x470] sm:$0xff] %v6518
                %v6520 = vld [vmem:[%s6360 + $0x278] sm:$0xff]
                %6521 = vst [vmem:[%s6361 + $0x478] sm:$0xff] %v6520
                %v6522 = vld [vmem:[%s6360 + $0x280] sm:$0xff]
                %6523 = vst [vmem:[%s6361 + $0x500] sm:$0xff] %v6522
                %v6524 = vld [vmem:[%s6360 + $0x288] sm:$0xff]
                %6525 = vst [vmem:[%s6361 + $0x508] sm:$0xff] %v6524
                %v6526 = vld [vmem:[%s6360 + $0x290] sm:$0xff]
                %6527 = vst [vmem:[%s6361 + $0x510] sm:$0xff] %v6526
                %v6528 = vld [vmem:[%s6360 + $0x298] sm:$0xff]
                %6529 = vst [vmem:[%s6361 + $0x518] sm:$0xff] %v6528
                %v6530 = vld [vmem:[%s6360 + $0x2a0] sm:$0xff]
                %6531 = vst [vmem:[%s6361 + $0x520] sm:$0xff] %v6530
                %v6532 = vld [vmem:[%s6360 + $0x2a8] sm:$0xff]
                %6533 = vst [vmem:[%s6361 + $0x528] sm:$0xff] %v6532
                %v6534 = vld [vmem:[%s6360 + $0x2b0] sm:$0xff]
                %6535 = vst [vmem:[%s6361 + $0x530] sm:$0xff] %v6534
                %v6536 = vld [vmem:[%s6360 + $0x2b8] sm:$0xff]
                %6537 = vst [vmem:[%s6361 + $0x538] sm:$0xff] %v6536
                %v6538 = vld [vmem:[%s6360 + $0x2c0] sm:$0xff]
                %6539 = vst [vmem:[%s6361 + $0x540] sm:$0xff] %v6538
                %v6540 = vld [vmem:[%s6360 + $0x2c8] sm:$0xff]
                %6541 = vst [vmem:[%s6361 + $0x548] sm:$0xff] %v6540
                %v6542 = vld [vmem:[%s6360 + $0x2d0] sm:$0xff]
                %6543 = vst [vmem:[%s6361 + $0x550] sm:$0xff] %v6542
                %v6544 = vld [vmem:[%s6360 + $0x2d8] sm:$0xff]
                %6545 = vst [vmem:[%s6361 + $0x558] sm:$0xff] %v6544
                %v6546 = vld [vmem:[%s6360 + $0x2e0] sm:$0xff]
                %6547 = vst [vmem:[%s6361 + $0x560] sm:$0xff] %v6546
                %v6548 = vld [vmem:[%s6360 + $0x2e8] sm:$0xff]
                %6549 = vst [vmem:[%s6361 + $0x568] sm:$0xff] %v6548
                %v6550 = vld [vmem:[%s6360 + $0x2f0] sm:$0xff]
                %6551 = vst [vmem:[%s6361 + $0x570] sm:$0xff] %v6550
                %v6552 = vld [vmem:[%s6360 + $0x2f8] sm:$0xff]
                %6553 = vst [vmem:[%s6361 + $0x578] sm:$0xff] %v6552
                %v6554 = vld [vmem:[%s6360 + $0x300] sm:$0xff]
                %6555 = vst [vmem:[%s6361 + $0x600] sm:$0xff] %v6554
                %v6556 = vld [vmem:[%s6360 + $0x308] sm:$0xff]
                %6557 = vst [vmem:[%s6361 + $0x608] sm:$0xff] %v6556
                %v6558 = vld [vmem:[%s6360 + $0x310] sm:$0xff]
                %6559 = vst [vmem:[%s6361 + $0x610] sm:$0xff] %v6558
                %v6560 = vld [vmem:[%s6360 + $0x318] sm:$0xff]
                %6561 = vst [vmem:[%s6361 + $0x618] sm:$0xff] %v6560
                %v6562 = vld [vmem:[%s6360 + $0x320] sm:$0xff]
                %6563 = vst [vmem:[%s6361 + $0x620] sm:$0xff] %v6562
                %v6564 = vld [vmem:[%s6360 + $0x328] sm:$0xff]
                %6565 = vst [vmem:[%s6361 + $0x628] sm:$0xff] %v6564
                %v6566 = vld [vmem:[%s6360 + $0x330] sm:$0xff]
                %6567 = vst [vmem:[%s6361 + $0x630] sm:$0xff] %v6566
                %v6568 = vld [vmem:[%s6360 + $0x338] sm:$0xff]
                %6569 = vst [vmem:[%s6361 + $0x638] sm:$0xff] %v6568
                %v6570 = vld [vmem:[%s6360 + $0x340] sm:$0xff]
                %6571 = vst [vmem:[%s6361 + $0x640] sm:$0xff] %v6570
                %v6572 = vld [vmem:[%s6360 + $0x348] sm:$0xff]
                %6573 = vst [vmem:[%s6361 + $0x648] sm:$0xff] %v6572
                %v6574 = vld [vmem:[%s6360 + $0x350] sm:$0xff]
                %6575 = vst [vmem:[%s6361 + $0x650] sm:$0xff] %v6574
                %v6576 = vld [vmem:[%s6360 + $0x358] sm:$0xff]
                %6577 = vst [vmem:[%s6361 + $0x658] sm:$0xff] %v6576
                %v6578 = vld [vmem:[%s6360 + $0x360] sm:$0xff]
                %6579 = vst [vmem:[%s6361 + $0x660] sm:$0xff] %v6578
                %v6580 = vld [vmem:[%s6360 + $0x368] sm:$0xff]
                %6581 = vst [vmem:[%s6361 + $0x668] sm:$0xff] %v6580
                %v6582 = vld [vmem:[%s6360 + $0x370] sm:$0xff]
                %6583 = vst [vmem:[%s6361 + $0x670] sm:$0xff] %v6582
                %v6584 = vld [vmem:[%s6360 + $0x378] sm:$0xff]
                %6585 = vst [vmem:[%s6361 + $0x678] sm:$0xff] %v6584
                %v6586 = vld [vmem:[%s6360 + $0x380] sm:$0xff]
                %6587 = vst [vmem:[%s6361 + $0x700] sm:$0xff] %v6586
                %v6588 = vld [vmem:[%s6360 + $0x388] sm:$0xff]
                %6589 = vst [vmem:[%s6361 + $0x708] sm:$0xff] %v6588
                %v6590 = vld [vmem:[%s6360 + $0x390] sm:$0xff]
                %6591 = vst [vmem:[%s6361 + $0x710] sm:$0xff] %v6590
                %v6592 = vld [vmem:[%s6360 + $0x398] sm:$0xff]
                %6593 = vst [vmem:[%s6361 + $0x718] sm:$0xff] %v6592
                %v6594 = vld [vmem:[%s6360 + $0x3a0] sm:$0xff]
                %6595 = vst [vmem:[%s6361 + $0x720] sm:$0xff] %v6594
                %v6596 = vld [vmem:[%s6360 + $0x3a8] sm:$0xff]
                %6597 = vst [vmem:[%s6361 + $0x728] sm:$0xff] %v6596
                %v6598 = vld [vmem:[%s6360 + $0x3b0] sm:$0xff]
                %6599 = vst [vmem:[%s6361 + $0x730] sm:$0xff] %v6598
                %v6600 = vld [vmem:[%s6360 + $0x3b8] sm:$0xff]
                %6601 = vst [vmem:[%s6361 + $0x738] sm:$0xff] %v6600
                %v6602 = vld [vmem:[%s6360 + $0x3c0] sm:$0xff]
                %6603 = vst [vmem:[%s6361 + $0x740] sm:$0xff] %v6602
                %v6604 = vld [vmem:[%s6360 + $0x3c8] sm:$0xff]
                %6605 = vst [vmem:[%s6361 + $0x748] sm:$0xff] %v6604
                %v6606 = vld [vmem:[%s6360 + $0x3d0] sm:$0xff]
                %6607 = vst [vmem:[%s6361 + $0x750] sm:$0xff] %v6606
                %v6608 = vld [vmem:[%s6360 + $0x3d8] sm:$0xff]
                %6609 = vst [vmem:[%s6361 + $0x758] sm:$0xff] %v6608
                %v6610 = vld [vmem:[%s6360 + $0x3e0] sm:$0xff]
                %6611 = vst [vmem:[%s6361 + $0x760] sm:$0xff] %v6610
                %v6612 = vld [vmem:[%s6360 + $0x3e8] sm:$0xff]
                %6613 = vst [vmem:[%s6361 + $0x768] sm:$0xff] %v6612
                %v6614 = vld [vmem:[%s6360 + $0x3f0] sm:$0xff]
                %6615 = vst [vmem:[%s6361 + $0x770] sm:$0xff] %v6614
                %v6616 = vld [vmem:[%s6360 + $0x3f8] sm:$0xff]
                %6617 = vst [vmem:[%s6361 + $0x778] sm:$0xff] %v6616
              $region142: #{tpu_custom_call.1} parent=136 // loop_footer
                %s6359 = sadd.s32 1, %s6355
              $region143: #{tpu_custom_call.1} parent=136 // loop_footer_branch
                %6354 = sbr.rel target = $region139
              $region144: #{tpu_custom_call.1} parent=136 // loop_exit
                _
            $region137: #{tpu_custom_call.1} parent=128 // pred_fallthru
              _
          $region129: #{tpu_custom_call.1} parent=124 // pred_fallthru
            _
          %6886 = vnop
        $region125: #{tpu_custom_call.1} parent=96 // pred_fallthru
          _
        // Predicated region
        $region160: #{tpu_custom_call.1} parent=96 // pred_check
          %p6887 = pneg %p365
        $region161: #{tpu_custom_call.1} parent=96 // pred_check_branch
          %6889 = sbr.rel (%p6887) target = $region163
        $region162: #{tpu_custom_call.1} parent=96 // pred_region
          %s6891 = ssub.s32 128, 128
          %6892 = vsyncadd %s6317, %s6891
          %s6893 = smul.addr %s45, 2
          %s6894 = sadd.s32 %s46, %s6893
          %s6895 = smul.addr %s6894, 128
          %s6896 = scalar_lea.hbm %s11, %s6895
          %s6898 = sshll.u32 %s6320, 4
          %s6899 = int_to_ptr.vmem [resolvable:$true] %s6898
          %6901 = dma.vmem_to_hbm [thread:$0]  %s6899, 128, %s6896, %s6317
        $region163: #{tpu_custom_call.1} parent=96 // pred_fallthru
          _
        // Predicated region
        $region164: #{tpu_custom_call.1} parent=96 // pred_check
          %p6902 = pneg %p393
        $region165: #{tpu_custom_call.1} parent=96 // pred_check_branch
          %6904 = sbr.rel (%p6902) target = $region167
        $region166: #{tpu_custom_call.1} parent=96 // pred_region
          %s6906 = ssub.s32 128, 128
          %6907 = vsyncadd %s6322, %s6906
          %s6908 = smul.addr %s45, 2
          %s6909 = sadd.s32 %s46, %s6908
          %s6910 = smul.addr %s6909, 128
          %s6911 = scalar_lea.hbm %s12, %s6910
          %s6913 = sshll.u32 %s6325, 4
          %s6914 = int_to_ptr.vmem [resolvable:$true] %s6913
          %6916 = dma.vmem_to_hbm [thread:$0]  %s6914, 128, %s6911, %s6322
        $region167: #{tpu_custom_call.1} parent=96 // pred_fallthru
          _
        // Predicated region
        $region168: #{tpu_custom_call.1} parent=96 // pred_check
          %p6917 = pneg %p421
        $region169: #{tpu_custom_call.1} parent=96 // pred_check_branch
          %6919 = sbr.rel (%p6917) target = $region171
        $region170: #{tpu_custom_call.1} parent=96 // pred_region
          %s6921 = ssub.s32 16, 16
          %6922 = vsyncadd %s6327, %s6921
          %s6923 = smul.addr %s45, 2
          %s6924 = sadd.s32 %s46, %s6923
          %s6925 = smul.addr %s6924, 16
          %s6926 = scalar_lea.hbm %s13, %s6925
          %s6928 = sshll.u32 %s6329, 4
          %s6929 = int_to_ptr.vmem [resolvable:$true] %s6928
          %6931 = dma.vmem_to_hbm [thread:$0]  %s6929, 16, %s6926, %s6327
        $region171: #{tpu_custom_call.1} parent=96 // pred_fallthru
          _
        // Predicated region
        $region172: #{tpu_custom_call.1} parent=96 // pred_check
          %p6932 = pneg %p449
        $region173: #{tpu_custom_call.1} parent=96 // pred_check_branch
          %6934 = sbr.rel (%p6932) target = $region175
        $region174: #{tpu_custom_call.1} parent=96 // pred_region
          %s6935 = smul.u32 16, %s46
        $region175: #{tpu_custom_call.1} parent=96 // pred_fallthru
          _
      $region97: #{tpu_custom_call.1} parent=5 // pred_fallthru
        _
      %p6936 = scmp.le.s32.totalorder 2, %s36
      // Predicated region
      $region176: #{tpu_custom_call.1} parent=5 // pred_check
        %p6937 = pneg %p6936
      $region177: #{tpu_custom_call.1} parent=5 // pred_check_branch
        %6939 = sbr.rel (%p6937) target = $region179
      $region178: #{tpu_custom_call.1} parent=5 // pred_region
        %s6940 = ssub.s32 %s36, 2
        // Predicated region
        $region180: #{tpu_custom_call.1} parent=178 // pred_check
          %p6941 = pneg %p343
        $region181: #{tpu_custom_call.1} parent=178 // pred_check_branch
          %6943 = sbr.rel (%p6941) target = $region183
        $region182: #{tpu_custom_call.1} parent=178 // pred_region
          %s6944 = sand.u32 %s328, 1
          %s6945 = sand.u32 %s328, 1
          %s6946 = smul.addr %s6945, 1024
          %s6947 = scalar_lea.vmem [#allocation12], %s6946
        $region183: #{tpu_custom_call.1} parent=178 // pred_fallthru
          _
        // Predicated region
        $region184: #{tpu_custom_call.1} parent=178 // pred_check
          %p6948 = pneg %p371
        $region185: #{tpu_custom_call.1} parent=178 // pred_check_branch
          %6950 = sbr.rel (%p6948) target = $region187
        $region186: #{tpu_custom_call.1} parent=178 // pred_region
          %s6951 = sand.u32 %s356, 1
          %s6952 = scalar_lea.sflag [#allocation4], %s6951
          %s6953 = sand.u32 %s356, 1
          %s6954 = smul.addr %s6953, 8
          %s6955 = scalar_lea.vmem [#allocation13], %s6954
          %6956 = dma.done %s6952, 128
        $region187: #{tpu_custom_call.1} parent=178 // pred_fallthru
          _
        // Predicated region
        $region188: #{tpu_custom_call.1} parent=178 // pred_check
          %p6957 = pneg %p399
        $region189: #{tpu_custom_call.1} parent=178 // pred_check_branch
          %6959 = sbr.rel (%p6957) target = $region191
        $region190: #{tpu_custom_call.1} parent=178 // pred_region
          %s6960 = sand.u32 %s42, 1
          %s6961 = scalar_lea.sflag [#allocation15], %s6960
          %s6962 = sand.u32 %s384, 1
          %s6963 = smul.addr %s6962, 8
          %s6964 = scalar_lea.vmem [#allocation14], %s6963
          %6965 = dma.done %s6961, 128
        $region191: #{tpu_custom_call.1} parent=178 // pred_fallthru
          _
        // Predicated region
        $region192: #{tpu_custom_call.1} parent=178 // pred_check
          %p6966 = pneg %p427
        $region193: #{tpu_custom_call.1} parent=178 // pred_check_branch
          %6968 = sbr.rel (%p6966) target = $region195
        $region194: #{tpu_custom_call.1} parent=178 // pred_region
          %s6969 = sand.u32 %s42, 1
          %s6970 = scalar_lea.sflag [#allocation15], %s6969
          %s6971 = sand.u32 %s412, 1
          %s6972 = scalar_lea.vmem [#allocation16], %s6971
          %6973 = dma.done %s6970, 16
        $region195: #{tpu_custom_call.1} parent=178 // pred_fallthru
          _
        // Predicated region
        $region196: #{tpu_custom_call.1} parent=178 // pred_check
          %p6974 = pneg %p455
        $region197: #{tpu_custom_call.1} parent=178 // pred_check_branch
          %6976 = sbr.rel (%p6974) target = $region199
        $region198: #{tpu_custom_call.1} parent=178 // pred_region
          %s6977 = smul.u32 16, %s48
          %p6978 = scmp.lt.s32.totalorder %s47, 1
          %s6979 = scalar_select %p6978, %s47, 1
          %p6980 = scmp.lt.s32.totalorder %s6977, 31
          %s6981 = scalar_select %p6980, %s6977, 31
          %s6982 = smul.addr %s6979, 32
          %s6983 = sadd.s32 %s6981, %s6982
          %s6984 = smul.addr %s6983, 8
          %s6985 = scalar_lea.vmem %s14, %s6984
        $region199: #{tpu_custom_call.1} parent=178 // pred_fallthru
          _
      $region179: #{tpu_custom_call.1} parent=5 // pred_fallthru
        _
    $region6: #{tpu_custom_call.1} parent=1 // loop_footer
      %s40 = sadd.s32 1, %s36
    $region7: #{tpu_custom_call.1} parent=1 // loop_footer_branch
      %35 = sbr.rel target = $region3
    $region8: #{tpu_custom_call.1} parent=1 // loop_exit
      _
    %6986 = vsyncpa [#allocation3], 1
    %s6987 = scalar_lea.sflag [#allocation3], 1
    %6988 = vsyncpa %s6987, 1
    %6989 = vsyncpa [#allocation7], 1
    %s6990 = scalar_lea.sflag [#allocation7], 1
    %6991 = vsyncpa %s6990, 1
    %6992 = vsyncpa [#allocation10], 1
    %s6993 = scalar_lea.sflag [#allocation10], 1
    %6994 = vsyncpa %s6993, 1
    %6995 = vsyncpa [#allocation4], 1
    %s6996 = scalar_lea.sflag [#allocation4], 1
    %6997 = vsyncpa %s6996, 1
    %6998 = vsyncpa [#allocation15], 1
    %s6999 = scalar_lea.sflag [#allocation15], 1
    %7000 = vsyncpa %s6999, 1

</llo_original>
